<compile_context>
chip_gen: v7x
topology: tpu7x:2x2x1
jax: 0.10.0
libtpu: 0.0.40
codegen_flags: <defaults>
</compile_context>

<pallas_src>
import functools

import jax
import jax.numpy as jnp
from jax import lax
from jax.experimental import pallas as pl
from jax.experimental.pallas import tpu as pltpu


def _round_up(x, m):
    return ((x + m - 1) // m) * m


def _vmem_limit_bytes():
    # Derive the scoped-VMEM budget from the hardware (v5e/v6e: 128 MiB,
    # v7x: 64 MiB per TensorCore) and leave ~25% headroom.  Fall back to the
    # compiler default if the query is unavailable.
    try:
        cap = pltpu.get_tpu_info().vmem_capacity_bytes
        return int(cap * 3 // 4)
    except Exception:
        return None


def _accum_conv_f32(x_ref, w_ref, *, kh, kw, wp, m_rows):
    """Conv for one image as kh*kw shifted bf16 MXU dots with f32 accumulation.

    x_ref: (1, R, Cin) bf16 block = spatially padded image, rows flattened.
    w_ref: (kh*kw, Cin, Coutp) bf16, one (Cin, Coutp) tile per tap.
    Returns f32 acc of shape (m_rows, Coutp); row y*wp + x is output (y, x)
    (the wp - W trailing columns per row are over-compute for the caller to
    mask / strip).
    """
    coutp = w_ref.shape[-1]
    # One block load + upcast; per-tap windows are value-level (sublane-shift)
    # slices at static offsets, re-cast to bf16 (exact: values came from bf16)
    # so the MXU runs at bf16 rate.
    xf = x_ref[0].astype(jnp.float32)                      # (R, Cin)
    acc = jnp.zeros((m_rows, coutp), jnp.float32)
    for di in range(kh):
        for dj in range(kw):
            s = di * wp + dj                               # static offset
            win = xf[s:s + m_rows, :].astype(jnp.bfloat16)  # (m_rows, Cin)
            acc = acc + jnp.dot(win, w_ref[di * kw + dj],
                                preferred_element_type=jnp.float32)
    return acc


def _conv_stats_kernel(x_ref, w_ref, sum_ref, sq_ref, *,
                       kh, kw, wp, w_img, m_rows):
    # Pass 1: conv stays in VMEM; only per-image per-channel partial sums and
    # sums-of-squares (BatchNorm batch statistics) are written to HBM.
    acc = _accum_conv_f32(x_ref, w_ref, kh=kh, kw=kw, wp=wp, m_rows=m_rows)
    col = lax.broadcasted_iota(jnp.int32, (m_rows, 1), 0) % wp
    valid = col < w_img                                    # mask junk columns
    sum_ref[0] = jnp.sum(jnp.where(valid, acc, 0.0), axis=0, keepdims=True)
    sq_ref[0] = jnp.sum(jnp.where(valid, acc * acc, 0.0), axis=0, keepdims=True)


def _conv_bn_relu_kernel(x_ref, w_ref, scale_ref, shift_ref, o_ref, *,
                         kh, kw, wp, m_rows):
    # Pass 2: recompute the conv (cheaper than a write+read round trip of the
    # intermediate) and fuse the folded BatchNorm affine + ReLU into the write.
    acc = _accum_conv_f32(x_ref, w_ref, kh=kh, kw=kw, wp=wp, m_rows=m_rows)
    y = jnp.maximum(acc * scale_ref[...] + shift_ref[...], 0.0)
    o_ref[0] = y.astype(o_ref.dtype)


def cnn_block_forward(x_nchw, conv_w, conv_b, gamma, beta, *,
                      kernel_size=3, stride=1, padding=1, eps=1e-5):
    """Forward of CNNBlock(activation='relu', norm=True), stride=1.

    x_nchw:  (N, Cin, H, W)       float32
    conv_w:  (Cout, Cin, KH, KW)  float32   (PyTorch OIHW)
    conv_b:  (Cout,)              float32   (cancels exactly through the
                                             training-mode BN mean subtraction)
    gamma, beta: (Cout,)          float32
    returns: (N, Cout, H, W)      float32
    """
    del conv_b  # exact cancellation only for training-mode (batch-stat) BN.
    # TODO(synk): eval-mode BN (running stats) would need the bias re-added.

    n, cin, h, w_img = x_nchw.shape
    cout = conv_w.shape[0]
    kh, kw = conv_w.shape[2], conv_w.shape[3]
    assert stride == 1 and kh == kw == kernel_size and padding == kernel_size // 2, (
        "kernel implements the CNNBlock defaults: stride=1 'same' odd conv")

    pad = padding
    wp = w_img + 2 * pad                 # over-computed row width
    m_rows = h * wp                      # conv rows per image (incl. junk cols)
    coutp = _round_up(cout, 128)         # lane-dense output channels
    rows_real = (h + 2 * pad) * wp
    # +(kw-1): keeps the last tap's window in-bounds; round to sublane multiple.
    r_pad = _round_up(rows_real + (kw - 1), 8)
    k_eff = kh * kw * cin

    # ---- Glue: NHWC, spatial pad, flatten rows, bf16 ------------------------
    x_nhwc = jnp.transpose(x_nchw, (0, 2, 3, 1)).astype(jnp.float32)
    xp = jnp.pad(x_nhwc, ((0, 0), (pad, pad), (pad, pad), (0, 0)))
    xflat = xp.reshape(n, rows_real, cin)
    xflat = jnp.pad(xflat, ((0, 0), (0, r_pad - rows_real), (0, 0)))
    xflat = xflat.astype(jnp.bfloat16)                     # (N, R, Cin)

    # Weights: one (Cin, Coutp) bf16 tile per tap (zero-padded channels give
    # zero conv -> zero stats -> zero output, stripped at the end).
    w_taps = jnp.transpose(conv_w, (2, 3, 1, 0)).reshape(kh * kw, cin, cout)
    w_taps = jnp.pad(w_taps.astype(jnp.float32),
                     ((0, 0), (0, 0), (0, coutp - cout))).astype(jnp.bfloat16)

    cparams = pltpu.CompilerParams(dimension_semantics=("parallel",),
                                   vmem_limit_bytes=_vmem_limit_bytes())

    # ---- Pass 1: conv (VMEM-resident) + per-image BN partial statistics -----
    stats_kernel = functools.partial(_conv_stats_kernel, kh=kh, kw=kw, wp=wp,
                                     w_img=w_img, m_rows=m_rows)
    psum, psq = pl.pallas_call(
        stats_kernel,
        out_shape=(jax.ShapeDtypeStruct((n, 1, coutp), jnp.float32),
                   jax.ShapeDtypeStruct((n, 1, coutp), jnp.float32)),
        grid_spec=pltpu.PrefetchScalarGridSpec(
            num_scalar_prefetch=0,
            grid=(n,),
            in_specs=[
                pl.BlockSpec((1, r_pad, cin), lambda b: (b, 0, 0)),
                pl.BlockSpec((kh * kw, cin, coutp), lambda b: (0, 0, 0)),
            ],
            out_specs=[
                pl.BlockSpec((1, 1, coutp), lambda b: (b, 0, 0)),
                pl.BlockSpec((1, 1, coutp), lambda b: (b, 0, 0)),
            ]),
        compiler_params=cparams,
        cost_estimate=pl.CostEstimate(
            flops=2 * n * m_rows * k_eff * coutp,
            transcendentals=0,
            bytes_accessed=2 * n * r_pad * cin + 2 * kh * kw * cin * coutp
                           + 4 * 2 * n * coutp),
    )(xflat, w_taps)

    # ---- Glue: finalize batch statistics, fold BN affine into scale/shift ---
    count = jnp.float32(n * h * w_img)                     # true element count
    mean = jnp.sum(psum[:, 0, :], axis=0) / count
    # NOTE: single-pass E[x^2]-mean^2 (f32); adequate here — switch to a
    # shifted two-pass variance if |mean| >> std in a real model.
    var = jnp.maximum(jnp.sum(psq[:, 0, :], axis=0) / count - mean * mean, 0.0)
    gamma_p = jnp.pad(gamma.astype(jnp.float32), (0, coutp - cout))
    beta_p = jnp.pad(beta.astype(jnp.float32), (0, coutp - cout))
    scale = gamma_p * lax.rsqrt(var + eps)
    shift = beta_p - mean * scale
    scale_row = scale.reshape(1, coutp)
    shift_row = shift.reshape(1, coutp)

    # ---- Pass 2: recompute conv, fused BN affine + ReLU, final write --------
    bnrelu_kernel = functools.partial(_conv_bn_relu_kernel, kh=kh, kw=kw,
                                      wp=wp, m_rows=m_rows)
    out_wide = pl.pallas_call(
        bnrelu_kernel,
        out_shape=jax.ShapeDtypeStruct((n, m_rows, coutp), jnp.float32),
        grid_spec=pltpu.PrefetchScalarGridSpec(
            num_scalar_prefetch=0,
            grid=(n,),
            in_specs=[
                pl.BlockSpec((1, r_pad, cin), lambda b: (b, 0, 0)),
                pl.BlockSpec((kh * kw, cin, coutp), lambda b: (0, 0, 0)),
                pl.BlockSpec((1, coutp), lambda b: (0, 0)),
                pl.BlockSpec((1, coutp), lambda b: (0, 0)),
            ],
            out_specs=pl.BlockSpec((1, m_rows, coutp), lambda b: (b, 0, 0))),
        compiler_params=cparams,
        cost_estimate=pl.CostEstimate(
            flops=2 * n * m_rows * k_eff * coutp + 3 * n * m_rows * coutp,
            transcendentals=0,
            bytes_accessed=2 * n * r_pad * cin + 2 * kh * kw * cin * coutp
                           + 4 * n * m_rows * coutp),
    )(xflat, w_taps, scale_row, shift_row)

    # ---- Glue: strip over-compute columns / channel padding, back to NCHW ---
    out_nhwc = out_wide.reshape(n, h, wp, coutp)[:, :, :w_img, :cout]
    return jnp.transpose(out_nhwc, (0, 3, 1, 2))


def _reference_forward(x_nchw, conv_w, conv_b, gamma, beta, eps=1e-5):
    # Pure-JAX reference (includes the bias: confirms it cancels through BN).
    y = lax.conv_general_dilated(
        x_nchw, conv_w, window_strides=(1, 1), padding=((1, 1), (1, 1)),
        dimension_numbers=("NCHW", "OIHW", "NCHW"),
        precision=lax.Precision.HIGHEST)
    y = y + conv_b.reshape(1, -1, 1, 1)
    mean = jnp.mean(y, axis=(0, 2, 3), keepdims=True)
    var = jnp.mean((y - mean) ** 2, axis=(0, 2, 3), keepdims=True)
    y = (y - mean) * lax.rsqrt(var + eps)
    y = y * gamma.reshape(1, -1, 1, 1) + beta.reshape(1, -1, 1, 1)
    return jnp.maximum(y, 0.0)


if __name__ == "__main__":
    key = jax.random.PRNGKey(0)
    k_x, k_w, k_b, k_g, k_be = jax.random.split(key, 5)

    N, Cin, H, W = 2, 4, 16, 16
    Cout, K = 8, 3

    x = jax.random.normal(k_x, (N, Cin, H, W), dtype=jnp.float32)

    fan_in = Cin * K * K
    bound = 1.0 / (fan_in ** 0.5)
    conv_w = jax.random.uniform(k_w, (Cout, Cin, K, K),
                                minval=-bound, maxval=bound, dtype=jnp.float32)
    conv_b = jax.random.uniform(k_b, (Cout,),
                                minval=-bound, maxval=bound, dtype=jnp.float32)
    gamma = jax.random.uniform(k_g, (Cout,), minval=0.5, maxval=1.5,
                               dtype=jnp.float32)
    beta = jax.random.uniform(k_be, (Cout,), minval=-0.5, maxval=0.5,
                              dtype=jnp.float32)

    fwd = jax.jit(cnn_block_forward)
    out = jax.block_until_ready(fwd(x, conv_w, conv_b, gamma, beta))
    assert out.shape == (N, Cout, H, W)

    # Reference 1: same bf16 quantization of the conv operands, f32 everywhere
    # else — isolates the kernel's math (should match to ~f32 accumulation
    # order, well inside 2e-3).
    xq = x.astype(jnp.bfloat16).astype(jnp.float32)
    wq = conv_w.astype(jnp.bfloat16).astype(jnp.float32)
    ref_q = jax.block_until_ready(_reference_forward(xq, wq, conv_b, gamma, beta))
    err_q = float(jnp.max(jnp.abs(out - ref_q)))
    assert jnp.allclose(out, ref_q, atol=2e-3, rtol=2e-3), err_q

    # Reference 2: full-f32 module semantics — bounds the end-to-end error
    # introduced by casting the conv operands to bf16.
    ref_f = jax.block_until_ready(_reference_forward(x, conv_w, conv_b, gamma, beta))
    err_f = float(jnp.max(jnp.abs(out - ref_f)))
    assert jnp.allclose(out, ref_f, atol=6e-2, rtol=6e-2), err_f

    print("KERNEL_OK")
</pallas_src>

<mosaic_0001>
module attributes {stable_mosaic.version = 11 : i64} {
  func.func @_conv_stats_kernel(%arg0: i32, %arg1: memref<1x328x4xbf16, #tpu.memory_space<vmem>>, %arg2: memref<9x4x128xbf16, #tpu.memory_space<vmem>>, %arg3: memref<1x1x128xf32, #tpu.memory_space<vmem>>, %arg4: memref<1x1x128xf32, #tpu.memory_space<vmem>>) attributes {dimension_semantics = [#tpu.dimension_semantics<parallel>], iteration_bounds = array<i64: 2>, scalar_prefetch = 0 : i64, scratch_operands = 0 : i64, tpu.core_type = #tpu.core_type<tc>, window_params = [{transform_indices = @transform_0, window_bounds = array<i64: 1, 328, 4>}, {pipeline_mode = #tpu.pipeline_mode<synchronous>, transform_indices = @transform_1, window_bounds = array<i64: 9, 4, 128>}, {transform_indices = @transform_2, window_bounds = array<i64: 1, 1, 128>}, {transform_indices = @transform_3, window_bounds = array<i64: 1, 1, 128>}]} {
    %c0 = arith.constant 0 : index
    %c0_0 = arith.constant 0 : index
    %c0_1 = arith.constant 0 : index
    %0 = vector.load %arg1[%c0, %c0_0, %c0_1] : memref<1x328x4xbf16, #tpu.memory_space<vmem>>, vector<1x328x4xbf16>
    %1 = vector.shape_cast %0 : vector<1x328x4xbf16> to vector<328x4xbf16>
    %2 = arith.extf %1 : vector<328x4xbf16> to vector<328x4xf32>
    %cst = arith.constant 0.000000e+00 : f32
    %3 = vector.broadcast %cst : f32 to vector<288x128xf32>
    %4 = vector.extract_strided_slice %2 {offsets = [0, 0], sizes = [288, 4], strides = [1, 1]} : vector<328x4xf32> to vector<288x4xf32>
    %5 = arith.truncf %4 : vector<288x4xf32> to vector<288x4xbf16>
    %c0_2 = arith.constant 0 : index
    %c0_3 = arith.constant 0 : index
    %c0_4 = arith.constant 0 : index
    %6 = vector.load %arg2[%c0_2, %c0_3, %c0_4] : memref<9x4x128xbf16, #tpu.memory_space<vmem>>, vector<1x4x128xbf16>
    %7 = vector.shape_cast %6 : vector<1x4x128xbf16> to vector<4x128xbf16>
    %cst_5 = arith.constant dense<0.000000e+00> : vector<288x128xf32>
    %8 = tpu.matmul %5, %7, %cst_5 {dimension_numbers = #tpu.dot_dimension_numbers<[1], [0], [0], [1], [0, 0, 1, 1], [], []>} : vector<288x4xbf16>, vector<4x128xbf16>, vector<288x128xf32> -> vector<288x128xf32>
    %9 = arith.addf %3, %8 : vector<288x128xf32>
    %10 = vector.extract_strided_slice %2 {offsets = [1, 0], sizes = [288, 4], strides = [1, 1]} : vector<328x4xf32> to vector<288x4xf32>
    %11 = arith.truncf %10 : vector<288x4xf32> to vector<288x4xbf16>
    %c1 = arith.constant 1 : index
    %c0_6 = arith.constant 0 : index
    %c0_7 = arith.constant 0 : index
    %12 = vector.load %arg2[%c1, %c0_6, %c0_7] : memref<9x4x128xbf16, #tpu.memory_space<vmem>>, vector<1x4x128xbf16>
    %13 = vector.shape_cast %12 : vector<1x4x128xbf16> to vector<4x128xbf16>
    %cst_8 = arith.constant dense<0.000000e+00> : vector<288x128xf32>
    %14 = tpu.matmul %11, %13, %cst_8 {dimension_numbers = #tpu.dot_dimension_numbers<[1], [0], [0], [1], [0, 0, 1, 1], [], []>} : vector<288x4xbf16>, vector<4x128xbf16>, vector<288x128xf32> -> vector<288x128xf32>
    %15 = arith.addf %9, %14 : vector<288x128xf32>
    %16 = vector.extract_strided_slice %2 {offsets = [2, 0], sizes = [288, 4], strides = [1, 1]} : vector<328x4xf32> to vector<288x4xf32>
    %17 = arith.truncf %16 : vector<288x4xf32> to vector<288x4xbf16>
    %c2 = arith.constant 2 : index
    %c0_9 = arith.constant 0 : index
    %c0_10 = arith.constant 0 : index
    %18 = vector.load %arg2[%c2, %c0_9, %c0_10] : memref<9x4x128xbf16, #tpu.memory_space<vmem>>, vector<1x4x128xbf16>
    %19 = vector.shape_cast %18 : vector<1x4x128xbf16> to vector<4x128xbf16>
    %cst_11 = arith.constant dense<0.000000e+00> : vector<288x128xf32>
    %20 = tpu.matmul %17, %19, %cst_11 {dimension_numbers = #tpu.dot_dimension_numbers<[1], [0], [0], [1], [0, 0, 1, 1], [], []>} : vector<288x4xbf16>, vector<4x128xbf16>, vector<288x128xf32> -> vector<288x128xf32>
    %21 = arith.addf %15, %20 : vector<288x128xf32>
    %22 = vector.extract_strided_slice %2 {offsets = [18, 0], sizes = [288, 4], strides = [1, 1]} : vector<328x4xf32> to vector<288x4xf32>
    %23 = arith.truncf %22 : vector<288x4xf32> to vector<288x4xbf16>
    %c3 = arith.constant 3 : index
    %c0_12 = arith.constant 0 : index
    %c0_13 = arith.constant 0 : index
    %24 = vector.load %arg2[%c3, %c0_12, %c0_13] : memref<9x4x128xbf16, #tpu.memory_space<vmem>>, vector<1x4x128xbf16>
    %25 = vector.shape_cast %24 : vector<1x4x128xbf16> to vector<4x128xbf16>
    %cst_14 = arith.constant dense<0.000000e+00> : vector<288x128xf32>
    %26 = tpu.matmul %23, %25, %cst_14 {dimension_numbers = #tpu.dot_dimension_numbers<[1], [0], [0], [1], [0, 0, 1, 1], [], []>} : vector<288x4xbf16>, vector<4x128xbf16>, vector<288x128xf32> -> vector<288x128xf32>
    %27 = arith.addf %21, %26 : vector<288x128xf32>
    %28 = vector.extract_strided_slice %2 {offsets = [19, 0], sizes = [288, 4], strides = [1, 1]} : vector<328x4xf32> to vector<288x4xf32>
    %29 = arith.truncf %28 : vector<288x4xf32> to vector<288x4xbf16>
    %c4 = arith.constant 4 : index
    %c0_15 = arith.constant 0 : index
    %c0_16 = arith.constant 0 : index
    %30 = vector.load %arg2[%c4, %c0_15, %c0_16] : memref<9x4x128xbf16, #tpu.memory_space<vmem>>, vector<1x4x128xbf16>
    %31 = vector.shape_cast %30 : vector<1x4x128xbf16> to vector<4x128xbf16>
    %cst_17 = arith.constant dense<0.000000e+00> : vector<288x128xf32>
    %32 = tpu.matmul %29, %31, %cst_17 {dimension_numbers = #tpu.dot_dimension_numbers<[1], [0], [0], [1], [0, 0, 1, 1], [], []>} : vector<288x4xbf16>, vector<4x128xbf16>, vector<288x128xf32> -> vector<288x128xf32>
    %33 = arith.addf %27, %32 : vector<288x128xf32>
    %34 = vector.extract_strided_slice %2 {offsets = [20, 0], sizes = [288, 4], strides = [1, 1]} : vector<328x4xf32> to vector<288x4xf32>
    %35 = arith.truncf %34 : vector<288x4xf32> to vector<288x4xbf16>
    %c5 = arith.constant 5 : index
    %c0_18 = arith.constant 0 : index
    %c0_19 = arith.constant 0 : index
    %36 = vector.load %arg2[%c5, %c0_18, %c0_19] : memref<9x4x128xbf16, #tpu.memory_space<vmem>>, vector<1x4x128xbf16>
    %37 = vector.shape_cast %36 : vector<1x4x128xbf16> to vector<4x128xbf16>
    %cst_20 = arith.constant dense<0.000000e+00> : vector<288x128xf32>
    %38 = tpu.matmul %35, %37, %cst_20 {dimension_numbers = #tpu.dot_dimension_numbers<[1], [0], [0], [1], [0, 0, 1, 1], [], []>} : vector<288x4xbf16>, vector<4x128xbf16>, vector<288x128xf32> -> vector<288x128xf32>
    %39 = arith.addf %33, %38 : vector<288x128xf32>
    %40 = vector.extract_strided_slice %2 {offsets = [36, 0], sizes = [288, 4], strides = [1, 1]} : vector<328x4xf32> to vector<288x4xf32>
    %41 = arith.truncf %40 : vector<288x4xf32> to vector<288x4xbf16>
    %c6 = arith.constant 6 : index
    %c0_21 = arith.constant 0 : index
    %c0_22 = arith.constant 0 : index
    %42 = vector.load %arg2[%c6, %c0_21, %c0_22] : memref<9x4x128xbf16, #tpu.memory_space<vmem>>, vector<1x4x128xbf16>
    %43 = vector.shape_cast %42 : vector<1x4x128xbf16> to vector<4x128xbf16>
    %cst_23 = arith.constant dense<0.000000e+00> : vector<288x128xf32>
    %44 = tpu.matmul %41, %43, %cst_23 {dimension_numbers = #tpu.dot_dimension_numbers<[1], [0], [0], [1], [0, 0, 1, 1], [], []>} : vector<288x4xbf16>, vector<4x128xbf16>, vector<288x128xf32> -> vector<288x128xf32>
    %45 = arith.addf %39, %44 : vector<288x128xf32>
    %46 = vector.extract_strided_slice %2 {offsets = [37, 0], sizes = [288, 4], strides = [1, 1]} : vector<328x4xf32> to vector<288x4xf32>
    %47 = arith.truncf %46 : vector<288x4xf32> to vector<288x4xbf16>
    %c7 = arith.constant 7 : index
    %c0_24 = arith.constant 0 : index
    %c0_25 = arith.constant 0 : index
    %48 = vector.load %arg2[%c7, %c0_24, %c0_25] : memref<9x4x128xbf16, #tpu.memory_space<vmem>>, vector<1x4x128xbf16>
    %49 = vector.shape_cast %48 : vector<1x4x128xbf16> to vector<4x128xbf16>
    %cst_26 = arith.constant dense<0.000000e+00> : vector<288x128xf32>
    %50 = tpu.matmul %47, %49, %cst_26 {dimension_numbers = #tpu.dot_dimension_numbers<[1], [0], [0], [1], [0, 0, 1, 1], [], []>} : vector<288x4xbf16>, vector<4x128xbf16>, vector<288x128xf32> -> vector<288x128xf32>
    %51 = arith.addf %45, %50 : vector<288x128xf32>
    %52 = vector.extract_strided_slice %2 {offsets = [38, 0], sizes = [288, 4], strides = [1, 1]} : vector<328x4xf32> to vector<288x4xf32>
    %53 = arith.truncf %52 : vector<288x4xf32> to vector<288x4xbf16>
    %c8 = arith.constant 8 : index
    %c0_27 = arith.constant 0 : index
    %c0_28 = arith.constant 0 : index
    %54 = vector.load %arg2[%c8, %c0_27, %c0_28] : memref<9x4x128xbf16, #tpu.memory_space<vmem>>, vector<1x4x128xbf16>
    %55 = vector.shape_cast %54 : vector<1x4x128xbf16> to vector<4x128xbf16>
    %cst_29 = arith.constant dense<0.000000e+00> : vector<288x128xf32>
    %56 = tpu.matmul %53, %55, %cst_29 {dimension_numbers = #tpu.dot_dimension_numbers<[1], [0], [0], [1], [0, 0, 1, 1], [], []>} : vector<288x4xbf16>, vector<4x128xbf16>, vector<288x128xf32> -> vector<288x128xf32>
    %57 = arith.addf %51, %56 : vector<288x128xf32>
    %58 = tpu.iota {dimensions = array<i32: 0>} : vector<288x1xi32>
    %c18_i32 = arith.constant 18 : i32
    %c0_i32 = arith.constant 0 : i32
    %59 = arith.cmpi eq, %c18_i32, %c0_i32 : i32
    %c1_i32 = arith.constant 1 : i32
    %60 = arith.select %59, %c1_i32, %c18_i32 : i32
    %61 = vector.broadcast %60 : i32 to vector<288x1xi32>
    %62 = arith.remsi %58, %61 : vector<288x1xi32>
    %c0_i32_30 = arith.constant 0 : i32
    %63 = vector.broadcast %c0_i32_30 : i32 to vector<288x1xi32>
    %64 = arith.cmpi ne, %62, %63 : vector<288x1xi32>
    %c0_i32_31 = arith.constant 0 : i32
    %65 = vector.broadcast %c0_i32_31 : i32 to vector<288x1xi32>
    %66 = arith.cmpi slt, %62, %65 : vector<288x1xi32>
    %c0_i32_32 = arith.constant 0 : i32
    %67 = arith.cmpi slt, %60, %c0_i32_32 : i32
    %68 = vector.broadcast %67 : i1 to vector<288x1xi1>
    %69 = vector.broadcast %68 : vector<288x1xi1> to vector<288x1xi1>
    %70 = arith.xori %66, %69 : vector<288x1xi1>
    %71 = arith.andi %70, %64 : vector<288x1xi1>
    %72 = vector.broadcast %60 : i32 to vector<288x1xi32>
    %73 = arith.addi %62, %72 : vector<288x1xi32>
    %74 = arith.select %71, %73, %62 : vector<288x1xi1>, vector<288x1xi32>
    %c16_i32 = arith.constant 16 : i32
    %75 = vector.broadcast %c16_i32 : i32 to vector<288x1xi32>
    %76 = arith.cmpi slt, %74, %75 : vector<288x1xi32>
    %cst_33 = arith.constant 0.000000e+00 : f32
    %77 = vector.shape_cast %76 : vector<288x1xi1> to vector<288x1xi1>
    %78 = vector.broadcast %77 : vector<288x1xi1> to vector<288x128xi1>
    %79 = vector.broadcast %cst_33 : f32 to vector<288x128xf32>
    %80 = arith.select %78, %57, %79 : vector<288x128xi1>, vector<288x128xf32>
    %cst_34 = arith.constant dense<0.000000e+00> : vector<128xf32>
    %81 = vector.multi_reduction <add>, %80, %cst_34 [0] : vector<288x128xf32> to vector<128xf32>
    %82 = vector.shape_cast %81 : vector<128xf32> to vector<1x128xf32>
    %c0_35 = arith.constant 0 : index
    %c0_36 = arith.constant 0 : index
    %c0_37 = arith.constant 0 : index
    %83 = vector.load %arg3[%c0_35, %c0_36, %c0_37] : memref<1x1x128xf32, #tpu.memory_space<vmem>>, vector<1x1x128xf32>
    %84 = vector.shape_cast %83 : vector<1x1x128xf32> to vector<1x128xf32>
    %85 = vector.shape_cast %82 : vector<1x128xf32> to vector<1x1x128xf32>
    tpu.vector_store %arg3[%c0_35, %c0_36, %c0_37], %85 {strides = array<i32>} : memref<1x1x128xf32, #tpu.memory_space<vmem>>, vector<1x1x128xf32>,
    %86 = arith.mulf %57, %57 : vector<288x128xf32>
    %cst_38 = arith.constant 0.000000e+00 : f32
    %87 = vector.shape_cast %76 : vector<288x1xi1> to vector<288x1xi1>
    %88 = vector.broadcast %87 : vector<288x1xi1> to vector<288x128xi1>
    %89 = vector.broadcast %cst_38 : f32 to vector<288x128xf32>
    %90 = arith.select %88, %86, %89 : vector<288x128xi1>, vector<288x128xf32>
    %cst_39 = arith.constant dense<0.000000e+00> : vector<128xf32>
    %91 = vector.multi_reduction <add>, %90, %cst_39 [0] : vector<288x128xf32> to vector<128xf32>
    %92 = vector.shape_cast %91 : vector<128xf32> to vector<1x128xf32>
    %c0_40 = arith.constant 0 : index
    %c0_41 = arith.constant 0 : index
    %c0_42 = arith.constant 0 : index
    %93 = vector.load %arg4[%c0_40, %c0_41, %c0_42] : memref<1x1x128xf32, #tpu.memory_space<vmem>>, vector<1x1x128xf32>
    %94 = vector.shape_cast %93 : vector<1x1x128xf32> to vector<1x128xf32>
    %95 = vector.shape_cast %92 : vector<1x128xf32> to vector<1x1x128xf32>
    tpu.vector_store %arg4[%c0_40, %c0_41, %c0_42], %95 {strides = array<i32>} : memref<1x1x128xf32, #tpu.memory_space<vmem>>, vector<1x1x128xf32>,
    return
  }
  func.func @transform_0(%arg0: i32) -> (i32, i32, i32) {
    %c0_i32 = arith.constant 0 : i32
    %c0_i32_0 = arith.constant 0 : i32
    %c0_i32_1 = arith.constant 0 : i32
    return %arg0, %c0_i32, %c0_i32_0 : i32, i32, i32
  }
  func.func @transform_1(%arg0: i32) -> (i32, i32, i32) {
    %c0_i32 = arith.constant 0 : i32
    %c0_i32_0 = arith.constant 0 : i32
    %c0_i32_1 = arith.constant 0 : i32
    %c0_i32_2 = arith.constant 0 : i32
    return %c0_i32, %c0_i32_0, %c0_i32_1 : i32, i32, i32
  }
  func.func @transform_2(%arg0: i32) -> (i32, i32, i32) {
    %c0_i32 = arith.constant 0 : i32
    %c0_i32_0 = arith.constant 0 : i32
    %c0_i32_1 = arith.constant 0 : i32
    return %arg0, %c0_i32, %c0_i32_0 : i32, i32, i32
  }
  func.func @transform_3(%arg0: i32) -> (i32, i32, i32) {
    %c0_i32 = arith.constant 0 : i32
    %c0_i32_0 = arith.constant 0 : i32
    %c0_i32_1 = arith.constant 0 : i32
    return %arg0, %c0_i32, %c0_i32_0 : i32, i32, i32
  }
}

module attributes {stable_mosaic.version = 11 : i64} {
  func.func @_conv_bn_relu_kernel(%arg0: i32, %arg1: memref<1x328x4xbf16, #tpu.memory_space<vmem>>, %arg2: memref<9x4x128xbf16, #tpu.memory_space<vmem>>, %arg3: memref<1x128xf32, #tpu.memory_space<vmem>>, %arg4: memref<1x128xf32, #tpu.memory_space<vmem>>, %arg5: memref<1x288x128xf32, #tpu.memory_space<vmem>>) attributes {dimension_semantics = [#tpu.dimension_semantics<parallel>], iteration_bounds = array<i64: 2>, scalar_prefetch = 0 : i64, scratch_operands = 0 : i64, tpu.core_type = #tpu.core_type<tc>, window_params = [{transform_indices = @transform_0, window_bounds = array<i64: 1, 328, 4>}, {pipeline_mode = #tpu.pipeline_mode<synchronous>, transform_indices = @transform_1, window_bounds = array<i64: 9, 4, 128>}, {pipeline_mode = #tpu.pipeline_mode<synchronous>, transform_indices = @transform_2, window_bounds = array<i64: 1, 128>}, {pipeline_mode = #tpu.pipeline_mode<synchronous>, transform_indices = @transform_3, window_bounds = array<i64: 1, 128>}, {transform_indices = @transform_4, window_bounds = array<i64: 1, 288, 128>}]} {
    %c0 = arith.constant 0 : index
    %c0_0 = arith.constant 0 : index
    %c0_1 = arith.constant 0 : index
    %0 = vector.load %arg1[%c0, %c0_0, %c0_1] : memref<1x328x4xbf16, #tpu.memory_space<vmem>>, vector<1x328x4xbf16>
    %1 = vector.shape_cast %0 : vector<1x328x4xbf16> to vector<328x4xbf16>
    %2 = arith.extf %1 : vector<328x4xbf16> to vector<328x4xf32>
    %cst = arith.constant 0.000000e+00 : f32
    %3 = vector.broadcast %cst : f32 to vector<288x128xf32>
    %4 = vector.extract_strided_slice %2 {offsets = [0, 0], sizes = [288, 4], strides = [1, 1]} : vector<328x4xf32> to vector<288x4xf32>
    %5 = arith.truncf %4 : vector<288x4xf32> to vector<288x4xbf16>
    %c0_2 = arith.constant 0 : index
    %c0_3 = arith.constant 0 : index
    %c0_4 = arith.constant 0 : index
    %6 = vector.load %arg2[%c0_2, %c0_3, %c0_4] : memref<9x4x128xbf16, #tpu.memory_space<vmem>>, vector<1x4x128xbf16>
    %7 = vector.shape_cast %6 : vector<1x4x128xbf16> to vector<4x128xbf16>
    %cst_5 = arith.constant dense<0.000000e+00> : vector<288x128xf32>
    %8 = tpu.matmul %5, %7, %cst_5 {dimension_numbers = #tpu.dot_dimension_numbers<[1], [0], [0], [1], [0, 0, 1, 1], [], []>} : vector<288x4xbf16>, vector<4x128xbf16>, vector<288x128xf32> -> vector<288x128xf32>
    %9 = arith.addf %3, %8 : vector<288x128xf32>
    %10 = vector.extract_strided_slice %2 {offsets = [1, 0], sizes = [288, 4], strides = [1, 1]} : vector<328x4xf32> to vector<288x4xf32>
    %11 = arith.truncf %10 : vector<288x4xf32> to vector<288x4xbf16>
    %c1 = arith.constant 1 : index
    %c0_6 = arith.constant 0 : index
    %c0_7 = arith.constant 0 : index
    %12 = vector.load %arg2[%c1, %c0_6, %c0_7] : memref<9x4x128xbf16, #tpu.memory_space<vmem>>, vector<1x4x128xbf16>
    %13 = vector.shape_cast %12 : vector<1x4x128xbf16> to vector<4x128xbf16>
    %cst_8 = arith.constant dense<0.000000e+00> : vector<288x128xf32>
    %14 = tpu.matmul %11, %13, %cst_8 {dimension_numbers = #tpu.dot_dimension_numbers<[1], [0], [0], [1], [0, 0, 1, 1], [], []>} : vector<288x4xbf16>, vector<4x128xbf16>, vector<288x128xf32> -> vector<288x128xf32>
    %15 = arith.addf %9, %14 : vector<288x128xf32>
    %16 = vector.extract_strided_slice %2 {offsets = [2, 0], sizes = [288, 4], strides = [1, 1]} : vector<328x4xf32> to vector<288x4xf32>
    %17 = arith.truncf %16 : vector<288x4xf32> to vector<288x4xbf16>
    %c2 = arith.constant 2 : index
    %c0_9 = arith.constant 0 : index
    %c0_10 = arith.constant 0 : index
    %18 = vector.load %arg2[%c2, %c0_9, %c0_10] : memref<9x4x128xbf16, #tpu.memory_space<vmem>>, vector<1x4x128xbf16>
    %19 = vector.shape_cast %18 : vector<1x4x128xbf16> to vector<4x128xbf16>
    %cst_11 = arith.constant dense<0.000000e+00> : vector<288x128xf32>
    %20 = tpu.matmul %17, %19, %cst_11 {dimension_numbers = #tpu.dot_dimension_numbers<[1], [0], [0], [1], [0, 0, 1, 1], [], []>} : vector<288x4xbf16>, vector<4x128xbf16>, vector<288x128xf32> -> vector<288x128xf32>
    %21 = arith.addf %15, %20 : vector<288x128xf32>
    %22 = vector.extract_strided_slice %2 {offsets = [18, 0], sizes = [288, 4], strides = [1, 1]} : vector<328x4xf32> to vector<288x4xf32>
    %23 = arith.truncf %22 : vector<288x4xf32> to vector<288x4xbf16>
    %c3 = arith.constant 3 : index
    %c0_12 = arith.constant 0 : index
    %c0_13 = arith.constant 0 : index
    %24 = vector.load %arg2[%c3, %c0_12, %c0_13] : memref<9x4x128xbf16, #tpu.memory_space<vmem>>, vector<1x4x128xbf16>
    %25 = vector.shape_cast %24 : vector<1x4x128xbf16> to vector<4x128xbf16>
    %cst_14 = arith.constant dense<0.000000e+00> : vector<288x128xf32>
    %26 = tpu.matmul %23, %25, %cst_14 {dimension_numbers = #tpu.dot_dimension_numbers<[1], [0], [0], [1], [0, 0, 1, 1], [], []>} : vector<288x4xbf16>, vector<4x128xbf16>, vector<288x128xf32> -> vector<288x128xf32>
    %27 = arith.addf %21, %26 : vector<288x128xf32>
    %28 = vector.extract_strided_slice %2 {offsets = [19, 0], sizes = [288, 4], strides = [1, 1]} : vector<328x4xf32> to vector<288x4xf32>
    %29 = arith.truncf %28 : vector<288x4xf32> to vector<288x4xbf16>
    %c4 = arith.constant 4 : index
    %c0_15 = arith.constant 0 : index
    %c0_16 = arith.constant 0 : index
    %30 = vector.load %arg2[%c4, %c0_15, %c0_16] : memref<9x4x128xbf16, #tpu.memory_space<vmem>>, vector<1x4x128xbf16>
    %31 = vector.shape_cast %30 : vector<1x4x128xbf16> to vector<4x128xbf16>
    %cst_17 = arith.constant dense<0.000000e+00> : vector<288x128xf32>
    %32 = tpu.matmul %29, %31, %cst_17 {dimension_numbers = #tpu.dot_dimension_numbers<[1], [0], [0], [1], [0, 0, 1, 1], [], []>} : vector<288x4xbf16>, vector<4x128xbf16>, vector<288x128xf32> -> vector<288x128xf32>
    %33 = arith.addf %27, %32 : vector<288x128xf32>
    %34 = vector.extract_strided_slice %2 {offsets = [20, 0], sizes = [288, 4], strides = [1, 1]} : vector<328x4xf32> to vector<288x4xf32>
    %35 = arith.truncf %34 : vector<288x4xf32> to vector<288x4xbf16>
    %c5 = arith.constant 5 : index
    %c0_18 = arith.constant 0 : index
    %c0_19 = arith.constant 0 : index
    %36 = vector.load %arg2[%c5, %c0_18, %c0_19] : memref<9x4x128xbf16, #tpu.memory_space<vmem>>, vector<1x4x128xbf16>
    %37 = vector.shape_cast %36 : vector<1x4x128xbf16> to vector<4x128xbf16>
    %cst_20 = arith.constant dense<0.000000e+00> : vector<288x128xf32>
    %38 = tpu.matmul %35, %37, %cst_20 {dimension_numbers = #tpu.dot_dimension_numbers<[1], [0], [0], [1], [0, 0, 1, 1], [], []>} : vector<288x4xbf16>, vector<4x128xbf16>, vector<288x128xf32> -> vector<288x128xf32>
    %39 = arith.addf %33, %38 : vector<288x128xf32>
    %40 = vector.extract_strided_slice %2 {offsets = [36, 0], sizes = [288, 4], strides = [1, 1]} : vector<328x4xf32> to vector<288x4xf32>
    %41 = arith.truncf %40 : vector<288x4xf32> to vector<288x4xbf16>
    %c6 = arith.constant 6 : index
    %c0_21 = arith.constant 0 : index
    %c0_22 = arith.constant 0 : index
    %42 = vector.load %arg2[%c6, %c0_21, %c0_22] : memref<9x4x128xbf16, #tpu.memory_space<vmem>>, vector<1x4x128xbf16>
    %43 = vector.shape_cast %42 : vector<1x4x128xbf16> to vector<4x128xbf16>
    %cst_23 = arith.constant dense<0.000000e+00> : vector<288x128xf32>
    %44 = tpu.matmul %41, %43, %cst_23 {dimension_numbers = #tpu.dot_dimension_numbers<[1], [0], [0], [1], [0, 0, 1, 1], [], []>} : vector<288x4xbf16>, vector<4x128xbf16>, vector<288x128xf32> -> vector<288x128xf32>
    %45 = arith.addf %39, %44 : vector<288x128xf32>
    %46 = vector.extract_strided_slice %2 {offsets = [37, 0], sizes = [288, 4], strides = [1, 1]} : vector<328x4xf32> to vector<288x4xf32>
    %47 = arith.truncf %46 : vector<288x4xf32> to vector<288x4xbf16>
    %c7 = arith.constant 7 : index
    %c0_24 = arith.constant 0 : index
    %c0_25 = arith.constant 0 : index
    %48 = vector.load %arg2[%c7, %c0_24, %c0_25] : memref<9x4x128xbf16, #tpu.memory_space<vmem>>, vector<1x4x128xbf16>
    %49 = vector.shape_cast %48 : vector<1x4x128xbf16> to vector<4x128xbf16>
    %cst_26 = arith.constant dense<0.000000e+00> : vector<288x128xf32>
    %50 = tpu.matmul %47, %49, %cst_26 {dimension_numbers = #tpu.dot_dimension_numbers<[1], [0], [0], [1], [0, 0, 1, 1], [], []>} : vector<288x4xbf16>, vector<4x128xbf16>, vector<288x128xf32> -> vector<288x128xf32>
    %51 = arith.addf %45, %50 : vector<288x128xf32>
    %52 = vector.extract_strided_slice %2 {offsets = [38, 0], sizes = [288, 4], strides = [1, 1]} : vector<328x4xf32> to vector<288x4xf32>
    %53 = arith.truncf %52 : vector<288x4xf32> to vector<288x4xbf16>
    %c8 = arith.constant 8 : index
    %c0_27 = arith.constant 0 : index
    %c0_28 = arith.constant 0 : index
    %54 = vector.load %arg2[%c8, %c0_27, %c0_28] : memref<9x4x128xbf16, #tpu.memory_space<vmem>>, vector<1x4x128xbf16>
    %55 = vector.shape_cast %54 : vector<1x4x128xbf16> to vector<4x128xbf16>
    %cst_29 = arith.constant dense<0.000000e+00> : vector<288x128xf32>
    %56 = tpu.matmul %53, %55, %cst_29 {dimension_numbers = #tpu.dot_dimension_numbers<[1], [0], [0], [1], [0, 0, 1, 1], [], []>} : vector<288x4xbf16>, vector<4x128xbf16>, vector<288x128xf32> -> vector<288x128xf32>
    %57 = arith.addf %51, %56 : vector<288x128xf32>
    %c0_30 = arith.constant 0 : index
    %c0_31 = arith.constant 0 : index
    %58 = vector.load %arg3[%c0_30, %c0_31] : memref<1x128xf32, #tpu.memory_space<vmem>>, vector<1x128xf32>
    %59 = vector.broadcast %58 : vector<1x128xf32> to vector<288x128xf32>
    %60 = arith.mulf %57, %59 : vector<288x128xf32>
    %c0_32 = arith.constant 0 : index
    %c0_33 = arith.constant 0 : index
    %61 = vector.load %arg4[%c0_32, %c0_33] : memref<1x128xf32, #tpu.memory_space<vmem>>, vector<1x128xf32>
    %62 = vector.broadcast %61 : vector<1x128xf32> to vector<288x128xf32>
    %63 = arith.addf %60, %62 : vector<288x128xf32>
    %cst_34 = arith.constant 0.000000e+00 : f32
    %64 = vector.broadcast %cst_34 : f32 to vector<288x128xf32>
    %65 = arith.maximumf %63, %64 : vector<288x128xf32>
    %c0_35 = arith.constant 0 : index
    %c0_36 = arith.constant 0 : index
    %c0_37 = arith.constant 0 : index
    %66 = vector.load %arg5[%c0_35, %c0_36, %c0_37] : memref<1x288x128xf32, #tpu.memory_space<vmem>>, vector<1x288x128xf32>
    %67 = vector.shape_cast %66 : vector<1x288x128xf32> to vector<288x128xf32>
    %68 = vector.shape_cast %65 : vector<288x128xf32> to vector<1x288x128xf32>
    tpu.vector_store %arg5[%c0_35, %c0_36, %c0_37], %68 {strides = array<i32>} : memref<1x288x128xf32, #tpu.memory_space<vmem>>, vector<1x288x128xf32>,
    return
  }
  func.func @transform_0(%arg0: i32) -> (i32, i32, i32) {
    %c0_i32 = arith.constant 0 : i32
    %c0_i32_0 = arith.constant 0 : i32
    %c0_i32_1 = arith.constant 0 : i32
    return %arg0, %c0_i32, %c0_i32_0 : i32, i32, i32
  }
  func.func @transform_1(%arg0: i32) -> (i32, i32, i32) {
    %c0_i32 = arith.constant 0 : i32
    %c0_i32_0 = arith.constant 0 : i32
    %c0_i32_1 = arith.constant 0 : i32
    %c0_i32_2 = arith.constant 0 : i32
    return %c0_i32, %c0_i32_0, %c0_i32_1 : i32, i32, i32
  }
  func.func @transform_2(%arg0: i32) -> (i32, i32) {
    %c0_i32 = arith.constant 0 : i32
    %c0_i32_0 = arith.constant 0 : i32
    %c0_i32_1 = arith.constant 0 : i32
    return %c0_i32, %c0_i32_0 : i32, i32
  }
  func.func @transform_3(%arg0: i32) -> (i32, i32) {
    %c0_i32 = arith.constant 0 : i32
    %c0_i32_0 = arith.constant 0 : i32
    %c0_i32_1 = arith.constant 0 : i32
    return %c0_i32, %c0_i32_0 : i32, i32
  }
  func.func @transform_4(%arg0: i32) -> (i32, i32, i32) {
    %c0_i32 = arith.constant 0 : i32
    %c0_i32_0 = arith.constant 0 : i32
    %c0_i32_1 = arith.constant 0 : i32
    return %arg0, %c0_i32, %c0_i32_0 : i32, i32, i32
  }
}

</mosaic_0001>

<llo_original>
// kernel: cnn_block_forward.3
$region0: #{cnn_block_forward.3}
  #allocation0 [shape = 'u32[]', space=smem, size = 0x4, offset = 0x4, fixed_abs, tag = 'smem constant byte address 0x4 - core index']
  #allocation1 [shape = 'u32[144,128]{1,0:T(1,128)}', space=vmem, size = 0x12000, scoped, tag = 'internal scratch']
  %s0 = inlined_call_operand.vmem [shape: bf16[2,328,4], index: 0, kind: input, shape index: {}]
  %s1 = inlined_call_operand.vmem [shape: bf16[9,4,128], index: 1, kind: input, shape index: {}]
  %s2 = inlined_call_operand.vmem [shape: f32[1,128], index: 2, kind: input, shape index: {}]
  %s3 = inlined_call_operand.vmem [shape: f32[1,128], index: 3, kind: input, shape index: {}]
  %s4 = inlined_call_operand.vmem [shape: f32[2,288,128], index: 4, kind: output, shape index: {}]
  %s5 = sld [smem:[#allocation0]]
  $region49: #{cnn_block_forward.3} parent=0
    _
  %s7 = ssub.s32 1, %s5
  %s8 = scalar_select 0, %s7, %s5
  loop: start=0, step=1, limit=4
  $region2: #{cnn_block_forward.3} parent=0 // loop_pre_header
    _
  $region3: #{cnn_block_forward.3} parent=0 // loop_header
    %s10 = sphi 0, %s14
    %p11 = scmp.ge.s32.totalorder %s10, 4
    %s20 = sphi 0, %s22
    %s23 = sphi 0, %s20
    %s24 = sphi 0, %s23
    %s40 = sphi 0, %s24
    %s44 = sphi 0, %s44
    %s46 = sphi 0, %s44
    %s47 = sphi 0, %s46
    %s61 = sphi 0, %s47
    %s65 = sphi 0, %s65
    %s67 = sphi 0, %s65
    %s68 = sphi 0, %s67
    %s82 = sphi 0, %s68
    %s86 = sphi 0, %s86
    %s88 = sphi 0, %s86
    %s89 = sphi 0, %s88
    %s103 = sphi 0, %s89
    %s109 = sphi 0, %s111
    %s112 = sphi 0, %s109
    %s113 = sphi 0, %s112
    %s129 = sphi 0, %s113
  $region4: #{cnn_block_forward.3} parent=0 // loop_header_branch
    %13 = sbr.rel (%p11) target = $region8
  $region5: #{cnn_block_forward.3} parent=0 // loop_body
    %s15 = ssub.s32 %s10, 1
    %s16 = ssub.s32 %s10, 2
    %s17 = sadd.s32 %s10, 1
    %s18 = ssub.s32 %s10, %s17
    %p19 = scmp.eq.s32.totalorder %s18, 0
    %s21 = sadd.s32 %s20, 1
    %s22 = scalar_select %p19, %s20, %s21
    %p25 = pneg %p19
    %p26 = scmp.eq.s32.totalorder %s10, 1
    %p27 = por %p25, %p26
    %p28 = scmp.ne.s32.totalorder %s20, %s23
    %p29 = scmp.eq.s32.totalorder %s10, 0
    %p30 = por %p28, %p29
    %p31 = scmp.ne.s32.totalorder %s20, %s23
    %p32 = scmp.eq.s32.totalorder %s15, 1
    %p33 = por %p31, %p32
    %p34 = scmp.ne.s32.totalorder %s23, %s24
    %p35 = scmp.eq.s32.totalorder %s15, 0
    %p36 = por %p34, %p35
    %p37 = scmp.ne.s32.totalorder %s23, %s24
    %p38 = scmp.eq.s32.totalorder %s16, 1
    %p39 = por %p37, %p38
    %p41 = scmp.ne.s32.totalorder %s24, %s40
    %p42 = scmp.eq.s32.totalorder %s16, 0
    %p43 = por %p41, %p42
    %s45 = sadd.s32 %s44, 1
    %p48 = scmp.eq.s32.totalorder %s10, 1
    %p49 = scmp.ne.s32.totalorder %s44, %s46
    %p50 = scmp.eq.s32.totalorder %s10, 0
    %p51 = por %p49, %p50
    %p52 = scmp.ne.s32.totalorder %s44, %s46
    %p53 = scmp.eq.s32.totalorder %s15, 1
    %p54 = por %p52, %p53
    %p55 = scmp.ne.s32.totalorder %s46, %s47
    %p56 = scmp.eq.s32.totalorder %s15, 0
    %p57 = por %p55, %p56
    %p58 = scmp.ne.s32.totalorder %s46, %s47
    %p59 = scmp.eq.s32.totalorder %s16, 1
    %p60 = por %p58, %p59
    %p62 = scmp.ne.s32.totalorder %s47, %s61
    %p63 = scmp.eq.s32.totalorder %s16, 0
    %p64 = por %p62, %p63
    %s66 = sadd.s32 %s65, 1
    %p69 = scmp.eq.s32.totalorder %s10, 1
    %p70 = scmp.ne.s32.totalorder %s65, %s67
    %p71 = scmp.eq.s32.totalorder %s10, 0
    %p72 = por %p70, %p71
    %p73 = scmp.ne.s32.totalorder %s65, %s67
    %p74 = scmp.eq.s32.totalorder %s15, 1
    %p75 = por %p73, %p74
    %p76 = scmp.ne.s32.totalorder %s67, %s68
    %p77 = scmp.eq.s32.totalorder %s15, 0
    %p78 = por %p76, %p77
    %p79 = scmp.ne.s32.totalorder %s67, %s68
    %p80 = scmp.eq.s32.totalorder %s16, 1
    %p81 = por %p79, %p80
    %p83 = scmp.ne.s32.totalorder %s68, %s82
    %p84 = scmp.eq.s32.totalorder %s16, 0
    %p85 = por %p83, %p84
    %s87 = sadd.s32 %s86, 1
    %p90 = scmp.eq.s32.totalorder %s10, 1
    %p91 = scmp.ne.s32.totalorder %s86, %s88
    %p92 = scmp.eq.s32.totalorder %s10, 0
    %p93 = por %p91, %p92
    %p94 = scmp.ne.s32.totalorder %s86, %s88
    %p95 = scmp.eq.s32.totalorder %s15, 1
    %p96 = por %p94, %p95
    %p97 = scmp.ne.s32.totalorder %s88, %s89
    %p98 = scmp.eq.s32.totalorder %s15, 0
    %p99 = por %p97, %p98
    %p100 = scmp.ne.s32.totalorder %s88, %s89
    %p101 = scmp.eq.s32.totalorder %s16, 1
    %p102 = por %p100, %p101
    %p104 = scmp.ne.s32.totalorder %s89, %s103
    %p105 = scmp.eq.s32.totalorder %s16, 0
    %p106 = por %p104, %p105
    %s107 = ssub.s32 %s10, %s17
    %p108 = scmp.eq.s32.totalorder %s107, 0
    %s110 = sadd.s32 %s109, 1
    %s111 = scalar_select %p108, %s109, %s110
    %p114 = pneg %p108
    %p115 = scmp.eq.s32.totalorder %s10, 1
    %p116 = por %p114, %p115
    %p117 = scmp.ne.s32.totalorder %s109, %s112
    %p118 = scmp.eq.s32.totalorder %s10, 0
    %p119 = por %p117, %p118
    %p120 = scmp.ne.s32.totalorder %s109, %s112
    %p121 = scmp.eq.s32.totalorder %s15, 1
    %p122 = por %p120, %p121
    %p123 = scmp.ne.s32.totalorder %s112, %s113
    %p124 = scmp.eq.s32.totalorder %s15, 0
    %p125 = por %p123, %p124
    %p126 = scmp.ne.s32.totalorder %s112, %s113
    %p127 = scmp.eq.s32.totalorder %s16, 1
    %p128 = por %p126, %p127
    %p130 = scmp.ne.s32.totalorder %s113, %s129
    %p131 = scmp.eq.s32.totalorder %s16, 0
    %p132 = por %p130, %p131
    %p133 = scmp.le.s32.totalorder 1, %s10
    %p134 = scmp.lt.s32.totalorder %s10, 3
    %p135 = pnand %p133, %p134
    %p136 = pneg %p135
    // Predicated region
    $region9: #{cnn_block_forward.3} parent=5 // pred_check
      _
    $region10: #{cnn_block_forward.3} parent=5 // pred_check_branch
      %138 = sbr.rel (%p135) target = $region12
    $region11: #{cnn_block_forward.3} parent=5 // pred_region
      %s139 = ssub.s32 %s10, 1
      // Predicated region
      $region13: #{cnn_block_forward.3} parent=11 // pred_check
        %p140 = pneg %p57
      $region14: #{cnn_block_forward.3} parent=11 // pred_check_branch
        %142 = sbr.rel (%p140) target = $region16
      $region15: #{cnn_block_forward.3} parent=11 // pred_region
        _
      $region16: #{cnn_block_forward.3} parent=11 // pred_fallthru
        _
      // Predicated region
      $region17: #{cnn_block_forward.3} parent=11 // pred_check
        %p143 = pneg %p78
      $region18: #{cnn_block_forward.3} parent=11 // pred_check_branch
        %145 = sbr.rel (%p143) target = $region20
      $region19: #{cnn_block_forward.3} parent=11 // pred_region
        _
      $region20: #{cnn_block_forward.3} parent=11 // pred_fallthru
        _
      // Predicated region
      $region21: #{cnn_block_forward.3} parent=11 // pred_check
        %p146 = pneg %p99
      $region22: #{cnn_block_forward.3} parent=11 // pred_check_branch
        %148 = sbr.rel (%p146) target = $region24
      $region23: #{cnn_block_forward.3} parent=11 // pred_region
        _
      $region24: #{cnn_block_forward.3} parent=11 // pred_fallthru
        _
    $region12: #{cnn_block_forward.3} parent=5 // pred_fallthru
      _
    %p149 = scmp.lt.s32.totalorder %s10, 2
    // Predicated region
    $region25: #{cnn_block_forward.3} parent=5 // pred_check
      %p150 = pneg %p149
    $region26: #{cnn_block_forward.3} parent=5 // pred_check_branch
      %152 = sbr.rel (%p150) target = $region28
    $region27: #{cnn_block_forward.3} parent=5 // pred_region
      // Predicated region
      $region29: #{cnn_block_forward.3} parent=27 // pred_check
        %p153 = pneg %p30
      $region30: #{cnn_block_forward.3} parent=27 // pred_check_branch
        %155 = sbr.rel (%p153) target = $region32
      $region31: #{cnn_block_forward.3} parent=27 // pred_region
        %p156 = scmp.lt.s32.totalorder %s10, 1
        %s157 = scalar_select %p156, %s10, 1
        %s158 = smul.addr %s157, 41
        %s159 = smul.addr %s158, 4
        %s160 = scalar_lea.vmem %s0, %s159
      $region32: #{cnn_block_forward.3} parent=27 // pred_fallthru
        _
    $region28: #{cnn_block_forward.3} parent=5 // pred_fallthru
      _
    %p161 = scmp.le.s32.totalorder 1, %s10
    %p162 = scmp.lt.s32.totalorder %s10, 3
    %p163 = pnand %p161, %p162
    %p164 = pneg %p163
    // Predicated region
    $region33: #{cnn_block_forward.3} parent=5 // pred_check
      _
    $region34: #{cnn_block_forward.3} parent=5 // pred_check_branch
      %166 = sbr.rel (%p163) target = $region36
    $region35: #{cnn_block_forward.3} parent=5 // pred_region
      %s167 = ssub.s32 %s10, 1
      %p168 = scmp.lt.s32.totalorder %s15, 1
      %s169 = scalar_select %p168, %s15, 1
      %s170 = smul.addr %s169, 41
      %s171 = smul.addr %s170, 4
      %s172 = scalar_lea.vmem %s0, %s171
      %p173 = pneg %p36
      %p174 = pneg %p33
      %p175 = pneg %p57
      %p176 = pneg %p54
      %p177 = pneg %p78
      %p178 = pneg %p75
      %p179 = pneg %p99
      %p180 = pneg %p96
      %p181 = pneg %p125
      %p182 = pneg %p122
      %p183 = scmp.lt.s32.totalorder %s15, 1
      %s184 = scalar_select %p183, %s15, 1
      %s185 = smul.addr %s184, 36
      %s186 = smul.addr %s185, 8
      %s187 = scalar_lea.vmem %s4, %s186
      %p188 = scmp.lt.s32.totalorder %s15, 1
      %s189 = scalar_select %p188, %s15, 1
      %s190 = smul.addr %s189, 41
      %s191 = smul.addr %s190, 4
      %s192 = scalar_lea.vmem %s0, %s191
      %p193 = scmp.lt.s32.totalorder %s15, 1
      %s194 = scalar_select %p193, %s15, 1
      %s195 = smul.addr %s194, 36
      %s196 = smul.addr %s195, 8
      %s197 = scalar_lea.vmem %s4, %s196
      %v199 = vld [vmem:[%s192] sm:$0xf]
      %v200 = vld [vmem:[%s192 + $0x4] sm:$0xf]
      %v201 = vld [vmem:[%s192 + $0x8] sm:$0xf]
      %v202 = vld [vmem:[%s192 + $0xc] sm:$0xf]
      %v203 = vld [vmem:[%s192 + $0x10] sm:$0xf]
      %v204 = vld [vmem:[%s192 + $0x14] sm:$0xf]
      %v205 = vld [vmem:[%s192 + $0x18] sm:$0xf]
      %v206 = vld [vmem:[%s192 + $0x1c] sm:$0xf]
      %v207 = vld [vmem:[%s192 + $0x20] sm:$0xf]
      %v208 = vld [vmem:[%s192 + $0x24] sm:$0xf]
      %v209 = vld [vmem:[%s192 + $0x28] sm:$0xf]
      %v210 = vld [vmem:[%s192 + $0x2c] sm:$0xf]
      %v211 = vld [vmem:[%s192 + $0x30] sm:$0xf]
      %v212 = vld [vmem:[%s192 + $0x34] sm:$0xf]
      %v213 = vld [vmem:[%s192 + $0x38] sm:$0xf]
      %v214 = vld [vmem:[%s192 + $0x3c] sm:$0xf]
      %v215 = vld [vmem:[%s192 + $0x40] sm:$0xf]
      %v216 = vld [vmem:[%s192 + $0x44] sm:$0xf]
      %v217 = vld [vmem:[%s192 + $0x48] sm:$0xf]
      %v218 = vld [vmem:[%s192 + $0x4c] sm:$0xf]
      %v219 = vld [vmem:[%s192 + $0x50] sm:$0xf]
      %v220 = vld [vmem:[%s192 + $0x54] sm:$0xf]
      %v221 = vld [vmem:[%s192 + $0x58] sm:$0xf]
      %v222 = vld [vmem:[%s192 + $0x5c] sm:$0xf]
      %v223 = vld [vmem:[%s192 + $0x60] sm:$0xf]
      %v224 = vld [vmem:[%s192 + $0x64] sm:$0xf]
      %v225 = vld [vmem:[%s192 + $0x68] sm:$0xf]
      %v226 = vld [vmem:[%s192 + $0x6c] sm:$0xf]
      %v227 = vld [vmem:[%s192 + $0x70] sm:$0xf]
      %v228 = vld [vmem:[%s192 + $0x74] sm:$0xf]
      %v229 = vld [vmem:[%s192 + $0x78] sm:$0xf]
      %v230 = vld [vmem:[%s192 + $0x7c] sm:$0xf]
      %v231 = vld [vmem:[%s192 + $0x80] sm:$0xf]
      %v232 = vld [vmem:[%s192 + $0x84] sm:$0xf]
      %v233 = vld [vmem:[%s192 + $0x88] sm:$0xf]
      %v234 = vld [vmem:[%s192 + $0x8c] sm:$0xf]
      %v235 = vld [vmem:[%s192 + $0x90] sm:$0xf]
      %v236 = vld [vmem:[%s192 + $0x94] sm:$0xf]
      %v237 = vld [vmem:[%s192 + $0x98] sm:$0xf]
      %v238 = vld [vmem:[%s192 + $0x9c] sm:$0xf]
      %v239 = vld [vmem:[%s192 + $0xa0] sm:$0xf]
      %v240 = vunpack.c.l.bf16 %v199
      %v241 = vunpack.c.l.bf16 %v200
      %v242 = vunpack.c.l.bf16 %v201
      %v243 = vunpack.c.l.bf16 %v202
      %v244 = vunpack.c.l.bf16 %v203
      %v245 = vunpack.c.l.bf16 %v204
      %v246 = vunpack.c.l.bf16 %v205
      %v247 = vunpack.c.l.bf16 %v206
      %v248 = vunpack.c.l.bf16 %v207
      %v249 = vunpack.c.l.bf16 %v208
      %v250 = vunpack.c.l.bf16 %v209
      %v251 = vunpack.c.l.bf16 %v210
      %v252 = vunpack.c.l.bf16 %v211
      %v253 = vunpack.c.l.bf16 %v212
      %v254 = vunpack.c.l.bf16 %v213
      %v255 = vunpack.c.l.bf16 %v214
      %v256 = vunpack.c.l.bf16 %v215
      %v257 = vunpack.c.l.bf16 %v216
      %v258 = vunpack.c.l.bf16 %v217
      %v259 = vunpack.c.l.bf16 %v218
      %v260 = vunpack.c.l.bf16 %v219
      %v261 = vunpack.c.l.bf16 %v220
      %v262 = vunpack.c.l.bf16 %v221
      %v263 = vunpack.c.l.bf16 %v222
      %v264 = vunpack.c.l.bf16 %v223
      %v265 = vunpack.c.l.bf16 %v224
      %v266 = vunpack.c.l.bf16 %v225
      %v267 = vunpack.c.l.bf16 %v226
      %v268 = vunpack.c.l.bf16 %v227
      %v269 = vunpack.c.l.bf16 %v228
      %v270 = vunpack.c.l.bf16 %v229
      %v271 = vunpack.c.l.bf16 %v230
      %v272 = vunpack.c.l.bf16 %v231
      %v273 = vunpack.c.l.bf16 %v232
      %v274 = vunpack.c.l.bf16 %v233
      %v275 = vunpack.c.l.bf16 %v234
      %v276 = vunpack.c.l.bf16 %v235
      %v277 = vunpack.c.l.bf16 %v236
      %v278 = vunpack.c.l.bf16 %v237
      %v279 = vunpack.c.l.bf16 %v238
      %v280 = vunpack.c.l.bf16 %v239
      %v281 = vpack.c.bf16 %v241, %v240
      %v282 = vpack.c.bf16 %v243, %v242
      %v283 = vpack.c.bf16 %v245, %v244
      %v284 = vpack.c.bf16 %v247, %v246
      %v285 = vpack.c.bf16 %v249, %v248
      %v286 = vpack.c.bf16 %v251, %v250
      %v287 = vpack.c.bf16 %v253, %v252
      %v288 = vpack.c.bf16 %v255, %v254
      %v289 = vpack.c.bf16 %v257, %v256
      %v290 = vpack.c.bf16 %v259, %v258
      %v291 = vpack.c.bf16 %v261, %v260
      %v292 = vpack.c.bf16 %v263, %v262
      %v293 = vpack.c.bf16 %v265, %v264
      %v294 = vpack.c.bf16 %v267, %v266
      %v295 = vpack.c.bf16 %v269, %v268
      %v296 = vpack.c.bf16 %v271, %v270
      %v297 = vpack.c.bf16 %v273, %v272
      %v298 = vpack.c.bf16 %v275, %v274
      %v299 = vld [vmem:[%s1] sm:$0x3]
      %v300 = vpack.c.bf16 %v276, %v276
      %s301 = scalar_lea.vmem %s1, 2
      %v302 = vld [vmem:[%s301] sm:$0x3]
      %vm303 = vsmask.f32 7424
      %v305 = vshrl.u32 %v281, 16
      %v307 = vshll.u32 %v281, 16
      %v309 = vrot.slane %v307, 1
      %v310 = vor.u32 %v305, %v309
      %v312 = vshll.u32 %v282, 16
      %v314 = vrot.slane %v312, 1
      %v315 = vsel %vm303, %v310, %v314
      %v316 = vshrl.u32 %v282, 16
      %v318 = vor.u32 %v316, %v314
      %v320 = vshll.u32 %v283, 16
      %v322 = vrot.slane %v320, 1
      %v323 = vsel %vm303, %v318, %v322
      %v324 = vshrl.u32 %v283, 16
      %v326 = vor.u32 %v324, %v322
      %v328 = vshll.u32 %v284, 16
      %v330 = vrot.slane %v328, 1
      %v331 = vsel %vm303, %v326, %v330
      %v332 = vshrl.u32 %v284, 16
      %v334 = vor.u32 %v332, %v330
      %v336 = vshll.u32 %v285, 16
      %v338 = vrot.slane %v336, 1
      %v339 = vsel %vm303, %v334, %v338
      %v340 = vshrl.u32 %v285, 16
      %v342 = vor.u32 %v340, %v338
      %v344 = vshll.u32 %v286, 16
      %v346 = vrot.slane %v344, 1
      %v347 = vsel %vm303, %v342, %v346
      %v348 = vshrl.u32 %v286, 16
      %v350 = vor.u32 %v348, %v346
      %v352 = vshll.u32 %v287, 16
      %v354 = vrot.slane %v352, 1
      %v355 = vsel %vm303, %v350, %v354
      %v356 = vshrl.u32 %v287, 16
      %v358 = vor.u32 %v356, %v354
      %v360 = vshll.u32 %v288, 16
      %v362 = vrot.slane %v360, 1
      %v363 = vsel %vm303, %v358, %v362
      %v364 = vshrl.u32 %v288, 16
      %v366 = vor.u32 %v364, %v362
      %v368 = vshll.u32 %v289, 16
      %v370 = vrot.slane %v368, 1
      %v371 = vsel %vm303, %v366, %v370
      %v372 = vshrl.u32 %v289, 16
      %v374 = vor.u32 %v372, %v370
      %v376 = vshll.u32 %v290, 16
      %v378 = vrot.slane %v376, 1
      %v379 = vsel %vm303, %v374, %v378
      %v380 = vshrl.u32 %v290, 16
      %v382 = vor.u32 %v380, %v378
      %v384 = vshll.u32 %v291, 16
      %v386 = vrot.slane %v384, 1
      %v387 = vsel %vm303, %v382, %v386
      %v388 = vshrl.u32 %v291, 16
      %v390 = vor.u32 %v388, %v386
      %v392 = vshll.u32 %v292, 16
      %v394 = vrot.slane %v392, 1
      %v395 = vsel %vm303, %v390, %v394
      %v396 = vshrl.u32 %v292, 16
      %v398 = vor.u32 %v396, %v394
      %v400 = vshll.u32 %v293, 16
      %v402 = vrot.slane %v400, 1
      %v403 = vsel %vm303, %v398, %v402
      %v404 = vshrl.u32 %v293, 16
      %v406 = vor.u32 %v404, %v402
      %v408 = vshll.u32 %v294, 16
      %v410 = vrot.slane %v408, 1
      %v411 = vsel %vm303, %v406, %v410
      %v412 = vshrl.u32 %v294, 16
      %v414 = vor.u32 %v412, %v410
      %v416 = vshll.u32 %v295, 16
      %v418 = vrot.slane %v416, 1
      %v419 = vsel %vm303, %v414, %v418
      %v420 = vshrl.u32 %v295, 16
      %v422 = vor.u32 %v420, %v418
      %v424 = vshll.u32 %v296, 16
      %v426 = vrot.slane %v424, 1
      %v427 = vsel %vm303, %v422, %v426
      %v428 = vshrl.u32 %v296, 16
      %v430 = vor.u32 %v428, %v426
      %v432 = vshll.u32 %v297, 16
      %v434 = vrot.slane %v432, 1
      %v435 = vsel %vm303, %v430, %v434
      %v436 = vshrl.u32 %v297, 16
      %v438 = vor.u32 %v436, %v434
      %v440 = vshll.u32 %v298, 16
      %v442 = vrot.slane %v440, 1
      %v443 = vsel %vm303, %v438, %v442
      %v444 = vshrl.u32 %v298, 16
      %v446 = vor.u32 %v444, %v442
      %v448 = vshll.u32 %v300, 16
      %v450 = vrot.slane %v448, 1
      %v451 = vsel %vm303, %v446, %v450
      %vm452 = vcmask 31744
      %v454 = vsel %vm452, %v315, 0
      %v457 = vsel %vm452, %v323, 0
      %v460 = vsel %vm452, %v331, 0
      %v463 = vsel %vm452, %v339, 0
      %v466 = vsel %vm452, %v347, 0
      %v469 = vsel %vm452, %v355, 0
      %v472 = vsel %vm452, %v363, 0
      %v475 = vsel %vm452, %v371, 0
      %v478 = vsel %vm452, %v379, 0
      %v481 = vsel %vm452, %v387, 0
      %v484 = vsel %vm452, %v395, 0
      %v487 = vsel %vm452, %v403, 0
      %v490 = vsel %vm452, %v411, 0
      %v493 = vsel %vm452, %v419, 0
      %v496 = vsel %vm452, %v427, 0
      %v499 = vsel %vm452, %v435, 0
      %v502 = vsel %vm452, %v443, 0
      %v505 = vsel %vm452, %v451, 0
      %vm507 = vcmask 1041408
      %v509 = vsel %vm507, %v302, 0
      %511 = vmatprep.subr.bf16.mxu0 0
      %512 = vmatpush1.bf16.msra.mxu0 %v509
      %513 = vmatprep.subr.bf16.mxu0 0
      %514 = vmatpush1.bf16.msra.mxu0 0
      %515 = vmatprep.subr.bf16.mxu0 0
      %516 = vmatpush1.bf16.msra.mxu0 0
      %517 = vmatprep.subr.bf16.mxu0 0
      %518 = vmatpush1.bf16.msra.mxu0 0
      %519 = vmatprep.subr.bf16.mxu0 0
      %520 = vmatpush1.bf16.msra.mxu0 0
      %521 = vmatprep.subr.bf16.mxu0 0
      %522 = vmatpush1.bf16.msra.mxu0 0
      %523 = vmatprep.subr.bf16.mxu0 0
      %524 = vmatpush1.bf16.msra.mxu0 0
      %525 = vmatprep.subr.bf16.mxu0 0
      %526 = vmatpush1.bf16.msra.mxu0 0
      %527 = vmatprep.subr.bf16.mxu0 0
      %528 = vmatpush1.bf16.msra.mxu0 0
      %529 = vmatprep.subr.bf16.mxu0 0
      %530 = vmatpush1.bf16.msra.mxu0 0
      %531 = vmatprep.subr.bf16.mxu0 0
      %532 = vmatpush1.bf16.msra.mxu0 0
      %533 = vmatprep.subr.bf16.mxu0 0
      %534 = vmatpush1.bf16.msra.mxu0 0
      %535 = vmatprep.subr.bf16.mxu0 0
      %536 = vmatpush1.bf16.msra.mxu0 0
      %537 = vmatprep.subr.bf16.mxu0 0
      %538 = vmatpush1.bf16.msra.mxu0 0
      %539 = vmatprep.subr.bf16.mxu0 0
      %540 = vmatpush1.bf16.msra.mxu0 0
      %541 = vmatprep.subr.bf16.mxu0 0
      %542 = vmatpush1.bf16.msra.mxu0 0
      %543 = vmatprep.mubr.bf16.mxu0 0
      %544 = vmatmul.mubr.bf16.gmra.mrb[0].mxu0 %v454
      %v545 = vpop.f32.mrb[0].mxu0
      %v546 = vadd.f32 0.0, %v545
      %v547 = vpop.f32.mrb[0].mxu0
      %v548 = vpop.f32.mrb[0].mxu0
      %v549 = vadd.f32 0.0, %v548
      %v550 = vpop.f32.mrb[0].mxu0
      %551 = vmatprep.mubr.bf16.mxu0 0
      %552 = vmatmul.mubr.bf16.gmra.mrb[0].mxu0 %v457
      %v553 = vpop.f32.mrb[0].mxu0
      %v554 = vadd.f32 0.0, %v553
      %v555 = vpop.f32.mrb[0].mxu0
      %v556 = vpop.f32.mrb[0].mxu0
      %v557 = vadd.f32 0.0, %v556
      %v558 = vpop.f32.mrb[0].mxu0
      %559 = vmatprep.mubr.bf16.mxu0 0
      %560 = vmatmul.mubr.bf16.gmra.mrb[0].mxu0 %v460
      %v561 = vpop.f32.mrb[0].mxu0
      %v562 = vadd.f32 0.0, %v561
      %v563 = vpop.f32.mrb[0].mxu0
      %v564 = vpop.f32.mrb[0].mxu0
      %v565 = vadd.f32 0.0, %v564
      %v566 = vpop.f32.mrb[0].mxu0
      %567 = vmatprep.mubr.bf16.mxu0 0
      %568 = vmatmul.mubr.bf16.gmra.mrb[0].mxu0 %v463
      %v569 = vpop.f32.mrb[0].mxu0
      %v570 = vadd.f32 0.0, %v569
      %v571 = vpop.f32.mrb[0].mxu0
      %v572 = vpop.f32.mrb[0].mxu0
      %v573 = vadd.f32 0.0, %v572
      %v574 = vpop.f32.mrb[0].mxu0
      %575 = vmatprep.mubr.bf16.mxu0 0
      %576 = vmatmul.mubr.bf16.gmra.mrb[0].mxu0 %v466
      %v577 = vpop.f32.mrb[0].mxu0
      %v578 = vadd.f32 0.0, %v577
      %v579 = vpop.f32.mrb[0].mxu0
      %v580 = vpop.f32.mrb[0].mxu0
      %v581 = vadd.f32 0.0, %v580
      %v582 = vpop.f32.mrb[0].mxu0
      %583 = vmatprep.mubr.bf16.mxu0 0
      %584 = vmatmul.mubr.bf16.gmra.mrb[0].mxu0 %v469
      %v585 = vpop.f32.mrb[0].mxu0
      %v586 = vadd.f32 0.0, %v585
      %v587 = vpop.f32.mrb[0].mxu0
      %v588 = vpop.f32.mrb[0].mxu0
      %v589 = vadd.f32 0.0, %v588
      %v590 = vpop.f32.mrb[0].mxu0
      %591 = vmatprep.mubr.bf16.mxu0 0
      %592 = vmatmul.mubr.bf16.gmra.mrb[0].mxu0 %v472
      %v593 = vpop.f32.mrb[0].mxu0
      %v594 = vadd.f32 0.0, %v593
      %v595 = vpop.f32.mrb[0].mxu0
      %v596 = vpop.f32.mrb[0].mxu0
      %v597 = vadd.f32 0.0, %v596
      %v598 = vpop.f32.mrb[0].mxu0
      %599 = vmatprep.mubr.bf16.mxu0 0
      %600 = vmatmul.mubr.bf16.gmra.mrb[0].mxu0 %v475
      %v601 = vpop.f32.mrb[0].mxu0
      %v602 = vadd.f32 0.0, %v601
      %v603 = vpop.f32.mrb[0].mxu0
      %v604 = vpop.f32.mrb[0].mxu0
      %v605 = vadd.f32 0.0, %v604
      %v606 = vpop.f32.mrb[0].mxu0
      %607 = vmatprep.mubr.bf16.mxu0 0
      %608 = vmatmul.mubr.bf16.gmra.mrb[0].mxu0 %v478
      %v609 = vpop.f32.mrb[0].mxu0
      %v610 = vadd.f32 0.0, %v609
      %v611 = vpop.f32.mrb[0].mxu0
      %v612 = vpop.f32.mrb[0].mxu0
      %v613 = vadd.f32 0.0, %v612
      %v614 = vpop.f32.mrb[0].mxu0
      %615 = vmatprep.mubr.bf16.mxu0 0
      %616 = vmatmul.mubr.bf16.gmra.mrb[0].mxu0 %v481
      %v617 = vpop.f32.mrb[0].mxu0
      %v618 = vadd.f32 0.0, %v617
      %v619 = vpop.f32.mrb[0].mxu0
      %v620 = vpop.f32.mrb[0].mxu0
      %v621 = vadd.f32 0.0, %v620
      %v622 = vpop.f32.mrb[0].mxu0
      %623 = vmatprep.mubr.bf16.mxu0 0
      %624 = vmatmul.mubr.bf16.gmra.mrb[0].mxu0 %v484
      %v625 = vpop.f32.mrb[0].mxu0
      %v626 = vadd.f32 0.0, %v625
      %v627 = vpop.f32.mrb[0].mxu0
      %v628 = vpop.f32.mrb[0].mxu0
      %v629 = vadd.f32 0.0, %v628
      %v630 = vpop.f32.mrb[0].mxu0
      %631 = vmatprep.mubr.bf16.mxu0 0
      %632 = vmatmul.mubr.bf16.gmra.mrb[0].mxu0 %v487
      %v633 = vpop.f32.mrb[0].mxu0
      %v634 = vadd.f32 0.0, %v633
      %v635 = vpop.f32.mrb[0].mxu0
      %v636 = vpop.f32.mrb[0].mxu0
      %v637 = vadd.f32 0.0, %v636
      %v638 = vpop.f32.mrb[0].mxu0
      %639 = vmatprep.mubr.bf16.mxu0 0
      %640 = vmatmul.mubr.bf16.gmra.mrb[0].mxu0 %v490
      %v641 = vpop.f32.mrb[0].mxu0
      %v642 = vadd.f32 0.0, %v641
      %v643 = vpop.f32.mrb[0].mxu0
      %v644 = vpop.f32.mrb[0].mxu0
      %v645 = vadd.f32 0.0, %v644
      %v646 = vpop.f32.mrb[0].mxu0
      %647 = vmatprep.mubr.bf16.mxu0 0
      %648 = vmatmul.mubr.bf16.gmra.mrb[0].mxu0 %v493
      %v649 = vpop.f32.mrb[0].mxu0
      %v650 = vadd.f32 0.0, %v649
      %v651 = vpop.f32.mrb[0].mxu0
      %v652 = vpop.f32.mrb[0].mxu0
      %v653 = vadd.f32 0.0, %v652
      %v654 = vpop.f32.mrb[0].mxu0
      %655 = vmatprep.mubr.bf16.mxu0 0
      %656 = vmatmul.mubr.bf16.gmra.mrb[0].mxu0 %v496
      %v657 = vpop.f32.mrb[0].mxu0
      %v658 = vadd.f32 0.0, %v657
      %v659 = vpop.f32.mrb[0].mxu0
      %v660 = vpop.f32.mrb[0].mxu0
      %v661 = vadd.f32 0.0, %v660
      %v662 = vpop.f32.mrb[0].mxu0
      %663 = vmatprep.mubr.bf16.mxu0 0
      %664 = vmatmul.mubr.bf16.gmra.mrb[0].mxu0 %v499
      %v665 = vpop.f32.mrb[0].mxu0
      %v666 = vadd.f32 0.0, %v665
      %v667 = vpop.f32.mrb[0].mxu0
      %v668 = vpop.f32.mrb[0].mxu0
      %v669 = vadd.f32 0.0, %v668
      %v670 = vpop.f32.mrb[0].mxu0
      %671 = vmatprep.mubr.bf16.mxu0 0
      %672 = vmatmul.mubr.bf16.gmra.mrb[0].mxu0 %v502
      %v673 = vpop.f32.mrb[0].mxu0
      %v674 = vadd.f32 0.0, %v673
      %v675 = vpop.f32.mrb[0].mxu0
      %v676 = vpop.f32.mrb[0].mxu0
      %v677 = vadd.f32 0.0, %v676
      %v678 = vpop.f32.mrb[0].mxu0
      %679 = vmatprep.mubr.bf16.mxu0 0
      %680 = vmatmul.mubr.bf16.gmra.mrb[0].mxu0 %v505
      %v681 = vpop.f32.mrb[0].mxu0
      %v682 = vadd.f32 0.0, %v681
      %v683 = vpop.f32.mrb[0].mxu0
      %v684 = vpop.f32.mrb[0].mxu0
      %v685 = vadd.f32 0.0, %v684
      %v686 = vpop.f32.mrb[0].mxu0
      %687 = vdwg.mxu0
      %v688 = vsel %vm452, %v281, 0
      %v690 = vsel %vm452, %v282, 0
      %v692 = vsel %vm452, %v283, 0
      %v694 = vsel %vm452, %v284, 0
      %v696 = vsel %vm452, %v285, 0
      %v698 = vsel %vm452, %v286, 0
      %v700 = vsel %vm452, %v287, 0
      %v702 = vsel %vm452, %v288, 0
      %v704 = vsel %vm452, %v289, 0
      %v706 = vsel %vm452, %v290, 0
      %v708 = vsel %vm452, %v291, 0
      %v710 = vsel %vm452, %v292, 0
      %v712 = vsel %vm452, %v293, 0
      %v714 = vsel %vm452, %v294, 0
      %v716 = vsel %vm452, %v295, 0
      %v718 = vsel %vm452, %v296, 0
      %v720 = vsel %vm452, %v297, 0
      %v722 = vsel %vm452, %v298, 0
      %v725 = vsel %vm507, %v299, 0
      %727 = vmatprep.subr.bf16.mxu0 0
      %728 = vmatpush1.bf16.msra.mxu0 %v725
      %729 = vmatprep.subr.bf16.mxu0 0
      %730 = vmatpush1.bf16.msra.mxu0 0
      %731 = vmatprep.subr.bf16.mxu0 0
      %732 = vmatpush1.bf16.msra.mxu0 0
      %733 = vmatprep.subr.bf16.mxu0 0
      %734 = vmatpush1.bf16.msra.mxu0 0
      %735 = vmatprep.subr.bf16.mxu0 0
      %736 = vmatpush1.bf16.msra.mxu0 0
      %737 = vmatprep.subr.bf16.mxu0 0
      %738 = vmatpush1.bf16.msra.mxu0 0
      %739 = vmatprep.subr.bf16.mxu0 0
      %740 = vmatpush1.bf16.msra.mxu0 0
      %741 = vmatprep.subr.bf16.mxu0 0
      %742 = vmatpush1.bf16.msra.mxu0 0
      %743 = vmatprep.subr.bf16.mxu0 0
      %744 = vmatpush1.bf16.msra.mxu0 0
      %745 = vmatprep.subr.bf16.mxu0 0
      %746 = vmatpush1.bf16.msra.mxu0 0
      %747 = vmatprep.subr.bf16.mxu0 0
      %748 = vmatpush1.bf16.msra.mxu0 0
      %749 = vmatprep.subr.bf16.mxu0 0
      %750 = vmatpush1.bf16.msra.mxu0 0
      %751 = vmatprep.subr.bf16.mxu0 0
      %752 = vmatpush1.bf16.msra.mxu0 0
      %753 = vmatprep.subr.bf16.mxu0 0
      %754 = vmatpush1.bf16.msra.mxu0 0
      %755 = vmatprep.subr.bf16.mxu0 0
      %756 = vmatpush1.bf16.msra.mxu0 0
      %757 = vmatprep.subr.bf16.mxu0 0
      %758 = vmatpush1.bf16.msra.mxu0 0
      %759 = vmatprep.mubr.bf16.mxu0 0
      %760 = vmatmul.mubr.bf16.gmra.mrb[0].mxu0 %v688
      %v761 = vpop.f32.mrb[0].mxu0
      %v762 = vadd.f32 %v546, %v761
      %v763 = vpop.f32.mrb[0].mxu0
      %v764 = vpop.f32.mrb[0].mxu0
      %v765 = vadd.f32 %v549, %v764
      %v766 = vpop.f32.mrb[0].mxu0
      %767 = vmatprep.mubr.bf16.mxu0 0
      %768 = vmatmul.mubr.bf16.gmra.mrb[0].mxu0 %v690
      %v769 = vpop.f32.mrb[0].mxu0
      %v770 = vadd.f32 %v554, %v769
      %v771 = vpop.f32.mrb[0].mxu0
      %v772 = vpop.f32.mrb[0].mxu0
      %v773 = vadd.f32 %v557, %v772
      %v774 = vpop.f32.mrb[0].mxu0
      %775 = vmatprep.mubr.bf16.mxu0 0
      %776 = vmatmul.mubr.bf16.gmra.mrb[0].mxu0 %v692
      %v777 = vpop.f32.mrb[0].mxu0
      %v778 = vadd.f32 %v562, %v777
      %v779 = vpop.f32.mrb[0].mxu0
      %v780 = vpop.f32.mrb[0].mxu0
      %v781 = vadd.f32 %v565, %v780
      %v782 = vpop.f32.mrb[0].mxu0
      %783 = vmatprep.mubr.bf16.mxu0 0
      %784 = vmatmul.mubr.bf16.gmra.mrb[0].mxu0 %v694
      %v785 = vpop.f32.mrb[0].mxu0
      %v786 = vadd.f32 %v570, %v785
      %v787 = vpop.f32.mrb[0].mxu0
      %v788 = vpop.f32.mrb[0].mxu0
      %v789 = vadd.f32 %v573, %v788
      %v790 = vpop.f32.mrb[0].mxu0
      %791 = vmatprep.mubr.bf16.mxu0 0
      %792 = vmatmul.mubr.bf16.gmra.mrb[0].mxu0 %v696
      %v793 = vpop.f32.mrb[0].mxu0
      %v794 = vadd.f32 %v578, %v793
      %v795 = vpop.f32.mrb[0].mxu0
      %v796 = vpop.f32.mrb[0].mxu0
      %v797 = vadd.f32 %v581, %v796
      %v798 = vpop.f32.mrb[0].mxu0
      %799 = vmatprep.mubr.bf16.mxu0 0
      %800 = vmatmul.mubr.bf16.gmra.mrb[0].mxu0 %v698
      %v801 = vpop.f32.mrb[0].mxu0
      %v802 = vadd.f32 %v586, %v801
      %v803 = vpop.f32.mrb[0].mxu0
      %v804 = vpop.f32.mrb[0].mxu0
      %v805 = vadd.f32 %v589, %v804
      %v806 = vpop.f32.mrb[0].mxu0
      %807 = vmatprep.mubr.bf16.mxu0 0
      %808 = vmatmul.mubr.bf16.gmra.mrb[0].mxu0 %v700
      %v809 = vpop.f32.mrb[0].mxu0
      %v810 = vadd.f32 %v594, %v809
      %v811 = vpop.f32.mrb[0].mxu0
      %v812 = vpop.f32.mrb[0].mxu0
      %v813 = vadd.f32 %v597, %v812
      %v814 = vpop.f32.mrb[0].mxu0
      %815 = vmatprep.mubr.bf16.mxu0 0
      %816 = vmatmul.mubr.bf16.gmra.mrb[0].mxu0 %v702
      %v817 = vpop.f32.mrb[0].mxu0
      %v818 = vadd.f32 %v602, %v817
      %v819 = vpop.f32.mrb[0].mxu0
      %v820 = vpop.f32.mrb[0].mxu0
      %v821 = vadd.f32 %v605, %v820
      %v822 = vpop.f32.mrb[0].mxu0
      %823 = vmatprep.mubr.bf16.mxu0 0
      %824 = vmatmul.mubr.bf16.gmra.mrb[0].mxu0 %v704
      %v825 = vpop.f32.mrb[0].mxu0
      %v826 = vadd.f32 %v610, %v825
      %v827 = vpop.f32.mrb[0].mxu0
      %v828 = vpop.f32.mrb[0].mxu0
      %v829 = vadd.f32 %v613, %v828
      %v830 = vpop.f32.mrb[0].mxu0
      %831 = vmatprep.mubr.bf16.mxu0 0
      %832 = vmatmul.mubr.bf16.gmra.mrb[0].mxu0 %v706
      %v833 = vpop.f32.mrb[0].mxu0
      %v834 = vadd.f32 %v618, %v833
      %v835 = vpop.f32.mrb[0].mxu0
      %v836 = vpop.f32.mrb[0].mxu0
      %v837 = vadd.f32 %v621, %v836
      %v838 = vpop.f32.mrb[0].mxu0
      %839 = vmatprep.mubr.bf16.mxu0 0
      %840 = vmatmul.mubr.bf16.gmra.mrb[0].mxu0 %v708
      %v841 = vpop.f32.mrb[0].mxu0
      %v842 = vadd.f32 %v626, %v841
      %v843 = vpop.f32.mrb[0].mxu0
      %v844 = vpop.f32.mrb[0].mxu0
      %v845 = vadd.f32 %v629, %v844
      %v846 = vpop.f32.mrb[0].mxu0
      %847 = vmatprep.mubr.bf16.mxu0 0
      %848 = vmatmul.mubr.bf16.gmra.mrb[0].mxu0 %v710
      %v849 = vpop.f32.mrb[0].mxu0
      %v850 = vadd.f32 %v634, %v849
      %v851 = vpop.f32.mrb[0].mxu0
      %v852 = vpop.f32.mrb[0].mxu0
      %v853 = vadd.f32 %v637, %v852
      %v854 = vpop.f32.mrb[0].mxu0
      %855 = vmatprep.mubr.bf16.mxu0 0
      %856 = vmatmul.mubr.bf16.gmra.mrb[0].mxu0 %v712
      %v857 = vpop.f32.mrb[0].mxu0
      %v858 = vadd.f32 %v642, %v857
      %v859 = vpop.f32.mrb[0].mxu0
      %v860 = vpop.f32.mrb[0].mxu0
      %v861 = vadd.f32 %v645, %v860
      %v862 = vpop.f32.mrb[0].mxu0
      %863 = vmatprep.mubr.bf16.mxu0 0
      %864 = vmatmul.mubr.bf16.gmra.mrb[0].mxu0 %v714
      %v865 = vpop.f32.mrb[0].mxu0
      %v866 = vadd.f32 %v650, %v865
      %v867 = vpop.f32.mrb[0].mxu0
      %v868 = vpop.f32.mrb[0].mxu0
      %v869 = vadd.f32 %v653, %v868
      %v870 = vpop.f32.mrb[0].mxu0
      %871 = vmatprep.mubr.bf16.mxu0 0
      %872 = vmatmul.mubr.bf16.gmra.mrb[0].mxu0 %v716
      %v873 = vpop.f32.mrb[0].mxu0
      %v874 = vadd.f32 %v658, %v873
      %v875 = vpop.f32.mrb[0].mxu0
      %v876 = vpop.f32.mrb[0].mxu0
      %v877 = vadd.f32 %v661, %v876
      %v878 = vpop.f32.mrb[0].mxu0
      %879 = vmatprep.mubr.bf16.mxu0 0
      %880 = vmatmul.mubr.bf16.gmra.mrb[0].mxu0 %v718
      %v881 = vpop.f32.mrb[0].mxu0
      %v882 = vadd.f32 %v666, %v881
      %v883 = vpop.f32.mrb[0].mxu0
      %v884 = vpop.f32.mrb[0].mxu0
      %v885 = vadd.f32 %v669, %v884
      %v886 = vpop.f32.mrb[0].mxu0
      %887 = vmatprep.mubr.bf16.mxu0 0
      %888 = vmatmul.mubr.bf16.gmra.mrb[0].mxu0 %v720
      %v889 = vpop.f32.mrb[0].mxu0
      %v890 = vadd.f32 %v674, %v889
      %v891 = vpop.f32.mrb[0].mxu0
      %v892 = vpop.f32.mrb[0].mxu0
      %v893 = vadd.f32 %v677, %v892
      %v894 = vpop.f32.mrb[0].mxu0
      %895 = vmatprep.mubr.bf16.mxu0 0
      %896 = vmatmul.mubr.bf16.gmra.mrb[0].mxu0 %v722
      %v897 = vpop.f32.mrb[0].mxu0
      %v898 = vadd.f32 %v682, %v897
      %v899 = vpop.f32.mrb[0].mxu0
      %v900 = vpop.f32.mrb[0].mxu0
      %v901 = vadd.f32 %v685, %v900
      %v902 = vpop.f32.mrb[0].mxu0
      %903 = vdwg.mxu0
      %s904 = scalar_lea.vmem %s1, 4
      %v905 = vld [vmem:[%s904] sm:$0x3]
      %vm925 = vcmask 1046528
      %v926 = vrot.slane %v281, 1
      %v927 = vrot.slane %v282, 1
      %v928 = vsel %vm925, %v926, %v927
      %v929 = vrot.slane %v283, 1
      %v930 = vsel %vm925, %v927, %v929
      %v931 = vrot.slane %v284, 1
      %v932 = vsel %vm925, %v929, %v931
      %v933 = vrot.slane %v285, 1
      %v934 = vsel %vm925, %v931, %v933
      %v935 = vrot.slane %v286, 1
      %v936 = vsel %vm925, %v933, %v935
      %v937 = vrot.slane %v287, 1
      %v938 = vsel %vm925, %v935, %v937
      %v939 = vrot.slane %v288, 1
      %v940 = vsel %vm925, %v937, %v939
      %v941 = vrot.slane %v289, 1
      %v942 = vsel %vm925, %v939, %v941
      %v943 = vrot.slane %v290, 1
      %v944 = vsel %vm925, %v941, %v943
      %v945 = vrot.slane %v291, 1
      %v946 = vsel %vm925, %v943, %v945
      %v947 = vrot.slane %v292, 1
      %v948 = vsel %vm925, %v945, %v947
      %v949 = vrot.slane %v293, 1
      %v950 = vsel %vm925, %v947, %v949
      %v951 = vrot.slane %v294, 1
      %v952 = vsel %vm925, %v949, %v951
      %v953 = vrot.slane %v295, 1
      %v954 = vsel %vm925, %v951, %v953
      %v955 = vrot.slane %v296, 1
      %v956 = vsel %vm925, %v953, %v955
      %v957 = vrot.slane %v297, 1
      %v958 = vsel %vm925, %v955, %v957
      %v959 = vrot.slane %v298, 1
      %v960 = vsel %vm925, %v957, %v959
      %v961 = vrot.slane %v300, 1
      %v962 = vsel %vm925, %v959, %v961
      %v964 = vsel %vm452, %v928, 0
      %v967 = vsel %vm452, %v930, 0
      %v970 = vsel %vm452, %v932, 0
      %v973 = vsel %vm452, %v934, 0
      %v976 = vsel %vm452, %v936, 0
      %v979 = vsel %vm452, %v938, 0
      %v982 = vsel %vm452, %v940, 0
      %v985 = vsel %vm452, %v942, 0
      %v988 = vsel %vm452, %v944, 0
      %v991 = vsel %vm452, %v946, 0
      %v994 = vsel %vm452, %v948, 0
      %v997 = vsel %vm452, %v950, 0
      %v1000 = vsel %vm452, %v952, 0
      %v1003 = vsel %vm452, %v954, 0
      %v1006 = vsel %vm452, %v956, 0
      %v1009 = vsel %vm452, %v958, 0
      %v1012 = vsel %vm452, %v960, 0
      %v1015 = vsel %vm452, %v962, 0
      %v1018 = vsel %vm507, %v905, 0
      %1020 = vmatprep.subr.bf16.mxu0 0
      %1021 = vmatpush1.bf16.msra.mxu0 %v1018
      %1022 = vmatprep.subr.bf16.mxu0 0
      %1023 = vmatpush1.bf16.msra.mxu0 0
      %1024 = vmatprep.subr.bf16.mxu0 0
      %1025 = vmatpush1.bf16.msra.mxu0 0
      %1026 = vmatprep.subr.bf16.mxu0 0
      %1027 = vmatpush1.bf16.msra.mxu0 0
      %1028 = vmatprep.subr.bf16.mxu0 0
      %1029 = vmatpush1.bf16.msra.mxu0 0
      %1030 = vmatprep.subr.bf16.mxu0 0
      %1031 = vmatpush1.bf16.msra.mxu0 0
      %1032 = vmatprep.subr.bf16.mxu0 0
      %1033 = vmatpush1.bf16.msra.mxu0 0
      %1034 = vmatprep.subr.bf16.mxu0 0
      %1035 = vmatpush1.bf16.msra.mxu0 0
      %1036 = vmatprep.subr.bf16.mxu0 0
      %1037 = vmatpush1.bf16.msra.mxu0 0
      %1038 = vmatprep.subr.bf16.mxu0 0
      %1039 = vmatpush1.bf16.msra.mxu0 0
      %1040 = vmatprep.subr.bf16.mxu0 0
      %1041 = vmatpush1.bf16.msra.mxu0 0
      %1042 = vmatprep.subr.bf16.mxu0 0
      %1043 = vmatpush1.bf16.msra.mxu0 0
      %1044 = vmatprep.subr.bf16.mxu0 0
      %1045 = vmatpush1.bf16.msra.mxu0 0
      %1046 = vmatprep.subr.bf16.mxu0 0
      %1047 = vmatpush1.bf16.msra.mxu0 0
      %1048 = vmatprep.subr.bf16.mxu0 0
      %1049 = vmatpush1.bf16.msra.mxu0 0
      %1050 = vmatprep.subr.bf16.mxu0 0
      %1051 = vmatpush1.bf16.msra.mxu0 0
      %1052 = vmatprep.mubr.bf16.mxu0 0
      %1053 = vmatmul.mubr.bf16.gmra.mrb[0].mxu0 %v964
      %v1054 = vpop.f32.mrb[0].mxu0
      %v1055 = vadd.f32 0.0, %v1054
      %v1056 = vpop.f32.mrb[0].mxu0
      %v1057 = vpop.f32.mrb[0].mxu0
      %v1058 = vadd.f32 0.0, %v1057
      %v1059 = vpop.f32.mrb[0].mxu0
      %1060 = vmatprep.mubr.bf16.mxu0 0
      %1061 = vmatmul.mubr.bf16.gmra.mrb[0].mxu0 %v967
      %v1062 = vpop.f32.mrb[0].mxu0
      %v1063 = vadd.f32 0.0, %v1062
      %v1064 = vpop.f32.mrb[0].mxu0
      %v1065 = vpop.f32.mrb[0].mxu0
      %v1066 = vadd.f32 0.0, %v1065
      %v1067 = vpop.f32.mrb[0].mxu0
      %1068 = vmatprep.mubr.bf16.mxu0 0
      %1069 = vmatmul.mubr.bf16.gmra.mrb[0].mxu0 %v970
      %v1070 = vpop.f32.mrb[0].mxu0
      %v1071 = vadd.f32 0.0, %v1070
      %v1072 = vpop.f32.mrb[0].mxu0
      %v1073 = vpop.f32.mrb[0].mxu0
      %v1074 = vadd.f32 0.0, %v1073
      %v1075 = vpop.f32.mrb[0].mxu0
      %1076 = vmatprep.mubr.bf16.mxu0 0
      %1077 = vmatmul.mubr.bf16.gmra.mrb[0].mxu0 %v973
      %v1078 = vpop.f32.mrb[0].mxu0
      %v1079 = vadd.f32 0.0, %v1078
      %v1080 = vpop.f32.mrb[0].mxu0
      %v1081 = vpop.f32.mrb[0].mxu0
      %v1082 = vadd.f32 0.0, %v1081
      %v1083 = vpop.f32.mrb[0].mxu0
      %1084 = vmatprep.mubr.bf16.mxu0 0
      %1085 = vmatmul.mubr.bf16.gmra.mrb[0].mxu0 %v976
      %v1086 = vpop.f32.mrb[0].mxu0
      %v1087 = vadd.f32 0.0, %v1086
      %v1088 = vpop.f32.mrb[0].mxu0
      %v1089 = vpop.f32.mrb[0].mxu0
      %v1090 = vadd.f32 0.0, %v1089
      %v1091 = vpop.f32.mrb[0].mxu0
      %1092 = vmatprep.mubr.bf16.mxu0 0
      %1093 = vmatmul.mubr.bf16.gmra.mrb[0].mxu0 %v979
      %v1094 = vpop.f32.mrb[0].mxu0
      %v1095 = vadd.f32 0.0, %v1094
      %v1096 = vpop.f32.mrb[0].mxu0
      %v1097 = vpop.f32.mrb[0].mxu0
      %v1098 = vadd.f32 0.0, %v1097
      %v1099 = vpop.f32.mrb[0].mxu0
      %1100 = vmatprep.mubr.bf16.mxu0 0
      %1101 = vmatmul.mubr.bf16.gmra.mrb[0].mxu0 %v982
      %v1102 = vpop.f32.mrb[0].mxu0
      %v1103 = vadd.f32 0.0, %v1102
      %v1104 = vpop.f32.mrb[0].mxu0
      %v1105 = vpop.f32.mrb[0].mxu0
      %v1106 = vadd.f32 0.0, %v1105
      %v1107 = vpop.f32.mrb[0].mxu0
      %1108 = vmatprep.mubr.bf16.mxu0 0
      %1109 = vmatmul.mubr.bf16.gmra.mrb[0].mxu0 %v985
      %v1110 = vpop.f32.mrb[0].mxu0
      %v1111 = vadd.f32 0.0, %v1110
      %v1112 = vpop.f32.mrb[0].mxu0
      %v1113 = vpop.f32.mrb[0].mxu0
      %v1114 = vadd.f32 0.0, %v1113
      %v1115 = vpop.f32.mrb[0].mxu0
      %1116 = vmatprep.mubr.bf16.mxu0 0
      %1117 = vmatmul.mubr.bf16.gmra.mrb[0].mxu0 %v988
      %v1118 = vpop.f32.mrb[0].mxu0
      %v1119 = vadd.f32 0.0, %v1118
      %v1120 = vpop.f32.mrb[0].mxu0
      %v1121 = vpop.f32.mrb[0].mxu0
      %v1122 = vadd.f32 0.0, %v1121
      %v1123 = vpop.f32.mrb[0].mxu0
      %1124 = vmatprep.mubr.bf16.mxu0 0
      %1125 = vmatmul.mubr.bf16.gmra.mrb[0].mxu0 %v991
      %v1126 = vpop.f32.mrb[0].mxu0
      %v1127 = vadd.f32 0.0, %v1126
      %v1128 = vpop.f32.mrb[0].mxu0
      %v1129 = vpop.f32.mrb[0].mxu0
      %v1130 = vadd.f32 0.0, %v1129
      %v1131 = vpop.f32.mrb[0].mxu0
      %1132 = vmatprep.mubr.bf16.mxu0 0
      %1133 = vmatmul.mubr.bf16.gmra.mrb[0].mxu0 %v994
      %v1134 = vpop.f32.mrb[0].mxu0
      %v1135 = vadd.f32 0.0, %v1134
      %v1136 = vpop.f32.mrb[0].mxu0
      %v1137 = vpop.f32.mrb[0].mxu0
      %v1138 = vadd.f32 0.0, %v1137
      %v1139 = vpop.f32.mrb[0].mxu0
      %1140 = vmatprep.mubr.bf16.mxu0 0
      %1141 = vmatmul.mubr.bf16.gmra.mrb[0].mxu0 %v997
      %v1142 = vpop.f32.mrb[0].mxu0
      %v1143 = vadd.f32 0.0, %v1142
      %v1144 = vpop.f32.mrb[0].mxu0
      %v1145 = vpop.f32.mrb[0].mxu0
      %v1146 = vadd.f32 0.0, %v1145
      %v1147 = vpop.f32.mrb[0].mxu0
      %1148 = vmatprep.mubr.bf16.mxu0 0
      %1149 = vmatmul.mubr.bf16.gmra.mrb[0].mxu0 %v1000
      %v1150 = vpop.f32.mrb[0].mxu0
      %v1151 = vadd.f32 0.0, %v1150
      %v1152 = vpop.f32.mrb[0].mxu0
      %v1153 = vpop.f32.mrb[0].mxu0
      %v1154 = vadd.f32 0.0, %v1153
      %v1155 = vpop.f32.mrb[0].mxu0
      %1156 = vmatprep.mubr.bf16.mxu0 0
      %1157 = vmatmul.mubr.bf16.gmra.mrb[0].mxu0 %v1003
      %v1158 = vpop.f32.mrb[0].mxu0
      %v1159 = vadd.f32 0.0, %v1158
      %v1160 = vpop.f32.mrb[0].mxu0
      %v1161 = vpop.f32.mrb[0].mxu0
      %v1162 = vadd.f32 0.0, %v1161
      %v1163 = vpop.f32.mrb[0].mxu0
      %1164 = vmatprep.mubr.bf16.mxu0 0
      %1165 = vmatmul.mubr.bf16.gmra.mrb[0].mxu0 %v1006
      %v1166 = vpop.f32.mrb[0].mxu0
      %v1167 = vadd.f32 0.0, %v1166
      %v1168 = vpop.f32.mrb[0].mxu0
      %v1169 = vpop.f32.mrb[0].mxu0
      %v1170 = vadd.f32 0.0, %v1169
      %v1171 = vpop.f32.mrb[0].mxu0
      %1172 = vmatprep.mubr.bf16.mxu0 0
      %1173 = vmatmul.mubr.bf16.gmra.mrb[0].mxu0 %v1009
      %v1174 = vpop.f32.mrb[0].mxu0
      %v1175 = vadd.f32 0.0, %v1174
      %v1176 = vpop.f32.mrb[0].mxu0
      %v1177 = vpop.f32.mrb[0].mxu0
      %v1178 = vadd.f32 0.0, %v1177
      %v1179 = vpop.f32.mrb[0].mxu0
      %1180 = vmatprep.mubr.bf16.mxu0 0
      %1181 = vmatmul.mubr.bf16.gmra.mrb[0].mxu0 %v1012
      %v1182 = vpop.f32.mrb[0].mxu0
      %v1183 = vadd.f32 0.0, %v1182
      %v1184 = vpop.f32.mrb[0].mxu0
      %v1185 = vpop.f32.mrb[0].mxu0
      %v1186 = vadd.f32 0.0, %v1185
      %v1187 = vpop.f32.mrb[0].mxu0
      %1188 = vmatprep.mubr.bf16.mxu0 0
      %1189 = vmatmul.mubr.bf16.gmra.mrb[0].mxu0 %v1015
      %v1190 = vpop.f32.mrb[0].mxu0
      %v1191 = vadd.f32 0.0, %v1190
      %v1192 = vpop.f32.mrb[0].mxu0
      %v1193 = vpop.f32.mrb[0].mxu0
      %v1194 = vadd.f32 0.0, %v1193
      %v1195 = vpop.f32.mrb[0].mxu0
      %1196 = vdwg.mxu0
      %v1197 = vadd.f32 %v762, %v1055
      %v1198 = vadd.f32 %v765, %v1058
      %v1199 = vadd.f32 %v770, %v1063
      %v1200 = vadd.f32 %v773, %v1066
      %v1201 = vadd.f32 %v778, %v1071
      %v1202 = vadd.f32 %v781, %v1074
      %v1203 = vadd.f32 %v786, %v1079
      %v1204 = vadd.f32 %v789, %v1082
      %v1205 = vadd.f32 %v794, %v1087
      %v1206 = vadd.f32 %v797, %v1090
      %v1207 = vadd.f32 %v802, %v1095
      %v1208 = vadd.f32 %v805, %v1098
      %v1209 = vadd.f32 %v810, %v1103
      %v1210 = vadd.f32 %v813, %v1106
      %v1211 = vadd.f32 %v818, %v1111
      %v1212 = vadd.f32 %v821, %v1114
      %v1213 = vadd.f32 %v826, %v1119
      %v1214 = vadd.f32 %v829, %v1122
      %v1215 = vadd.f32 %v834, %v1127
      %v1216 = vadd.f32 %v837, %v1130
      %v1217 = vadd.f32 %v842, %v1135
      %v1218 = vadd.f32 %v845, %v1138
      %v1219 = vadd.f32 %v850, %v1143
      %v1220 = vadd.f32 %v853, %v1146
      %v1221 = vadd.f32 %v858, %v1151
      %v1222 = vadd.f32 %v861, %v1154
      %v1223 = vadd.f32 %v866, %v1159
      %v1224 = vadd.f32 %v869, %v1162
      %v1225 = vadd.f32 %v874, %v1167
      %v1226 = vadd.f32 %v877, %v1170
      %v1227 = vadd.f32 %v882, %v1175
      %v1228 = vadd.f32 %v885, %v1178
      %v1229 = vadd.f32 %v890, %v1183
      %v1230 = vadd.f32 %v893, %v1186
      %v1231 = vadd.f32 %v898, %v1191
      %v1232 = vadd.f32 %v901, %v1194
      %v1233 = vpack.c.bf16 %v277, %v276
      %v1234 = vpack.c.bf16 %v278, %v278
      %s1235 = scalar_lea.vmem %s1, 6
      %v1236 = vld [vmem:[%s1235] sm:$0x3]
      %v1239 = vrot.slane %v1233, 1
      %v1240 = vsel %vm925, %v959, %v1239
      %v1241 = vrot.slane %v1234, 1
      %v1242 = vsel %vm925, %v1239, %v1241
      %v1244 = vsel %vm452, %v1240, 0
      %v1247 = vsel %vm452, %v1242, 0
      %v1250 = vsel %vm507, %v1236, 0
      %1252 = vmatprep.subr.bf16.mxu0 0
      %1253 = vmatpush1.bf16.msra.mxu0 %v1250
      %1254 = vmatprep.subr.bf16.mxu0 0
      %1255 = vmatpush1.bf16.msra.mxu0 0
      %1256 = vmatprep.subr.bf16.mxu0 0
      %1257 = vmatpush1.bf16.msra.mxu0 0
      %1258 = vmatprep.subr.bf16.mxu0 0
      %1259 = vmatpush1.bf16.msra.mxu0 0
      %1260 = vmatprep.subr.bf16.mxu0 0
      %1261 = vmatpush1.bf16.msra.mxu0 0
      %1262 = vmatprep.subr.bf16.mxu0 0
      %1263 = vmatpush1.bf16.msra.mxu0 0
      %1264 = vmatprep.subr.bf16.mxu0 0
      %1265 = vmatpush1.bf16.msra.mxu0 0
      %1266 = vmatprep.subr.bf16.mxu0 0
      %1267 = vmatpush1.bf16.msra.mxu0 0
      %1268 = vmatprep.subr.bf16.mxu0 0
      %1269 = vmatpush1.bf16.msra.mxu0 0
      %1270 = vmatprep.subr.bf16.mxu0 0
      %1271 = vmatpush1.bf16.msra.mxu0 0
      %1272 = vmatprep.subr.bf16.mxu0 0
      %1273 = vmatpush1.bf16.msra.mxu0 0
      %1274 = vmatprep.subr.bf16.mxu0 0
      %1275 = vmatpush1.bf16.msra.mxu0 0
      %1276 = vmatprep.subr.bf16.mxu0 0
      %1277 = vmatpush1.bf16.msra.mxu0 0
      %1278 = vmatprep.subr.bf16.mxu0 0
      %1279 = vmatpush1.bf16.msra.mxu0 0
      %1280 = vmatprep.subr.bf16.mxu0 0
      %1281 = vmatpush1.bf16.msra.mxu0 0
      %1282 = vmatprep.subr.bf16.mxu0 0
      %1283 = vmatpush1.bf16.msra.mxu0 0
      %1284 = vmatprep.mubr.bf16.mxu0 0
      %1285 = vmatmul.mubr.bf16.gmra.mrb[0].mxu0 %v967
      %v1286 = vpop.f32.mrb[0].mxu0
      %v1287 = vadd.f32 0.0, %v1286
      %v1288 = vpop.f32.mrb[0].mxu0
      %v1289 = vpop.f32.mrb[0].mxu0
      %v1290 = vadd.f32 0.0, %v1289
      %v1291 = vpop.f32.mrb[0].mxu0
      %1292 = vmatprep.mubr.bf16.mxu0 0
      %1293 = vmatmul.mubr.bf16.gmra.mrb[0].mxu0 %v970
      %v1294 = vpop.f32.mrb[0].mxu0
      %v1295 = vadd.f32 0.0, %v1294
      %v1296 = vpop.f32.mrb[0].mxu0
      %v1297 = vpop.f32.mrb[0].mxu0
      %v1298 = vadd.f32 0.0, %v1297
      %v1299 = vpop.f32.mrb[0].mxu0
      %1300 = vmatprep.mubr.bf16.mxu0 0
      %1301 = vmatmul.mubr.bf16.gmra.mrb[0].mxu0 %v973
      %v1302 = vpop.f32.mrb[0].mxu0
      %v1303 = vadd.f32 0.0, %v1302
      %v1304 = vpop.f32.mrb[0].mxu0
      %v1305 = vpop.f32.mrb[0].mxu0
      %v1306 = vadd.f32 0.0, %v1305
      %v1307 = vpop.f32.mrb[0].mxu0
      %1308 = vmatprep.mubr.bf16.mxu0 0
      %1309 = vmatmul.mubr.bf16.gmra.mrb[0].mxu0 %v976
      %v1310 = vpop.f32.mrb[0].mxu0
      %v1311 = vadd.f32 0.0, %v1310
      %v1312 = vpop.f32.mrb[0].mxu0
      %v1313 = vpop.f32.mrb[0].mxu0
      %v1314 = vadd.f32 0.0, %v1313
      %v1315 = vpop.f32.mrb[0].mxu0
      %1316 = vmatprep.mubr.bf16.mxu0 0
      %1317 = vmatmul.mubr.bf16.gmra.mrb[0].mxu0 %v979
      %v1318 = vpop.f32.mrb[0].mxu0
      %v1319 = vadd.f32 0.0, %v1318
      %v1320 = vpop.f32.mrb[0].mxu0
      %v1321 = vpop.f32.mrb[0].mxu0
      %v1322 = vadd.f32 0.0, %v1321
      %v1323 = vpop.f32.mrb[0].mxu0
      %1324 = vmatprep.mubr.bf16.mxu0 0
      %1325 = vmatmul.mubr.bf16.gmra.mrb[0].mxu0 %v982
      %v1326 = vpop.f32.mrb[0].mxu0
      %v1327 = vadd.f32 0.0, %v1326
      %v1328 = vpop.f32.mrb[0].mxu0
      %v1329 = vpop.f32.mrb[0].mxu0
      %v1330 = vadd.f32 0.0, %v1329
      %v1331 = vpop.f32.mrb[0].mxu0
      %1332 = vmatprep.mubr.bf16.mxu0 0
      %1333 = vmatmul.mubr.bf16.gmra.mrb[0].mxu0 %v985
      %v1334 = vpop.f32.mrb[0].mxu0
      %v1335 = vadd.f32 0.0, %v1334
      %v1336 = vpop.f32.mrb[0].mxu0
      %v1337 = vpop.f32.mrb[0].mxu0
      %v1338 = vadd.f32 0.0, %v1337
      %v1339 = vpop.f32.mrb[0].mxu0
      %1340 = vmatprep.mubr.bf16.mxu0 0
      %1341 = vmatmul.mubr.bf16.gmra.mrb[0].mxu0 %v988
      %v1342 = vpop.f32.mrb[0].mxu0
      %v1343 = vadd.f32 0.0, %v1342
      %v1344 = vpop.f32.mrb[0].mxu0
      %v1345 = vpop.f32.mrb[0].mxu0
      %v1346 = vadd.f32 0.0, %v1345
      %v1347 = vpop.f32.mrb[0].mxu0
      %1348 = vmatprep.mubr.bf16.mxu0 0
      %1349 = vmatmul.mubr.bf16.gmra.mrb[0].mxu0 %v991
      %v1350 = vpop.f32.mrb[0].mxu0
      %v1351 = vadd.f32 0.0, %v1350
      %v1352 = vpop.f32.mrb[0].mxu0
      %v1353 = vpop.f32.mrb[0].mxu0
      %v1354 = vadd.f32 0.0, %v1353
      %v1355 = vpop.f32.mrb[0].mxu0
      %1356 = vmatprep.mubr.bf16.mxu0 0
      %1357 = vmatmul.mubr.bf16.gmra.mrb[0].mxu0 %v994
      %v1358 = vpop.f32.mrb[0].mxu0
      %v1359 = vadd.f32 0.0, %v1358
      %v1360 = vpop.f32.mrb[0].mxu0
      %v1361 = vpop.f32.mrb[0].mxu0
      %v1362 = vadd.f32 0.0, %v1361
      %v1363 = vpop.f32.mrb[0].mxu0
      %1364 = vmatprep.mubr.bf16.mxu0 0
      %1365 = vmatmul.mubr.bf16.gmra.mrb[0].mxu0 %v997
      %v1366 = vpop.f32.mrb[0].mxu0
      %v1367 = vadd.f32 0.0, %v1366
      %v1368 = vpop.f32.mrb[0].mxu0
      %v1369 = vpop.f32.mrb[0].mxu0
      %v1370 = vadd.f32 0.0, %v1369
      %v1371 = vpop.f32.mrb[0].mxu0
      %1372 = vmatprep.mubr.bf16.mxu0 0
      %1373 = vmatmul.mubr.bf16.gmra.mrb[0].mxu0 %v1000
      %v1374 = vpop.f32.mrb[0].mxu0
      %v1375 = vadd.f32 0.0, %v1374
      %v1376 = vpop.f32.mrb[0].mxu0
      %v1377 = vpop.f32.mrb[0].mxu0
      %v1378 = vadd.f32 0.0, %v1377
      %v1379 = vpop.f32.mrb[0].mxu0
      %1380 = vmatprep.mubr.bf16.mxu0 0
      %1381 = vmatmul.mubr.bf16.gmra.mrb[0].mxu0 %v1003
      %v1382 = vpop.f32.mrb[0].mxu0
      %v1383 = vadd.f32 0.0, %v1382
      %v1384 = vpop.f32.mrb[0].mxu0
      %v1385 = vpop.f32.mrb[0].mxu0
      %v1386 = vadd.f32 0.0, %v1385
      %v1387 = vpop.f32.mrb[0].mxu0
      %1388 = vmatprep.mubr.bf16.mxu0 0
      %1389 = vmatmul.mubr.bf16.gmra.mrb[0].mxu0 %v1006
      %v1390 = vpop.f32.mrb[0].mxu0
      %v1391 = vadd.f32 0.0, %v1390
      %v1392 = vpop.f32.mrb[0].mxu0
      %v1393 = vpop.f32.mrb[0].mxu0
      %v1394 = vadd.f32 0.0, %v1393
      %v1395 = vpop.f32.mrb[0].mxu0
      %1396 = vmatprep.mubr.bf16.mxu0 0
      %1397 = vmatmul.mubr.bf16.gmra.mrb[0].mxu0 %v1009
      %v1398 = vpop.f32.mrb[0].mxu0
      %v1399 = vadd.f32 0.0, %v1398
      %v1400 = vpop.f32.mrb[0].mxu0
      %v1401 = vpop.f32.mrb[0].mxu0
      %v1402 = vadd.f32 0.0, %v1401
      %v1403 = vpop.f32.mrb[0].mxu0
      %1404 = vmatprep.mubr.bf16.mxu0 0
      %1405 = vmatmul.mubr.bf16.gmra.mrb[0].mxu0 %v1012
      %v1406 = vpop.f32.mrb[0].mxu0
      %v1407 = vadd.f32 0.0, %v1406
      %v1408 = vpop.f32.mrb[0].mxu0
      %v1409 = vpop.f32.mrb[0].mxu0
      %v1410 = vadd.f32 0.0, %v1409
      %v1411 = vpop.f32.mrb[0].mxu0
      %1412 = vmatprep.mubr.bf16.mxu0 0
      %1413 = vmatmul.mubr.bf16.gmra.mrb[0].mxu0 %v1244
      %v1414 = vpop.f32.mrb[0].mxu0
      %v1415 = vadd.f32 0.0, %v1414
      %v1416 = vpop.f32.mrb[0].mxu0
      %v1417 = vpop.f32.mrb[0].mxu0
      %v1418 = vadd.f32 0.0, %v1417
      %v1419 = vpop.f32.mrb[0].mxu0
      %1420 = vmatprep.mubr.bf16.mxu0 0
      %1421 = vmatmul.mubr.bf16.gmra.mrb[0].mxu0 %v1247
      %v1422 = vpop.f32.mrb[0].mxu0
      %v1423 = vadd.f32 0.0, %v1422
      %v1424 = vpop.f32.mrb[0].mxu0
      %v1425 = vpop.f32.mrb[0].mxu0
      %v1426 = vadd.f32 0.0, %v1425
      %v1427 = vpop.f32.mrb[0].mxu0
      %1428 = vdwg.mxu0
      %v1429 = vadd.f32 %v1197, %v1287
      %v1430 = vadd.f32 %v1198, %v1290
      %v1431 = vadd.f32 %v1199, %v1295
      %v1432 = vadd.f32 %v1200, %v1298
      %v1433 = vadd.f32 %v1201, %v1303
      %v1434 = vadd.f32 %v1202, %v1306
      %v1435 = vadd.f32 %v1203, %v1311
      %v1436 = vadd.f32 %v1204, %v1314
      %v1437 = vadd.f32 %v1205, %v1319
      %v1438 = vadd.f32 %v1206, %v1322
      %v1439 = vadd.f32 %v1207, %v1327
      %v1440 = vadd.f32 %v1208, %v1330
      %v1441 = vadd.f32 %v1209, %v1335
      %v1442 = vadd.f32 %v1210, %v1338
      %v1443 = vadd.f32 %v1211, %v1343
      %v1444 = vadd.f32 %v1212, %v1346
      %v1445 = vadd.f32 %v1213, %v1351
      %v1446 = vadd.f32 %v1214, %v1354
      %v1447 = vadd.f32 %v1215, %v1359
      %v1448 = vadd.f32 %v1216, %v1362
      %v1449 = vadd.f32 %v1217, %v1367
      %v1450 = vadd.f32 %v1218, %v1370
      %v1451 = vadd.f32 %v1219, %v1375
      %v1452 = vadd.f32 %v1220, %v1378
      %v1453 = vadd.f32 %v1221, %v1383
      %v1454 = vadd.f32 %v1222, %v1386
      %v1455 = vadd.f32 %v1223, %v1391
      %v1456 = vadd.f32 %v1224, %v1394
      %v1457 = vadd.f32 %v1225, %v1399
      %v1458 = vadd.f32 %v1226, %v1402
      %v1459 = vadd.f32 %v1227, %v1407
      %v1460 = vadd.f32 %v1228, %v1410
      %v1461 = vadd.f32 %v1229, %v1415
      %v1462 = vadd.f32 %v1230, %v1418
      %v1463 = vadd.f32 %v1231, %v1423
      %v1464 = vadd.f32 %v1232, %v1426
      %s1465 = scalar_lea.vmem %s1, 8
      %v1466 = vld [vmem:[%s1465] sm:$0x3]
      %vm1467 = vsmask.f32 6400
      %v1468 = vrot.slane %v316, 1
      %v1469 = vrot.slane %v312, 2
      %v1470 = vor.u32 %v1468, %v1469
      %v1471 = vrot.slane %v324, 1
      %v1472 = vrot.slane %v320, 2
      %v1473 = vor.u32 %v1471, %v1472
      %v1474 = vsel %vm1467, %v1470, %v1473
      %v1475 = vrot.slane %v332, 1
      %v1476 = vrot.slane %v328, 2
      %v1477 = vor.u32 %v1475, %v1476
      %v1478 = vsel %vm1467, %v1473, %v1477
      %v1479 = vrot.slane %v340, 1
      %v1480 = vrot.slane %v336, 2
      %v1481 = vor.u32 %v1479, %v1480
      %v1482 = vsel %vm1467, %v1477, %v1481
      %v1483 = vrot.slane %v348, 1
      %v1484 = vrot.slane %v344, 2
      %v1485 = vor.u32 %v1483, %v1484
      %v1486 = vsel %vm1467, %v1481, %v1485
      %v1487 = vrot.slane %v356, 1
      %v1488 = vrot.slane %v352, 2
      %v1489 = vor.u32 %v1487, %v1488
      %v1490 = vsel %vm1467, %v1485, %v1489
      %v1491 = vrot.slane %v364, 1
      %v1492 = vrot.slane %v360, 2
      %v1493 = vor.u32 %v1491, %v1492
      %v1494 = vsel %vm1467, %v1489, %v1493
      %v1495 = vrot.slane %v372, 1
      %v1496 = vrot.slane %v368, 2
      %v1497 = vor.u32 %v1495, %v1496
      %v1498 = vsel %vm1467, %v1493, %v1497
      %v1499 = vrot.slane %v380, 1
      %v1500 = vrot.slane %v376, 2
      %v1501 = vor.u32 %v1499, %v1500
      %v1502 = vsel %vm1467, %v1497, %v1501
      %v1503 = vrot.slane %v388, 1
      %v1504 = vrot.slane %v384, 2
      %v1505 = vor.u32 %v1503, %v1504
      %v1506 = vsel %vm1467, %v1501, %v1505
      %v1507 = vrot.slane %v396, 1
      %v1508 = vrot.slane %v392, 2
      %v1509 = vor.u32 %v1507, %v1508
      %v1510 = vsel %vm1467, %v1505, %v1509
      %v1511 = vrot.slane %v404, 1
      %v1512 = vrot.slane %v400, 2
      %v1513 = vor.u32 %v1511, %v1512
      %v1514 = vsel %vm1467, %v1509, %v1513
      %v1515 = vrot.slane %v412, 1
      %v1516 = vrot.slane %v408, 2
      %v1517 = vor.u32 %v1515, %v1516
      %v1518 = vsel %vm1467, %v1513, %v1517
      %v1519 = vrot.slane %v420, 1
      %v1520 = vrot.slane %v416, 2
      %v1521 = vor.u32 %v1519, %v1520
      %v1522 = vsel %vm1467, %v1517, %v1521
      %v1523 = vrot.slane %v428, 1
      %v1524 = vrot.slane %v424, 2
      %v1525 = vor.u32 %v1523, %v1524
      %v1526 = vsel %vm1467, %v1521, %v1525
      %v1527 = vrot.slane %v436, 1
      %v1528 = vrot.slane %v432, 2
      %v1529 = vor.u32 %v1527, %v1528
      %v1530 = vsel %vm1467, %v1525, %v1529
      %v1531 = vrot.slane %v444, 1
      %v1532 = vrot.slane %v440, 2
      %v1533 = vor.u32 %v1531, %v1532
      %v1534 = vsel %vm1467, %v1529, %v1533
      %v1536 = vshrl.u32 %v1233, 16
      %v1538 = vrot.slane %v1536, 1
      %v1539 = vshll.u32 %v1233, 16
      %v1541 = vrot.slane %v1539, 2
      %v1542 = vor.u32 %v1538, %v1541
      %v1543 = vsel %vm1467, %v1533, %v1542
      %v1545 = vshrl.u32 %v1234, 16
      %v1547 = vrot.slane %v1545, 1
      %v1548 = vshll.u32 %v1234, 16
      %v1550 = vrot.slane %v1548, 2
      %v1551 = vor.u32 %v1547, %v1550
      %v1552 = vsel %vm1467, %v1542, %v1551
      %v1554 = vsel %vm452, %v1474, 0
      %v1557 = vsel %vm452, %v1478, 0
      %v1560 = vsel %vm452, %v1482, 0
      %v1563 = vsel %vm452, %v1486, 0
      %v1566 = vsel %vm452, %v1490, 0
      %v1569 = vsel %vm452, %v1494, 0
      %v1572 = vsel %vm452, %v1498, 0
      %v1575 = vsel %vm452, %v1502, 0
      %v1578 = vsel %vm452, %v1506, 0
      %v1581 = vsel %vm452, %v1510, 0
      %v1584 = vsel %vm452, %v1514, 0
      %v1587 = vsel %vm452, %v1518, 0
      %v1590 = vsel %vm452, %v1522, 0
      %v1593 = vsel %vm452, %v1526, 0
      %v1596 = vsel %vm452, %v1530, 0
      %v1599 = vsel %vm452, %v1534, 0
      %v1602 = vsel %vm452, %v1543, 0
      %v1605 = vsel %vm452, %v1552, 0
      %v1608 = vsel %vm507, %v1466, 0
      %1610 = vmatprep.subr.bf16.mxu0 0
      %1611 = vmatpush1.bf16.msra.mxu0 %v1608
      %1612 = vmatprep.subr.bf16.mxu0 0
      %1613 = vmatpush1.bf16.msra.mxu0 0
      %1614 = vmatprep.subr.bf16.mxu0 0
      %1615 = vmatpush1.bf16.msra.mxu0 0
      %1616 = vmatprep.subr.bf16.mxu0 0
      %1617 = vmatpush1.bf16.msra.mxu0 0
      %1618 = vmatprep.subr.bf16.mxu0 0
      %1619 = vmatpush1.bf16.msra.mxu0 0
      %1620 = vmatprep.subr.bf16.mxu0 0
      %1621 = vmatpush1.bf16.msra.mxu0 0
      %1622 = vmatprep.subr.bf16.mxu0 0
      %1623 = vmatpush1.bf16.msra.mxu0 0
      %1624 = vmatprep.subr.bf16.mxu0 0
      %1625 = vmatpush1.bf16.msra.mxu0 0
      %1626 = vmatprep.subr.bf16.mxu0 0
      %1627 = vmatpush1.bf16.msra.mxu0 0
      %1628 = vmatprep.subr.bf16.mxu0 0
      %1629 = vmatpush1.bf16.msra.mxu0 0
      %1630 = vmatprep.subr.bf16.mxu0 0
      %1631 = vmatpush1.bf16.msra.mxu0 0
      %1632 = vmatprep.subr.bf16.mxu0 0
      %1633 = vmatpush1.bf16.msra.mxu0 0
      %1634 = vmatprep.subr.bf16.mxu0 0
      %1635 = vmatpush1.bf16.msra.mxu0 0
      %1636 = vmatprep.subr.bf16.mxu0 0
      %1637 = vmatpush1.bf16.msra.mxu0 0
      %1638 = vmatprep.subr.bf16.mxu0 0
      %1639 = vmatpush1.bf16.msra.mxu0 0
      %1640 = vmatprep.subr.bf16.mxu0 0
      %1641 = vmatpush1.bf16.msra.mxu0 0
      %1642 = vmatprep.mubr.bf16.mxu0 0
      %1643 = vmatmul.mubr.bf16.gmra.mrb[0].mxu0 %v1554
      %v1644 = vpop.f32.mrb[0].mxu0
      %v1645 = vadd.f32 0.0, %v1644
      %v1646 = vpop.f32.mrb[0].mxu0
      %v1647 = vpop.f32.mrb[0].mxu0
      %v1648 = vadd.f32 0.0, %v1647
      %v1649 = vpop.f32.mrb[0].mxu0
      %1650 = vmatprep.mubr.bf16.mxu0 0
      %1651 = vmatmul.mubr.bf16.gmra.mrb[0].mxu0 %v1557
      %v1652 = vpop.f32.mrb[0].mxu0
      %v1653 = vadd.f32 0.0, %v1652
      %v1654 = vpop.f32.mrb[0].mxu0
      %v1655 = vpop.f32.mrb[0].mxu0
      %v1656 = vadd.f32 0.0, %v1655
      %v1657 = vpop.f32.mrb[0].mxu0
      %1658 = vmatprep.mubr.bf16.mxu0 0
      %1659 = vmatmul.mubr.bf16.gmra.mrb[0].mxu0 %v1560
      %v1660 = vpop.f32.mrb[0].mxu0
      %v1661 = vadd.f32 0.0, %v1660
      %v1662 = vpop.f32.mrb[0].mxu0
      %v1663 = vpop.f32.mrb[0].mxu0
      %v1664 = vadd.f32 0.0, %v1663
      %v1665 = vpop.f32.mrb[0].mxu0
      %1666 = vmatprep.mubr.bf16.mxu0 0
      %1667 = vmatmul.mubr.bf16.gmra.mrb[0].mxu0 %v1563
      %v1668 = vpop.f32.mrb[0].mxu0
      %v1669 = vadd.f32 0.0, %v1668
      %v1670 = vpop.f32.mrb[0].mxu0
      %v1671 = vpop.f32.mrb[0].mxu0
      %v1672 = vadd.f32 0.0, %v1671
      %v1673 = vpop.f32.mrb[0].mxu0
      %1674 = vmatprep.mubr.bf16.mxu0 0
      %1675 = vmatmul.mubr.bf16.gmra.mrb[0].mxu0 %v1566
      %v1676 = vpop.f32.mrb[0].mxu0
      %v1677 = vadd.f32 0.0, %v1676
      %v1678 = vpop.f32.mrb[0].mxu0
      %v1679 = vpop.f32.mrb[0].mxu0
      %v1680 = vadd.f32 0.0, %v1679
      %v1681 = vpop.f32.mrb[0].mxu0
      %1682 = vmatprep.mubr.bf16.mxu0 0
      %1683 = vmatmul.mubr.bf16.gmra.mrb[0].mxu0 %v1569
      %v1684 = vpop.f32.mrb[0].mxu0
      %v1685 = vadd.f32 0.0, %v1684
      %v1686 = vpop.f32.mrb[0].mxu0
      %v1687 = vpop.f32.mrb[0].mxu0
      %v1688 = vadd.f32 0.0, %v1687
      %v1689 = vpop.f32.mrb[0].mxu0
      %1690 = vmatprep.mubr.bf16.mxu0 0
      %1691 = vmatmul.mubr.bf16.gmra.mrb[0].mxu0 %v1572
      %v1692 = vpop.f32.mrb[0].mxu0
      %v1693 = vadd.f32 0.0, %v1692
      %v1694 = vpop.f32.mrb[0].mxu0
      %v1695 = vpop.f32.mrb[0].mxu0
      %v1696 = vadd.f32 0.0, %v1695
      %v1697 = vpop.f32.mrb[0].mxu0
      %1698 = vmatprep.mubr.bf16.mxu0 0
      %1699 = vmatmul.mubr.bf16.gmra.mrb[0].mxu0 %v1575
      %v1700 = vpop.f32.mrb[0].mxu0
      %v1701 = vadd.f32 0.0, %v1700
      %v1702 = vpop.f32.mrb[0].mxu0
      %v1703 = vpop.f32.mrb[0].mxu0
      %v1704 = vadd.f32 0.0, %v1703
      %v1705 = vpop.f32.mrb[0].mxu0
      %1706 = vmatprep.mubr.bf16.mxu0 0
      %1707 = vmatmul.mubr.bf16.gmra.mrb[0].mxu0 %v1578
      %v1708 = vpop.f32.mrb[0].mxu0
      %v1709 = vadd.f32 0.0, %v1708
      %v1710 = vpop.f32.mrb[0].mxu0
      %v1711 = vpop.f32.mrb[0].mxu0
      %v1712 = vadd.f32 0.0, %v1711
      %v1713 = vpop.f32.mrb[0].mxu0
      %1714 = vmatprep.mubr.bf16.mxu0 0
      %1715 = vmatmul.mubr.bf16.gmra.mrb[0].mxu0 %v1581
      %v1716 = vpop.f32.mrb[0].mxu0
      %v1717 = vadd.f32 0.0, %v1716
      %v1718 = vpop.f32.mrb[0].mxu0
      %v1719 = vpop.f32.mrb[0].mxu0
      %v1720 = vadd.f32 0.0, %v1719
      %v1721 = vpop.f32.mrb[0].mxu0
      %1722 = vmatprep.mubr.bf16.mxu0 0
      %1723 = vmatmul.mubr.bf16.gmra.mrb[0].mxu0 %v1584
      %v1724 = vpop.f32.mrb[0].mxu0
      %v1725 = vadd.f32 0.0, %v1724
      %v1726 = vpop.f32.mrb[0].mxu0
      %v1727 = vpop.f32.mrb[0].mxu0
      %v1728 = vadd.f32 0.0, %v1727
      %v1729 = vpop.f32.mrb[0].mxu0
      %1730 = vmatprep.mubr.bf16.mxu0 0
      %1731 = vmatmul.mubr.bf16.gmra.mrb[0].mxu0 %v1587
      %v1732 = vpop.f32.mrb[0].mxu0
      %v1733 = vadd.f32 0.0, %v1732
      %v1734 = vpop.f32.mrb[0].mxu0
      %v1735 = vpop.f32.mrb[0].mxu0
      %v1736 = vadd.f32 0.0, %v1735
      %v1737 = vpop.f32.mrb[0].mxu0
      %1738 = vmatprep.mubr.bf16.mxu0 0
      %1739 = vmatmul.mubr.bf16.gmra.mrb[0].mxu0 %v1590
      %v1740 = vpop.f32.mrb[0].mxu0
      %v1741 = vadd.f32 0.0, %v1740
      %v1742 = vpop.f32.mrb[0].mxu0
      %v1743 = vpop.f32.mrb[0].mxu0
      %v1744 = vadd.f32 0.0, %v1743
      %v1745 = vpop.f32.mrb[0].mxu0
      %1746 = vmatprep.mubr.bf16.mxu0 0
      %1747 = vmatmul.mubr.bf16.gmra.mrb[0].mxu0 %v1593
      %v1748 = vpop.f32.mrb[0].mxu0
      %v1749 = vadd.f32 0.0, %v1748
      %v1750 = vpop.f32.mrb[0].mxu0
      %v1751 = vpop.f32.mrb[0].mxu0
      %v1752 = vadd.f32 0.0, %v1751
      %v1753 = vpop.f32.mrb[0].mxu0
      %1754 = vmatprep.mubr.bf16.mxu0 0
      %1755 = vmatmul.mubr.bf16.gmra.mrb[0].mxu0 %v1596
      %v1756 = vpop.f32.mrb[0].mxu0
      %v1757 = vadd.f32 0.0, %v1756
      %v1758 = vpop.f32.mrb[0].mxu0
      %v1759 = vpop.f32.mrb[0].mxu0
      %v1760 = vadd.f32 0.0, %v1759
      %v1761 = vpop.f32.mrb[0].mxu0
      %1762 = vmatprep.mubr.bf16.mxu0 0
      %1763 = vmatmul.mubr.bf16.gmra.mrb[0].mxu0 %v1599
      %v1764 = vpop.f32.mrb[0].mxu0
      %v1765 = vadd.f32 0.0, %v1764
      %v1766 = vpop.f32.mrb[0].mxu0
      %v1767 = vpop.f32.mrb[0].mxu0
      %v1768 = vadd.f32 0.0, %v1767
      %v1769 = vpop.f32.mrb[0].mxu0
      %1770 = vmatprep.mubr.bf16.mxu0 0
      %1771 = vmatmul.mubr.bf16.gmra.mrb[0].mxu0 %v1602
      %v1772 = vpop.f32.mrb[0].mxu0
      %v1773 = vadd.f32 0.0, %v1772
      %v1774 = vpop.f32.mrb[0].mxu0
      %v1775 = vpop.f32.mrb[0].mxu0
      %v1776 = vadd.f32 0.0, %v1775
      %v1777 = vpop.f32.mrb[0].mxu0
      %1778 = vmatprep.mubr.bf16.mxu0 0
      %1779 = vmatmul.mubr.bf16.gmra.mrb[0].mxu0 %v1605
      %v1780 = vpop.f32.mrb[0].mxu0
      %v1781 = vadd.f32 0.0, %v1780
      %v1782 = vpop.f32.mrb[0].mxu0
      %v1783 = vpop.f32.mrb[0].mxu0
      %v1784 = vadd.f32 0.0, %v1783
      %v1785 = vpop.f32.mrb[0].mxu0
      %1786 = vdwg.mxu0
      %v1787 = vadd.f32 %v1429, %v1645
      %v1788 = vadd.f32 %v1430, %v1648
      %v1789 = vadd.f32 %v1431, %v1653
      %v1790 = vadd.f32 %v1432, %v1656
      %v1791 = vadd.f32 %v1433, %v1661
      %v1792 = vadd.f32 %v1434, %v1664
      %v1793 = vadd.f32 %v1435, %v1669
      %v1794 = vadd.f32 %v1436, %v1672
      %v1795 = vadd.f32 %v1437, %v1677
      %v1796 = vadd.f32 %v1438, %v1680
      %v1797 = vadd.f32 %v1439, %v1685
      %v1798 = vadd.f32 %v1440, %v1688
      %v1799 = vadd.f32 %v1441, %v1693
      %v1800 = vadd.f32 %v1442, %v1696
      %v1801 = vadd.f32 %v1443, %v1701
      %v1802 = vadd.f32 %v1444, %v1704
      %v1803 = vadd.f32 %v1445, %v1709
      %v1804 = vadd.f32 %v1446, %v1712
      %v1805 = vadd.f32 %v1447, %v1717
      %v1806 = vadd.f32 %v1448, %v1720
      %v1807 = vadd.f32 %v1449, %v1725
      %v1808 = vadd.f32 %v1450, %v1728
      %v1809 = vadd.f32 %v1451, %v1733
      %v1810 = vadd.f32 %v1452, %v1736
      %v1811 = vadd.f32 %v1453, %v1741
      %v1812 = vadd.f32 %v1454, %v1744
      %v1813 = vadd.f32 %v1455, %v1749
      %v1814 = vadd.f32 %v1456, %v1752
      %v1815 = vadd.f32 %v1457, %v1757
      %v1816 = vadd.f32 %v1458, %v1760
      %v1817 = vadd.f32 %v1459, %v1765
      %v1818 = vadd.f32 %v1460, %v1768
      %v1819 = vadd.f32 %v1461, %v1773
      %v1820 = vadd.f32 %v1462, %v1776
      %v1821 = vadd.f32 %v1463, %v1781
      %v1822 = vadd.f32 %v1464, %v1784
      %s1823 = scalar_lea.vmem %s1, 10
      %v1824 = vld [vmem:[%s1823] sm:$0x3]
      %vm1825 = vcmask 1045504
      %v1826 = vrot.slane %v282, 2
      %v1827 = vrot.slane %v283, 2
      %v1828 = vsel %vm1825, %v1826, %v1827
      %v1829 = vrot.slane %v284, 2
      %v1830 = vsel %vm1825, %v1827, %v1829
      %v1831 = vrot.slane %v285, 2
      %v1832 = vsel %vm1825, %v1829, %v1831
      %v1833 = vrot.slane %v286, 2
      %v1834 = vsel %vm1825, %v1831, %v1833
      %v1835 = vrot.slane %v287, 2
      %v1836 = vsel %vm1825, %v1833, %v1835
      %v1837 = vrot.slane %v288, 2
      %v1838 = vsel %vm1825, %v1835, %v1837
      %v1839 = vrot.slane %v289, 2
      %v1840 = vsel %vm1825, %v1837, %v1839
      %v1841 = vrot.slane %v290, 2
      %v1842 = vsel %vm1825, %v1839, %v1841
      %v1843 = vrot.slane %v291, 2
      %v1844 = vsel %vm1825, %v1841, %v1843
      %v1845 = vrot.slane %v292, 2
      %v1846 = vsel %vm1825, %v1843, %v1845
      %v1847 = vrot.slane %v293, 2
      %v1848 = vsel %vm1825, %v1845, %v1847
      %v1849 = vrot.slane %v294, 2
      %v1850 = vsel %vm1825, %v1847, %v1849
      %v1851 = vrot.slane %v295, 2
      %v1852 = vsel %vm1825, %v1849, %v1851
      %v1853 = vrot.slane %v296, 2
      %v1854 = vsel %vm1825, %v1851, %v1853
      %v1855 = vrot.slane %v297, 2
      %v1856 = vsel %vm1825, %v1853, %v1855
      %v1857 = vrot.slane %v298, 2
      %v1858 = vsel %vm1825, %v1855, %v1857
      %v1859 = vrot.slane %v1233, 2
      %v1860 = vsel %vm1825, %v1857, %v1859
      %v1861 = vrot.slane %v1234, 2
      %v1862 = vsel %vm1825, %v1859, %v1861
      %v1864 = vsel %vm452, %v1828, 0
      %v1867 = vsel %vm452, %v1830, 0
      %v1870 = vsel %vm452, %v1832, 0
      %v1873 = vsel %vm452, %v1834, 0
      %v1876 = vsel %vm452, %v1836, 0
      %v1879 = vsel %vm452, %v1838, 0
      %v1882 = vsel %vm452, %v1840, 0
      %v1885 = vsel %vm452, %v1842, 0
      %v1888 = vsel %vm452, %v1844, 0
      %v1891 = vsel %vm452, %v1846, 0
      %v1894 = vsel %vm452, %v1848, 0
      %v1897 = vsel %vm452, %v1850, 0
      %v1900 = vsel %vm452, %v1852, 0
      %v1903 = vsel %vm452, %v1854, 0
      %v1906 = vsel %vm452, %v1856, 0
      %v1909 = vsel %vm452, %v1858, 0
      %v1912 = vsel %vm452, %v1860, 0
      %v1915 = vsel %vm452, %v1862, 0
      %v1918 = vsel %vm507, %v1824, 0
      %1920 = vmatprep.subr.bf16.mxu0 0
      %1921 = vmatpush1.bf16.msra.mxu0 %v1918
      %1922 = vmatprep.subr.bf16.mxu0 0
      %1923 = vmatpush1.bf16.msra.mxu0 0
      %1924 = vmatprep.subr.bf16.mxu0 0
      %1925 = vmatpush1.bf16.msra.mxu0 0
      %1926 = vmatprep.subr.bf16.mxu0 0
      %1927 = vmatpush1.bf16.msra.mxu0 0
      %1928 = vmatprep.subr.bf16.mxu0 0
      %1929 = vmatpush1.bf16.msra.mxu0 0
      %1930 = vmatprep.subr.bf16.mxu0 0
      %1931 = vmatpush1.bf16.msra.mxu0 0
      %1932 = vmatprep.subr.bf16.mxu0 0
      %1933 = vmatpush1.bf16.msra.mxu0 0
      %1934 = vmatprep.subr.bf16.mxu0 0
      %1935 = vmatpush1.bf16.msra.mxu0 0
      %1936 = vmatprep.subr.bf16.mxu0 0
      %1937 = vmatpush1.bf16.msra.mxu0 0
      %1938 = vmatprep.subr.bf16.mxu0 0
      %1939 = vmatpush1.bf16.msra.mxu0 0
      %1940 = vmatprep.subr.bf16.mxu0 0
      %1941 = vmatpush1.bf16.msra.mxu0 0
      %1942 = vmatprep.subr.bf16.mxu0 0
      %1943 = vmatpush1.bf16.msra.mxu0 0
      %1944 = vmatprep.subr.bf16.mxu0 0
      %1945 = vmatpush1.bf16.msra.mxu0 0
      %1946 = vmatprep.subr.bf16.mxu0 0
      %1947 = vmatpush1.bf16.msra.mxu0 0
      %1948 = vmatprep.subr.bf16.mxu0 0
      %1949 = vmatpush1.bf16.msra.mxu0 0
      %1950 = vmatprep.subr.bf16.mxu0 0
      %1951 = vmatpush1.bf16.msra.mxu0 0
      %1952 = vmatprep.mubr.bf16.mxu0 0
      %1953 = vmatmul.mubr.bf16.gmra.mrb[0].mxu0 %v1864
      %v1954 = vpop.f32.mrb[0].mxu0
      %v1955 = vadd.f32 0.0, %v1954
      %v1956 = vpop.f32.mrb[0].mxu0
      %v1957 = vpop.f32.mrb[0].mxu0
      %v1958 = vadd.f32 0.0, %v1957
      %v1959 = vpop.f32.mrb[0].mxu0
      %1960 = vmatprep.mubr.bf16.mxu0 0
      %1961 = vmatmul.mubr.bf16.gmra.mrb[0].mxu0 %v1867
      %v1962 = vpop.f32.mrb[0].mxu0
      %v1963 = vadd.f32 0.0, %v1962
      %v1964 = vpop.f32.mrb[0].mxu0
      %v1965 = vpop.f32.mrb[0].mxu0
      %v1966 = vadd.f32 0.0, %v1965
      %v1967 = vpop.f32.mrb[0].mxu0
      %1968 = vmatprep.mubr.bf16.mxu0 0
      %1969 = vmatmul.mubr.bf16.gmra.mrb[0].mxu0 %v1870
      %v1970 = vpop.f32.mrb[0].mxu0
      %v1971 = vadd.f32 0.0, %v1970
      %v1972 = vpop.f32.mrb[0].mxu0
      %v1973 = vpop.f32.mrb[0].mxu0
      %v1974 = vadd.f32 0.0, %v1973
      %v1975 = vpop.f32.mrb[0].mxu0
      %1976 = vmatprep.mubr.bf16.mxu0 0
      %1977 = vmatmul.mubr.bf16.gmra.mrb[0].mxu0 %v1873
      %v1978 = vpop.f32.mrb[0].mxu0
      %v1979 = vadd.f32 0.0, %v1978
      %v1980 = vpop.f32.mrb[0].mxu0
      %v1981 = vpop.f32.mrb[0].mxu0
      %v1982 = vadd.f32 0.0, %v1981
      %v1983 = vpop.f32.mrb[0].mxu0
      %1984 = vmatprep.mubr.bf16.mxu0 0
      %1985 = vmatmul.mubr.bf16.gmra.mrb[0].mxu0 %v1876
      %v1986 = vpop.f32.mrb[0].mxu0
      %v1987 = vadd.f32 0.0, %v1986
      %v1988 = vpop.f32.mrb[0].mxu0
      %v1989 = vpop.f32.mrb[0].mxu0
      %v1990 = vadd.f32 0.0, %v1989
      %v1991 = vpop.f32.mrb[0].mxu0
      %1992 = vmatprep.mubr.bf16.mxu0 0
      %1993 = vmatmul.mubr.bf16.gmra.mrb[0].mxu0 %v1879
      %v1994 = vpop.f32.mrb[0].mxu0
      %v1995 = vadd.f32 0.0, %v1994
      %v1996 = vpop.f32.mrb[0].mxu0
      %v1997 = vpop.f32.mrb[0].mxu0
      %v1998 = vadd.f32 0.0, %v1997
      %v1999 = vpop.f32.mrb[0].mxu0
      %2000 = vmatprep.mubr.bf16.mxu0 0
      %2001 = vmatmul.mubr.bf16.gmra.mrb[0].mxu0 %v1882
      %v2002 = vpop.f32.mrb[0].mxu0
      %v2003 = vadd.f32 0.0, %v2002
      %v2004 = vpop.f32.mrb[0].mxu0
      %v2005 = vpop.f32.mrb[0].mxu0
      %v2006 = vadd.f32 0.0, %v2005
      %v2007 = vpop.f32.mrb[0].mxu0
      %2008 = vmatprep.mubr.bf16.mxu0 0
      %2009 = vmatmul.mubr.bf16.gmra.mrb[0].mxu0 %v1885
      %v2010 = vpop.f32.mrb[0].mxu0
      %v2011 = vadd.f32 0.0, %v2010
      %v2012 = vpop.f32.mrb[0].mxu0
      %v2013 = vpop.f32.mrb[0].mxu0
      %v2014 = vadd.f32 0.0, %v2013
      %v2015 = vpop.f32.mrb[0].mxu0
      %2016 = vmatprep.mubr.bf16.mxu0 0
      %2017 = vmatmul.mubr.bf16.gmra.mrb[0].mxu0 %v1888
      %v2018 = vpop.f32.mrb[0].mxu0
      %v2019 = vadd.f32 0.0, %v2018
      %v2020 = vpop.f32.mrb[0].mxu0
      %v2021 = vpop.f32.mrb[0].mxu0
      %v2022 = vadd.f32 0.0, %v2021
      %v2023 = vpop.f32.mrb[0].mxu0
      %2024 = vmatprep.mubr.bf16.mxu0 0
      %2025 = vmatmul.mubr.bf16.gmra.mrb[0].mxu0 %v1891
      %v2026 = vpop.f32.mrb[0].mxu0
      %v2027 = vadd.f32 0.0, %v2026
      %v2028 = vpop.f32.mrb[0].mxu0
      %v2029 = vpop.f32.mrb[0].mxu0
      %v2030 = vadd.f32 0.0, %v2029
      %v2031 = vpop.f32.mrb[0].mxu0
      %2032 = vmatprep.mubr.bf16.mxu0 0
      %2033 = vmatmul.mubr.bf16.gmra.mrb[0].mxu0 %v1894
      %v2034 = vpop.f32.mrb[0].mxu0
      %v2035 = vadd.f32 0.0, %v2034
      %v2036 = vpop.f32.mrb[0].mxu0
      %v2037 = vpop.f32.mrb[0].mxu0
      %v2038 = vadd.f32 0.0, %v2037
      %v2039 = vpop.f32.mrb[0].mxu0
      %2040 = vmatprep.mubr.bf16.mxu0 0
      %2041 = vmatmul.mubr.bf16.gmra.mrb[0].mxu0 %v1897
      %v2042 = vpop.f32.mrb[0].mxu0
      %v2043 = vadd.f32 0.0, %v2042
      %v2044 = vpop.f32.mrb[0].mxu0
      %v2045 = vpop.f32.mrb[0].mxu0
      %v2046 = vadd.f32 0.0, %v2045
      %v2047 = vpop.f32.mrb[0].mxu0
      %2048 = vmatprep.mubr.bf16.mxu0 0
      %2049 = vmatmul.mubr.bf16.gmra.mrb[0].mxu0 %v1900
      %v2050 = vpop.f32.mrb[0].mxu0
      %v2051 = vadd.f32 0.0, %v2050
      %v2052 = vpop.f32.mrb[0].mxu0
      %v2053 = vpop.f32.mrb[0].mxu0
      %v2054 = vadd.f32 0.0, %v2053
      %v2055 = vpop.f32.mrb[0].mxu0
      %2056 = vmatprep.mubr.bf16.mxu0 0
      %2057 = vmatmul.mubr.bf16.gmra.mrb[0].mxu0 %v1903
      %v2058 = vpop.f32.mrb[0].mxu0
      %v2059 = vadd.f32 0.0, %v2058
      %v2060 = vpop.f32.mrb[0].mxu0
      %v2061 = vpop.f32.mrb[0].mxu0
      %v2062 = vadd.f32 0.0, %v2061
      %v2063 = vpop.f32.mrb[0].mxu0
      %2064 = vmatprep.mubr.bf16.mxu0 0
      %2065 = vmatmul.mubr.bf16.gmra.mrb[0].mxu0 %v1906
      %v2066 = vpop.f32.mrb[0].mxu0
      %v2067 = vadd.f32 0.0, %v2066
      %v2068 = vpop.f32.mrb[0].mxu0
      %v2069 = vpop.f32.mrb[0].mxu0
      %v2070 = vadd.f32 0.0, %v2069
      %v2071 = vpop.f32.mrb[0].mxu0
      %2072 = vmatprep.mubr.bf16.mxu0 0
      %2073 = vmatmul.mubr.bf16.gmra.mrb[0].mxu0 %v1909
      %v2074 = vpop.f32.mrb[0].mxu0
      %v2075 = vadd.f32 0.0, %v2074
      %v2076 = vpop.f32.mrb[0].mxu0
      %v2077 = vpop.f32.mrb[0].mxu0
      %v2078 = vadd.f32 0.0, %v2077
      %v2079 = vpop.f32.mrb[0].mxu0
      %2080 = vmatprep.mubr.bf16.mxu0 0
      %2081 = vmatmul.mubr.bf16.gmra.mrb[0].mxu0 %v1912
      %v2082 = vpop.f32.mrb[0].mxu0
      %v2083 = vadd.f32 0.0, %v2082
      %v2084 = vpop.f32.mrb[0].mxu0
      %v2085 = vpop.f32.mrb[0].mxu0
      %v2086 = vadd.f32 0.0, %v2085
      %v2087 = vpop.f32.mrb[0].mxu0
      %2088 = vmatprep.mubr.bf16.mxu0 0
      %2089 = vmatmul.mubr.bf16.gmra.mrb[0].mxu0 %v1915
      %v2090 = vpop.f32.mrb[0].mxu0
      %v2091 = vadd.f32 0.0, %v2090
      %v2092 = vpop.f32.mrb[0].mxu0
      %v2093 = vpop.f32.mrb[0].mxu0
      %v2094 = vadd.f32 0.0, %v2093
      %v2095 = vpop.f32.mrb[0].mxu0
      %2096 = vdwg.mxu0
      %v2097 = vadd.f32 %v1787, %v1955
      %v2098 = vadd.f32 %v1788, %v1958
      %v2099 = vadd.f32 %v1789, %v1963
      %v2100 = vadd.f32 %v1790, %v1966
      %v2101 = vadd.f32 %v1791, %v1971
      %v2102 = vadd.f32 %v1792, %v1974
      %v2103 = vadd.f32 %v1793, %v1979
      %v2104 = vadd.f32 %v1794, %v1982
      %v2105 = vadd.f32 %v1795, %v1987
      %v2106 = vadd.f32 %v1796, %v1990
      %v2107 = vadd.f32 %v1797, %v1995
      %v2108 = vadd.f32 %v1798, %v1998
      %v2109 = vadd.f32 %v1799, %v2003
      %v2110 = vadd.f32 %v1800, %v2006
      %v2111 = vadd.f32 %v1801, %v2011
      %v2112 = vadd.f32 %v1802, %v2014
      %v2113 = vadd.f32 %v1803, %v2019
      %v2114 = vadd.f32 %v1804, %v2022
      %v2115 = vadd.f32 %v1805, %v2027
      %v2116 = vadd.f32 %v1806, %v2030
      %v2117 = vadd.f32 %v1807, %v2035
      %v2118 = vadd.f32 %v1808, %v2038
      %v2119 = vadd.f32 %v1809, %v2043
      %v2120 = vadd.f32 %v1810, %v2046
      %v2121 = vadd.f32 %v1811, %v2051
      %v2122 = vadd.f32 %v1812, %v2054
      %v2123 = vadd.f32 %v1813, %v2059
      %v2124 = vadd.f32 %v1814, %v2062
      %v2125 = vadd.f32 %v1815, %v2067
      %v2126 = vadd.f32 %v1816, %v2070
      %v2127 = vadd.f32 %v1817, %v2075
      %v2128 = vadd.f32 %v1818, %v2078
      %v2129 = vadd.f32 %v1819, %v2083
      %v2130 = vadd.f32 %v1820, %v2086
      %v2131 = vadd.f32 %v1821, %v2091
      %v2132 = vadd.f32 %v1822, %v2094
      %v2133 = vpack.c.bf16 %v279, %v278
      %v2134 = vpack.c.bf16 %v280, %v280
      %s2135 = scalar_lea.vmem %s1, 12
      %v2136 = vld [vmem:[%s2135] sm:$0x3]
      %v2139 = vrot.slane %v2133, 2
      %v2140 = vsel %vm1825, %v1859, %v2139
      %v2141 = vrot.slane %v2134, 2
      %v2142 = vsel %vm1825, %v2139, %v2141
      %v2144 = vsel %vm452, %v2140, 0
      %v2147 = vsel %vm452, %v2142, 0
      %v2150 = vsel %vm507, %v2136, 0
      %2152 = vmatprep.subr.bf16.mxu0 0
      %2153 = vmatpush1.bf16.msra.mxu0 %v2150
      %2154 = vmatprep.subr.bf16.mxu0 0
      %2155 = vmatpush1.bf16.msra.mxu0 0
      %2156 = vmatprep.subr.bf16.mxu0 0
      %2157 = vmatpush1.bf16.msra.mxu0 0
      %2158 = vmatprep.subr.bf16.mxu0 0
      %2159 = vmatpush1.bf16.msra.mxu0 0
      %2160 = vmatprep.subr.bf16.mxu0 0
      %2161 = vmatpush1.bf16.msra.mxu0 0
      %2162 = vmatprep.subr.bf16.mxu0 0
      %2163 = vmatpush1.bf16.msra.mxu0 0
      %2164 = vmatprep.subr.bf16.mxu0 0
      %2165 = vmatpush1.bf16.msra.mxu0 0
      %2166 = vmatprep.subr.bf16.mxu0 0
      %2167 = vmatpush1.bf16.msra.mxu0 0
      %2168 = vmatprep.subr.bf16.mxu0 0
      %2169 = vmatpush1.bf16.msra.mxu0 0
      %2170 = vmatprep.subr.bf16.mxu0 0
      %2171 = vmatpush1.bf16.msra.mxu0 0
      %2172 = vmatprep.subr.bf16.mxu0 0
      %2173 = vmatpush1.bf16.msra.mxu0 0
      %2174 = vmatprep.subr.bf16.mxu0 0
      %2175 = vmatpush1.bf16.msra.mxu0 0
      %2176 = vmatprep.subr.bf16.mxu0 0
      %2177 = vmatpush1.bf16.msra.mxu0 0
      %2178 = vmatprep.subr.bf16.mxu0 0
      %2179 = vmatpush1.bf16.msra.mxu0 0
      %2180 = vmatprep.subr.bf16.mxu0 0
      %2181 = vmatpush1.bf16.msra.mxu0 0
      %2182 = vmatprep.subr.bf16.mxu0 0
      %2183 = vmatpush1.bf16.msra.mxu0 0
      %2184 = vmatprep.mubr.bf16.mxu0 0
      %2185 = vmatmul.mubr.bf16.gmra.mrb[0].mxu0 %v1867
      %v2186 = vpop.f32.mrb[0].mxu0
      %v2187 = vadd.f32 0.0, %v2186
      %v2188 = vpop.f32.mrb[0].mxu0
      %v2189 = vpop.f32.mrb[0].mxu0
      %v2190 = vadd.f32 0.0, %v2189
      %v2191 = vpop.f32.mrb[0].mxu0
      %2192 = vmatprep.mubr.bf16.mxu0 0
      %2193 = vmatmul.mubr.bf16.gmra.mrb[0].mxu0 %v1870
      %v2194 = vpop.f32.mrb[0].mxu0
      %v2195 = vadd.f32 0.0, %v2194
      %v2196 = vpop.f32.mrb[0].mxu0
      %v2197 = vpop.f32.mrb[0].mxu0
      %v2198 = vadd.f32 0.0, %v2197
      %v2199 = vpop.f32.mrb[0].mxu0
      %2200 = vmatprep.mubr.bf16.mxu0 0
      %2201 = vmatmul.mubr.bf16.gmra.mrb[0].mxu0 %v1873
      %v2202 = vpop.f32.mrb[0].mxu0
      %v2203 = vadd.f32 0.0, %v2202
      %v2204 = vpop.f32.mrb[0].mxu0
      %v2205 = vpop.f32.mrb[0].mxu0
      %v2206 = vadd.f32 0.0, %v2205
      %v2207 = vpop.f32.mrb[0].mxu0
      %2208 = vmatprep.mubr.bf16.mxu0 0
      %2209 = vmatmul.mubr.bf16.gmra.mrb[0].mxu0 %v1876
      %v2210 = vpop.f32.mrb[0].mxu0
      %v2211 = vadd.f32 0.0, %v2210
      %v2212 = vpop.f32.mrb[0].mxu0
      %v2213 = vpop.f32.mrb[0].mxu0
      %v2214 = vadd.f32 0.0, %v2213
      %v2215 = vpop.f32.mrb[0].mxu0
      %2216 = vmatprep.mubr.bf16.mxu0 0
      %2217 = vmatmul.mubr.bf16.gmra.mrb[0].mxu0 %v1879
      %v2218 = vpop.f32.mrb[0].mxu0
      %v2219 = vadd.f32 0.0, %v2218
      %v2220 = vpop.f32.mrb[0].mxu0
      %v2221 = vpop.f32.mrb[0].mxu0
      %v2222 = vadd.f32 0.0, %v2221
      %v2223 = vpop.f32.mrb[0].mxu0
      %2224 = vmatprep.mubr.bf16.mxu0 0
      %2225 = vmatmul.mubr.bf16.gmra.mrb[0].mxu0 %v1882
      %v2226 = vpop.f32.mrb[0].mxu0
      %v2227 = vadd.f32 0.0, %v2226
      %v2228 = vpop.f32.mrb[0].mxu0
      %v2229 = vpop.f32.mrb[0].mxu0
      %v2230 = vadd.f32 0.0, %v2229
      %v2231 = vpop.f32.mrb[0].mxu0
      %2232 = vmatprep.mubr.bf16.mxu0 0
      %2233 = vmatmul.mubr.bf16.gmra.mrb[0].mxu0 %v1885
      %v2234 = vpop.f32.mrb[0].mxu0
      %v2235 = vadd.f32 0.0, %v2234
      %v2236 = vpop.f32.mrb[0].mxu0
      %v2237 = vpop.f32.mrb[0].mxu0
      %v2238 = vadd.f32 0.0, %v2237
      %v2239 = vpop.f32.mrb[0].mxu0
      %2240 = vmatprep.mubr.bf16.mxu0 0
      %2241 = vmatmul.mubr.bf16.gmra.mrb[0].mxu0 %v1888
      %v2242 = vpop.f32.mrb[0].mxu0
      %v2243 = vadd.f32 0.0, %v2242
      %v2244 = vpop.f32.mrb[0].mxu0
      %v2245 = vpop.f32.mrb[0].mxu0
      %v2246 = vadd.f32 0.0, %v2245
      %v2247 = vpop.f32.mrb[0].mxu0
      %2248 = vmatprep.mubr.bf16.mxu0 0
      %2249 = vmatmul.mubr.bf16.gmra.mrb[0].mxu0 %v1891
      %v2250 = vpop.f32.mrb[0].mxu0
      %v2251 = vadd.f32 0.0, %v2250
      %v2252 = vpop.f32.mrb[0].mxu0
      %v2253 = vpop.f32.mrb[0].mxu0
      %v2254 = vadd.f32 0.0, %v2253
      %v2255 = vpop.f32.mrb[0].mxu0
      %2256 = vmatprep.mubr.bf16.mxu0 0
      %2257 = vmatmul.mubr.bf16.gmra.mrb[0].mxu0 %v1894
      %v2258 = vpop.f32.mrb[0].mxu0
      %v2259 = vadd.f32 0.0, %v2258
      %v2260 = vpop.f32.mrb[0].mxu0
      %v2261 = vpop.f32.mrb[0].mxu0
      %v2262 = vadd.f32 0.0, %v2261
      %v2263 = vpop.f32.mrb[0].mxu0
      %2264 = vmatprep.mubr.bf16.mxu0 0
      %2265 = vmatmul.mubr.bf16.gmra.mrb[0].mxu0 %v1897
      %v2266 = vpop.f32.mrb[0].mxu0
      %v2267 = vadd.f32 0.0, %v2266
      %v2268 = vpop.f32.mrb[0].mxu0
      %v2269 = vpop.f32.mrb[0].mxu0
      %v2270 = vadd.f32 0.0, %v2269
      %v2271 = vpop.f32.mrb[0].mxu0
      %2272 = vmatprep.mubr.bf16.mxu0 0
      %2273 = vmatmul.mubr.bf16.gmra.mrb[0].mxu0 %v1900
      %v2274 = vpop.f32.mrb[0].mxu0
      %v2275 = vadd.f32 0.0, %v2274
      %v2276 = vpop.f32.mrb[0].mxu0
      %v2277 = vpop.f32.mrb[0].mxu0
      %v2278 = vadd.f32 0.0, %v2277
      %v2279 = vpop.f32.mrb[0].mxu0
      %2280 = vmatprep.mubr.bf16.mxu0 0
      %2281 = vmatmul.mubr.bf16.gmra.mrb[0].mxu0 %v1903
      %v2282 = vpop.f32.mrb[0].mxu0
      %v2283 = vadd.f32 0.0, %v2282
      %v2284 = vpop.f32.mrb[0].mxu0
      %v2285 = vpop.f32.mrb[0].mxu0
      %v2286 = vadd.f32 0.0, %v2285
      %v2287 = vpop.f32.mrb[0].mxu0
      %2288 = vmatprep.mubr.bf16.mxu0 0
      %2289 = vmatmul.mubr.bf16.gmra.mrb[0].mxu0 %v1906
      %v2290 = vpop.f32.mrb[0].mxu0
      %v2291 = vadd.f32 0.0, %v2290
      %v2292 = vpop.f32.mrb[0].mxu0
      %v2293 = vpop.f32.mrb[0].mxu0
      %v2294 = vadd.f32 0.0, %v2293
      %v2295 = vpop.f32.mrb[0].mxu0
      %2296 = vmatprep.mubr.bf16.mxu0 0
      %2297 = vmatmul.mubr.bf16.gmra.mrb[0].mxu0 %v1909
      %v2298 = vpop.f32.mrb[0].mxu0
      %v2299 = vadd.f32 0.0, %v2298
      %v2300 = vpop.f32.mrb[0].mxu0
      %v2301 = vpop.f32.mrb[0].mxu0
      %v2302 = vadd.f32 0.0, %v2301
      %v2303 = vpop.f32.mrb[0].mxu0
      %2304 = vmatprep.mubr.bf16.mxu0 0
      %2305 = vmatmul.mubr.bf16.gmra.mrb[0].mxu0 %v1912
      %v2306 = vpop.f32.mrb[0].mxu0
      %v2307 = vadd.f32 0.0, %v2306
      %v2308 = vpop.f32.mrb[0].mxu0
      %v2309 = vpop.f32.mrb[0].mxu0
      %v2310 = vadd.f32 0.0, %v2309
      %v2311 = vpop.f32.mrb[0].mxu0
      %2312 = vmatprep.mubr.bf16.mxu0 0
      %2313 = vmatmul.mubr.bf16.gmra.mrb[0].mxu0 %v2144
      %v2314 = vpop.f32.mrb[0].mxu0
      %v2315 = vadd.f32 0.0, %v2314
      %v2316 = vpop.f32.mrb[0].mxu0
      %v2317 = vpop.f32.mrb[0].mxu0
      %v2318 = vadd.f32 0.0, %v2317
      %v2319 = vpop.f32.mrb[0].mxu0
      %2320 = vmatprep.mubr.bf16.mxu0 0
      %2321 = vmatmul.mubr.bf16.gmra.mrb[0].mxu0 %v2147
      %v2322 = vpop.f32.mrb[0].mxu0
      %v2323 = vadd.f32 0.0, %v2322
      %v2324 = vpop.f32.mrb[0].mxu0
      %v2325 = vpop.f32.mrb[0].mxu0
      %v2326 = vadd.f32 0.0, %v2325
      %v2327 = vpop.f32.mrb[0].mxu0
      %2328 = vdwg.mxu0
      %v2329 = vadd.f32 %v2097, %v2187
      %v2330 = vadd.f32 %v2098, %v2190
      %v2331 = vadd.f32 %v2099, %v2195
      %v2332 = vadd.f32 %v2100, %v2198
      %v2333 = vadd.f32 %v2101, %v2203
      %v2334 = vadd.f32 %v2102, %v2206
      %v2335 = vadd.f32 %v2103, %v2211
      %v2336 = vadd.f32 %v2104, %v2214
      %v2337 = vadd.f32 %v2105, %v2219
      %v2338 = vadd.f32 %v2106, %v2222
      %v2339 = vadd.f32 %v2107, %v2227
      %v2340 = vadd.f32 %v2108, %v2230
      %v2341 = vadd.f32 %v2109, %v2235
      %v2342 = vadd.f32 %v2110, %v2238
      %v2343 = vadd.f32 %v2111, %v2243
      %v2344 = vadd.f32 %v2112, %v2246
      %v2345 = vadd.f32 %v2113, %v2251
      %v2346 = vadd.f32 %v2114, %v2254
      %v2347 = vadd.f32 %v2115, %v2259
      %v2348 = vadd.f32 %v2116, %v2262
      %v2349 = vadd.f32 %v2117, %v2267
      %v2350 = vadd.f32 %v2118, %v2270
      %v2351 = vadd.f32 %v2119, %v2275
      %v2352 = vadd.f32 %v2120, %v2278
      %v2353 = vadd.f32 %v2121, %v2283
      %v2354 = vadd.f32 %v2122, %v2286
      %v2355 = vadd.f32 %v2123, %v2291
      %v2356 = vadd.f32 %v2124, %v2294
      %v2357 = vadd.f32 %v2125, %v2299
      %v2358 = vadd.f32 %v2126, %v2302
      %v2359 = vadd.f32 %v2127, %v2307
      %v2360 = vadd.f32 %v2128, %v2310
      %v2361 = vadd.f32 %v2129, %v2315
      %v2362 = vadd.f32 %v2130, %v2318
      %v2363 = vadd.f32 %v2131, %v2323
      %v2364 = vadd.f32 %v2132, %v2326
      %s2365 = scalar_lea.vmem %s1, 14
      %v2366 = vld [vmem:[%s2365] sm:$0x3]
      %vm2367 = vsmask.f32 5376
      %v2368 = vrot.slane %v324, 2
      %v2369 = vrot.slane %v320, 3
      %v2370 = vor.u32 %v2368, %v2369
      %v2371 = vrot.slane %v332, 2
      %v2372 = vrot.slane %v328, 3
      %v2373 = vor.u32 %v2371, %v2372
      %v2374 = vsel %vm2367, %v2370, %v2373
      %v2375 = vrot.slane %v340, 2
      %v2376 = vrot.slane %v336, 3
      %v2377 = vor.u32 %v2375, %v2376
      %v2378 = vsel %vm2367, %v2373, %v2377
      %v2379 = vrot.slane %v348, 2
      %v2380 = vrot.slane %v344, 3
      %v2381 = vor.u32 %v2379, %v2380
      %v2382 = vsel %vm2367, %v2377, %v2381
      %v2383 = vrot.slane %v356, 2
      %v2384 = vrot.slane %v352, 3
      %v2385 = vor.u32 %v2383, %v2384
      %v2386 = vsel %vm2367, %v2381, %v2385
      %v2387 = vrot.slane %v364, 2
      %v2388 = vrot.slane %v360, 3
      %v2389 = vor.u32 %v2387, %v2388
      %v2390 = vsel %vm2367, %v2385, %v2389
      %v2391 = vrot.slane %v372, 2
      %v2392 = vrot.slane %v368, 3
      %v2393 = vor.u32 %v2391, %v2392
      %v2394 = vsel %vm2367, %v2389, %v2393
      %v2395 = vrot.slane %v380, 2
      %v2396 = vrot.slane %v376, 3
      %v2397 = vor.u32 %v2395, %v2396
      %v2398 = vsel %vm2367, %v2393, %v2397
      %v2399 = vrot.slane %v388, 2
      %v2400 = vrot.slane %v384, 3
      %v2401 = vor.u32 %v2399, %v2400
      %v2402 = vsel %vm2367, %v2397, %v2401
      %v2403 = vrot.slane %v396, 2
      %v2404 = vrot.slane %v392, 3
      %v2405 = vor.u32 %v2403, %v2404
      %v2406 = vsel %vm2367, %v2401, %v2405
      %v2407 = vrot.slane %v404, 2
      %v2408 = vrot.slane %v400, 3
      %v2409 = vor.u32 %v2407, %v2408
      %v2410 = vsel %vm2367, %v2405, %v2409
      %v2411 = vrot.slane %v412, 2
      %v2412 = vrot.slane %v408, 3
      %v2413 = vor.u32 %v2411, %v2412
      %v2414 = vsel %vm2367, %v2409, %v2413
      %v2415 = vrot.slane %v420, 2
      %v2416 = vrot.slane %v416, 3
      %v2417 = vor.u32 %v2415, %v2416
      %v2418 = vsel %vm2367, %v2413, %v2417
      %v2419 = vrot.slane %v428, 2
      %v2420 = vrot.slane %v424, 3
      %v2421 = vor.u32 %v2419, %v2420
      %v2422 = vsel %vm2367, %v2417, %v2421
      %v2423 = vrot.slane %v436, 2
      %v2424 = vrot.slane %v432, 3
      %v2425 = vor.u32 %v2423, %v2424
      %v2426 = vsel %vm2367, %v2421, %v2425
      %v2427 = vrot.slane %v444, 2
      %v2428 = vrot.slane %v440, 3
      %v2429 = vor.u32 %v2427, %v2428
      %v2430 = vsel %vm2367, %v2425, %v2429
      %v2431 = vrot.slane %v1536, 2
      %v2432 = vrot.slane %v1539, 3
      %v2433 = vor.u32 %v2431, %v2432
      %v2434 = vsel %vm2367, %v2429, %v2433
      %v2436 = vshrl.u32 %v2133, 16
      %v2438 = vrot.slane %v2436, 2
      %v2439 = vshll.u32 %v2133, 16
      %v2441 = vrot.slane %v2439, 3
      %v2442 = vor.u32 %v2438, %v2441
      %v2443 = vsel %vm2367, %v2433, %v2442
      %v2445 = vshrl.u32 %v2134, 16
      %v2447 = vrot.slane %v2445, 2
      %v2448 = vshll.u32 %v2134, 16
      %v2450 = vrot.slane %v2448, 3
      %v2451 = vor.u32 %v2447, %v2450
      %v2452 = vsel %vm2367, %v2442, %v2451
      %v2454 = vsel %vm452, %v2374, 0
      %v2457 = vsel %vm452, %v2378, 0
      %v2460 = vsel %vm452, %v2382, 0
      %v2463 = vsel %vm452, %v2386, 0
      %v2466 = vsel %vm452, %v2390, 0
      %v2469 = vsel %vm452, %v2394, 0
      %v2472 = vsel %vm452, %v2398, 0
      %v2475 = vsel %vm452, %v2402, 0
      %v2478 = vsel %vm452, %v2406, 0
      %v2481 = vsel %vm452, %v2410, 0
      %v2484 = vsel %vm452, %v2414, 0
      %v2487 = vsel %vm452, %v2418, 0
      %v2490 = vsel %vm452, %v2422, 0
      %v2493 = vsel %vm452, %v2426, 0
      %v2496 = vsel %vm452, %v2430, 0
      %v2499 = vsel %vm452, %v2434, 0
      %v2502 = vsel %vm452, %v2443, 0
      %v2505 = vsel %vm452, %v2452, 0
      %v2508 = vsel %vm507, %v2366, 0
      %2510 = vmatprep.subr.bf16.mxu0 0
      %2511 = vmatpush1.bf16.msra.mxu0 %v2508
      %2512 = vmatprep.subr.bf16.mxu0 0
      %2513 = vmatpush1.bf16.msra.mxu0 0
      %2514 = vmatprep.subr.bf16.mxu0 0
      %2515 = vmatpush1.bf16.msra.mxu0 0
      %2516 = vmatprep.subr.bf16.mxu0 0
      %2517 = vmatpush1.bf16.msra.mxu0 0
      %2518 = vmatprep.subr.bf16.mxu0 0
      %2519 = vmatpush1.bf16.msra.mxu0 0
      %2520 = vmatprep.subr.bf16.mxu0 0
      %2521 = vmatpush1.bf16.msra.mxu0 0
      %2522 = vmatprep.subr.bf16.mxu0 0
      %2523 = vmatpush1.bf16.msra.mxu0 0
      %2524 = vmatprep.subr.bf16.mxu0 0
      %2525 = vmatpush1.bf16.msra.mxu0 0
      %2526 = vmatprep.subr.bf16.mxu0 0
      %2527 = vmatpush1.bf16.msra.mxu0 0
      %2528 = vmatprep.subr.bf16.mxu0 0
      %2529 = vmatpush1.bf16.msra.mxu0 0
      %2530 = vmatprep.subr.bf16.mxu0 0
      %2531 = vmatpush1.bf16.msra.mxu0 0
      %2532 = vmatprep.subr.bf16.mxu0 0
      %2533 = vmatpush1.bf16.msra.mxu0 0
      %2534 = vmatprep.subr.bf16.mxu0 0
      %2535 = vmatpush1.bf16.msra.mxu0 0
      %2536 = vmatprep.subr.bf16.mxu0 0
      %2537 = vmatpush1.bf16.msra.mxu0 0
      %2538 = vmatprep.subr.bf16.mxu0 0
      %2539 = vmatpush1.bf16.msra.mxu0 0
      %2540 = vmatprep.subr.bf16.mxu0 0
      %2541 = vmatpush1.bf16.msra.mxu0 0
      %2542 = vmatprep.mubr.bf16.mxu0 0
      %2543 = vmatmul.mubr.bf16.gmra.mrb[0].mxu0 %v2454
      %v2544 = vpop.f32.mrb[0].mxu0
      %v2545 = vadd.f32 0.0, %v2544
      %v2546 = vpop.f32.mrb[0].mxu0
      %v2547 = vpop.f32.mrb[0].mxu0
      %v2548 = vadd.f32 0.0, %v2547
      %v2549 = vpop.f32.mrb[0].mxu0
      %2550 = vmatprep.mubr.bf16.mxu0 0
      %2551 = vmatmul.mubr.bf16.gmra.mrb[0].mxu0 %v2457
      %v2552 = vpop.f32.mrb[0].mxu0
      %v2553 = vadd.f32 0.0, %v2552
      %v2554 = vpop.f32.mrb[0].mxu0
      %v2555 = vpop.f32.mrb[0].mxu0
      %v2556 = vadd.f32 0.0, %v2555
      %v2557 = vpop.f32.mrb[0].mxu0
      %2558 = vmatprep.mubr.bf16.mxu0 0
      %2559 = vmatmul.mubr.bf16.gmra.mrb[0].mxu0 %v2460
      %v2560 = vpop.f32.mrb[0].mxu0
      %v2561 = vadd.f32 0.0, %v2560
      %v2562 = vpop.f32.mrb[0].mxu0
      %v2563 = vpop.f32.mrb[0].mxu0
      %v2564 = vadd.f32 0.0, %v2563
      %v2565 = vpop.f32.mrb[0].mxu0
      %2566 = vmatprep.mubr.bf16.mxu0 0
      %2567 = vmatmul.mubr.bf16.gmra.mrb[0].mxu0 %v2463
      %v2568 = vpop.f32.mrb[0].mxu0
      %v2569 = vadd.f32 0.0, %v2568
      %v2570 = vpop.f32.mrb[0].mxu0
      %v2571 = vpop.f32.mrb[0].mxu0
      %v2572 = vadd.f32 0.0, %v2571
      %v2573 = vpop.f32.mrb[0].mxu0
      %2574 = vmatprep.mubr.bf16.mxu0 0
      %2575 = vmatmul.mubr.bf16.gmra.mrb[0].mxu0 %v2466
      %v2576 = vpop.f32.mrb[0].mxu0
      %v2577 = vadd.f32 0.0, %v2576
      %v2578 = vpop.f32.mrb[0].mxu0
      %v2579 = vpop.f32.mrb[0].mxu0
      %v2580 = vadd.f32 0.0, %v2579
      %v2581 = vpop.f32.mrb[0].mxu0
      %2582 = vmatprep.mubr.bf16.mxu0 0
      %2583 = vmatmul.mubr.bf16.gmra.mrb[0].mxu0 %v2469
      %v2584 = vpop.f32.mrb[0].mxu0
      %v2585 = vadd.f32 0.0, %v2584
      %v2586 = vpop.f32.mrb[0].mxu0
      %v2587 = vpop.f32.mrb[0].mxu0
      %v2588 = vadd.f32 0.0, %v2587
      %v2589 = vpop.f32.mrb[0].mxu0
      %2590 = vmatprep.mubr.bf16.mxu0 0
      %2591 = vmatmul.mubr.bf16.gmra.mrb[0].mxu0 %v2472
      %v2592 = vpop.f32.mrb[0].mxu0
      %v2593 = vadd.f32 0.0, %v2592
      %v2594 = vpop.f32.mrb[0].mxu0
      %v2595 = vpop.f32.mrb[0].mxu0
      %v2596 = vadd.f32 0.0, %v2595
      %v2597 = vpop.f32.mrb[0].mxu0
      %2598 = vmatprep.mubr.bf16.mxu0 0
      %2599 = vmatmul.mubr.bf16.gmra.mrb[0].mxu0 %v2475
      %v2600 = vpop.f32.mrb[0].mxu0
      %v2601 = vadd.f32 0.0, %v2600
      %v2602 = vpop.f32.mrb[0].mxu0
      %v2603 = vpop.f32.mrb[0].mxu0
      %v2604 = vadd.f32 0.0, %v2603
      %v2605 = vpop.f32.mrb[0].mxu0
      %2606 = vmatprep.mubr.bf16.mxu0 0
      %2607 = vmatmul.mubr.bf16.gmra.mrb[0].mxu0 %v2478
      %v2608 = vpop.f32.mrb[0].mxu0
      %v2609 = vadd.f32 0.0, %v2608
      %v2610 = vpop.f32.mrb[0].mxu0
      %v2611 = vpop.f32.mrb[0].mxu0
      %v2612 = vadd.f32 0.0, %v2611
      %v2613 = vpop.f32.mrb[0].mxu0
      %2614 = vmatprep.mubr.bf16.mxu0 0
      %2615 = vmatmul.mubr.bf16.gmra.mrb[0].mxu0 %v2481
      %v2616 = vpop.f32.mrb[0].mxu0
      %v2617 = vadd.f32 0.0, %v2616
      %v2618 = vpop.f32.mrb[0].mxu0
      %v2619 = vpop.f32.mrb[0].mxu0
      %v2620 = vadd.f32 0.0, %v2619
      %v2621 = vpop.f32.mrb[0].mxu0
      %2622 = vmatprep.mubr.bf16.mxu0 0
      %2623 = vmatmul.mubr.bf16.gmra.mrb[0].mxu0 %v2484
      %v2624 = vpop.f32.mrb[0].mxu0
      %v2625 = vadd.f32 0.0, %v2624
      %v2626 = vpop.f32.mrb[0].mxu0
      %v2627 = vpop.f32.mrb[0].mxu0
      %v2628 = vadd.f32 0.0, %v2627
      %v2629 = vpop.f32.mrb[0].mxu0
      %2630 = vmatprep.mubr.bf16.mxu0 0
      %2631 = vmatmul.mubr.bf16.gmra.mrb[0].mxu0 %v2487
      %v2632 = vpop.f32.mrb[0].mxu0
      %v2633 = vadd.f32 0.0, %v2632
      %v2634 = vpop.f32.mrb[0].mxu0
      %v2635 = vpop.f32.mrb[0].mxu0
      %v2636 = vadd.f32 0.0, %v2635
      %v2637 = vpop.f32.mrb[0].mxu0
      %2638 = vmatprep.mubr.bf16.mxu0 0
      %2639 = vmatmul.mubr.bf16.gmra.mrb[0].mxu0 %v2490
      %v2640 = vpop.f32.mrb[0].mxu0
      %v2641 = vadd.f32 0.0, %v2640
      %v2642 = vpop.f32.mrb[0].mxu0
      %v2643 = vpop.f32.mrb[0].mxu0
      %v2644 = vadd.f32 0.0, %v2643
      %v2645 = vpop.f32.mrb[0].mxu0
      %2646 = vmatprep.mubr.bf16.mxu0 0
      %2647 = vmatmul.mubr.bf16.gmra.mrb[0].mxu0 %v2493
      %v2648 = vpop.f32.mrb[0].mxu0
      %v2649 = vadd.f32 0.0, %v2648
      %v2650 = vpop.f32.mrb[0].mxu0
      %v2651 = vpop.f32.mrb[0].mxu0
      %v2652 = vadd.f32 0.0, %v2651
      %v2653 = vpop.f32.mrb[0].mxu0
      %2654 = vmatprep.mubr.bf16.mxu0 0
      %2655 = vmatmul.mubr.bf16.gmra.mrb[0].mxu0 %v2496
      %v2656 = vpop.f32.mrb[0].mxu0
      %v2657 = vadd.f32 0.0, %v2656
      %v2658 = vpop.f32.mrb[0].mxu0
      %v2659 = vpop.f32.mrb[0].mxu0
      %v2660 = vadd.f32 0.0, %v2659
      %v2661 = vpop.f32.mrb[0].mxu0
      %2662 = vmatprep.mubr.bf16.mxu0 0
      %2663 = vmatmul.mubr.bf16.gmra.mrb[0].mxu0 %v2499
      %v2664 = vpop.f32.mrb[0].mxu0
      %v2665 = vadd.f32 0.0, %v2664
      %v2666 = vpop.f32.mrb[0].mxu0
      %v2667 = vpop.f32.mrb[0].mxu0
      %v2668 = vadd.f32 0.0, %v2667
      %v2669 = vpop.f32.mrb[0].mxu0
      %2670 = vmatprep.mubr.bf16.mxu0 0
      %2671 = vmatmul.mubr.bf16.gmra.mrb[0].mxu0 %v2502
      %v2672 = vpop.f32.mrb[0].mxu0
      %v2673 = vadd.f32 0.0, %v2672
      %v2674 = vpop.f32.mrb[0].mxu0
      %v2675 = vpop.f32.mrb[0].mxu0
      %v2676 = vadd.f32 0.0, %v2675
      %v2677 = vpop.f32.mrb[0].mxu0
      %2678 = vmatprep.mubr.bf16.mxu0 0
      %2679 = vmatmul.mubr.bf16.gmra.mrb[0].mxu0 %v2505
      %v2680 = vpop.f32.mrb[0].mxu0
      %v2681 = vadd.f32 0.0, %v2680
      %v2682 = vpop.f32.mrb[0].mxu0
      %v2683 = vpop.f32.mrb[0].mxu0
      %v2684 = vadd.f32 0.0, %v2683
      %v2685 = vpop.f32.mrb[0].mxu0
      %2686 = vdwg.mxu0
      %v2687 = vadd.f32 %v2329, %v2545
      %v2688 = vadd.f32 %v2330, %v2548
      %v2689 = vadd.f32 %v2331, %v2553
      %v2690 = vadd.f32 %v2332, %v2556
      %v2691 = vadd.f32 %v2333, %v2561
      %v2692 = vadd.f32 %v2334, %v2564
      %v2693 = vadd.f32 %v2335, %v2569
      %v2694 = vadd.f32 %v2336, %v2572
      %v2695 = vadd.f32 %v2337, %v2577
      %v2696 = vadd.f32 %v2338, %v2580
      %v2697 = vadd.f32 %v2339, %v2585
      %v2698 = vadd.f32 %v2340, %v2588
      %v2699 = vadd.f32 %v2341, %v2593
      %v2700 = vadd.f32 %v2342, %v2596
      %v2701 = vadd.f32 %v2343, %v2601
      %v2702 = vadd.f32 %v2344, %v2604
      %v2703 = vadd.f32 %v2345, %v2609
      %v2704 = vadd.f32 %v2346, %v2612
      %v2705 = vadd.f32 %v2347, %v2617
      %v2706 = vadd.f32 %v2348, %v2620
      %v2707 = vadd.f32 %v2349, %v2625
      %v2708 = vadd.f32 %v2350, %v2628
      %v2709 = vadd.f32 %v2351, %v2633
      %v2710 = vadd.f32 %v2352, %v2636
      %v2711 = vadd.f32 %v2353, %v2641
      %v2712 = vadd.f32 %v2354, %v2644
      %v2713 = vadd.f32 %v2355, %v2649
      %v2714 = vadd.f32 %v2356, %v2652
      %v2715 = vadd.f32 %v2357, %v2657
      %v2716 = vadd.f32 %v2358, %v2660
      %v2717 = vadd.f32 %v2359, %v2665
      %v2718 = vadd.f32 %v2360, %v2668
      %v2719 = vadd.f32 %v2361, %v2673
      %v2720 = vadd.f32 %v2362, %v2676
      %v2721 = vadd.f32 %v2363, %v2681
      %v2722 = vadd.f32 %v2364, %v2684
      %s2723 = scalar_lea.vmem %s1, 16
      %v2724 = vld [vmem:[%s2723] sm:$0x3]
      %vm2725 = vcmask 1044480
      %v2726 = vrot.slane %v283, 3
      %v2727 = vrot.slane %v284, 3
      %v2728 = vsel %vm2725, %v2726, %v2727
      %v2729 = vrot.slane %v285, 3
      %v2730 = vsel %vm2725, %v2727, %v2729
      %v2731 = vrot.slane %v286, 3
      %v2732 = vsel %vm2725, %v2729, %v2731
      %v2733 = vrot.slane %v287, 3
      %v2734 = vsel %vm2725, %v2731, %v2733
      %v2735 = vrot.slane %v288, 3
      %v2736 = vsel %vm2725, %v2733, %v2735
      %v2737 = vrot.slane %v289, 3
      %v2738 = vsel %vm2725, %v2735, %v2737
      %v2739 = vrot.slane %v290, 3
      %v2740 = vsel %vm2725, %v2737, %v2739
      %v2741 = vrot.slane %v291, 3
      %v2742 = vsel %vm2725, %v2739, %v2741
      %v2743 = vrot.slane %v292, 3
      %v2744 = vsel %vm2725, %v2741, %v2743
      %v2745 = vrot.slane %v293, 3
      %v2746 = vsel %vm2725, %v2743, %v2745
      %v2747 = vrot.slane %v294, 3
      %v2748 = vsel %vm2725, %v2745, %v2747
      %v2749 = vrot.slane %v295, 3
      %v2750 = vsel %vm2725, %v2747, %v2749
      %v2751 = vrot.slane %v296, 3
      %v2752 = vsel %vm2725, %v2749, %v2751
      %v2753 = vrot.slane %v297, 3
      %v2754 = vsel %vm2725, %v2751, %v2753
      %v2755 = vrot.slane %v298, 3
      %v2756 = vsel %vm2725, %v2753, %v2755
      %v2757 = vrot.slane %v1233, 3
      %v2758 = vsel %vm2725, %v2755, %v2757
      %v2759 = vrot.slane %v2133, 3
      %v2760 = vsel %vm2725, %v2757, %v2759
      %v2761 = vrot.slane %v2134, 3
      %v2762 = vsel %vm2725, %v2759, %v2761
      %v2764 = vsel %vm452, %v2728, 0
      %v2767 = vsel %vm452, %v2730, 0
      %v2770 = vsel %vm452, %v2732, 0
      %v2773 = vsel %vm452, %v2734, 0
      %v2776 = vsel %vm452, %v2736, 0
      %v2779 = vsel %vm452, %v2738, 0
      %v2782 = vsel %vm452, %v2740, 0
      %v2785 = vsel %vm452, %v2742, 0
      %v2788 = vsel %vm452, %v2744, 0
      %v2791 = vsel %vm452, %v2746, 0
      %v2794 = vsel %vm452, %v2748, 0
      %v2797 = vsel %vm452, %v2750, 0
      %v2800 = vsel %vm452, %v2752, 0
      %v2803 = vsel %vm452, %v2754, 0
      %v2806 = vsel %vm452, %v2756, 0
      %v2809 = vsel %vm452, %v2758, 0
      %v2812 = vsel %vm452, %v2760, 0
      %v2815 = vsel %vm452, %v2762, 0
      %v2818 = vsel %vm507, %v2724, 0
      %2820 = vmatprep.subr.bf16.mxu0 0
      %2821 = vmatpush1.bf16.msra.mxu0 %v2818
      %2822 = vmatprep.subr.bf16.mxu0 0
      %2823 = vmatpush1.bf16.msra.mxu0 0
      %2824 = vmatprep.subr.bf16.mxu0 0
      %2825 = vmatpush1.bf16.msra.mxu0 0
      %2826 = vmatprep.subr.bf16.mxu0 0
      %2827 = vmatpush1.bf16.msra.mxu0 0
      %2828 = vmatprep.subr.bf16.mxu0 0
      %2829 = vmatpush1.bf16.msra.mxu0 0
      %2830 = vmatprep.subr.bf16.mxu0 0
      %2831 = vmatpush1.bf16.msra.mxu0 0
      %2832 = vmatprep.subr.bf16.mxu0 0
      %2833 = vmatpush1.bf16.msra.mxu0 0
      %2834 = vmatprep.subr.bf16.mxu0 0
      %2835 = vmatpush1.bf16.msra.mxu0 0
      %2836 = vmatprep.subr.bf16.mxu0 0
      %2837 = vmatpush1.bf16.msra.mxu0 0
      %2838 = vmatprep.subr.bf16.mxu0 0
      %2839 = vmatpush1.bf16.msra.mxu0 0
      %2840 = vmatprep.subr.bf16.mxu0 0
      %2841 = vmatpush1.bf16.msra.mxu0 0
      %2842 = vmatprep.subr.bf16.mxu0 0
      %2843 = vmatpush1.bf16.msra.mxu0 0
      %2844 = vmatprep.subr.bf16.mxu0 0
      %2845 = vmatpush1.bf16.msra.mxu0 0
      %2846 = vmatprep.subr.bf16.mxu0 0
      %2847 = vmatpush1.bf16.msra.mxu0 0
      %2848 = vmatprep.subr.bf16.mxu0 0
      %2849 = vmatpush1.bf16.msra.mxu0 0
      %2850 = vmatprep.subr.bf16.mxu0 0
      %2851 = vmatpush1.bf16.msra.mxu0 0
      %2852 = vmatprep.mubr.bf16.mxu0 0
      %2853 = vmatmul.mubr.bf16.gmra.mrb[0].mxu0 %v2764
      %v2854 = vpop.f32.mrb[0].mxu0
      %v2855 = vadd.f32 0.0, %v2854
      %v2856 = vpop.f32.mrb[0].mxu0
      %v2857 = vpop.f32.mrb[0].mxu0
      %v2858 = vadd.f32 0.0, %v2857
      %v2859 = vpop.f32.mrb[0].mxu0
      %2860 = vmatprep.mubr.bf16.mxu0 0
      %2861 = vmatmul.mubr.bf16.gmra.mrb[0].mxu0 %v2767
      %v2862 = vpop.f32.mrb[0].mxu0
      %v2863 = vadd.f32 0.0, %v2862
      %v2864 = vpop.f32.mrb[0].mxu0
      %v2865 = vpop.f32.mrb[0].mxu0
      %v2866 = vadd.f32 0.0, %v2865
      %v2867 = vpop.f32.mrb[0].mxu0
      %2868 = vmatprep.mubr.bf16.mxu0 0
      %2869 = vmatmul.mubr.bf16.gmra.mrb[0].mxu0 %v2770
      %v2870 = vpop.f32.mrb[0].mxu0
      %v2871 = vadd.f32 0.0, %v2870
      %v2872 = vpop.f32.mrb[0].mxu0
      %v2873 = vpop.f32.mrb[0].mxu0
      %v2874 = vadd.f32 0.0, %v2873
      %v2875 = vpop.f32.mrb[0].mxu0
      %2876 = vmatprep.mubr.bf16.mxu0 0
      %2877 = vmatmul.mubr.bf16.gmra.mrb[0].mxu0 %v2773
      %v2878 = vpop.f32.mrb[0].mxu0
      %v2879 = vadd.f32 0.0, %v2878
      %v2880 = vpop.f32.mrb[0].mxu0
      %v2881 = vpop.f32.mrb[0].mxu0
      %v2882 = vadd.f32 0.0, %v2881
      %v2883 = vpop.f32.mrb[0].mxu0
      %2884 = vmatprep.mubr.bf16.mxu0 0
      %2885 = vmatmul.mubr.bf16.gmra.mrb[0].mxu0 %v2776
      %v2886 = vpop.f32.mrb[0].mxu0
      %v2887 = vadd.f32 0.0, %v2886
      %v2888 = vpop.f32.mrb[0].mxu0
      %v2889 = vpop.f32.mrb[0].mxu0
      %v2890 = vadd.f32 0.0, %v2889
      %v2891 = vpop.f32.mrb[0].mxu0
      %2892 = vmatprep.mubr.bf16.mxu0 0
      %2893 = vmatmul.mubr.bf16.gmra.mrb[0].mxu0 %v2779
      %v2894 = vpop.f32.mrb[0].mxu0
      %v2895 = vadd.f32 0.0, %v2894
      %v2896 = vpop.f32.mrb[0].mxu0
      %v2897 = vpop.f32.mrb[0].mxu0
      %v2898 = vadd.f32 0.0, %v2897
      %v2899 = vpop.f32.mrb[0].mxu0
      %2900 = vmatprep.mubr.bf16.mxu0 0
      %2901 = vmatmul.mubr.bf16.gmra.mrb[0].mxu0 %v2782
      %v2902 = vpop.f32.mrb[0].mxu0
      %v2903 = vadd.f32 0.0, %v2902
      %v2904 = vpop.f32.mrb[0].mxu0
      %v2905 = vpop.f32.mrb[0].mxu0
      %v2906 = vadd.f32 0.0, %v2905
      %v2907 = vpop.f32.mrb[0].mxu0
      %2908 = vmatprep.mubr.bf16.mxu0 0
      %2909 = vmatmul.mubr.bf16.gmra.mrb[0].mxu0 %v2785
      %v2910 = vpop.f32.mrb[0].mxu0
      %v2911 = vadd.f32 0.0, %v2910
      %v2912 = vpop.f32.mrb[0].mxu0
      %v2913 = vpop.f32.mrb[0].mxu0
      %v2914 = vadd.f32 0.0, %v2913
      %v2915 = vpop.f32.mrb[0].mxu0
      %2916 = vmatprep.mubr.bf16.mxu0 0
      %2917 = vmatmul.mubr.bf16.gmra.mrb[0].mxu0 %v2788
      %v2918 = vpop.f32.mrb[0].mxu0
      %v2919 = vadd.f32 0.0, %v2918
      %v2920 = vpop.f32.mrb[0].mxu0
      %v2921 = vpop.f32.mrb[0].mxu0
      %v2922 = vadd.f32 0.0, %v2921
      %v2923 = vpop.f32.mrb[0].mxu0
      %2924 = vmatprep.mubr.bf16.mxu0 0
      %2925 = vmatmul.mubr.bf16.gmra.mrb[0].mxu0 %v2791
      %v2926 = vpop.f32.mrb[0].mxu0
      %v2927 = vadd.f32 0.0, %v2926
      %v2928 = vpop.f32.mrb[0].mxu0
      %v2929 = vpop.f32.mrb[0].mxu0
      %v2930 = vadd.f32 0.0, %v2929
      %v2931 = vpop.f32.mrb[0].mxu0
      %2932 = vmatprep.mubr.bf16.mxu0 0
      %2933 = vmatmul.mubr.bf16.gmra.mrb[0].mxu0 %v2794
      %v2934 = vpop.f32.mrb[0].mxu0
      %v2935 = vadd.f32 0.0, %v2934
      %v2936 = vpop.f32.mrb[0].mxu0
      %v2937 = vpop.f32.mrb[0].mxu0
      %v2938 = vadd.f32 0.0, %v2937
      %v2939 = vpop.f32.mrb[0].mxu0
      %2940 = vmatprep.mubr.bf16.mxu0 0
      %2941 = vmatmul.mubr.bf16.gmra.mrb[0].mxu0 %v2797
      %v2942 = vpop.f32.mrb[0].mxu0
      %v2943 = vadd.f32 0.0, %v2942
      %v2944 = vpop.f32.mrb[0].mxu0
      %v2945 = vpop.f32.mrb[0].mxu0
      %v2946 = vadd.f32 0.0, %v2945
      %v2947 = vpop.f32.mrb[0].mxu0
      %2948 = vmatprep.mubr.bf16.mxu0 0
      %2949 = vmatmul.mubr.bf16.gmra.mrb[0].mxu0 %v2800
      %v2950 = vpop.f32.mrb[0].mxu0
      %v2951 = vadd.f32 0.0, %v2950
      %v2952 = vpop.f32.mrb[0].mxu0
      %v2953 = vpop.f32.mrb[0].mxu0
      %v2954 = vadd.f32 0.0, %v2953
      %v2955 = vpop.f32.mrb[0].mxu0
      %2956 = vmatprep.mubr.bf16.mxu0 0
      %2957 = vmatmul.mubr.bf16.gmra.mrb[0].mxu0 %v2803
      %v2958 = vpop.f32.mrb[0].mxu0
      %v2959 = vadd.f32 0.0, %v2958
      %v2960 = vpop.f32.mrb[0].mxu0
      %v2961 = vpop.f32.mrb[0].mxu0
      %v2962 = vadd.f32 0.0, %v2961
      %v2963 = vpop.f32.mrb[0].mxu0
      %2964 = vmatprep.mubr.bf16.mxu0 0
      %2965 = vmatmul.mubr.bf16.gmra.mrb[0].mxu0 %v2806
      %v2966 = vpop.f32.mrb[0].mxu0
      %v2967 = vadd.f32 0.0, %v2966
      %v2968 = vpop.f32.mrb[0].mxu0
      %v2969 = vpop.f32.mrb[0].mxu0
      %v2970 = vadd.f32 0.0, %v2969
      %v2971 = vpop.f32.mrb[0].mxu0
      %2972 = vmatprep.mubr.bf16.mxu0 0
      %2973 = vmatmul.mubr.bf16.gmra.mrb[0].mxu0 %v2809
      %v2974 = vpop.f32.mrb[0].mxu0
      %v2975 = vadd.f32 0.0, %v2974
      %v2976 = vpop.f32.mrb[0].mxu0
      %v2977 = vpop.f32.mrb[0].mxu0
      %v2978 = vadd.f32 0.0, %v2977
      %v2979 = vpop.f32.mrb[0].mxu0
      %2980 = vmatprep.mubr.bf16.mxu0 0
      %2981 = vmatmul.mubr.bf16.gmra.mrb[0].mxu0 %v2812
      %v2982 = vpop.f32.mrb[0].mxu0
      %v2983 = vadd.f32 0.0, %v2982
      %v2984 = vpop.f32.mrb[0].mxu0
      %v2985 = vpop.f32.mrb[0].mxu0
      %v2986 = vadd.f32 0.0, %v2985
      %v2987 = vpop.f32.mrb[0].mxu0
      %2988 = vmatprep.mubr.bf16.mxu0 0
      %2989 = vmatmul.mubr.bf16.gmra.mrb[0].mxu0 %v2815
      %v2990 = vpop.f32.mrb[0].mxu0
      %v2991 = vadd.f32 0.0, %v2990
      %v2992 = vpop.f32.mrb[0].mxu0
      %v2993 = vpop.f32.mrb[0].mxu0
      %v2994 = vadd.f32 0.0, %v2993
      %v2995 = vpop.f32.mrb[0].mxu0
      %2996 = vdwg.mxu0
      %v2997 = vadd.f32 %v2687, %v2855
      %v2998 = vadd.f32 %v2688, %v2858
      %v2999 = vadd.f32 %v2689, %v2863
      %v3000 = vadd.f32 %v2690, %v2866
      %v3001 = vadd.f32 %v2691, %v2871
      %v3002 = vadd.f32 %v2692, %v2874
      %v3003 = vadd.f32 %v2693, %v2879
      %v3004 = vadd.f32 %v2694, %v2882
      %v3005 = vadd.f32 %v2695, %v2887
      %v3006 = vadd.f32 %v2696, %v2890
      %v3007 = vadd.f32 %v2697, %v2895
      %v3008 = vadd.f32 %v2698, %v2898
      %v3009 = vadd.f32 %v2699, %v2903
      %v3010 = vadd.f32 %v2700, %v2906
      %v3011 = vadd.f32 %v2701, %v2911
      %v3012 = vadd.f32 %v2702, %v2914
      %v3013 = vadd.f32 %v2703, %v2919
      %v3014 = vadd.f32 %v2704, %v2922
      %v3015 = vadd.f32 %v2705, %v2927
      %v3016 = vadd.f32 %v2706, %v2930
      %v3017 = vadd.f32 %v2707, %v2935
      %v3018 = vadd.f32 %v2708, %v2938
      %v3019 = vadd.f32 %v2709, %v2943
      %v3020 = vadd.f32 %v2710, %v2946
      %v3021 = vadd.f32 %v2711, %v2951
      %v3022 = vadd.f32 %v2712, %v2954
      %v3023 = vadd.f32 %v2713, %v2959
      %v3024 = vadd.f32 %v2714, %v2962
      %v3025 = vadd.f32 %v2715, %v2967
      %v3026 = vadd.f32 %v2716, %v2970
      %v3027 = vadd.f32 %v2717, %v2975
      %v3028 = vadd.f32 %v2718, %v2978
      %v3029 = vadd.f32 %v2719, %v2983
      %v3030 = vadd.f32 %v2720, %v2986
      %v3031 = vadd.f32 %v2721, %v2991
      %v3032 = vadd.f32 %v2722, %v2994
      %v3033 = vld [vmem:[%s2] sm:$0x1]
      %v3035 = vlaneseq
      %v3036 = vshrl.u32 %v3035, 7
      %v3037 = vsub.s32 0, %v3036
      %v3038 = vrot.slane %v3033, %v3037
      %v3040 = vmul.f32 %v2997, %v3038
      %v3041 = vmul.f32 %v2998, %v3038
      %v3042 = vmul.f32 %v2999, %v3038
      %v3043 = vmul.f32 %v3000, %v3038
      %v3044 = vmul.f32 %v3001, %v3038
      %v3045 = vmul.f32 %v3002, %v3038
      %v3046 = vmul.f32 %v3003, %v3038
      %v3047 = vmul.f32 %v3004, %v3038
      %v3048 = vmul.f32 %v3005, %v3038
      %v3049 = vmul.f32 %v3006, %v3038
      %v3050 = vmul.f32 %v3007, %v3038
      %v3051 = vmul.f32 %v3008, %v3038
      %v3052 = vmul.f32 %v3009, %v3038
      %v3053 = vmul.f32 %v3010, %v3038
      %v3054 = vmul.f32 %v3011, %v3038
      %v3055 = vmul.f32 %v3012, %v3038
      %v3056 = vmul.f32 %v3013, %v3038
      %v3057 = vmul.f32 %v3014, %v3038
      %v3058 = vmul.f32 %v3015, %v3038
      %v3059 = vmul.f32 %v3016, %v3038
      %v3060 = vmul.f32 %v3017, %v3038
      %v3061 = vmul.f32 %v3018, %v3038
      %v3062 = vmul.f32 %v3019, %v3038
      %v3063 = vmul.f32 %v3020, %v3038
      %v3064 = vmul.f32 %v3021, %v3038
      %v3065 = vmul.f32 %v3022, %v3038
      %v3066 = vmul.f32 %v3023, %v3038
      %v3067 = vmul.f32 %v3024, %v3038
      %v3068 = vmul.f32 %v3025, %v3038
      %v3069 = vmul.f32 %v3026, %v3038
      %v3070 = vmul.f32 %v3027, %v3038
      %v3071 = vmul.f32 %v3028, %v3038
      %v3072 = vmul.f32 %v3029, %v3038
      %v3073 = vmul.f32 %v3030, %v3038
      %v3074 = vmul.f32 %v3031, %v3038
      %v3075 = vmul.f32 %v3032, %v3038
      %v3076 = vld [vmem:[%s3] sm:$0x1]
      %v3078 = vlaneseq
      %v3079 = vshrl.u32 %v3078, 7
      %v3080 = vsub.s32 0, %v3079
      %v3081 = vrot.slane %v3076, %v3080
      %v3083 = vadd.f32 %v3040, %v3081
      %v3084 = vadd.f32 %v3041, %v3081
      %v3085 = vadd.f32 %v3042, %v3081
      %v3086 = vadd.f32 %v3043, %v3081
      %v3087 = vadd.f32 %v3044, %v3081
      %v3088 = vadd.f32 %v3045, %v3081
      %v3089 = vadd.f32 %v3046, %v3081
      %v3090 = vadd.f32 %v3047, %v3081
      %v3091 = vadd.f32 %v3048, %v3081
      %v3092 = vadd.f32 %v3049, %v3081
      %v3093 = vadd.f32 %v3050, %v3081
      %v3094 = vadd.f32 %v3051, %v3081
      %v3095 = vadd.f32 %v3052, %v3081
      %v3096 = vadd.f32 %v3053, %v3081
      %v3097 = vadd.f32 %v3054, %v3081
      %v3098 = vadd.f32 %v3055, %v3081
      %v3099 = vadd.f32 %v3056, %v3081
      %v3100 = vadd.f32 %v3057, %v3081
      %v3101 = vadd.f32 %v3058, %v3081
      %v3102 = vadd.f32 %v3059, %v3081
      %v3103 = vadd.f32 %v3060, %v3081
      %v3104 = vadd.f32 %v3061, %v3081
      %v3105 = vadd.f32 %v3062, %v3081
      %v3106 = vadd.f32 %v3063, %v3081
      %v3107 = vadd.f32 %v3064, %v3081
      %v3108 = vadd.f32 %v3065, %v3081
      %v3109 = vadd.f32 %v3066, %v3081
      %v3110 = vadd.f32 %v3067, %v3081
      %v3111 = vadd.f32 %v3068, %v3081
      %v3112 = vadd.f32 %v3069, %v3081
      %v3113 = vadd.f32 %v3070, %v3081
      %v3114 = vadd.f32 %v3071, %v3081
      %v3115 = vadd.f32 %v3072, %v3081
      %v3116 = vadd.f32 %v3073, %v3081
      %v3117 = vadd.f32 %v3074, %v3081
      %v3118 = vadd.f32 %v3075, %v3081
      %v3119 = vmax.f32 %v3083, 0.0
      %v3120 = vmax.f32 %v3084, 0.0
      %v3121 = vmax.f32 %v3085, 0.0
      %v3122 = vmax.f32 %v3086, 0.0
      %v3123 = vmax.f32 %v3087, 0.0
      %v3124 = vmax.f32 %v3088, 0.0
      %v3125 = vmax.f32 %v3089, 0.0
      %v3126 = vmax.f32 %v3090, 0.0
      %v3127 = vmax.f32 %v3091, 0.0
      %v3128 = vmax.f32 %v3092, 0.0
      %v3129 = vmax.f32 %v3093, 0.0
      %v3130 = vmax.f32 %v3094, 0.0
      %v3131 = vmax.f32 %v3095, 0.0
      %v3132 = vmax.f32 %v3096, 0.0
      %v3133 = vmax.f32 %v3097, 0.0
      %v3134 = vmax.f32 %v3098, 0.0
      %v3135 = vmax.f32 %v3099, 0.0
      %v3136 = vmax.f32 %v3100, 0.0
      %v3137 = vmax.f32 %v3101, 0.0
      %v3138 = vmax.f32 %v3102, 0.0
      %v3139 = vmax.f32 %v3103, 0.0
      %v3140 = vmax.f32 %v3104, 0.0
      %v3141 = vmax.f32 %v3105, 0.0
      %v3142 = vmax.f32 %v3106, 0.0
      %v3143 = vmax.f32 %v3107, 0.0
      %v3144 = vmax.f32 %v3108, 0.0
      %v3145 = vmax.f32 %v3109, 0.0
      %v3146 = vmax.f32 %v3110, 0.0
      %v3147 = vmax.f32 %v3111, 0.0
      %v3148 = vmax.f32 %v3112, 0.0
      %v3149 = vmax.f32 %v3113, 0.0
      %v3150 = vmax.f32 %v3114, 0.0
      %v3151 = vmax.f32 %v3115, 0.0
      %v3152 = vmax.f32 %v3116, 0.0
      %v3153 = vmax.f32 %v3117, 0.0
      %v3154 = vmax.f32 %v3118, 0.0
      %3155 = vst [vmem:[%s197] sm:$0xff] %v3119
      %3156 = vst [vmem:[%s197 + $0x8] sm:$0xff] %v3120
      %3157 = vst [vmem:[%s197 + $0x10] sm:$0xff] %v3121
      %3158 = vst [vmem:[%s197 + $0x18] sm:$0xff] %v3122
      %3159 = vst [vmem:[%s197 + $0x20] sm:$0xff] %v3123
      %3160 = vst [vmem:[%s197 + $0x28] sm:$0xff] %v3124
      %3161 = vst [vmem:[%s197 + $0x30] sm:$0xff] %v3125
      %3162 = vst [vmem:[%s197 + $0x38] sm:$0xff] %v3126
      %3163 = vst [vmem:[%s197 + $0x40] sm:$0xff] %v3127
      %3164 = vst [vmem:[%s197 + $0x48] sm:$0xff] %v3128
      %3165 = vst [vmem:[%s197 + $0x50] sm:$0xff] %v3129
      %3166 = vst [vmem:[%s197 + $0x58] sm:$0xff] %v3130
      %3167 = vst [vmem:[%s197 + $0x60] sm:$0xff] %v3131
      %3168 = vst [vmem:[%s197 + $0x68] sm:$0xff] %v3132
      %3169 = vst [vmem:[%s197 + $0x70] sm:$0xff] %v3133
      %3170 = vst [vmem:[%s197 + $0x78] sm:$0xff] %v3134
      %3171 = vst [vmem:[%s197 + $0x80] sm:$0xff] %v3135
      %3172 = vst [vmem:[%s197 + $0x88] sm:$0xff] %v3136
      %3173 = vst [vmem:[%s197 + $0x90] sm:$0xff] %v3137
      %3174 = vst [vmem:[%s197 + $0x98] sm:$0xff] %v3138
      %3175 = vst [vmem:[%s197 + $0xa0] sm:$0xff] %v3139
      %3176 = vst [vmem:[%s197 + $0xa8] sm:$0xff] %v3140
      %3177 = vst [vmem:[%s197 + $0xb0] sm:$0xff] %v3141
      %3178 = vst [vmem:[%s197 + $0xb8] sm:$0xff] %v3142
      %3179 = vst [vmem:[%s197 + $0xc0] sm:$0xff] %v3143
      %3180 = vst [vmem:[%s197 + $0xc8] sm:$0xff] %v3144
      %3181 = vst [vmem:[%s197 + $0xd0] sm:$0xff] %v3145
      %3182 = vst [vmem:[%s197 + $0xd8] sm:$0xff] %v3146
      %3183 = vst [vmem:[%s197 + $0xe0] sm:$0xff] %v3147
      %3184 = vst [vmem:[%s197 + $0xe8] sm:$0xff] %v3148
      %3185 = vst [vmem:[%s197 + $0xf0] sm:$0xff] %v3149
      %3186 = vst [vmem:[%s197 + $0xf8] sm:$0xff] %v3150
      %3187 = vst [vmem:[%s197 + $0x100] sm:$0xff] %v3151
      %3188 = vst [vmem:[%s197 + $0x108] sm:$0xff] %v3152
      %3189 = vst [vmem:[%s197 + $0x110] sm:$0xff] %v3153
      %3190 = vst [vmem:[%s197 + $0x118] sm:$0xff] %v3154
      %p3191 = scmp.lt.s32.totalorder %s15, 1
      %s3192 = scalar_select %p3191, %s15, 1
      %s3193 = smul.addr %s3192, 36
      %s3194 = smul.addr %s3193, 8
      %s3195 = scalar_lea.vmem %s4, %s3194
      // Predicated region
      $region37: #{cnn_block_forward.3} parent=35 // pred_check
        %p3196 = pneg %p122
      $region38: #{cnn_block_forward.3} parent=35 // pred_check_branch
        %3198 = sbr.rel (%p3196) target = $region40
      $region39: #{cnn_block_forward.3} parent=35 // pred_region
        _
      $region40: #{cnn_block_forward.3} parent=35 // pred_fallthru
        _
    $region36: #{cnn_block_forward.3} parent=5 // pred_fallthru
      _
    %p3199 = scmp.le.s32.totalorder 2, %s10
    // Predicated region
    $region41: #{cnn_block_forward.3} parent=5 // pred_check
      %p3200 = pneg %p3199
    $region42: #{cnn_block_forward.3} parent=5 // pred_check_branch
      %3202 = sbr.rel (%p3200) target = $region44
    $region43: #{cnn_block_forward.3} parent=5 // pred_region
      %s3203 = ssub.s32 %s10, 2
      // Predicated region
      $region45: #{cnn_block_forward.3} parent=43 // pred_check
        %p3204 = pneg %p128
      $region46: #{cnn_block_forward.3} parent=43 // pred_check_branch
        %3206 = sbr.rel (%p3204) target = $region48
      $region47: #{cnn_block_forward.3} parent=43 // pred_region
        %p3207 = scmp.lt.s32.totalorder %s16, 1
        %s3208 = scalar_select %p3207, %s16, 1
        %s3209 = smul.addr %s3208, 36
        %s3210 = smul.addr %s3209, 8
        %s3211 = scalar_lea.vmem %s4, %s3210
      $region48: #{cnn_block_forward.3} parent=43 // pred_fallthru
        _
    $region44: #{cnn_block_forward.3} parent=5 // pred_fallthru
      _
  $region6: #{cnn_block_forward.3} parent=0 // loop_footer
    %s14 = sadd.s32 1, %s10
  $region7: #{cnn_block_forward.3} parent=0 // loop_footer_branch
    %9 = sbr.rel target = $region3
  $region8: #{cnn_block_forward.3} parent=0 // loop_exit
    _

// kernel: cnn_block_forward.2
$region0: #{cnn_block_forward.2}
  #allocation0 [shape = 'u32[]', space=smem, size = 0x4, offset = 0x4, fixed_abs, tag = 'smem constant byte address 0x4 - core index']
  #allocation1 [shape = 'u32[144,128]{1,0:T(1,128)}', space=vmem, size = 0x12000, scoped, tag = 'internal scratch']
  %s0 = inlined_call_operand.vmem [shape: bf16[2,328,4], index: 0, kind: input, shape index: {}]
  %s1 = inlined_call_operand.vmem [shape: bf16[9,4,128], index: 1, kind: input, shape index: {}]
  %s2 = inlined_call_operand.vmem [shape: f32[2,1,128], index: 2, kind: output, shape index: {0}]
  %s3 = inlined_call_operand.vmem [shape: f32[2,1,128], index: 3, kind: output, shape index: {1}]
  %4 = xla_tuple %s2, %s3
  %s5 = sld [smem:[#allocation0]]
  $region49: #{cnn_block_forward.2} parent=0
    _
  %s7 = ssub.s32 1, %s5
  %s8 = scalar_select 0, %s7, %s5
  loop: start=0, step=1, limit=4
  $region2: #{cnn_block_forward.2} parent=0 // loop_pre_header
    _
  $region3: #{cnn_block_forward.2} parent=0 // loop_header
    %s10 = sphi 0, %s14
    %p11 = scmp.ge.s32.totalorder %s10, 4
    %s20 = sphi 0, %s22
    %s23 = sphi 0, %s20
    %s24 = sphi 0, %s23
    %s40 = sphi 0, %s24
    %s44 = sphi 0, %s44
    %s46 = sphi 0, %s44
    %s47 = sphi 0, %s46
    %s61 = sphi 0, %s47
    %s67 = sphi 0, %s69
    %s70 = sphi 0, %s67
    %s71 = sphi 0, %s70
    %s87 = sphi 0, %s71
    %s93 = sphi 0, %s95
    %s96 = sphi 0, %s93
    %s97 = sphi 0, %s96
    %s113 = sphi 0, %s97
  $region4: #{cnn_block_forward.2} parent=0 // loop_header_branch
    %13 = sbr.rel (%p11) target = $region8
  $region5: #{cnn_block_forward.2} parent=0 // loop_body
    %s15 = ssub.s32 %s10, 1
    %s16 = ssub.s32 %s10, 2
    %s17 = sadd.s32 %s10, 1
    %s18 = ssub.s32 %s10, %s17
    %p19 = scmp.eq.s32.totalorder %s18, 0
    %s21 = sadd.s32 %s20, 1
    %s22 = scalar_select %p19, %s20, %s21
    %p25 = pneg %p19
    %p26 = scmp.eq.s32.totalorder %s10, 1
    %p27 = por %p25, %p26
    %p28 = scmp.ne.s32.totalorder %s20, %s23
    %p29 = scmp.eq.s32.totalorder %s10, 0
    %p30 = por %p28, %p29
    %p31 = scmp.ne.s32.totalorder %s20, %s23
    %p32 = scmp.eq.s32.totalorder %s15, 1
    %p33 = por %p31, %p32
    %p34 = scmp.ne.s32.totalorder %s23, %s24
    %p35 = scmp.eq.s32.totalorder %s15, 0
    %p36 = por %p34, %p35
    %p37 = scmp.ne.s32.totalorder %s23, %s24
    %p38 = scmp.eq.s32.totalorder %s16, 1
    %p39 = por %p37, %p38
    %p41 = scmp.ne.s32.totalorder %s24, %s40
    %p42 = scmp.eq.s32.totalorder %s16, 0
    %p43 = por %p41, %p42
    %s45 = sadd.s32 %s44, 1
    %p48 = scmp.eq.s32.totalorder %s10, 1
    %p49 = scmp.ne.s32.totalorder %s44, %s46
    %p50 = scmp.eq.s32.totalorder %s10, 0
    %p51 = por %p49, %p50
    %p52 = scmp.ne.s32.totalorder %s44, %s46
    %p53 = scmp.eq.s32.totalorder %s15, 1
    %p54 = por %p52, %p53
    %p55 = scmp.ne.s32.totalorder %s46, %s47
    %p56 = scmp.eq.s32.totalorder %s15, 0
    %p57 = por %p55, %p56
    %p58 = scmp.ne.s32.totalorder %s46, %s47
    %p59 = scmp.eq.s32.totalorder %s16, 1
    %p60 = por %p58, %p59
    %p62 = scmp.ne.s32.totalorder %s47, %s61
    %p63 = scmp.eq.s32.totalorder %s16, 0
    %p64 = por %p62, %p63
    %s65 = ssub.s32 %s10, %s17
    %p66 = scmp.eq.s32.totalorder %s65, 0
    %s68 = sadd.s32 %s67, 1
    %s69 = scalar_select %p66, %s67, %s68
    %p72 = pneg %p66
    %p73 = scmp.eq.s32.totalorder %s10, 1
    %p74 = por %p72, %p73
    %p75 = scmp.ne.s32.totalorder %s67, %s70
    %p76 = scmp.eq.s32.totalorder %s10, 0
    %p77 = por %p75, %p76
    %p78 = scmp.ne.s32.totalorder %s67, %s70
    %p79 = scmp.eq.s32.totalorder %s15, 1
    %p80 = por %p78, %p79
    %p81 = scmp.ne.s32.totalorder %s70, %s71
    %p82 = scmp.eq.s32.totalorder %s15, 0
    %p83 = por %p81, %p82
    %p84 = scmp.ne.s32.totalorder %s70, %s71
    %p85 = scmp.eq.s32.totalorder %s16, 1
    %p86 = por %p84, %p85
    %p88 = scmp.ne.s32.totalorder %s71, %s87
    %p89 = scmp.eq.s32.totalorder %s16, 0
    %p90 = por %p88, %p89
    %s91 = ssub.s32 %s10, %s17
    %p92 = scmp.eq.s32.totalorder %s91, 0
    %s94 = sadd.s32 %s93, 1
    %s95 = scalar_select %p92, %s93, %s94
    %p98 = pneg %p92
    %p99 = scmp.eq.s32.totalorder %s10, 1
    %p100 = por %p98, %p99
    %p101 = scmp.ne.s32.totalorder %s93, %s96
    %p102 = scmp.eq.s32.totalorder %s10, 0
    %p103 = por %p101, %p102
    %p104 = scmp.ne.s32.totalorder %s93, %s96
    %p105 = scmp.eq.s32.totalorder %s15, 1
    %p106 = por %p104, %p105
    %p107 = scmp.ne.s32.totalorder %s96, %s97
    %p108 = scmp.eq.s32.totalorder %s15, 0
    %p109 = por %p107, %p108
    %p110 = scmp.ne.s32.totalorder %s96, %s97
    %p111 = scmp.eq.s32.totalorder %s16, 1
    %p112 = por %p110, %p111
    %p114 = scmp.ne.s32.totalorder %s97, %s113
    %p115 = scmp.eq.s32.totalorder %s16, 0
    %p116 = por %p114, %p115
    %p117 = scmp.le.s32.totalorder 1, %s10
    %p118 = scmp.lt.s32.totalorder %s10, 3
    %p119 = pnand %p117, %p118
    %p120 = pneg %p119
    // Predicated region
    $region9: #{cnn_block_forward.2} parent=5 // pred_check
      _
    $region10: #{cnn_block_forward.2} parent=5 // pred_check_branch
      %122 = sbr.rel (%p119) target = $region12
    $region11: #{cnn_block_forward.2} parent=5 // pred_region
      %s123 = ssub.s32 %s10, 1
      // Predicated region
      $region13: #{cnn_block_forward.2} parent=11 // pred_check
        %p124 = pneg %p57
      $region14: #{cnn_block_forward.2} parent=11 // pred_check_branch
        %126 = sbr.rel (%p124) target = $region16
      $region15: #{cnn_block_forward.2} parent=11 // pred_region
        _
      $region16: #{cnn_block_forward.2} parent=11 // pred_fallthru
        _
    $region12: #{cnn_block_forward.2} parent=5 // pred_fallthru
      _
    %p127 = scmp.lt.s32.totalorder %s10, 2
    // Predicated region
    $region17: #{cnn_block_forward.2} parent=5 // pred_check
      %p128 = pneg %p127
    $region18: #{cnn_block_forward.2} parent=5 // pred_check_branch
      %130 = sbr.rel (%p128) target = $region20
    $region19: #{cnn_block_forward.2} parent=5 // pred_region
      // Predicated region
      $region21: #{cnn_block_forward.2} parent=19 // pred_check
        %p131 = pneg %p30
      $region22: #{cnn_block_forward.2} parent=19 // pred_check_branch
        %133 = sbr.rel (%p131) target = $region24
      $region23: #{cnn_block_forward.2} parent=19 // pred_region
        %p134 = scmp.lt.s32.totalorder %s10, 1
        %s135 = scalar_select %p134, %s10, 1
        %s136 = smul.addr %s135, 41
        %s137 = smul.addr %s136, 4
        %s138 = scalar_lea.vmem %s0, %s137
      $region24: #{cnn_block_forward.2} parent=19 // pred_fallthru
        _
    $region20: #{cnn_block_forward.2} parent=5 // pred_fallthru
      _
    %p139 = scmp.le.s32.totalorder 1, %s10
    %p140 = scmp.lt.s32.totalorder %s10, 3
    %p141 = pnand %p139, %p140
    %p142 = pneg %p141
    // Predicated region
    $region25: #{cnn_block_forward.2} parent=5 // pred_check
      _
    $region26: #{cnn_block_forward.2} parent=5 // pred_check_branch
      %144 = sbr.rel (%p141) target = $region28
    $region27: #{cnn_block_forward.2} parent=5 // pred_region
      %s145 = ssub.s32 %s10, 1
      %p146 = scmp.lt.s32.totalorder %s15, 1
      %s147 = scalar_select %p146, %s15, 1
      %s148 = smul.addr %s147, 41
      %s149 = smul.addr %s148, 4
      %s150 = scalar_lea.vmem %s0, %s149
      %p151 = pneg %p36
      %p152 = pneg %p33
      %p153 = pneg %p57
      %p154 = pneg %p54
      %p155 = pneg %p83
      %p156 = pneg %p80
      %p157 = scmp.lt.s32.totalorder %s15, 1
      %s158 = scalar_select %p157, %s15, 1
      %s159 = scalar_lea.vmem %s2, %s158
      %p160 = pneg %p109
      %p161 = pneg %p106
      %p162 = scmp.lt.s32.totalorder %s15, 1
      %s163 = scalar_select %p162, %s15, 1
      %s164 = scalar_lea.vmem %s3, %s163
      %p165 = scmp.lt.s32.totalorder %s15, 1
      %s166 = scalar_select %p165, %s15, 1
      %s167 = smul.addr %s166, 41
      %s168 = smul.addr %s167, 4
      %s169 = scalar_lea.vmem %s0, %s168
      %p170 = scmp.lt.s32.totalorder %s15, 1
      %s171 = scalar_select %p170, %s15, 1
      %s172 = scalar_lea.vmem %s2, %s171
      %p173 = scmp.lt.s32.totalorder %s15, 1
      %s174 = scalar_select %p173, %s15, 1
      %s175 = scalar_lea.vmem %s3, %s174
      %v177 = vld [vmem:[%s169] sm:$0xf]
      %v178 = vld [vmem:[%s169 + $0x4] sm:$0xf]
      %v179 = vld [vmem:[%s169 + $0x8] sm:$0xf]
      %v180 = vld [vmem:[%s169 + $0xc] sm:$0xf]
      %v181 = vld [vmem:[%s169 + $0x10] sm:$0xf]
      %v182 = vld [vmem:[%s169 + $0x14] sm:$0xf]
      %v183 = vld [vmem:[%s169 + $0x18] sm:$0xf]
      %v184 = vld [vmem:[%s169 + $0x1c] sm:$0xf]
      %v185 = vld [vmem:[%s169 + $0x20] sm:$0xf]
      %v186 = vld [vmem:[%s169 + $0x24] sm:$0xf]
      %v187 = vld [vmem:[%s169 + $0x28] sm:$0xf]
      %v188 = vld [vmem:[%s169 + $0x2c] sm:$0xf]
      %v189 = vld [vmem:[%s169 + $0x30] sm:$0xf]
      %v190 = vld [vmem:[%s169 + $0x34] sm:$0xf]
      %v191 = vld [vmem:[%s169 + $0x38] sm:$0xf]
      %v192 = vld [vmem:[%s169 + $0x3c] sm:$0xf]
      %v193 = vld [vmem:[%s169 + $0x40] sm:$0xf]
      %v194 = vld [vmem:[%s169 + $0x44] sm:$0xf]
      %v195 = vld [vmem:[%s169 + $0x48] sm:$0xf]
      %v196 = vld [vmem:[%s169 + $0x4c] sm:$0xf]
      %v197 = vld [vmem:[%s169 + $0x50] sm:$0xf]
      %v198 = vld [vmem:[%s169 + $0x54] sm:$0xf]
      %v199 = vld [vmem:[%s169 + $0x58] sm:$0xf]
      %v200 = vld [vmem:[%s169 + $0x5c] sm:$0xf]
      %v201 = vld [vmem:[%s169 + $0x60] sm:$0xf]
      %v202 = vld [vmem:[%s169 + $0x64] sm:$0xf]
      %v203 = vld [vmem:[%s169 + $0x68] sm:$0xf]
      %v204 = vld [vmem:[%s169 + $0x6c] sm:$0xf]
      %v205 = vld [vmem:[%s169 + $0x70] sm:$0xf]
      %v206 = vld [vmem:[%s169 + $0x74] sm:$0xf]
      %v207 = vld [vmem:[%s169 + $0x78] sm:$0xf]
      %v208 = vld [vmem:[%s169 + $0x7c] sm:$0xf]
      %v209 = vld [vmem:[%s169 + $0x80] sm:$0xf]
      %v210 = vld [vmem:[%s169 + $0x84] sm:$0xf]
      %v211 = vld [vmem:[%s169 + $0x88] sm:$0xf]
      %v212 = vld [vmem:[%s169 + $0x8c] sm:$0xf]
      %v213 = vld [vmem:[%s169 + $0x90] sm:$0xf]
      %v214 = vld [vmem:[%s169 + $0x94] sm:$0xf]
      %v215 = vld [vmem:[%s169 + $0x98] sm:$0xf]
      %v216 = vld [vmem:[%s169 + $0x9c] sm:$0xf]
      %v217 = vld [vmem:[%s169 + $0xa0] sm:$0xf]
      %v218 = vunpack.c.l.bf16 %v177
      %v219 = vunpack.c.l.bf16 %v178
      %v220 = vunpack.c.l.bf16 %v179
      %v221 = vunpack.c.l.bf16 %v180
      %v222 = vunpack.c.l.bf16 %v181
      %v223 = vunpack.c.l.bf16 %v182
      %v224 = vunpack.c.l.bf16 %v183
      %v225 = vunpack.c.l.bf16 %v184
      %v226 = vunpack.c.l.bf16 %v185
      %v227 = vunpack.c.l.bf16 %v186
      %v228 = vunpack.c.l.bf16 %v187
      %v229 = vunpack.c.l.bf16 %v188
      %v230 = vunpack.c.l.bf16 %v189
      %v231 = vunpack.c.l.bf16 %v190
      %v232 = vunpack.c.l.bf16 %v191
      %v233 = vunpack.c.l.bf16 %v192
      %v234 = vunpack.c.l.bf16 %v193
      %v235 = vunpack.c.l.bf16 %v194
      %v236 = vunpack.c.l.bf16 %v195
      %v237 = vunpack.c.l.bf16 %v196
      %v238 = vunpack.c.l.bf16 %v197
      %v239 = vunpack.c.l.bf16 %v198
      %v240 = vunpack.c.l.bf16 %v199
      %v241 = vunpack.c.l.bf16 %v200
      %v242 = vunpack.c.l.bf16 %v201
      %v243 = vunpack.c.l.bf16 %v202
      %v244 = vunpack.c.l.bf16 %v203
      %v245 = vunpack.c.l.bf16 %v204
      %v246 = vunpack.c.l.bf16 %v205
      %v247 = vunpack.c.l.bf16 %v206
      %v248 = vunpack.c.l.bf16 %v207
      %v249 = vunpack.c.l.bf16 %v208
      %v250 = vunpack.c.l.bf16 %v209
      %v251 = vunpack.c.l.bf16 %v210
      %v252 = vunpack.c.l.bf16 %v211
      %v253 = vunpack.c.l.bf16 %v212
      %v254 = vunpack.c.l.bf16 %v213
      %v255 = vunpack.c.l.bf16 %v214
      %v256 = vunpack.c.l.bf16 %v215
      %v257 = vunpack.c.l.bf16 %v216
      %v258 = vunpack.c.l.bf16 %v217
      %v259 = vpack.c.bf16 %v219, %v218
      %v260 = vpack.c.bf16 %v221, %v220
      %v261 = vpack.c.bf16 %v223, %v222
      %v262 = vpack.c.bf16 %v225, %v224
      %v263 = vpack.c.bf16 %v227, %v226
      %v264 = vpack.c.bf16 %v229, %v228
      %v265 = vpack.c.bf16 %v231, %v230
      %v266 = vpack.c.bf16 %v233, %v232
      %v267 = vpack.c.bf16 %v235, %v234
      %v268 = vpack.c.bf16 %v237, %v236
      %v269 = vpack.c.bf16 %v239, %v238
      %v270 = vpack.c.bf16 %v241, %v240
      %v271 = vpack.c.bf16 %v243, %v242
      %v272 = vpack.c.bf16 %v245, %v244
      %v273 = vpack.c.bf16 %v247, %v246
      %v274 = vpack.c.bf16 %v249, %v248
      %v275 = vpack.c.bf16 %v251, %v250
      %v276 = vpack.c.bf16 %v253, %v252
      %v277 = vld [vmem:[%s1] sm:$0x3]
      %v278 = vpack.c.bf16 %v254, %v254
      %s279 = scalar_lea.vmem %s1, 2
      %v280 = vld [vmem:[%s279] sm:$0x3]
      %vm281 = vsmask.f32 7424
      %v283 = vshrl.u32 %v259, 16
      %v285 = vshll.u32 %v259, 16
      %v287 = vrot.slane %v285, 1
      %v288 = vor.u32 %v283, %v287
      %v290 = vshll.u32 %v260, 16
      %v292 = vrot.slane %v290, 1
      %v293 = vsel %vm281, %v288, %v292
      %v294 = vshrl.u32 %v260, 16
      %v296 = vor.u32 %v294, %v292
      %v298 = vshll.u32 %v261, 16
      %v300 = vrot.slane %v298, 1
      %v301 = vsel %vm281, %v296, %v300
      %v302 = vshrl.u32 %v261, 16
      %v304 = vor.u32 %v302, %v300
      %v306 = vshll.u32 %v262, 16
      %v308 = vrot.slane %v306, 1
      %v309 = vsel %vm281, %v304, %v308
      %v310 = vshrl.u32 %v262, 16
      %v312 = vor.u32 %v310, %v308
      %v314 = vshll.u32 %v263, 16
      %v316 = vrot.slane %v314, 1
      %v317 = vsel %vm281, %v312, %v316
      %v318 = vshrl.u32 %v263, 16
      %v320 = vor.u32 %v318, %v316
      %v322 = vshll.u32 %v264, 16
      %v324 = vrot.slane %v322, 1
      %v325 = vsel %vm281, %v320, %v324
      %v326 = vshrl.u32 %v264, 16
      %v328 = vor.u32 %v326, %v324
      %v330 = vshll.u32 %v265, 16
      %v332 = vrot.slane %v330, 1
      %v333 = vsel %vm281, %v328, %v332
      %v334 = vshrl.u32 %v265, 16
      %v336 = vor.u32 %v334, %v332
      %v338 = vshll.u32 %v266, 16
      %v340 = vrot.slane %v338, 1
      %v341 = vsel %vm281, %v336, %v340
      %v342 = vshrl.u32 %v266, 16
      %v344 = vor.u32 %v342, %v340
      %v346 = vshll.u32 %v267, 16
      %v348 = vrot.slane %v346, 1
      %v349 = vsel %vm281, %v344, %v348
      %v350 = vshrl.u32 %v267, 16
      %v352 = vor.u32 %v350, %v348
      %v354 = vshll.u32 %v268, 16
      %v356 = vrot.slane %v354, 1
      %v357 = vsel %vm281, %v352, %v356
      %v358 = vshrl.u32 %v268, 16
      %v360 = vor.u32 %v358, %v356
      %v362 = vshll.u32 %v269, 16
      %v364 = vrot.slane %v362, 1
      %v365 = vsel %vm281, %v360, %v364
      %v366 = vshrl.u32 %v269, 16
      %v368 = vor.u32 %v366, %v364
      %v370 = vshll.u32 %v270, 16
      %v372 = vrot.slane %v370, 1
      %v373 = vsel %vm281, %v368, %v372
      %v374 = vshrl.u32 %v270, 16
      %v376 = vor.u32 %v374, %v372
      %v378 = vshll.u32 %v271, 16
      %v380 = vrot.slane %v378, 1
      %v381 = vsel %vm281, %v376, %v380
      %v382 = vshrl.u32 %v271, 16
      %v384 = vor.u32 %v382, %v380
      %v386 = vshll.u32 %v272, 16
      %v388 = vrot.slane %v386, 1
      %v389 = vsel %vm281, %v384, %v388
      %v390 = vshrl.u32 %v272, 16
      %v392 = vor.u32 %v390, %v388
      %v394 = vshll.u32 %v273, 16
      %v396 = vrot.slane %v394, 1
      %v397 = vsel %vm281, %v392, %v396
      %v398 = vshrl.u32 %v273, 16
      %v400 = vor.u32 %v398, %v396
      %v402 = vshll.u32 %v274, 16
      %v404 = vrot.slane %v402, 1
      %v405 = vsel %vm281, %v400, %v404
      %v406 = vshrl.u32 %v274, 16
      %v408 = vor.u32 %v406, %v404
      %v410 = vshll.u32 %v275, 16
      %v412 = vrot.slane %v410, 1
      %v413 = vsel %vm281, %v408, %v412
      %v414 = vshrl.u32 %v275, 16
      %v416 = vor.u32 %v414, %v412
      %v418 = vshll.u32 %v276, 16
      %v420 = vrot.slane %v418, 1
      %v421 = vsel %vm281, %v416, %v420
      %v422 = vshrl.u32 %v276, 16
      %v424 = vor.u32 %v422, %v420
      %v426 = vshll.u32 %v278, 16
      %v428 = vrot.slane %v426, 1
      %v429 = vsel %vm281, %v424, %v428
      %vm430 = vcmask 31744
      %v432 = vsel %vm430, %v293, 0
      %v435 = vsel %vm430, %v301, 0
      %v438 = vsel %vm430, %v309, 0
      %v441 = vsel %vm430, %v317, 0
      %v444 = vsel %vm430, %v325, 0
      %v447 = vsel %vm430, %v333, 0
      %v450 = vsel %vm430, %v341, 0
      %v453 = vsel %vm430, %v349, 0
      %v456 = vsel %vm430, %v357, 0
      %v459 = vsel %vm430, %v365, 0
      %v462 = vsel %vm430, %v373, 0
      %v465 = vsel %vm430, %v381, 0
      %v468 = vsel %vm430, %v389, 0
      %v471 = vsel %vm430, %v397, 0
      %v474 = vsel %vm430, %v405, 0
      %v477 = vsel %vm430, %v413, 0
      %v480 = vsel %vm430, %v421, 0
      %v483 = vsel %vm430, %v429, 0
      %vm485 = vcmask 1041408
      %v487 = vsel %vm485, %v280, 0
      %489 = vmatprep.subr.bf16.mxu0 0
      %490 = vmatpush1.bf16.msra.mxu0 %v487
      %491 = vmatprep.subr.bf16.mxu0 0
      %492 = vmatpush1.bf16.msra.mxu0 0
      %493 = vmatprep.subr.bf16.mxu0 0
      %494 = vmatpush1.bf16.msra.mxu0 0
      %495 = vmatprep.subr.bf16.mxu0 0
      %496 = vmatpush1.bf16.msra.mxu0 0
      %497 = vmatprep.subr.bf16.mxu0 0
      %498 = vmatpush1.bf16.msra.mxu0 0
      %499 = vmatprep.subr.bf16.mxu0 0
      %500 = vmatpush1.bf16.msra.mxu0 0
      %501 = vmatprep.subr.bf16.mxu0 0
      %502 = vmatpush1.bf16.msra.mxu0 0
      %503 = vmatprep.subr.bf16.mxu0 0
      %504 = vmatpush1.bf16.msra.mxu0 0
      %505 = vmatprep.subr.bf16.mxu0 0
      %506 = vmatpush1.bf16.msra.mxu0 0
      %507 = vmatprep.subr.bf16.mxu0 0
      %508 = vmatpush1.bf16.msra.mxu0 0
      %509 = vmatprep.subr.bf16.mxu0 0
      %510 = vmatpush1.bf16.msra.mxu0 0
      %511 = vmatprep.subr.bf16.mxu0 0
      %512 = vmatpush1.bf16.msra.mxu0 0
      %513 = vmatprep.subr.bf16.mxu0 0
      %514 = vmatpush1.bf16.msra.mxu0 0
      %515 = vmatprep.subr.bf16.mxu0 0
      %516 = vmatpush1.bf16.msra.mxu0 0
      %517 = vmatprep.subr.bf16.mxu0 0
      %518 = vmatpush1.bf16.msra.mxu0 0
      %519 = vmatprep.subr.bf16.mxu0 0
      %520 = vmatpush1.bf16.msra.mxu0 0
      %521 = vmatprep.mubr.bf16.mxu0 0
      %522 = vmatmul.mubr.bf16.gmra.mrb[0].mxu0 %v432
      %v523 = vpop.f32.mrb[0].mxu0
      %v524 = vadd.f32 0.0, %v523
      %v525 = vpop.f32.mrb[0].mxu0
      %v526 = vpop.f32.mrb[0].mxu0
      %v527 = vadd.f32 0.0, %v526
      %v528 = vpop.f32.mrb[0].mxu0
      %529 = vmatprep.mubr.bf16.mxu0 0
      %530 = vmatmul.mubr.bf16.gmra.mrb[0].mxu0 %v435
      %v531 = vpop.f32.mrb[0].mxu0
      %v532 = vadd.f32 0.0, %v531
      %v533 = vpop.f32.mrb[0].mxu0
      %v534 = vpop.f32.mrb[0].mxu0
      %v535 = vadd.f32 0.0, %v534
      %v536 = vpop.f32.mrb[0].mxu0
      %537 = vmatprep.mubr.bf16.mxu0 0
      %538 = vmatmul.mubr.bf16.gmra.mrb[0].mxu0 %v438
      %v539 = vpop.f32.mrb[0].mxu0
      %v540 = vadd.f32 0.0, %v539
      %v541 = vpop.f32.mrb[0].mxu0
      %v542 = vpop.f32.mrb[0].mxu0
      %v543 = vadd.f32 0.0, %v542
      %v544 = vpop.f32.mrb[0].mxu0
      %545 = vmatprep.mubr.bf16.mxu0 0
      %546 = vmatmul.mubr.bf16.gmra.mrb[0].mxu0 %v441
      %v547 = vpop.f32.mrb[0].mxu0
      %v548 = vadd.f32 0.0, %v547
      %v549 = vpop.f32.mrb[0].mxu0
      %v550 = vpop.f32.mrb[0].mxu0
      %v551 = vadd.f32 0.0, %v550
      %v552 = vpop.f32.mrb[0].mxu0
      %553 = vmatprep.mubr.bf16.mxu0 0
      %554 = vmatmul.mubr.bf16.gmra.mrb[0].mxu0 %v444
      %v555 = vpop.f32.mrb[0].mxu0
      %v556 = vadd.f32 0.0, %v555
      %v557 = vpop.f32.mrb[0].mxu0
      %v558 = vpop.f32.mrb[0].mxu0
      %v559 = vadd.f32 0.0, %v558
      %v560 = vpop.f32.mrb[0].mxu0
      %561 = vmatprep.mubr.bf16.mxu0 0
      %562 = vmatmul.mubr.bf16.gmra.mrb[0].mxu0 %v447
      %v563 = vpop.f32.mrb[0].mxu0
      %v564 = vadd.f32 0.0, %v563
      %v565 = vpop.f32.mrb[0].mxu0
      %v566 = vpop.f32.mrb[0].mxu0
      %v567 = vadd.f32 0.0, %v566
      %v568 = vpop.f32.mrb[0].mxu0
      %569 = vmatprep.mubr.bf16.mxu0 0
      %570 = vmatmul.mubr.bf16.gmra.mrb[0].mxu0 %v450
      %v571 = vpop.f32.mrb[0].mxu0
      %v572 = vadd.f32 0.0, %v571
      %v573 = vpop.f32.mrb[0].mxu0
      %v574 = vpop.f32.mrb[0].mxu0
      %v575 = vadd.f32 0.0, %v574
      %v576 = vpop.f32.mrb[0].mxu0
      %577 = vmatprep.mubr.bf16.mxu0 0
      %578 = vmatmul.mubr.bf16.gmra.mrb[0].mxu0 %v453
      %v579 = vpop.f32.mrb[0].mxu0
      %v580 = vadd.f32 0.0, %v579
      %v581 = vpop.f32.mrb[0].mxu0
      %v582 = vpop.f32.mrb[0].mxu0
      %v583 = vadd.f32 0.0, %v582
      %v584 = vpop.f32.mrb[0].mxu0
      %585 = vmatprep.mubr.bf16.mxu0 0
      %586 = vmatmul.mubr.bf16.gmra.mrb[0].mxu0 %v456
      %v587 = vpop.f32.mrb[0].mxu0
      %v588 = vadd.f32 0.0, %v587
      %v589 = vpop.f32.mrb[0].mxu0
      %v590 = vpop.f32.mrb[0].mxu0
      %v591 = vadd.f32 0.0, %v590
      %v592 = vpop.f32.mrb[0].mxu0
      %593 = vmatprep.mubr.bf16.mxu0 0
      %594 = vmatmul.mubr.bf16.gmra.mrb[0].mxu0 %v459
      %v595 = vpop.f32.mrb[0].mxu0
      %v596 = vadd.f32 0.0, %v595
      %v597 = vpop.f32.mrb[0].mxu0
      %v598 = vpop.f32.mrb[0].mxu0
      %v599 = vadd.f32 0.0, %v598
      %v600 = vpop.f32.mrb[0].mxu0
      %601 = vmatprep.mubr.bf16.mxu0 0
      %602 = vmatmul.mubr.bf16.gmra.mrb[0].mxu0 %v462
      %v603 = vpop.f32.mrb[0].mxu0
      %v604 = vadd.f32 0.0, %v603
      %v605 = vpop.f32.mrb[0].mxu0
      %v606 = vpop.f32.mrb[0].mxu0
      %v607 = vadd.f32 0.0, %v606
      %v608 = vpop.f32.mrb[0].mxu0
      %609 = vmatprep.mubr.bf16.mxu0 0
      %610 = vmatmul.mubr.bf16.gmra.mrb[0].mxu0 %v465
      %v611 = vpop.f32.mrb[0].mxu0
      %v612 = vadd.f32 0.0, %v611
      %v613 = vpop.f32.mrb[0].mxu0
      %v614 = vpop.f32.mrb[0].mxu0
      %v615 = vadd.f32 0.0, %v614
      %v616 = vpop.f32.mrb[0].mxu0
      %617 = vmatprep.mubr.bf16.mxu0 0
      %618 = vmatmul.mubr.bf16.gmra.mrb[0].mxu0 %v468
      %v619 = vpop.f32.mrb[0].mxu0
      %v620 = vadd.f32 0.0, %v619
      %v621 = vpop.f32.mrb[0].mxu0
      %v622 = vpop.f32.mrb[0].mxu0
      %v623 = vadd.f32 0.0, %v622
      %v624 = vpop.f32.mrb[0].mxu0
      %625 = vmatprep.mubr.bf16.mxu0 0
      %626 = vmatmul.mubr.bf16.gmra.mrb[0].mxu0 %v471
      %v627 = vpop.f32.mrb[0].mxu0
      %v628 = vadd.f32 0.0, %v627
      %v629 = vpop.f32.mrb[0].mxu0
      %v630 = vpop.f32.mrb[0].mxu0
      %v631 = vadd.f32 0.0, %v630
      %v632 = vpop.f32.mrb[0].mxu0
      %633 = vmatprep.mubr.bf16.mxu0 0
      %634 = vmatmul.mubr.bf16.gmra.mrb[0].mxu0 %v474
      %v635 = vpop.f32.mrb[0].mxu0
      %v636 = vadd.f32 0.0, %v635
      %v637 = vpop.f32.mrb[0].mxu0
      %v638 = vpop.f32.mrb[0].mxu0
      %v639 = vadd.f32 0.0, %v638
      %v640 = vpop.f32.mrb[0].mxu0
      %641 = vmatprep.mubr.bf16.mxu0 0
      %642 = vmatmul.mubr.bf16.gmra.mrb[0].mxu0 %v477
      %v643 = vpop.f32.mrb[0].mxu0
      %v644 = vadd.f32 0.0, %v643
      %v645 = vpop.f32.mrb[0].mxu0
      %v646 = vpop.f32.mrb[0].mxu0
      %v647 = vadd.f32 0.0, %v646
      %v648 = vpop.f32.mrb[0].mxu0
      %649 = vmatprep.mubr.bf16.mxu0 0
      %650 = vmatmul.mubr.bf16.gmra.mrb[0].mxu0 %v480
      %v651 = vpop.f32.mrb[0].mxu0
      %v652 = vadd.f32 0.0, %v651
      %v653 = vpop.f32.mrb[0].mxu0
      %v654 = vpop.f32.mrb[0].mxu0
      %v655 = vadd.f32 0.0, %v654
      %v656 = vpop.f32.mrb[0].mxu0
      %657 = vmatprep.mubr.bf16.mxu0 0
      %658 = vmatmul.mubr.bf16.gmra.mrb[0].mxu0 %v483
      %v659 = vpop.f32.mrb[0].mxu0
      %v660 = vadd.f32 0.0, %v659
      %v661 = vpop.f32.mrb[0].mxu0
      %v662 = vpop.f32.mrb[0].mxu0
      %v663 = vadd.f32 0.0, %v662
      %v664 = vpop.f32.mrb[0].mxu0
      %665 = vdwg.mxu0
      %v666 = vsel %vm430, %v259, 0
      %v668 = vsel %vm430, %v260, 0
      %v670 = vsel %vm430, %v261, 0
      %v672 = vsel %vm430, %v262, 0
      %v674 = vsel %vm430, %v263, 0
      %v676 = vsel %vm430, %v264, 0
      %v678 = vsel %vm430, %v265, 0
      %v680 = vsel %vm430, %v266, 0
      %v682 = vsel %vm430, %v267, 0
      %v684 = vsel %vm430, %v268, 0
      %v686 = vsel %vm430, %v269, 0
      %v688 = vsel %vm430, %v270, 0
      %v690 = vsel %vm430, %v271, 0
      %v692 = vsel %vm430, %v272, 0
      %v694 = vsel %vm430, %v273, 0
      %v696 = vsel %vm430, %v274, 0
      %v698 = vsel %vm430, %v275, 0
      %v700 = vsel %vm430, %v276, 0
      %v703 = vsel %vm485, %v277, 0
      %705 = vmatprep.subr.bf16.mxu0 0
      %706 = vmatpush1.bf16.msra.mxu0 %v703
      %707 = vmatprep.subr.bf16.mxu0 0
      %708 = vmatpush1.bf16.msra.mxu0 0
      %709 = vmatprep.subr.bf16.mxu0 0
      %710 = vmatpush1.bf16.msra.mxu0 0
      %711 = vmatprep.subr.bf16.mxu0 0
      %712 = vmatpush1.bf16.msra.mxu0 0
      %713 = vmatprep.subr.bf16.mxu0 0
      %714 = vmatpush1.bf16.msra.mxu0 0
      %715 = vmatprep.subr.bf16.mxu0 0
      %716 = vmatpush1.bf16.msra.mxu0 0
      %717 = vmatprep.subr.bf16.mxu0 0
      %718 = vmatpush1.bf16.msra.mxu0 0
      %719 = vmatprep.subr.bf16.mxu0 0
      %720 = vmatpush1.bf16.msra.mxu0 0
      %721 = vmatprep.subr.bf16.mxu0 0
      %722 = vmatpush1.bf16.msra.mxu0 0
      %723 = vmatprep.subr.bf16.mxu0 0
      %724 = vmatpush1.bf16.msra.mxu0 0
      %725 = vmatprep.subr.bf16.mxu0 0
      %726 = vmatpush1.bf16.msra.mxu0 0
      %727 = vmatprep.subr.bf16.mxu0 0
      %728 = vmatpush1.bf16.msra.mxu0 0
      %729 = vmatprep.subr.bf16.mxu0 0
      %730 = vmatpush1.bf16.msra.mxu0 0
      %731 = vmatprep.subr.bf16.mxu0 0
      %732 = vmatpush1.bf16.msra.mxu0 0
      %733 = vmatprep.subr.bf16.mxu0 0
      %734 = vmatpush1.bf16.msra.mxu0 0
      %735 = vmatprep.subr.bf16.mxu0 0
      %736 = vmatpush1.bf16.msra.mxu0 0
      %737 = vmatprep.mubr.bf16.mxu0 0
      %738 = vmatmul.mubr.bf16.gmra.mrb[0].mxu0 %v666
      %v739 = vpop.f32.mrb[0].mxu0
      %v740 = vadd.f32 %v524, %v739
      %v741 = vpop.f32.mrb[0].mxu0
      %v742 = vpop.f32.mrb[0].mxu0
      %v743 = vadd.f32 %v527, %v742
      %v744 = vpop.f32.mrb[0].mxu0
      %745 = vmatprep.mubr.bf16.mxu0 0
      %746 = vmatmul.mubr.bf16.gmra.mrb[0].mxu0 %v668
      %v747 = vpop.f32.mrb[0].mxu0
      %v748 = vadd.f32 %v532, %v747
      %v749 = vpop.f32.mrb[0].mxu0
      %v750 = vpop.f32.mrb[0].mxu0
      %v751 = vadd.f32 %v535, %v750
      %v752 = vpop.f32.mrb[0].mxu0
      %753 = vmatprep.mubr.bf16.mxu0 0
      %754 = vmatmul.mubr.bf16.gmra.mrb[0].mxu0 %v670
      %v755 = vpop.f32.mrb[0].mxu0
      %v756 = vadd.f32 %v540, %v755
      %v757 = vpop.f32.mrb[0].mxu0
      %v758 = vpop.f32.mrb[0].mxu0
      %v759 = vadd.f32 %v543, %v758
      %v760 = vpop.f32.mrb[0].mxu0
      %761 = vmatprep.mubr.bf16.mxu0 0
      %762 = vmatmul.mubr.bf16.gmra.mrb[0].mxu0 %v672
      %v763 = vpop.f32.mrb[0].mxu0
      %v764 = vadd.f32 %v548, %v763
      %v765 = vpop.f32.mrb[0].mxu0
      %v766 = vpop.f32.mrb[0].mxu0
      %v767 = vadd.f32 %v551, %v766
      %v768 = vpop.f32.mrb[0].mxu0
      %769 = vmatprep.mubr.bf16.mxu0 0
      %770 = vmatmul.mubr.bf16.gmra.mrb[0].mxu0 %v674
      %v771 = vpop.f32.mrb[0].mxu0
      %v772 = vadd.f32 %v556, %v771
      %v773 = vpop.f32.mrb[0].mxu0
      %v774 = vpop.f32.mrb[0].mxu0
      %v775 = vadd.f32 %v559, %v774
      %v776 = vpop.f32.mrb[0].mxu0
      %777 = vmatprep.mubr.bf16.mxu0 0
      %778 = vmatmul.mubr.bf16.gmra.mrb[0].mxu0 %v676
      %v779 = vpop.f32.mrb[0].mxu0
      %v780 = vadd.f32 %v564, %v779
      %v781 = vpop.f32.mrb[0].mxu0
      %v782 = vpop.f32.mrb[0].mxu0
      %v783 = vadd.f32 %v567, %v782
      %v784 = vpop.f32.mrb[0].mxu0
      %785 = vmatprep.mubr.bf16.mxu0 0
      %786 = vmatmul.mubr.bf16.gmra.mrb[0].mxu0 %v678
      %v787 = vpop.f32.mrb[0].mxu0
      %v788 = vadd.f32 %v572, %v787
      %v789 = vpop.f32.mrb[0].mxu0
      %v790 = vpop.f32.mrb[0].mxu0
      %v791 = vadd.f32 %v575, %v790
      %v792 = vpop.f32.mrb[0].mxu0
      %793 = vmatprep.mubr.bf16.mxu0 0
      %794 = vmatmul.mubr.bf16.gmra.mrb[0].mxu0 %v680
      %v795 = vpop.f32.mrb[0].mxu0
      %v796 = vadd.f32 %v580, %v795
      %v797 = vpop.f32.mrb[0].mxu0
      %v798 = vpop.f32.mrb[0].mxu0
      %v799 = vadd.f32 %v583, %v798
      %v800 = vpop.f32.mrb[0].mxu0
      %801 = vmatprep.mubr.bf16.mxu0 0
      %802 = vmatmul.mubr.bf16.gmra.mrb[0].mxu0 %v682
      %v803 = vpop.f32.mrb[0].mxu0
      %v804 = vadd.f32 %v588, %v803
      %v805 = vpop.f32.mrb[0].mxu0
      %v806 = vpop.f32.mrb[0].mxu0
      %v807 = vadd.f32 %v591, %v806
      %v808 = vpop.f32.mrb[0].mxu0
      %809 = vmatprep.mubr.bf16.mxu0 0
      %810 = vmatmul.mubr.bf16.gmra.mrb[0].mxu0 %v684
      %v811 = vpop.f32.mrb[0].mxu0
      %v812 = vadd.f32 %v596, %v811
      %v813 = vpop.f32.mrb[0].mxu0
      %v814 = vpop.f32.mrb[0].mxu0
      %v815 = vadd.f32 %v599, %v814
      %v816 = vpop.f32.mrb[0].mxu0
      %817 = vmatprep.mubr.bf16.mxu0 0
      %818 = vmatmul.mubr.bf16.gmra.mrb[0].mxu0 %v686
      %v819 = vpop.f32.mrb[0].mxu0
      %v820 = vadd.f32 %v604, %v819
      %v821 = vpop.f32.mrb[0].mxu0
      %v822 = vpop.f32.mrb[0].mxu0
      %v823 = vadd.f32 %v607, %v822
      %v824 = vpop.f32.mrb[0].mxu0
      %825 = vmatprep.mubr.bf16.mxu0 0
      %826 = vmatmul.mubr.bf16.gmra.mrb[0].mxu0 %v688
      %v827 = vpop.f32.mrb[0].mxu0
      %v828 = vadd.f32 %v612, %v827
      %v829 = vpop.f32.mrb[0].mxu0
      %v830 = vpop.f32.mrb[0].mxu0
      %v831 = vadd.f32 %v615, %v830
      %v832 = vpop.f32.mrb[0].mxu0
      %833 = vmatprep.mubr.bf16.mxu0 0
      %834 = vmatmul.mubr.bf16.gmra.mrb[0].mxu0 %v690
      %v835 = vpop.f32.mrb[0].mxu0
      %v836 = vadd.f32 %v620, %v835
      %v837 = vpop.f32.mrb[0].mxu0
      %v838 = vpop.f32.mrb[0].mxu0
      %v839 = vadd.f32 %v623, %v838
      %v840 = vpop.f32.mrb[0].mxu0
      %841 = vmatprep.mubr.bf16.mxu0 0
      %842 = vmatmul.mubr.bf16.gmra.mrb[0].mxu0 %v692
      %v843 = vpop.f32.mrb[0].mxu0
      %v844 = vadd.f32 %v628, %v843
      %v845 = vpop.f32.mrb[0].mxu0
      %v846 = vpop.f32.mrb[0].mxu0
      %v847 = vadd.f32 %v631, %v846
      %v848 = vpop.f32.mrb[0].mxu0
      %849 = vmatprep.mubr.bf16.mxu0 0
      %850 = vmatmul.mubr.bf16.gmra.mrb[0].mxu0 %v694
      %v851 = vpop.f32.mrb[0].mxu0
      %v852 = vadd.f32 %v636, %v851
      %v853 = vpop.f32.mrb[0].mxu0
      %v854 = vpop.f32.mrb[0].mxu0
      %v855 = vadd.f32 %v639, %v854
      %v856 = vpop.f32.mrb[0].mxu0
      %857 = vmatprep.mubr.bf16.mxu0 0
      %858 = vmatmul.mubr.bf16.gmra.mrb[0].mxu0 %v696
      %v859 = vpop.f32.mrb[0].mxu0
      %v860 = vadd.f32 %v644, %v859
      %v861 = vpop.f32.mrb[0].mxu0
      %v862 = vpop.f32.mrb[0].mxu0
      %v863 = vadd.f32 %v647, %v862
      %v864 = vpop.f32.mrb[0].mxu0
      %865 = vmatprep.mubr.bf16.mxu0 0
      %866 = vmatmul.mubr.bf16.gmra.mrb[0].mxu0 %v698
      %v867 = vpop.f32.mrb[0].mxu0
      %v868 = vadd.f32 %v652, %v867
      %v869 = vpop.f32.mrb[0].mxu0
      %v870 = vpop.f32.mrb[0].mxu0
      %v871 = vadd.f32 %v655, %v870
      %v872 = vpop.f32.mrb[0].mxu0
      %873 = vmatprep.mubr.bf16.mxu0 0
      %874 = vmatmul.mubr.bf16.gmra.mrb[0].mxu0 %v700
      %v875 = vpop.f32.mrb[0].mxu0
      %v876 = vadd.f32 %v660, %v875
      %v877 = vpop.f32.mrb[0].mxu0
      %v878 = vpop.f32.mrb[0].mxu0
      %v879 = vadd.f32 %v663, %v878
      %v880 = vpop.f32.mrb[0].mxu0
      %881 = vdwg.mxu0
      %s882 = scalar_lea.vmem %s1, 4
      %v883 = vld [vmem:[%s882] sm:$0x3]
      %vm903 = vcmask 1046528
      %v904 = vrot.slane %v259, 1
      %v905 = vrot.slane %v260, 1
      %v906 = vsel %vm903, %v904, %v905
      %v907 = vrot.slane %v261, 1
      %v908 = vsel %vm903, %v905, %v907
      %v909 = vrot.slane %v262, 1
      %v910 = vsel %vm903, %v907, %v909
      %v911 = vrot.slane %v263, 1
      %v912 = vsel %vm903, %v909, %v911
      %v913 = vrot.slane %v264, 1
      %v914 = vsel %vm903, %v911, %v913
      %v915 = vrot.slane %v265, 1
      %v916 = vsel %vm903, %v913, %v915
      %v917 = vrot.slane %v266, 1
      %v918 = vsel %vm903, %v915, %v917
      %v919 = vrot.slane %v267, 1
      %v920 = vsel %vm903, %v917, %v919
      %v921 = vrot.slane %v268, 1
      %v922 = vsel %vm903, %v919, %v921
      %v923 = vrot.slane %v269, 1
      %v924 = vsel %vm903, %v921, %v923
      %v925 = vrot.slane %v270, 1
      %v926 = vsel %vm903, %v923, %v925
      %v927 = vrot.slane %v271, 1
      %v928 = vsel %vm903, %v925, %v927
      %v929 = vrot.slane %v272, 1
      %v930 = vsel %vm903, %v927, %v929
      %v931 = vrot.slane %v273, 1
      %v932 = vsel %vm903, %v929, %v931
      %v933 = vrot.slane %v274, 1
      %v934 = vsel %vm903, %v931, %v933
      %v935 = vrot.slane %v275, 1
      %v936 = vsel %vm903, %v933, %v935
      %v937 = vrot.slane %v276, 1
      %v938 = vsel %vm903, %v935, %v937
      %v939 = vrot.slane %v278, 1
      %v940 = vsel %vm903, %v937, %v939
      %v942 = vsel %vm430, %v906, 0
      %v945 = vsel %vm430, %v908, 0
      %v948 = vsel %vm430, %v910, 0
      %v951 = vsel %vm430, %v912, 0
      %v954 = vsel %vm430, %v914, 0
      %v957 = vsel %vm430, %v916, 0
      %v960 = vsel %vm430, %v918, 0
      %v963 = vsel %vm430, %v920, 0
      %v966 = vsel %vm430, %v922, 0
      %v969 = vsel %vm430, %v924, 0
      %v972 = vsel %vm430, %v926, 0
      %v975 = vsel %vm430, %v928, 0
      %v978 = vsel %vm430, %v930, 0
      %v981 = vsel %vm430, %v932, 0
      %v984 = vsel %vm430, %v934, 0
      %v987 = vsel %vm430, %v936, 0
      %v990 = vsel %vm430, %v938, 0
      %v993 = vsel %vm430, %v940, 0
      %v996 = vsel %vm485, %v883, 0
      %998 = vmatprep.subr.bf16.mxu0 0
      %999 = vmatpush1.bf16.msra.mxu0 %v996
      %1000 = vmatprep.subr.bf16.mxu0 0
      %1001 = vmatpush1.bf16.msra.mxu0 0
      %1002 = vmatprep.subr.bf16.mxu0 0
      %1003 = vmatpush1.bf16.msra.mxu0 0
      %1004 = vmatprep.subr.bf16.mxu0 0
      %1005 = vmatpush1.bf16.msra.mxu0 0
      %1006 = vmatprep.subr.bf16.mxu0 0
      %1007 = vmatpush1.bf16.msra.mxu0 0
      %1008 = vmatprep.subr.bf16.mxu0 0
      %1009 = vmatpush1.bf16.msra.mxu0 0
      %1010 = vmatprep.subr.bf16.mxu0 0
      %1011 = vmatpush1.bf16.msra.mxu0 0
      %1012 = vmatprep.subr.bf16.mxu0 0
      %1013 = vmatpush1.bf16.msra.mxu0 0
      %1014 = vmatprep.subr.bf16.mxu0 0
      %1015 = vmatpush1.bf16.msra.mxu0 0
      %1016 = vmatprep.subr.bf16.mxu0 0
      %1017 = vmatpush1.bf16.msra.mxu0 0
      %1018 = vmatprep.subr.bf16.mxu0 0
      %1019 = vmatpush1.bf16.msra.mxu0 0
      %1020 = vmatprep.subr.bf16.mxu0 0
      %1021 = vmatpush1.bf16.msra.mxu0 0
      %1022 = vmatprep.subr.bf16.mxu0 0
      %1023 = vmatpush1.bf16.msra.mxu0 0
      %1024 = vmatprep.subr.bf16.mxu0 0
      %1025 = vmatpush1.bf16.msra.mxu0 0
      %1026 = vmatprep.subr.bf16.mxu0 0
      %1027 = vmatpush1.bf16.msra.mxu0 0
      %1028 = vmatprep.subr.bf16.mxu0 0
      %1029 = vmatpush1.bf16.msra.mxu0 0
      %1030 = vmatprep.mubr.bf16.mxu0 0
      %1031 = vmatmul.mubr.bf16.gmra.mrb[0].mxu0 %v942
      %v1032 = vpop.f32.mrb[0].mxu0
      %v1033 = vadd.f32 0.0, %v1032
      %v1034 = vpop.f32.mrb[0].mxu0
      %v1035 = vpop.f32.mrb[0].mxu0
      %v1036 = vadd.f32 0.0, %v1035
      %v1037 = vpop.f32.mrb[0].mxu0
      %1038 = vmatprep.mubr.bf16.mxu0 0
      %1039 = vmatmul.mubr.bf16.gmra.mrb[0].mxu0 %v945
      %v1040 = vpop.f32.mrb[0].mxu0
      %v1041 = vadd.f32 0.0, %v1040
      %v1042 = vpop.f32.mrb[0].mxu0
      %v1043 = vpop.f32.mrb[0].mxu0
      %v1044 = vadd.f32 0.0, %v1043
      %v1045 = vpop.f32.mrb[0].mxu0
      %1046 = vmatprep.mubr.bf16.mxu0 0
      %1047 = vmatmul.mubr.bf16.gmra.mrb[0].mxu0 %v948
      %v1048 = vpop.f32.mrb[0].mxu0
      %v1049 = vadd.f32 0.0, %v1048
      %v1050 = vpop.f32.mrb[0].mxu0
      %v1051 = vpop.f32.mrb[0].mxu0
      %v1052 = vadd.f32 0.0, %v1051
      %v1053 = vpop.f32.mrb[0].mxu0
      %1054 = vmatprep.mubr.bf16.mxu0 0
      %1055 = vmatmul.mubr.bf16.gmra.mrb[0].mxu0 %v951
      %v1056 = vpop.f32.mrb[0].mxu0
      %v1057 = vadd.f32 0.0, %v1056
      %v1058 = vpop.f32.mrb[0].mxu0
      %v1059 = vpop.f32.mrb[0].mxu0
      %v1060 = vadd.f32 0.0, %v1059
      %v1061 = vpop.f32.mrb[0].mxu0
      %1062 = vmatprep.mubr.bf16.mxu0 0
      %1063 = vmatmul.mubr.bf16.gmra.mrb[0].mxu0 %v954
      %v1064 = vpop.f32.mrb[0].mxu0
      %v1065 = vadd.f32 0.0, %v1064
      %v1066 = vpop.f32.mrb[0].mxu0
      %v1067 = vpop.f32.mrb[0].mxu0
      %v1068 = vadd.f32 0.0, %v1067
      %v1069 = vpop.f32.mrb[0].mxu0
      %1070 = vmatprep.mubr.bf16.mxu0 0
      %1071 = vmatmul.mubr.bf16.gmra.mrb[0].mxu0 %v957
      %v1072 = vpop.f32.mrb[0].mxu0
      %v1073 = vadd.f32 0.0, %v1072
      %v1074 = vpop.f32.mrb[0].mxu0
      %v1075 = vpop.f32.mrb[0].mxu0
      %v1076 = vadd.f32 0.0, %v1075
      %v1077 = vpop.f32.mrb[0].mxu0
      %1078 = vmatprep.mubr.bf16.mxu0 0
      %1079 = vmatmul.mubr.bf16.gmra.mrb[0].mxu0 %v960
      %v1080 = vpop.f32.mrb[0].mxu0
      %v1081 = vadd.f32 0.0, %v1080
      %v1082 = vpop.f32.mrb[0].mxu0
      %v1083 = vpop.f32.mrb[0].mxu0
      %v1084 = vadd.f32 0.0, %v1083
      %v1085 = vpop.f32.mrb[0].mxu0
      %1086 = vmatprep.mubr.bf16.mxu0 0
      %1087 = vmatmul.mubr.bf16.gmra.mrb[0].mxu0 %v963
      %v1088 = vpop.f32.mrb[0].mxu0
      %v1089 = vadd.f32 0.0, %v1088
      %v1090 = vpop.f32.mrb[0].mxu0
      %v1091 = vpop.f32.mrb[0].mxu0
      %v1092 = vadd.f32 0.0, %v1091
      %v1093 = vpop.f32.mrb[0].mxu0
      %1094 = vmatprep.mubr.bf16.mxu0 0
      %1095 = vmatmul.mubr.bf16.gmra.mrb[0].mxu0 %v966
      %v1096 = vpop.f32.mrb[0].mxu0
      %v1097 = vadd.f32 0.0, %v1096
      %v1098 = vpop.f32.mrb[0].mxu0
      %v1099 = vpop.f32.mrb[0].mxu0
      %v1100 = vadd.f32 0.0, %v1099
      %v1101 = vpop.f32.mrb[0].mxu0
      %1102 = vmatprep.mubr.bf16.mxu0 0
      %1103 = vmatmul.mubr.bf16.gmra.mrb[0].mxu0 %v969
      %v1104 = vpop.f32.mrb[0].mxu0
      %v1105 = vadd.f32 0.0, %v1104
      %v1106 = vpop.f32.mrb[0].mxu0
      %v1107 = vpop.f32.mrb[0].mxu0
      %v1108 = vadd.f32 0.0, %v1107
      %v1109 = vpop.f32.mrb[0].mxu0
      %1110 = vmatprep.mubr.bf16.mxu0 0
      %1111 = vmatmul.mubr.bf16.gmra.mrb[0].mxu0 %v972
      %v1112 = vpop.f32.mrb[0].mxu0
      %v1113 = vadd.f32 0.0, %v1112
      %v1114 = vpop.f32.mrb[0].mxu0
      %v1115 = vpop.f32.mrb[0].mxu0
      %v1116 = vadd.f32 0.0, %v1115
      %v1117 = vpop.f32.mrb[0].mxu0
      %1118 = vmatprep.mubr.bf16.mxu0 0
      %1119 = vmatmul.mubr.bf16.gmra.mrb[0].mxu0 %v975
      %v1120 = vpop.f32.mrb[0].mxu0
      %v1121 = vadd.f32 0.0, %v1120
      %v1122 = vpop.f32.mrb[0].mxu0
      %v1123 = vpop.f32.mrb[0].mxu0
      %v1124 = vadd.f32 0.0, %v1123
      %v1125 = vpop.f32.mrb[0].mxu0
      %1126 = vmatprep.mubr.bf16.mxu0 0
      %1127 = vmatmul.mubr.bf16.gmra.mrb[0].mxu0 %v978
      %v1128 = vpop.f32.mrb[0].mxu0
      %v1129 = vadd.f32 0.0, %v1128
      %v1130 = vpop.f32.mrb[0].mxu0
      %v1131 = vpop.f32.mrb[0].mxu0
      %v1132 = vadd.f32 0.0, %v1131
      %v1133 = vpop.f32.mrb[0].mxu0
      %1134 = vmatprep.mubr.bf16.mxu0 0
      %1135 = vmatmul.mubr.bf16.gmra.mrb[0].mxu0 %v981
      %v1136 = vpop.f32.mrb[0].mxu0
      %v1137 = vadd.f32 0.0, %v1136
      %v1138 = vpop.f32.mrb[0].mxu0
      %v1139 = vpop.f32.mrb[0].mxu0
      %v1140 = vadd.f32 0.0, %v1139
      %v1141 = vpop.f32.mrb[0].mxu0
      %1142 = vmatprep.mubr.bf16.mxu0 0
      %1143 = vmatmul.mubr.bf16.gmra.mrb[0].mxu0 %v984
      %v1144 = vpop.f32.mrb[0].mxu0
      %v1145 = vadd.f32 0.0, %v1144
      %v1146 = vpop.f32.mrb[0].mxu0
      %v1147 = vpop.f32.mrb[0].mxu0
      %v1148 = vadd.f32 0.0, %v1147
      %v1149 = vpop.f32.mrb[0].mxu0
      %1150 = vmatprep.mubr.bf16.mxu0 0
      %1151 = vmatmul.mubr.bf16.gmra.mrb[0].mxu0 %v987
      %v1152 = vpop.f32.mrb[0].mxu0
      %v1153 = vadd.f32 0.0, %v1152
      %v1154 = vpop.f32.mrb[0].mxu0
      %v1155 = vpop.f32.mrb[0].mxu0
      %v1156 = vadd.f32 0.0, %v1155
      %v1157 = vpop.f32.mrb[0].mxu0
      %1158 = vmatprep.mubr.bf16.mxu0 0
      %1159 = vmatmul.mubr.bf16.gmra.mrb[0].mxu0 %v990
      %v1160 = vpop.f32.mrb[0].mxu0
      %v1161 = vadd.f32 0.0, %v1160
      %v1162 = vpop.f32.mrb[0].mxu0
      %v1163 = vpop.f32.mrb[0].mxu0
      %v1164 = vadd.f32 0.0, %v1163
      %v1165 = vpop.f32.mrb[0].mxu0
      %1166 = vmatprep.mubr.bf16.mxu0 0
      %1167 = vmatmul.mubr.bf16.gmra.mrb[0].mxu0 %v993
      %v1168 = vpop.f32.mrb[0].mxu0
      %v1169 = vadd.f32 0.0, %v1168
      %v1170 = vpop.f32.mrb[0].mxu0
      %v1171 = vpop.f32.mrb[0].mxu0
      %v1172 = vadd.f32 0.0, %v1171
      %v1173 = vpop.f32.mrb[0].mxu0
      %1174 = vdwg.mxu0
      %v1175 = vadd.f32 %v740, %v1033
      %v1176 = vadd.f32 %v743, %v1036
      %v1177 = vadd.f32 %v748, %v1041
      %v1178 = vadd.f32 %v751, %v1044
      %v1179 = vadd.f32 %v756, %v1049
      %v1180 = vadd.f32 %v759, %v1052
      %v1181 = vadd.f32 %v764, %v1057
      %v1182 = vadd.f32 %v767, %v1060
      %v1183 = vadd.f32 %v772, %v1065
      %v1184 = vadd.f32 %v775, %v1068
      %v1185 = vadd.f32 %v780, %v1073
      %v1186 = vadd.f32 %v783, %v1076
      %v1187 = vadd.f32 %v788, %v1081
      %v1188 = vadd.f32 %v791, %v1084
      %v1189 = vadd.f32 %v796, %v1089
      %v1190 = vadd.f32 %v799, %v1092
      %v1191 = vadd.f32 %v804, %v1097
      %v1192 = vadd.f32 %v807, %v1100
      %v1193 = vadd.f32 %v812, %v1105
      %v1194 = vadd.f32 %v815, %v1108
      %v1195 = vadd.f32 %v820, %v1113
      %v1196 = vadd.f32 %v823, %v1116
      %v1197 = vadd.f32 %v828, %v1121
      %v1198 = vadd.f32 %v831, %v1124
      %v1199 = vadd.f32 %v836, %v1129
      %v1200 = vadd.f32 %v839, %v1132
      %v1201 = vadd.f32 %v844, %v1137
      %v1202 = vadd.f32 %v847, %v1140
      %v1203 = vadd.f32 %v852, %v1145
      %v1204 = vadd.f32 %v855, %v1148
      %v1205 = vadd.f32 %v860, %v1153
      %v1206 = vadd.f32 %v863, %v1156
      %v1207 = vadd.f32 %v868, %v1161
      %v1208 = vadd.f32 %v871, %v1164
      %v1209 = vadd.f32 %v876, %v1169
      %v1210 = vadd.f32 %v879, %v1172
      %v1211 = vpack.c.bf16 %v255, %v254
      %v1212 = vpack.c.bf16 %v256, %v256
      %s1213 = scalar_lea.vmem %s1, 6
      %v1214 = vld [vmem:[%s1213] sm:$0x3]
      %v1217 = vrot.slane %v1211, 1
      %v1218 = vsel %vm903, %v937, %v1217
      %v1219 = vrot.slane %v1212, 1
      %v1220 = vsel %vm903, %v1217, %v1219
      %v1222 = vsel %vm430, %v1218, 0
      %v1225 = vsel %vm430, %v1220, 0
      %v1228 = vsel %vm485, %v1214, 0
      %1230 = vmatprep.subr.bf16.mxu0 0
      %1231 = vmatpush1.bf16.msra.mxu0 %v1228
      %1232 = vmatprep.subr.bf16.mxu0 0
      %1233 = vmatpush1.bf16.msra.mxu0 0
      %1234 = vmatprep.subr.bf16.mxu0 0
      %1235 = vmatpush1.bf16.msra.mxu0 0
      %1236 = vmatprep.subr.bf16.mxu0 0
      %1237 = vmatpush1.bf16.msra.mxu0 0
      %1238 = vmatprep.subr.bf16.mxu0 0
      %1239 = vmatpush1.bf16.msra.mxu0 0
      %1240 = vmatprep.subr.bf16.mxu0 0
      %1241 = vmatpush1.bf16.msra.mxu0 0
      %1242 = vmatprep.subr.bf16.mxu0 0
      %1243 = vmatpush1.bf16.msra.mxu0 0
      %1244 = vmatprep.subr.bf16.mxu0 0
      %1245 = vmatpush1.bf16.msra.mxu0 0
      %1246 = vmatprep.subr.bf16.mxu0 0
      %1247 = vmatpush1.bf16.msra.mxu0 0
      %1248 = vmatprep.subr.bf16.mxu0 0
      %1249 = vmatpush1.bf16.msra.mxu0 0
      %1250 = vmatprep.subr.bf16.mxu0 0
      %1251 = vmatpush1.bf16.msra.mxu0 0
      %1252 = vmatprep.subr.bf16.mxu0 0
      %1253 = vmatpush1.bf16.msra.mxu0 0
      %1254 = vmatprep.subr.bf16.mxu0 0
      %1255 = vmatpush1.bf16.msra.mxu0 0
      %1256 = vmatprep.subr.bf16.mxu0 0
      %1257 = vmatpush1.bf16.msra.mxu0 0
      %1258 = vmatprep.subr.bf16.mxu0 0
      %1259 = vmatpush1.bf16.msra.mxu0 0
      %1260 = vmatprep.subr.bf16.mxu0 0
      %1261 = vmatpush1.bf16.msra.mxu0 0
      %1262 = vmatprep.mubr.bf16.mxu0 0
      %1263 = vmatmul.mubr.bf16.gmra.mrb[0].mxu0 %v945
      %v1264 = vpop.f32.mrb[0].mxu0
      %v1265 = vadd.f32 0.0, %v1264
      %v1266 = vpop.f32.mrb[0].mxu0
      %v1267 = vpop.f32.mrb[0].mxu0
      %v1268 = vadd.f32 0.0, %v1267
      %v1269 = vpop.f32.mrb[0].mxu0
      %1270 = vmatprep.mubr.bf16.mxu0 0
      %1271 = vmatmul.mubr.bf16.gmra.mrb[0].mxu0 %v948
      %v1272 = vpop.f32.mrb[0].mxu0
      %v1273 = vadd.f32 0.0, %v1272
      %v1274 = vpop.f32.mrb[0].mxu0
      %v1275 = vpop.f32.mrb[0].mxu0
      %v1276 = vadd.f32 0.0, %v1275
      %v1277 = vpop.f32.mrb[0].mxu0
      %1278 = vmatprep.mubr.bf16.mxu0 0
      %1279 = vmatmul.mubr.bf16.gmra.mrb[0].mxu0 %v951
      %v1280 = vpop.f32.mrb[0].mxu0
      %v1281 = vadd.f32 0.0, %v1280
      %v1282 = vpop.f32.mrb[0].mxu0
      %v1283 = vpop.f32.mrb[0].mxu0
      %v1284 = vadd.f32 0.0, %v1283
      %v1285 = vpop.f32.mrb[0].mxu0
      %1286 = vmatprep.mubr.bf16.mxu0 0
      %1287 = vmatmul.mubr.bf16.gmra.mrb[0].mxu0 %v954
      %v1288 = vpop.f32.mrb[0].mxu0
      %v1289 = vadd.f32 0.0, %v1288
      %v1290 = vpop.f32.mrb[0].mxu0
      %v1291 = vpop.f32.mrb[0].mxu0
      %v1292 = vadd.f32 0.0, %v1291
      %v1293 = vpop.f32.mrb[0].mxu0
      %1294 = vmatprep.mubr.bf16.mxu0 0
      %1295 = vmatmul.mubr.bf16.gmra.mrb[0].mxu0 %v957
      %v1296 = vpop.f32.mrb[0].mxu0
      %v1297 = vadd.f32 0.0, %v1296
      %v1298 = vpop.f32.mrb[0].mxu0
      %v1299 = vpop.f32.mrb[0].mxu0
      %v1300 = vadd.f32 0.0, %v1299
      %v1301 = vpop.f32.mrb[0].mxu0
      %1302 = vmatprep.mubr.bf16.mxu0 0
      %1303 = vmatmul.mubr.bf16.gmra.mrb[0].mxu0 %v960
      %v1304 = vpop.f32.mrb[0].mxu0
      %v1305 = vadd.f32 0.0, %v1304
      %v1306 = vpop.f32.mrb[0].mxu0
      %v1307 = vpop.f32.mrb[0].mxu0
      %v1308 = vadd.f32 0.0, %v1307
      %v1309 = vpop.f32.mrb[0].mxu0
      %1310 = vmatprep.mubr.bf16.mxu0 0
      %1311 = vmatmul.mubr.bf16.gmra.mrb[0].mxu0 %v963
      %v1312 = vpop.f32.mrb[0].mxu0
      %v1313 = vadd.f32 0.0, %v1312
      %v1314 = vpop.f32.mrb[0].mxu0
      %v1315 = vpop.f32.mrb[0].mxu0
      %v1316 = vadd.f32 0.0, %v1315
      %v1317 = vpop.f32.mrb[0].mxu0
      %1318 = vmatprep.mubr.bf16.mxu0 0
      %1319 = vmatmul.mubr.bf16.gmra.mrb[0].mxu0 %v966
      %v1320 = vpop.f32.mrb[0].mxu0
      %v1321 = vadd.f32 0.0, %v1320
      %v1322 = vpop.f32.mrb[0].mxu0
      %v1323 = vpop.f32.mrb[0].mxu0
      %v1324 = vadd.f32 0.0, %v1323
      %v1325 = vpop.f32.mrb[0].mxu0
      %1326 = vmatprep.mubr.bf16.mxu0 0
      %1327 = vmatmul.mubr.bf16.gmra.mrb[0].mxu0 %v969
      %v1328 = vpop.f32.mrb[0].mxu0
      %v1329 = vadd.f32 0.0, %v1328
      %v1330 = vpop.f32.mrb[0].mxu0
      %v1331 = vpop.f32.mrb[0].mxu0
      %v1332 = vadd.f32 0.0, %v1331
      %v1333 = vpop.f32.mrb[0].mxu0
      %1334 = vmatprep.mubr.bf16.mxu0 0
      %1335 = vmatmul.mubr.bf16.gmra.mrb[0].mxu0 %v972
      %v1336 = vpop.f32.mrb[0].mxu0
      %v1337 = vadd.f32 0.0, %v1336
      %v1338 = vpop.f32.mrb[0].mxu0
      %v1339 = vpop.f32.mrb[0].mxu0
      %v1340 = vadd.f32 0.0, %v1339
      %v1341 = vpop.f32.mrb[0].mxu0
      %1342 = vmatprep.mubr.bf16.mxu0 0
      %1343 = vmatmul.mubr.bf16.gmra.mrb[0].mxu0 %v975
      %v1344 = vpop.f32.mrb[0].mxu0
      %v1345 = vadd.f32 0.0, %v1344
      %v1346 = vpop.f32.mrb[0].mxu0
      %v1347 = vpop.f32.mrb[0].mxu0
      %v1348 = vadd.f32 0.0, %v1347
      %v1349 = vpop.f32.mrb[0].mxu0
      %1350 = vmatprep.mubr.bf16.mxu0 0
      %1351 = vmatmul.mubr.bf16.gmra.mrb[0].mxu0 %v978
      %v1352 = vpop.f32.mrb[0].mxu0
      %v1353 = vadd.f32 0.0, %v1352
      %v1354 = vpop.f32.mrb[0].mxu0
      %v1355 = vpop.f32.mrb[0].mxu0
      %v1356 = vadd.f32 0.0, %v1355
      %v1357 = vpop.f32.mrb[0].mxu0
      %1358 = vmatprep.mubr.bf16.mxu0 0
      %1359 = vmatmul.mubr.bf16.gmra.mrb[0].mxu0 %v981
      %v1360 = vpop.f32.mrb[0].mxu0
      %v1361 = vadd.f32 0.0, %v1360
      %v1362 = vpop.f32.mrb[0].mxu0
      %v1363 = vpop.f32.mrb[0].mxu0
      %v1364 = vadd.f32 0.0, %v1363
      %v1365 = vpop.f32.mrb[0].mxu0
      %1366 = vmatprep.mubr.bf16.mxu0 0
      %1367 = vmatmul.mubr.bf16.gmra.mrb[0].mxu0 %v984
      %v1368 = vpop.f32.mrb[0].mxu0
      %v1369 = vadd.f32 0.0, %v1368
      %v1370 = vpop.f32.mrb[0].mxu0
      %v1371 = vpop.f32.mrb[0].mxu0
      %v1372 = vadd.f32 0.0, %v1371
      %v1373 = vpop.f32.mrb[0].mxu0
      %1374 = vmatprep.mubr.bf16.mxu0 0
      %1375 = vmatmul.mubr.bf16.gmra.mrb[0].mxu0 %v987
      %v1376 = vpop.f32.mrb[0].mxu0
      %v1377 = vadd.f32 0.0, %v1376
      %v1378 = vpop.f32.mrb[0].mxu0
      %v1379 = vpop.f32.mrb[0].mxu0
      %v1380 = vadd.f32 0.0, %v1379
      %v1381 = vpop.f32.mrb[0].mxu0
      %1382 = vmatprep.mubr.bf16.mxu0 0
      %1383 = vmatmul.mubr.bf16.gmra.mrb[0].mxu0 %v990
      %v1384 = vpop.f32.mrb[0].mxu0
      %v1385 = vadd.f32 0.0, %v1384
      %v1386 = vpop.f32.mrb[0].mxu0
      %v1387 = vpop.f32.mrb[0].mxu0
      %v1388 = vadd.f32 0.0, %v1387
      %v1389 = vpop.f32.mrb[0].mxu0
      %1390 = vmatprep.mubr.bf16.mxu0 0
      %1391 = vmatmul.mubr.bf16.gmra.mrb[0].mxu0 %v1222
      %v1392 = vpop.f32.mrb[0].mxu0
      %v1393 = vadd.f32 0.0, %v1392
      %v1394 = vpop.f32.mrb[0].mxu0
      %v1395 = vpop.f32.mrb[0].mxu0
      %v1396 = vadd.f32 0.0, %v1395
      %v1397 = vpop.f32.mrb[0].mxu0
      %1398 = vmatprep.mubr.bf16.mxu0 0
      %1399 = vmatmul.mubr.bf16.gmra.mrb[0].mxu0 %v1225
      %v1400 = vpop.f32.mrb[0].mxu0
      %v1401 = vadd.f32 0.0, %v1400
      %v1402 = vpop.f32.mrb[0].mxu0
      %v1403 = vpop.f32.mrb[0].mxu0
      %v1404 = vadd.f32 0.0, %v1403
      %v1405 = vpop.f32.mrb[0].mxu0
      %1406 = vdwg.mxu0
      %v1407 = vadd.f32 %v1175, %v1265
      %v1408 = vadd.f32 %v1176, %v1268
      %v1409 = vadd.f32 %v1177, %v1273
      %v1410 = vadd.f32 %v1178, %v1276
      %v1411 = vadd.f32 %v1179, %v1281
      %v1412 = vadd.f32 %v1180, %v1284
      %v1413 = vadd.f32 %v1181, %v1289
      %v1414 = vadd.f32 %v1182, %v1292
      %v1415 = vadd.f32 %v1183, %v1297
      %v1416 = vadd.f32 %v1184, %v1300
      %v1417 = vadd.f32 %v1185, %v1305
      %v1418 = vadd.f32 %v1186, %v1308
      %v1419 = vadd.f32 %v1187, %v1313
      %v1420 = vadd.f32 %v1188, %v1316
      %v1421 = vadd.f32 %v1189, %v1321
      %v1422 = vadd.f32 %v1190, %v1324
      %v1423 = vadd.f32 %v1191, %v1329
      %v1424 = vadd.f32 %v1192, %v1332
      %v1425 = vadd.f32 %v1193, %v1337
      %v1426 = vadd.f32 %v1194, %v1340
      %v1427 = vadd.f32 %v1195, %v1345
      %v1428 = vadd.f32 %v1196, %v1348
      %v1429 = vadd.f32 %v1197, %v1353
      %v1430 = vadd.f32 %v1198, %v1356
      %v1431 = vadd.f32 %v1199, %v1361
      %v1432 = vadd.f32 %v1200, %v1364
      %v1433 = vadd.f32 %v1201, %v1369
      %v1434 = vadd.f32 %v1202, %v1372
      %v1435 = vadd.f32 %v1203, %v1377
      %v1436 = vadd.f32 %v1204, %v1380
      %v1437 = vadd.f32 %v1205, %v1385
      %v1438 = vadd.f32 %v1206, %v1388
      %v1439 = vadd.f32 %v1207, %v1393
      %v1440 = vadd.f32 %v1208, %v1396
      %v1441 = vadd.f32 %v1209, %v1401
      %v1442 = vadd.f32 %v1210, %v1404
      %s1443 = scalar_lea.vmem %s1, 8
      %v1444 = vld [vmem:[%s1443] sm:$0x3]
      %vm1445 = vsmask.f32 6400
      %v1446 = vrot.slane %v294, 1
      %v1447 = vrot.slane %v290, 2
      %v1448 = vor.u32 %v1446, %v1447
      %v1449 = vrot.slane %v302, 1
      %v1450 = vrot.slane %v298, 2
      %v1451 = vor.u32 %v1449, %v1450
      %v1452 = vsel %vm1445, %v1448, %v1451
      %v1453 = vrot.slane %v310, 1
      %v1454 = vrot.slane %v306, 2
      %v1455 = vor.u32 %v1453, %v1454
      %v1456 = vsel %vm1445, %v1451, %v1455
      %v1457 = vrot.slane %v318, 1
      %v1458 = vrot.slane %v314, 2
      %v1459 = vor.u32 %v1457, %v1458
      %v1460 = vsel %vm1445, %v1455, %v1459
      %v1461 = vrot.slane %v326, 1
      %v1462 = vrot.slane %v322, 2
      %v1463 = vor.u32 %v1461, %v1462
      %v1464 = vsel %vm1445, %v1459, %v1463
      %v1465 = vrot.slane %v334, 1
      %v1466 = vrot.slane %v330, 2
      %v1467 = vor.u32 %v1465, %v1466
      %v1468 = vsel %vm1445, %v1463, %v1467
      %v1469 = vrot.slane %v342, 1
      %v1470 = vrot.slane %v338, 2
      %v1471 = vor.u32 %v1469, %v1470
      %v1472 = vsel %vm1445, %v1467, %v1471
      %v1473 = vrot.slane %v350, 1
      %v1474 = vrot.slane %v346, 2
      %v1475 = vor.u32 %v1473, %v1474
      %v1476 = vsel %vm1445, %v1471, %v1475
      %v1477 = vrot.slane %v358, 1
      %v1478 = vrot.slane %v354, 2
      %v1479 = vor.u32 %v1477, %v1478
      %v1480 = vsel %vm1445, %v1475, %v1479
      %v1481 = vrot.slane %v366, 1
      %v1482 = vrot.slane %v362, 2
      %v1483 = vor.u32 %v1481, %v1482
      %v1484 = vsel %vm1445, %v1479, %v1483
      %v1485 = vrot.slane %v374, 1
      %v1486 = vrot.slane %v370, 2
      %v1487 = vor.u32 %v1485, %v1486
      %v1488 = vsel %vm1445, %v1483, %v1487
      %v1489 = vrot.slane %v382, 1
      %v1490 = vrot.slane %v378, 2
      %v1491 = vor.u32 %v1489, %v1490
      %v1492 = vsel %vm1445, %v1487, %v1491
      %v1493 = vrot.slane %v390, 1
      %v1494 = vrot.slane %v386, 2
      %v1495 = vor.u32 %v1493, %v1494
      %v1496 = vsel %vm1445, %v1491, %v1495
      %v1497 = vrot.slane %v398, 1
      %v1498 = vrot.slane %v394, 2
      %v1499 = vor.u32 %v1497, %v1498
      %v1500 = vsel %vm1445, %v1495, %v1499
      %v1501 = vrot.slane %v406, 1
      %v1502 = vrot.slane %v402, 2
      %v1503 = vor.u32 %v1501, %v1502
      %v1504 = vsel %vm1445, %v1499, %v1503
      %v1505 = vrot.slane %v414, 1
      %v1506 = vrot.slane %v410, 2
      %v1507 = vor.u32 %v1505, %v1506
      %v1508 = vsel %vm1445, %v1503, %v1507
      %v1509 = vrot.slane %v422, 1
      %v1510 = vrot.slane %v418, 2
      %v1511 = vor.u32 %v1509, %v1510
      %v1512 = vsel %vm1445, %v1507, %v1511
      %v1514 = vshrl.u32 %v1211, 16
      %v1516 = vrot.slane %v1514, 1
      %v1517 = vshll.u32 %v1211, 16
      %v1519 = vrot.slane %v1517, 2
      %v1520 = vor.u32 %v1516, %v1519
      %v1521 = vsel %vm1445, %v1511, %v1520
      %v1523 = vshrl.u32 %v1212, 16
      %v1525 = vrot.slane %v1523, 1
      %v1526 = vshll.u32 %v1212, 16
      %v1528 = vrot.slane %v1526, 2
      %v1529 = vor.u32 %v1525, %v1528
      %v1530 = vsel %vm1445, %v1520, %v1529
      %v1532 = vsel %vm430, %v1452, 0
      %v1535 = vsel %vm430, %v1456, 0
      %v1538 = vsel %vm430, %v1460, 0
      %v1541 = vsel %vm430, %v1464, 0
      %v1544 = vsel %vm430, %v1468, 0
      %v1547 = vsel %vm430, %v1472, 0
      %v1550 = vsel %vm430, %v1476, 0
      %v1553 = vsel %vm430, %v1480, 0
      %v1556 = vsel %vm430, %v1484, 0
      %v1559 = vsel %vm430, %v1488, 0
      %v1562 = vsel %vm430, %v1492, 0
      %v1565 = vsel %vm430, %v1496, 0
      %v1568 = vsel %vm430, %v1500, 0
      %v1571 = vsel %vm430, %v1504, 0
      %v1574 = vsel %vm430, %v1508, 0
      %v1577 = vsel %vm430, %v1512, 0
      %v1580 = vsel %vm430, %v1521, 0
      %v1583 = vsel %vm430, %v1530, 0
      %v1586 = vsel %vm485, %v1444, 0
      %1588 = vmatprep.subr.bf16.mxu0 0
      %1589 = vmatpush1.bf16.msra.mxu0 %v1586
      %1590 = vmatprep.subr.bf16.mxu0 0
      %1591 = vmatpush1.bf16.msra.mxu0 0
      %1592 = vmatprep.subr.bf16.mxu0 0
      %1593 = vmatpush1.bf16.msra.mxu0 0
      %1594 = vmatprep.subr.bf16.mxu0 0
      %1595 = vmatpush1.bf16.msra.mxu0 0
      %1596 = vmatprep.subr.bf16.mxu0 0
      %1597 = vmatpush1.bf16.msra.mxu0 0
      %1598 = vmatprep.subr.bf16.mxu0 0
      %1599 = vmatpush1.bf16.msra.mxu0 0
      %1600 = vmatprep.subr.bf16.mxu0 0
      %1601 = vmatpush1.bf16.msra.mxu0 0
      %1602 = vmatprep.subr.bf16.mxu0 0
      %1603 = vmatpush1.bf16.msra.mxu0 0
      %1604 = vmatprep.subr.bf16.mxu0 0
      %1605 = vmatpush1.bf16.msra.mxu0 0
      %1606 = vmatprep.subr.bf16.mxu0 0
      %1607 = vmatpush1.bf16.msra.mxu0 0
      %1608 = vmatprep.subr.bf16.mxu0 0
      %1609 = vmatpush1.bf16.msra.mxu0 0
      %1610 = vmatprep.subr.bf16.mxu0 0
      %1611 = vmatpush1.bf16.msra.mxu0 0
      %1612 = vmatprep.subr.bf16.mxu0 0
      %1613 = vmatpush1.bf16.msra.mxu0 0
      %1614 = vmatprep.subr.bf16.mxu0 0
      %1615 = vmatpush1.bf16.msra.mxu0 0
      %1616 = vmatprep.subr.bf16.mxu0 0
      %1617 = vmatpush1.bf16.msra.mxu0 0
      %1618 = vmatprep.subr.bf16.mxu0 0
      %1619 = vmatpush1.bf16.msra.mxu0 0
      %1620 = vmatprep.mubr.bf16.mxu0 0
      %1621 = vmatmul.mubr.bf16.gmra.mrb[0].mxu0 %v1532
      %v1622 = vpop.f32.mrb[0].mxu0
      %v1623 = vadd.f32 0.0, %v1622
      %v1624 = vpop.f32.mrb[0].mxu0
      %v1625 = vpop.f32.mrb[0].mxu0
      %v1626 = vadd.f32 0.0, %v1625
      %v1627 = vpop.f32.mrb[0].mxu0
      %1628 = vmatprep.mubr.bf16.mxu0 0
      %1629 = vmatmul.mubr.bf16.gmra.mrb[0].mxu0 %v1535
      %v1630 = vpop.f32.mrb[0].mxu0
      %v1631 = vadd.f32 0.0, %v1630
      %v1632 = vpop.f32.mrb[0].mxu0
      %v1633 = vpop.f32.mrb[0].mxu0
      %v1634 = vadd.f32 0.0, %v1633
      %v1635 = vpop.f32.mrb[0].mxu0
      %1636 = vmatprep.mubr.bf16.mxu0 0
      %1637 = vmatmul.mubr.bf16.gmra.mrb[0].mxu0 %v1538
      %v1638 = vpop.f32.mrb[0].mxu0
      %v1639 = vadd.f32 0.0, %v1638
      %v1640 = vpop.f32.mrb[0].mxu0
      %v1641 = vpop.f32.mrb[0].mxu0
      %v1642 = vadd.f32 0.0, %v1641
      %v1643 = vpop.f32.mrb[0].mxu0
      %1644 = vmatprep.mubr.bf16.mxu0 0
      %1645 = vmatmul.mubr.bf16.gmra.mrb[0].mxu0 %v1541
      %v1646 = vpop.f32.mrb[0].mxu0
      %v1647 = vadd.f32 0.0, %v1646
      %v1648 = vpop.f32.mrb[0].mxu0
      %v1649 = vpop.f32.mrb[0].mxu0
      %v1650 = vadd.f32 0.0, %v1649
      %v1651 = vpop.f32.mrb[0].mxu0
      %1652 = vmatprep.mubr.bf16.mxu0 0
      %1653 = vmatmul.mubr.bf16.gmra.mrb[0].mxu0 %v1544
      %v1654 = vpop.f32.mrb[0].mxu0
      %v1655 = vadd.f32 0.0, %v1654
      %v1656 = vpop.f32.mrb[0].mxu0
      %v1657 = vpop.f32.mrb[0].mxu0
      %v1658 = vadd.f32 0.0, %v1657
      %v1659 = vpop.f32.mrb[0].mxu0
      %1660 = vmatprep.mubr.bf16.mxu0 0
      %1661 = vmatmul.mubr.bf16.gmra.mrb[0].mxu0 %v1547
      %v1662 = vpop.f32.mrb[0].mxu0
      %v1663 = vadd.f32 0.0, %v1662
      %v1664 = vpop.f32.mrb[0].mxu0
      %v1665 = vpop.f32.mrb[0].mxu0
      %v1666 = vadd.f32 0.0, %v1665
      %v1667 = vpop.f32.mrb[0].mxu0
      %1668 = vmatprep.mubr.bf16.mxu0 0
      %1669 = vmatmul.mubr.bf16.gmra.mrb[0].mxu0 %v1550
      %v1670 = vpop.f32.mrb[0].mxu0
      %v1671 = vadd.f32 0.0, %v1670
      %v1672 = vpop.f32.mrb[0].mxu0
      %v1673 = vpop.f32.mrb[0].mxu0
      %v1674 = vadd.f32 0.0, %v1673
      %v1675 = vpop.f32.mrb[0].mxu0
      %1676 = vmatprep.mubr.bf16.mxu0 0
      %1677 = vmatmul.mubr.bf16.gmra.mrb[0].mxu0 %v1553
      %v1678 = vpop.f32.mrb[0].mxu0
      %v1679 = vadd.f32 0.0, %v1678
      %v1680 = vpop.f32.mrb[0].mxu0
      %v1681 = vpop.f32.mrb[0].mxu0
      %v1682 = vadd.f32 0.0, %v1681
      %v1683 = vpop.f32.mrb[0].mxu0
      %1684 = vmatprep.mubr.bf16.mxu0 0
      %1685 = vmatmul.mubr.bf16.gmra.mrb[0].mxu0 %v1556
      %v1686 = vpop.f32.mrb[0].mxu0
      %v1687 = vadd.f32 0.0, %v1686
      %v1688 = vpop.f32.mrb[0].mxu0
      %v1689 = vpop.f32.mrb[0].mxu0
      %v1690 = vadd.f32 0.0, %v1689
      %v1691 = vpop.f32.mrb[0].mxu0
      %1692 = vmatprep.mubr.bf16.mxu0 0
      %1693 = vmatmul.mubr.bf16.gmra.mrb[0].mxu0 %v1559
      %v1694 = vpop.f32.mrb[0].mxu0
      %v1695 = vadd.f32 0.0, %v1694
      %v1696 = vpop.f32.mrb[0].mxu0
      %v1697 = vpop.f32.mrb[0].mxu0
      %v1698 = vadd.f32 0.0, %v1697
      %v1699 = vpop.f32.mrb[0].mxu0
      %1700 = vmatprep.mubr.bf16.mxu0 0
      %1701 = vmatmul.mubr.bf16.gmra.mrb[0].mxu0 %v1562
      %v1702 = vpop.f32.mrb[0].mxu0
      %v1703 = vadd.f32 0.0, %v1702
      %v1704 = vpop.f32.mrb[0].mxu0
      %v1705 = vpop.f32.mrb[0].mxu0
      %v1706 = vadd.f32 0.0, %v1705
      %v1707 = vpop.f32.mrb[0].mxu0
      %1708 = vmatprep.mubr.bf16.mxu0 0
      %1709 = vmatmul.mubr.bf16.gmra.mrb[0].mxu0 %v1565
      %v1710 = vpop.f32.mrb[0].mxu0
      %v1711 = vadd.f32 0.0, %v1710
      %v1712 = vpop.f32.mrb[0].mxu0
      %v1713 = vpop.f32.mrb[0].mxu0
      %v1714 = vadd.f32 0.0, %v1713
      %v1715 = vpop.f32.mrb[0].mxu0
      %1716 = vmatprep.mubr.bf16.mxu0 0
      %1717 = vmatmul.mubr.bf16.gmra.mrb[0].mxu0 %v1568
      %v1718 = vpop.f32.mrb[0].mxu0
      %v1719 = vadd.f32 0.0, %v1718
      %v1720 = vpop.f32.mrb[0].mxu0
      %v1721 = vpop.f32.mrb[0].mxu0
      %v1722 = vadd.f32 0.0, %v1721
      %v1723 = vpop.f32.mrb[0].mxu0
      %1724 = vmatprep.mubr.bf16.mxu0 0
      %1725 = vmatmul.mubr.bf16.gmra.mrb[0].mxu0 %v1571
      %v1726 = vpop.f32.mrb[0].mxu0
      %v1727 = vadd.f32 0.0, %v1726
      %v1728 = vpop.f32.mrb[0].mxu0
      %v1729 = vpop.f32.mrb[0].mxu0
      %v1730 = vadd.f32 0.0, %v1729
      %v1731 = vpop.f32.mrb[0].mxu0
      %1732 = vmatprep.mubr.bf16.mxu0 0
      %1733 = vmatmul.mubr.bf16.gmra.mrb[0].mxu0 %v1574
      %v1734 = vpop.f32.mrb[0].mxu0
      %v1735 = vadd.f32 0.0, %v1734
      %v1736 = vpop.f32.mrb[0].mxu0
      %v1737 = vpop.f32.mrb[0].mxu0
      %v1738 = vadd.f32 0.0, %v1737
      %v1739 = vpop.f32.mrb[0].mxu0
      %1740 = vmatprep.mubr.bf16.mxu0 0
      %1741 = vmatmul.mubr.bf16.gmra.mrb[0].mxu0 %v1577
      %v1742 = vpop.f32.mrb[0].mxu0
      %v1743 = vadd.f32 0.0, %v1742
      %v1744 = vpop.f32.mrb[0].mxu0
      %v1745 = vpop.f32.mrb[0].mxu0
      %v1746 = vadd.f32 0.0, %v1745
      %v1747 = vpop.f32.mrb[0].mxu0
      %1748 = vmatprep.mubr.bf16.mxu0 0
      %1749 = vmatmul.mubr.bf16.gmra.mrb[0].mxu0 %v1580
      %v1750 = vpop.f32.mrb[0].mxu0
      %v1751 = vadd.f32 0.0, %v1750
      %v1752 = vpop.f32.mrb[0].mxu0
      %v1753 = vpop.f32.mrb[0].mxu0
      %v1754 = vadd.f32 0.0, %v1753
      %v1755 = vpop.f32.mrb[0].mxu0
      %1756 = vmatprep.mubr.bf16.mxu0 0
      %1757 = vmatmul.mubr.bf16.gmra.mrb[0].mxu0 %v1583
      %v1758 = vpop.f32.mrb[0].mxu0
      %v1759 = vadd.f32 0.0, %v1758
      %v1760 = vpop.f32.mrb[0].mxu0
      %v1761 = vpop.f32.mrb[0].mxu0
      %v1762 = vadd.f32 0.0, %v1761
      %v1763 = vpop.f32.mrb[0].mxu0
      %1764 = vdwg.mxu0
      %v1765 = vadd.f32 %v1407, %v1623
      %v1766 = vadd.f32 %v1408, %v1626
      %v1767 = vadd.f32 %v1409, %v1631
      %v1768 = vadd.f32 %v1410, %v1634
      %v1769 = vadd.f32 %v1411, %v1639
      %v1770 = vadd.f32 %v1412, %v1642
      %v1771 = vadd.f32 %v1413, %v1647
      %v1772 = vadd.f32 %v1414, %v1650
      %v1773 = vadd.f32 %v1415, %v1655
      %v1774 = vadd.f32 %v1416, %v1658
      %v1775 = vadd.f32 %v1417, %v1663
      %v1776 = vadd.f32 %v1418, %v1666
      %v1777 = vadd.f32 %v1419, %v1671
      %v1778 = vadd.f32 %v1420, %v1674
      %v1779 = vadd.f32 %v1421, %v1679
      %v1780 = vadd.f32 %v1422, %v1682
      %v1781 = vadd.f32 %v1423, %v1687
      %v1782 = vadd.f32 %v1424, %v1690
      %v1783 = vadd.f32 %v1425, %v1695
      %v1784 = vadd.f32 %v1426, %v1698
      %v1785 = vadd.f32 %v1427, %v1703
      %v1786 = vadd.f32 %v1428, %v1706
      %v1787 = vadd.f32 %v1429, %v1711
      %v1788 = vadd.f32 %v1430, %v1714
      %v1789 = vadd.f32 %v1431, %v1719
      %v1790 = vadd.f32 %v1432, %v1722
      %v1791 = vadd.f32 %v1433, %v1727
      %v1792 = vadd.f32 %v1434, %v1730
      %v1793 = vadd.f32 %v1435, %v1735
      %v1794 = vadd.f32 %v1436, %v1738
      %v1795 = vadd.f32 %v1437, %v1743
      %v1796 = vadd.f32 %v1438, %v1746
      %v1797 = vadd.f32 %v1439, %v1751
      %v1798 = vadd.f32 %v1440, %v1754
      %v1799 = vadd.f32 %v1441, %v1759
      %v1800 = vadd.f32 %v1442, %v1762
      %s1801 = scalar_lea.vmem %s1, 10
      %v1802 = vld [vmem:[%s1801] sm:$0x3]
      %vm1803 = vcmask 1045504
      %v1804 = vrot.slane %v260, 2
      %v1805 = vrot.slane %v261, 2
      %v1806 = vsel %vm1803, %v1804, %v1805
      %v1807 = vrot.slane %v262, 2
      %v1808 = vsel %vm1803, %v1805, %v1807
      %v1809 = vrot.slane %v263, 2
      %v1810 = vsel %vm1803, %v1807, %v1809
      %v1811 = vrot.slane %v264, 2
      %v1812 = vsel %vm1803, %v1809, %v1811
      %v1813 = vrot.slane %v265, 2
      %v1814 = vsel %vm1803, %v1811, %v1813
      %v1815 = vrot.slane %v266, 2
      %v1816 = vsel %vm1803, %v1813, %v1815
      %v1817 = vrot.slane %v267, 2
      %v1818 = vsel %vm1803, %v1815, %v1817
      %v1819 = vrot.slane %v268, 2
      %v1820 = vsel %vm1803, %v1817, %v1819
      %v1821 = vrot.slane %v269, 2
      %v1822 = vsel %vm1803, %v1819, %v1821
      %v1823 = vrot.slane %v270, 2
      %v1824 = vsel %vm1803, %v1821, %v1823
      %v1825 = vrot.slane %v271, 2
      %v1826 = vsel %vm1803, %v1823, %v1825
      %v1827 = vrot.slane %v272, 2
      %v1828 = vsel %vm1803, %v1825, %v1827
      %v1829 = vrot.slane %v273, 2
      %v1830 = vsel %vm1803, %v1827, %v1829
      %v1831 = vrot.slane %v274, 2
      %v1832 = vsel %vm1803, %v1829, %v1831
      %v1833 = vrot.slane %v275, 2
      %v1834 = vsel %vm1803, %v1831, %v1833
      %v1835 = vrot.slane %v276, 2
      %v1836 = vsel %vm1803, %v1833, %v1835
      %v1837 = vrot.slane %v1211, 2
      %v1838 = vsel %vm1803, %v1835, %v1837
      %v1839 = vrot.slane %v1212, 2
      %v1840 = vsel %vm1803, %v1837, %v1839
      %v1842 = vsel %vm430, %v1806, 0
      %v1845 = vsel %vm430, %v1808, 0
      %v1848 = vsel %vm430, %v1810, 0
      %v1851 = vsel %vm430, %v1812, 0
      %v1854 = vsel %vm430, %v1814, 0
      %v1857 = vsel %vm430, %v1816, 0
      %v1860 = vsel %vm430, %v1818, 0
      %v1863 = vsel %vm430, %v1820, 0
      %v1866 = vsel %vm430, %v1822, 0
      %v1869 = vsel %vm430, %v1824, 0
      %v1872 = vsel %vm430, %v1826, 0
      %v1875 = vsel %vm430, %v1828, 0
      %v1878 = vsel %vm430, %v1830, 0
      %v1881 = vsel %vm430, %v1832, 0
      %v1884 = vsel %vm430, %v1834, 0
      %v1887 = vsel %vm430, %v1836, 0
      %v1890 = vsel %vm430, %v1838, 0
      %v1893 = vsel %vm430, %v1840, 0
      %v1896 = vsel %vm485, %v1802, 0
      %1898 = vmatprep.subr.bf16.mxu0 0
      %1899 = vmatpush1.bf16.msra.mxu0 %v1896
      %1900 = vmatprep.subr.bf16.mxu0 0
      %1901 = vmatpush1.bf16.msra.mxu0 0
      %1902 = vmatprep.subr.bf16.mxu0 0
      %1903 = vmatpush1.bf16.msra.mxu0 0
      %1904 = vmatprep.subr.bf16.mxu0 0
      %1905 = vmatpush1.bf16.msra.mxu0 0
      %1906 = vmatprep.subr.bf16.mxu0 0
      %1907 = vmatpush1.bf16.msra.mxu0 0
      %1908 = vmatprep.subr.bf16.mxu0 0
      %1909 = vmatpush1.bf16.msra.mxu0 0
      %1910 = vmatprep.subr.bf16.mxu0 0
      %1911 = vmatpush1.bf16.msra.mxu0 0
      %1912 = vmatprep.subr.bf16.mxu0 0
      %1913 = vmatpush1.bf16.msra.mxu0 0
      %1914 = vmatprep.subr.bf16.mxu0 0
      %1915 = vmatpush1.bf16.msra.mxu0 0
      %1916 = vmatprep.subr.bf16.mxu0 0
      %1917 = vmatpush1.bf16.msra.mxu0 0
      %1918 = vmatprep.subr.bf16.mxu0 0
      %1919 = vmatpush1.bf16.msra.mxu0 0
      %1920 = vmatprep.subr.bf16.mxu0 0
      %1921 = vmatpush1.bf16.msra.mxu0 0
      %1922 = vmatprep.subr.bf16.mxu0 0
      %1923 = vmatpush1.bf16.msra.mxu0 0
      %1924 = vmatprep.subr.bf16.mxu0 0
      %1925 = vmatpush1.bf16.msra.mxu0 0
      %1926 = vmatprep.subr.bf16.mxu0 0
      %1927 = vmatpush1.bf16.msra.mxu0 0
      %1928 = vmatprep.subr.bf16.mxu0 0
      %1929 = vmatpush1.bf16.msra.mxu0 0
      %1930 = vmatprep.mubr.bf16.mxu0 0
      %1931 = vmatmul.mubr.bf16.gmra.mrb[0].mxu0 %v1842
      %v1932 = vpop.f32.mrb[0].mxu0
      %v1933 = vadd.f32 0.0, %v1932
      %v1934 = vpop.f32.mrb[0].mxu0
      %v1935 = vpop.f32.mrb[0].mxu0
      %v1936 = vadd.f32 0.0, %v1935
      %v1937 = vpop.f32.mrb[0].mxu0
      %1938 = vmatprep.mubr.bf16.mxu0 0
      %1939 = vmatmul.mubr.bf16.gmra.mrb[0].mxu0 %v1845
      %v1940 = vpop.f32.mrb[0].mxu0
      %v1941 = vadd.f32 0.0, %v1940
      %v1942 = vpop.f32.mrb[0].mxu0
      %v1943 = vpop.f32.mrb[0].mxu0
      %v1944 = vadd.f32 0.0, %v1943
      %v1945 = vpop.f32.mrb[0].mxu0
      %1946 = vmatprep.mubr.bf16.mxu0 0
      %1947 = vmatmul.mubr.bf16.gmra.mrb[0].mxu0 %v1848
      %v1948 = vpop.f32.mrb[0].mxu0
      %v1949 = vadd.f32 0.0, %v1948
      %v1950 = vpop.f32.mrb[0].mxu0
      %v1951 = vpop.f32.mrb[0].mxu0
      %v1952 = vadd.f32 0.0, %v1951
      %v1953 = vpop.f32.mrb[0].mxu0
      %1954 = vmatprep.mubr.bf16.mxu0 0
      %1955 = vmatmul.mubr.bf16.gmra.mrb[0].mxu0 %v1851
      %v1956 = vpop.f32.mrb[0].mxu0
      %v1957 = vadd.f32 0.0, %v1956
      %v1958 = vpop.f32.mrb[0].mxu0
      %v1959 = vpop.f32.mrb[0].mxu0
      %v1960 = vadd.f32 0.0, %v1959
      %v1961 = vpop.f32.mrb[0].mxu0
      %1962 = vmatprep.mubr.bf16.mxu0 0
      %1963 = vmatmul.mubr.bf16.gmra.mrb[0].mxu0 %v1854
      %v1964 = vpop.f32.mrb[0].mxu0
      %v1965 = vadd.f32 0.0, %v1964
      %v1966 = vpop.f32.mrb[0].mxu0
      %v1967 = vpop.f32.mrb[0].mxu0
      %v1968 = vadd.f32 0.0, %v1967
      %v1969 = vpop.f32.mrb[0].mxu0
      %1970 = vmatprep.mubr.bf16.mxu0 0
      %1971 = vmatmul.mubr.bf16.gmra.mrb[0].mxu0 %v1857
      %v1972 = vpop.f32.mrb[0].mxu0
      %v1973 = vadd.f32 0.0, %v1972
      %v1974 = vpop.f32.mrb[0].mxu0
      %v1975 = vpop.f32.mrb[0].mxu0
      %v1976 = vadd.f32 0.0, %v1975
      %v1977 = vpop.f32.mrb[0].mxu0
      %1978 = vmatprep.mubr.bf16.mxu0 0
      %1979 = vmatmul.mubr.bf16.gmra.mrb[0].mxu0 %v1860
      %v1980 = vpop.f32.mrb[0].mxu0
      %v1981 = vadd.f32 0.0, %v1980
      %v1982 = vpop.f32.mrb[0].mxu0
      %v1983 = vpop.f32.mrb[0].mxu0
      %v1984 = vadd.f32 0.0, %v1983
      %v1985 = vpop.f32.mrb[0].mxu0
      %1986 = vmatprep.mubr.bf16.mxu0 0
      %1987 = vmatmul.mubr.bf16.gmra.mrb[0].mxu0 %v1863
      %v1988 = vpop.f32.mrb[0].mxu0
      %v1989 = vadd.f32 0.0, %v1988
      %v1990 = vpop.f32.mrb[0].mxu0
      %v1991 = vpop.f32.mrb[0].mxu0
      %v1992 = vadd.f32 0.0, %v1991
      %v1993 = vpop.f32.mrb[0].mxu0
      %1994 = vmatprep.mubr.bf16.mxu0 0
      %1995 = vmatmul.mubr.bf16.gmra.mrb[0].mxu0 %v1866
      %v1996 = vpop.f32.mrb[0].mxu0
      %v1997 = vadd.f32 0.0, %v1996
      %v1998 = vpop.f32.mrb[0].mxu0
      %v1999 = vpop.f32.mrb[0].mxu0
      %v2000 = vadd.f32 0.0, %v1999
      %v2001 = vpop.f32.mrb[0].mxu0
      %2002 = vmatprep.mubr.bf16.mxu0 0
      %2003 = vmatmul.mubr.bf16.gmra.mrb[0].mxu0 %v1869
      %v2004 = vpop.f32.mrb[0].mxu0
      %v2005 = vadd.f32 0.0, %v2004
      %v2006 = vpop.f32.mrb[0].mxu0
      %v2007 = vpop.f32.mrb[0].mxu0
      %v2008 = vadd.f32 0.0, %v2007
      %v2009 = vpop.f32.mrb[0].mxu0
      %2010 = vmatprep.mubr.bf16.mxu0 0
      %2011 = vmatmul.mubr.bf16.gmra.mrb[0].mxu0 %v1872
      %v2012 = vpop.f32.mrb[0].mxu0
      %v2013 = vadd.f32 0.0, %v2012
      %v2014 = vpop.f32.mrb[0].mxu0
      %v2015 = vpop.f32.mrb[0].mxu0
      %v2016 = vadd.f32 0.0, %v2015
      %v2017 = vpop.f32.mrb[0].mxu0
      %2018 = vmatprep.mubr.bf16.mxu0 0
      %2019 = vmatmul.mubr.bf16.gmra.mrb[0].mxu0 %v1875
      %v2020 = vpop.f32.mrb[0].mxu0
      %v2021 = vadd.f32 0.0, %v2020
      %v2022 = vpop.f32.mrb[0].mxu0
      %v2023 = vpop.f32.mrb[0].mxu0
      %v2024 = vadd.f32 0.0, %v2023
      %v2025 = vpop.f32.mrb[0].mxu0
      %2026 = vmatprep.mubr.bf16.mxu0 0
      %2027 = vmatmul.mubr.bf16.gmra.mrb[0].mxu0 %v1878
      %v2028 = vpop.f32.mrb[0].mxu0
      %v2029 = vadd.f32 0.0, %v2028
      %v2030 = vpop.f32.mrb[0].mxu0
      %v2031 = vpop.f32.mrb[0].mxu0
      %v2032 = vadd.f32 0.0, %v2031
      %v2033 = vpop.f32.mrb[0].mxu0
      %2034 = vmatprep.mubr.bf16.mxu0 0
      %2035 = vmatmul.mubr.bf16.gmra.mrb[0].mxu0 %v1881
      %v2036 = vpop.f32.mrb[0].mxu0
      %v2037 = vadd.f32 0.0, %v2036
      %v2038 = vpop.f32.mrb[0].mxu0
      %v2039 = vpop.f32.mrb[0].mxu0
      %v2040 = vadd.f32 0.0, %v2039
      %v2041 = vpop.f32.mrb[0].mxu0
      %2042 = vmatprep.mubr.bf16.mxu0 0
      %2043 = vmatmul.mubr.bf16.gmra.mrb[0].mxu0 %v1884
      %v2044 = vpop.f32.mrb[0].mxu0
      %v2045 = vadd.f32 0.0, %v2044
      %v2046 = vpop.f32.mrb[0].mxu0
      %v2047 = vpop.f32.mrb[0].mxu0
      %v2048 = vadd.f32 0.0, %v2047
      %v2049 = vpop.f32.mrb[0].mxu0
      %2050 = vmatprep.mubr.bf16.mxu0 0
      %2051 = vmatmul.mubr.bf16.gmra.mrb[0].mxu0 %v1887
      %v2052 = vpop.f32.mrb[0].mxu0
      %v2053 = vadd.f32 0.0, %v2052
      %v2054 = vpop.f32.mrb[0].mxu0
      %v2055 = vpop.f32.mrb[0].mxu0
      %v2056 = vadd.f32 0.0, %v2055
      %v2057 = vpop.f32.mrb[0].mxu0
      %2058 = vmatprep.mubr.bf16.mxu0 0
      %2059 = vmatmul.mubr.bf16.gmra.mrb[0].mxu0 %v1890
      %v2060 = vpop.f32.mrb[0].mxu0
      %v2061 = vadd.f32 0.0, %v2060
      %v2062 = vpop.f32.mrb[0].mxu0
      %v2063 = vpop.f32.mrb[0].mxu0
      %v2064 = vadd.f32 0.0, %v2063
      %v2065 = vpop.f32.mrb[0].mxu0
      %2066 = vmatprep.mubr.bf16.mxu0 0
      %2067 = vmatmul.mubr.bf16.gmra.mrb[0].mxu0 %v1893
      %v2068 = vpop.f32.mrb[0].mxu0
      %v2069 = vadd.f32 0.0, %v2068
      %v2070 = vpop.f32.mrb[0].mxu0
      %v2071 = vpop.f32.mrb[0].mxu0
      %v2072 = vadd.f32 0.0, %v2071
      %v2073 = vpop.f32.mrb[0].mxu0
      %2074 = vdwg.mxu0
      %v2075 = vadd.f32 %v1765, %v1933
      %v2076 = vadd.f32 %v1766, %v1936
      %v2077 = vadd.f32 %v1767, %v1941
      %v2078 = vadd.f32 %v1768, %v1944
      %v2079 = vadd.f32 %v1769, %v1949
      %v2080 = vadd.f32 %v1770, %v1952
      %v2081 = vadd.f32 %v1771, %v1957
      %v2082 = vadd.f32 %v1772, %v1960
      %v2083 = vadd.f32 %v1773, %v1965
      %v2084 = vadd.f32 %v1774, %v1968
      %v2085 = vadd.f32 %v1775, %v1973
      %v2086 = vadd.f32 %v1776, %v1976
      %v2087 = vadd.f32 %v1777, %v1981
      %v2088 = vadd.f32 %v1778, %v1984
      %v2089 = vadd.f32 %v1779, %v1989
      %v2090 = vadd.f32 %v1780, %v1992
      %v2091 = vadd.f32 %v1781, %v1997
      %v2092 = vadd.f32 %v1782, %v2000
      %v2093 = vadd.f32 %v1783, %v2005
      %v2094 = vadd.f32 %v1784, %v2008
      %v2095 = vadd.f32 %v1785, %v2013
      %v2096 = vadd.f32 %v1786, %v2016
      %v2097 = vadd.f32 %v1787, %v2021
      %v2098 = vadd.f32 %v1788, %v2024
      %v2099 = vadd.f32 %v1789, %v2029
      %v2100 = vadd.f32 %v1790, %v2032
      %v2101 = vadd.f32 %v1791, %v2037
      %v2102 = vadd.f32 %v1792, %v2040
      %v2103 = vadd.f32 %v1793, %v2045
      %v2104 = vadd.f32 %v1794, %v2048
      %v2105 = vadd.f32 %v1795, %v2053
      %v2106 = vadd.f32 %v1796, %v2056
      %v2107 = vadd.f32 %v1797, %v2061
      %v2108 = vadd.f32 %v1798, %v2064
      %v2109 = vadd.f32 %v1799, %v2069
      %v2110 = vadd.f32 %v1800, %v2072
      %v2111 = vpack.c.bf16 %v257, %v256
      %v2112 = vpack.c.bf16 %v258, %v258
      %s2113 = scalar_lea.vmem %s1, 12
      %v2114 = vld [vmem:[%s2113] sm:$0x3]
      %v2117 = vrot.slane %v2111, 2
      %v2118 = vsel %vm1803, %v1837, %v2117
      %v2119 = vrot.slane %v2112, 2
      %v2120 = vsel %vm1803, %v2117, %v2119
      %v2122 = vsel %vm430, %v2118, 0
      %v2125 = vsel %vm430, %v2120, 0
      %v2128 = vsel %vm485, %v2114, 0
      %2130 = vmatprep.subr.bf16.mxu0 0
      %2131 = vmatpush1.bf16.msra.mxu0 %v2128
      %2132 = vmatprep.subr.bf16.mxu0 0
      %2133 = vmatpush1.bf16.msra.mxu0 0
      %2134 = vmatprep.subr.bf16.mxu0 0
      %2135 = vmatpush1.bf16.msra.mxu0 0
      %2136 = vmatprep.subr.bf16.mxu0 0
      %2137 = vmatpush1.bf16.msra.mxu0 0
      %2138 = vmatprep.subr.bf16.mxu0 0
      %2139 = vmatpush1.bf16.msra.mxu0 0
      %2140 = vmatprep.subr.bf16.mxu0 0
      %2141 = vmatpush1.bf16.msra.mxu0 0
      %2142 = vmatprep.subr.bf16.mxu0 0
      %2143 = vmatpush1.bf16.msra.mxu0 0
      %2144 = vmatprep.subr.bf16.mxu0 0
      %2145 = vmatpush1.bf16.msra.mxu0 0
      %2146 = vmatprep.subr.bf16.mxu0 0
      %2147 = vmatpush1.bf16.msra.mxu0 0
      %2148 = vmatprep.subr.bf16.mxu0 0
      %2149 = vmatpush1.bf16.msra.mxu0 0
      %2150 = vmatprep.subr.bf16.mxu0 0
      %2151 = vmatpush1.bf16.msra.mxu0 0
      %2152 = vmatprep.subr.bf16.mxu0 0
      %2153 = vmatpush1.bf16.msra.mxu0 0
      %2154 = vmatprep.subr.bf16.mxu0 0
      %2155 = vmatpush1.bf16.msra.mxu0 0
      %2156 = vmatprep.subr.bf16.mxu0 0
      %2157 = vmatpush1.bf16.msra.mxu0 0
      %2158 = vmatprep.subr.bf16.mxu0 0
      %2159 = vmatpush1.bf16.msra.mxu0 0
      %2160 = vmatprep.subr.bf16.mxu0 0
      %2161 = vmatpush1.bf16.msra.mxu0 0
      %2162 = vmatprep.mubr.bf16.mxu0 0
      %2163 = vmatmul.mubr.bf16.gmra.mrb[0].mxu0 %v1845
      %v2164 = vpop.f32.mrb[0].mxu0
      %v2165 = vadd.f32 0.0, %v2164
      %v2166 = vpop.f32.mrb[0].mxu0
      %v2167 = vpop.f32.mrb[0].mxu0
      %v2168 = vadd.f32 0.0, %v2167
      %v2169 = vpop.f32.mrb[0].mxu0
      %2170 = vmatprep.mubr.bf16.mxu0 0
      %2171 = vmatmul.mubr.bf16.gmra.mrb[0].mxu0 %v1848
      %v2172 = vpop.f32.mrb[0].mxu0
      %v2173 = vadd.f32 0.0, %v2172
      %v2174 = vpop.f32.mrb[0].mxu0
      %v2175 = vpop.f32.mrb[0].mxu0
      %v2176 = vadd.f32 0.0, %v2175
      %v2177 = vpop.f32.mrb[0].mxu0
      %2178 = vmatprep.mubr.bf16.mxu0 0
      %2179 = vmatmul.mubr.bf16.gmra.mrb[0].mxu0 %v1851
      %v2180 = vpop.f32.mrb[0].mxu0
      %v2181 = vadd.f32 0.0, %v2180
      %v2182 = vpop.f32.mrb[0].mxu0
      %v2183 = vpop.f32.mrb[0].mxu0
      %v2184 = vadd.f32 0.0, %v2183
      %v2185 = vpop.f32.mrb[0].mxu0
      %2186 = vmatprep.mubr.bf16.mxu0 0
      %2187 = vmatmul.mubr.bf16.gmra.mrb[0].mxu0 %v1854
      %v2188 = vpop.f32.mrb[0].mxu0
      %v2189 = vadd.f32 0.0, %v2188
      %v2190 = vpop.f32.mrb[0].mxu0
      %v2191 = vpop.f32.mrb[0].mxu0
      %v2192 = vadd.f32 0.0, %v2191
      %v2193 = vpop.f32.mrb[0].mxu0
      %2194 = vmatprep.mubr.bf16.mxu0 0
      %2195 = vmatmul.mubr.bf16.gmra.mrb[0].mxu0 %v1857
      %v2196 = vpop.f32.mrb[0].mxu0
      %v2197 = vadd.f32 0.0, %v2196
      %v2198 = vpop.f32.mrb[0].mxu0
      %v2199 = vpop.f32.mrb[0].mxu0
      %v2200 = vadd.f32 0.0, %v2199
      %v2201 = vpop.f32.mrb[0].mxu0
      %2202 = vmatprep.mubr.bf16.mxu0 0
      %2203 = vmatmul.mubr.bf16.gmra.mrb[0].mxu0 %v1860
      %v2204 = vpop.f32.mrb[0].mxu0
      %v2205 = vadd.f32 0.0, %v2204
      %v2206 = vpop.f32.mrb[0].mxu0
      %v2207 = vpop.f32.mrb[0].mxu0
      %v2208 = vadd.f32 0.0, %v2207
      %v2209 = vpop.f32.mrb[0].mxu0
      %2210 = vmatprep.mubr.bf16.mxu0 0
      %2211 = vmatmul.mubr.bf16.gmra.mrb[0].mxu0 %v1863
      %v2212 = vpop.f32.mrb[0].mxu0
      %v2213 = vadd.f32 0.0, %v2212
      %v2214 = vpop.f32.mrb[0].mxu0
      %v2215 = vpop.f32.mrb[0].mxu0
      %v2216 = vadd.f32 0.0, %v2215
      %v2217 = vpop.f32.mrb[0].mxu0
      %2218 = vmatprep.mubr.bf16.mxu0 0
      %2219 = vmatmul.mubr.bf16.gmra.mrb[0].mxu0 %v1866
      %v2220 = vpop.f32.mrb[0].mxu0
      %v2221 = vadd.f32 0.0, %v2220
      %v2222 = vpop.f32.mrb[0].mxu0
      %v2223 = vpop.f32.mrb[0].mxu0
      %v2224 = vadd.f32 0.0, %v2223
      %v2225 = vpop.f32.mrb[0].mxu0
      %2226 = vmatprep.mubr.bf16.mxu0 0
      %2227 = vmatmul.mubr.bf16.gmra.mrb[0].mxu0 %v1869
      %v2228 = vpop.f32.mrb[0].mxu0
      %v2229 = vadd.f32 0.0, %v2228
      %v2230 = vpop.f32.mrb[0].mxu0
      %v2231 = vpop.f32.mrb[0].mxu0
      %v2232 = vadd.f32 0.0, %v2231
      %v2233 = vpop.f32.mrb[0].mxu0
      %2234 = vmatprep.mubr.bf16.mxu0 0
      %2235 = vmatmul.mubr.bf16.gmra.mrb[0].mxu0 %v1872
      %v2236 = vpop.f32.mrb[0].mxu0
      %v2237 = vadd.f32 0.0, %v2236
      %v2238 = vpop.f32.mrb[0].mxu0
      %v2239 = vpop.f32.mrb[0].mxu0
      %v2240 = vadd.f32 0.0, %v2239
      %v2241 = vpop.f32.mrb[0].mxu0
      %2242 = vmatprep.mubr.bf16.mxu0 0
      %2243 = vmatmul.mubr.bf16.gmra.mrb[0].mxu0 %v1875
      %v2244 = vpop.f32.mrb[0].mxu0
      %v2245 = vadd.f32 0.0, %v2244
      %v2246 = vpop.f32.mrb[0].mxu0
      %v2247 = vpop.f32.mrb[0].mxu0
      %v2248 = vadd.f32 0.0, %v2247
      %v2249 = vpop.f32.mrb[0].mxu0
      %2250 = vmatprep.mubr.bf16.mxu0 0
      %2251 = vmatmul.mubr.bf16.gmra.mrb[0].mxu0 %v1878
      %v2252 = vpop.f32.mrb[0].mxu0
      %v2253 = vadd.f32 0.0, %v2252
      %v2254 = vpop.f32.mrb[0].mxu0
      %v2255 = vpop.f32.mrb[0].mxu0
      %v2256 = vadd.f32 0.0, %v2255
      %v2257 = vpop.f32.mrb[0].mxu0
      %2258 = vmatprep.mubr.bf16.mxu0 0
      %2259 = vmatmul.mubr.bf16.gmra.mrb[0].mxu0 %v1881
      %v2260 = vpop.f32.mrb[0].mxu0
      %v2261 = vadd.f32 0.0, %v2260
      %v2262 = vpop.f32.mrb[0].mxu0
      %v2263 = vpop.f32.mrb[0].mxu0
      %v2264 = vadd.f32 0.0, %v2263
      %v2265 = vpop.f32.mrb[0].mxu0
      %2266 = vmatprep.mubr.bf16.mxu0 0
      %2267 = vmatmul.mubr.bf16.gmra.mrb[0].mxu0 %v1884
      %v2268 = vpop.f32.mrb[0].mxu0
      %v2269 = vadd.f32 0.0, %v2268
      %v2270 = vpop.f32.mrb[0].mxu0
      %v2271 = vpop.f32.mrb[0].mxu0
      %v2272 = vadd.f32 0.0, %v2271
      %v2273 = vpop.f32.mrb[0].mxu0
      %2274 = vmatprep.mubr.bf16.mxu0 0
      %2275 = vmatmul.mubr.bf16.gmra.mrb[0].mxu0 %v1887
      %v2276 = vpop.f32.mrb[0].mxu0
      %v2277 = vadd.f32 0.0, %v2276
      %v2278 = vpop.f32.mrb[0].mxu0
      %v2279 = vpop.f32.mrb[0].mxu0
      %v2280 = vadd.f32 0.0, %v2279
      %v2281 = vpop.f32.mrb[0].mxu0
      %2282 = vmatprep.mubr.bf16.mxu0 0
      %2283 = vmatmul.mubr.bf16.gmra.mrb[0].mxu0 %v1890
      %v2284 = vpop.f32.mrb[0].mxu0
      %v2285 = vadd.f32 0.0, %v2284
      %v2286 = vpop.f32.mrb[0].mxu0
      %v2287 = vpop.f32.mrb[0].mxu0
      %v2288 = vadd.f32 0.0, %v2287
      %v2289 = vpop.f32.mrb[0].mxu0
      %2290 = vmatprep.mubr.bf16.mxu0 0
      %2291 = vmatmul.mubr.bf16.gmra.mrb[0].mxu0 %v2122
      %v2292 = vpop.f32.mrb[0].mxu0
      %v2293 = vadd.f32 0.0, %v2292
      %v2294 = vpop.f32.mrb[0].mxu0
      %v2295 = vpop.f32.mrb[0].mxu0
      %v2296 = vadd.f32 0.0, %v2295
      %v2297 = vpop.f32.mrb[0].mxu0
      %2298 = vmatprep.mubr.bf16.mxu0 0
      %2299 = vmatmul.mubr.bf16.gmra.mrb[0].mxu0 %v2125
      %v2300 = vpop.f32.mrb[0].mxu0
      %v2301 = vadd.f32 0.0, %v2300
      %v2302 = vpop.f32.mrb[0].mxu0
      %v2303 = vpop.f32.mrb[0].mxu0
      %v2304 = vadd.f32 0.0, %v2303
      %v2305 = vpop.f32.mrb[0].mxu0
      %2306 = vdwg.mxu0
      %v2307 = vadd.f32 %v2075, %v2165
      %v2308 = vadd.f32 %v2076, %v2168
      %v2309 = vadd.f32 %v2077, %v2173
      %v2310 = vadd.f32 %v2078, %v2176
      %v2311 = vadd.f32 %v2079, %v2181
      %v2312 = vadd.f32 %v2080, %v2184
      %v2313 = vadd.f32 %v2081, %v2189
      %v2314 = vadd.f32 %v2082, %v2192
      %v2315 = vadd.f32 %v2083, %v2197
      %v2316 = vadd.f32 %v2084, %v2200
      %v2317 = vadd.f32 %v2085, %v2205
      %v2318 = vadd.f32 %v2086, %v2208
      %v2319 = vadd.f32 %v2087, %v2213
      %v2320 = vadd.f32 %v2088, %v2216
      %v2321 = vadd.f32 %v2089, %v2221
      %v2322 = vadd.f32 %v2090, %v2224
      %v2323 = vadd.f32 %v2091, %v2229
      %v2324 = vadd.f32 %v2092, %v2232
      %v2325 = vadd.f32 %v2093, %v2237
      %v2326 = vadd.f32 %v2094, %v2240
      %v2327 = vadd.f32 %v2095, %v2245
      %v2328 = vadd.f32 %v2096, %v2248
      %v2329 = vadd.f32 %v2097, %v2253
      %v2330 = vadd.f32 %v2098, %v2256
      %v2331 = vadd.f32 %v2099, %v2261
      %v2332 = vadd.f32 %v2100, %v2264
      %v2333 = vadd.f32 %v2101, %v2269
      %v2334 = vadd.f32 %v2102, %v2272
      %v2335 = vadd.f32 %v2103, %v2277
      %v2336 = vadd.f32 %v2104, %v2280
      %v2337 = vadd.f32 %v2105, %v2285
      %v2338 = vadd.f32 %v2106, %v2288
      %v2339 = vadd.f32 %v2107, %v2293
      %v2340 = vadd.f32 %v2108, %v2296
      %v2341 = vadd.f32 %v2109, %v2301
      %v2342 = vadd.f32 %v2110, %v2304
      %s2343 = scalar_lea.vmem %s1, 14
      %v2344 = vld [vmem:[%s2343] sm:$0x3]
      %vm2345 = vsmask.f32 5376
      %v2346 = vrot.slane %v302, 2
      %v2347 = vrot.slane %v298, 3
      %v2348 = vor.u32 %v2346, %v2347
      %v2349 = vrot.slane %v310, 2
      %v2350 = vrot.slane %v306, 3
      %v2351 = vor.u32 %v2349, %v2350
      %v2352 = vsel %vm2345, %v2348, %v2351
      %v2353 = vrot.slane %v318, 2
      %v2354 = vrot.slane %v314, 3
      %v2355 = vor.u32 %v2353, %v2354
      %v2356 = vsel %vm2345, %v2351, %v2355
      %v2357 = vrot.slane %v326, 2
      %v2358 = vrot.slane %v322, 3
      %v2359 = vor.u32 %v2357, %v2358
      %v2360 = vsel %vm2345, %v2355, %v2359
      %v2361 = vrot.slane %v334, 2
      %v2362 = vrot.slane %v330, 3
      %v2363 = vor.u32 %v2361, %v2362
      %v2364 = vsel %vm2345, %v2359, %v2363
      %v2365 = vrot.slane %v342, 2
      %v2366 = vrot.slane %v338, 3
      %v2367 = vor.u32 %v2365, %v2366
      %v2368 = vsel %vm2345, %v2363, %v2367
      %v2369 = vrot.slane %v350, 2
      %v2370 = vrot.slane %v346, 3
      %v2371 = vor.u32 %v2369, %v2370
      %v2372 = vsel %vm2345, %v2367, %v2371
      %v2373 = vrot.slane %v358, 2
      %v2374 = vrot.slane %v354, 3
      %v2375 = vor.u32 %v2373, %v2374
      %v2376 = vsel %vm2345, %v2371, %v2375
      %v2377 = vrot.slane %v366, 2
      %v2378 = vrot.slane %v362, 3
      %v2379 = vor.u32 %v2377, %v2378
      %v2380 = vsel %vm2345, %v2375, %v2379
      %v2381 = vrot.slane %v374, 2
      %v2382 = vrot.slane %v370, 3
      %v2383 = vor.u32 %v2381, %v2382
      %v2384 = vsel %vm2345, %v2379, %v2383
      %v2385 = vrot.slane %v382, 2
      %v2386 = vrot.slane %v378, 3
      %v2387 = vor.u32 %v2385, %v2386
      %v2388 = vsel %vm2345, %v2383, %v2387
      %v2389 = vrot.slane %v390, 2
      %v2390 = vrot.slane %v386, 3
      %v2391 = vor.u32 %v2389, %v2390
      %v2392 = vsel %vm2345, %v2387, %v2391
      %v2393 = vrot.slane %v398, 2
      %v2394 = vrot.slane %v394, 3
      %v2395 = vor.u32 %v2393, %v2394
      %v2396 = vsel %vm2345, %v2391, %v2395
      %v2397 = vrot.slane %v406, 2
      %v2398 = vrot.slane %v402, 3
      %v2399 = vor.u32 %v2397, %v2398
      %v2400 = vsel %vm2345, %v2395, %v2399
      %v2401 = vrot.slane %v414, 2
      %v2402 = vrot.slane %v410, 3
      %v2403 = vor.u32 %v2401, %v2402
      %v2404 = vsel %vm2345, %v2399, %v2403
      %v2405 = vrot.slane %v422, 2
      %v2406 = vrot.slane %v418, 3
      %v2407 = vor.u32 %v2405, %v2406
      %v2408 = vsel %vm2345, %v2403, %v2407
      %v2409 = vrot.slane %v1514, 2
      %v2410 = vrot.slane %v1517, 3
      %v2411 = vor.u32 %v2409, %v2410
      %v2412 = vsel %vm2345, %v2407, %v2411
      %v2414 = vshrl.u32 %v2111, 16
      %v2416 = vrot.slane %v2414, 2
      %v2417 = vshll.u32 %v2111, 16
      %v2419 = vrot.slane %v2417, 3
      %v2420 = vor.u32 %v2416, %v2419
      %v2421 = vsel %vm2345, %v2411, %v2420
      %v2423 = vshrl.u32 %v2112, 16
      %v2425 = vrot.slane %v2423, 2
      %v2426 = vshll.u32 %v2112, 16
      %v2428 = vrot.slane %v2426, 3
      %v2429 = vor.u32 %v2425, %v2428
      %v2430 = vsel %vm2345, %v2420, %v2429
      %v2432 = vsel %vm430, %v2352, 0
      %v2435 = vsel %vm430, %v2356, 0
      %v2438 = vsel %vm430, %v2360, 0
      %v2441 = vsel %vm430, %v2364, 0
      %v2444 = vsel %vm430, %v2368, 0
      %v2447 = vsel %vm430, %v2372, 0
      %v2450 = vsel %vm430, %v2376, 0
      %v2453 = vsel %vm430, %v2380, 0
      %v2456 = vsel %vm430, %v2384, 0
      %v2459 = vsel %vm430, %v2388, 0
      %v2462 = vsel %vm430, %v2392, 0
      %v2465 = vsel %vm430, %v2396, 0
      %v2468 = vsel %vm430, %v2400, 0
      %v2471 = vsel %vm430, %v2404, 0
      %v2474 = vsel %vm430, %v2408, 0
      %v2477 = vsel %vm430, %v2412, 0
      %v2480 = vsel %vm430, %v2421, 0
      %v2483 = vsel %vm430, %v2430, 0
      %v2486 = vsel %vm485, %v2344, 0
      %2488 = vmatprep.subr.bf16.mxu0 0
      %2489 = vmatpush1.bf16.msra.mxu0 %v2486
      %2490 = vmatprep.subr.bf16.mxu0 0
      %2491 = vmatpush1.bf16.msra.mxu0 0
      %2492 = vmatprep.subr.bf16.mxu0 0
      %2493 = vmatpush1.bf16.msra.mxu0 0
      %2494 = vmatprep.subr.bf16.mxu0 0
      %2495 = vmatpush1.bf16.msra.mxu0 0
      %2496 = vmatprep.subr.bf16.mxu0 0
      %2497 = vmatpush1.bf16.msra.mxu0 0
      %2498 = vmatprep.subr.bf16.mxu0 0
      %2499 = vmatpush1.bf16.msra.mxu0 0
      %2500 = vmatprep.subr.bf16.mxu0 0
      %2501 = vmatpush1.bf16.msra.mxu0 0
      %2502 = vmatprep.subr.bf16.mxu0 0
      %2503 = vmatpush1.bf16.msra.mxu0 0
      %2504 = vmatprep.subr.bf16.mxu0 0
      %2505 = vmatpush1.bf16.msra.mxu0 0
      %2506 = vmatprep.subr.bf16.mxu0 0
      %2507 = vmatpush1.bf16.msra.mxu0 0
      %2508 = vmatprep.subr.bf16.mxu0 0
      %2509 = vmatpush1.bf16.msra.mxu0 0
      %2510 = vmatprep.subr.bf16.mxu0 0
      %2511 = vmatpush1.bf16.msra.mxu0 0
      %2512 = vmatprep.subr.bf16.mxu0 0
      %2513 = vmatpush1.bf16.msra.mxu0 0
      %2514 = vmatprep.subr.bf16.mxu0 0
      %2515 = vmatpush1.bf16.msra.mxu0 0
      %2516 = vmatprep.subr.bf16.mxu0 0
      %2517 = vmatpush1.bf16.msra.mxu0 0
      %2518 = vmatprep.subr.bf16.mxu0 0
      %2519 = vmatpush1.bf16.msra.mxu0 0
      %2520 = vmatprep.mubr.bf16.mxu0 0
      %2521 = vmatmul.mubr.bf16.gmra.mrb[0].mxu0 %v2432
      %v2522 = vpop.f32.mrb[0].mxu0
      %v2523 = vadd.f32 0.0, %v2522
      %v2524 = vpop.f32.mrb[0].mxu0
      %v2525 = vpop.f32.mrb[0].mxu0
      %v2526 = vadd.f32 0.0, %v2525
      %v2527 = vpop.f32.mrb[0].mxu0
      %2528 = vmatprep.mubr.bf16.mxu0 0
      %2529 = vmatmul.mubr.bf16.gmra.mrb[0].mxu0 %v2435
      %v2530 = vpop.f32.mrb[0].mxu0
      %v2531 = vadd.f32 0.0, %v2530
      %v2532 = vpop.f32.mrb[0].mxu0
      %v2533 = vpop.f32.mrb[0].mxu0
      %v2534 = vadd.f32 0.0, %v2533
      %v2535 = vpop.f32.mrb[0].mxu0
      %2536 = vmatprep.mubr.bf16.mxu0 0
      %2537 = vmatmul.mubr.bf16.gmra.mrb[0].mxu0 %v2438
      %v2538 = vpop.f32.mrb[0].mxu0
      %v2539 = vadd.f32 0.0, %v2538
      %v2540 = vpop.f32.mrb[0].mxu0
      %v2541 = vpop.f32.mrb[0].mxu0
      %v2542 = vadd.f32 0.0, %v2541
      %v2543 = vpop.f32.mrb[0].mxu0
      %2544 = vmatprep.mubr.bf16.mxu0 0
      %2545 = vmatmul.mubr.bf16.gmra.mrb[0].mxu0 %v2441
      %v2546 = vpop.f32.mrb[0].mxu0
      %v2547 = vadd.f32 0.0, %v2546
      %v2548 = vpop.f32.mrb[0].mxu0
      %v2549 = vpop.f32.mrb[0].mxu0
      %v2550 = vadd.f32 0.0, %v2549
      %v2551 = vpop.f32.mrb[0].mxu0
      %2552 = vmatprep.mubr.bf16.mxu0 0
      %2553 = vmatmul.mubr.bf16.gmra.mrb[0].mxu0 %v2444
      %v2554 = vpop.f32.mrb[0].mxu0
      %v2555 = vadd.f32 0.0, %v2554
      %v2556 = vpop.f32.mrb[0].mxu0
      %v2557 = vpop.f32.mrb[0].mxu0
      %v2558 = vadd.f32 0.0, %v2557
      %v2559 = vpop.f32.mrb[0].mxu0
      %2560 = vmatprep.mubr.bf16.mxu0 0
      %2561 = vmatmul.mubr.bf16.gmra.mrb[0].mxu0 %v2447
      %v2562 = vpop.f32.mrb[0].mxu0
      %v2563 = vadd.f32 0.0, %v2562
      %v2564 = vpop.f32.mrb[0].mxu0
      %v2565 = vpop.f32.mrb[0].mxu0
      %v2566 = vadd.f32 0.0, %v2565
      %v2567 = vpop.f32.mrb[0].mxu0
      %2568 = vmatprep.mubr.bf16.mxu0 0
      %2569 = vmatmul.mubr.bf16.gmra.mrb[0].mxu0 %v2450
      %v2570 = vpop.f32.mrb[0].mxu0
      %v2571 = vadd.f32 0.0, %v2570
      %v2572 = vpop.f32.mrb[0].mxu0
      %v2573 = vpop.f32.mrb[0].mxu0
      %v2574 = vadd.f32 0.0, %v2573
      %v2575 = vpop.f32.mrb[0].mxu0
      %2576 = vmatprep.mubr.bf16.mxu0 0
      %2577 = vmatmul.mubr.bf16.gmra.mrb[0].mxu0 %v2453
      %v2578 = vpop.f32.mrb[0].mxu0
      %v2579 = vadd.f32 0.0, %v2578
      %v2580 = vpop.f32.mrb[0].mxu0
      %v2581 = vpop.f32.mrb[0].mxu0
      %v2582 = vadd.f32 0.0, %v2581
      %v2583 = vpop.f32.mrb[0].mxu0
      %2584 = vmatprep.mubr.bf16.mxu0 0
      %2585 = vmatmul.mubr.bf16.gmra.mrb[0].mxu0 %v2456
      %v2586 = vpop.f32.mrb[0].mxu0
      %v2587 = vadd.f32 0.0, %v2586
      %v2588 = vpop.f32.mrb[0].mxu0
      %v2589 = vpop.f32.mrb[0].mxu0
      %v2590 = vadd.f32 0.0, %v2589
      %v2591 = vpop.f32.mrb[0].mxu0
      %2592 = vmatprep.mubr.bf16.mxu0 0
      %2593 = vmatmul.mubr.bf16.gmra.mrb[0].mxu0 %v2459
      %v2594 = vpop.f32.mrb[0].mxu0
      %v2595 = vadd.f32 0.0, %v2594
      %v2596 = vpop.f32.mrb[0].mxu0
      %v2597 = vpop.f32.mrb[0].mxu0
      %v2598 = vadd.f32 0.0, %v2597
      %v2599 = vpop.f32.mrb[0].mxu0
      %2600 = vmatprep.mubr.bf16.mxu0 0
      %2601 = vmatmul.mubr.bf16.gmra.mrb[0].mxu0 %v2462
      %v2602 = vpop.f32.mrb[0].mxu0
      %v2603 = vadd.f32 0.0, %v2602
      %v2604 = vpop.f32.mrb[0].mxu0
      %v2605 = vpop.f32.mrb[0].mxu0
      %v2606 = vadd.f32 0.0, %v2605
      %v2607 = vpop.f32.mrb[0].mxu0
      %2608 = vmatprep.mubr.bf16.mxu0 0
      %2609 = vmatmul.mubr.bf16.gmra.mrb[0].mxu0 %v2465
      %v2610 = vpop.f32.mrb[0].mxu0
      %v2611 = vadd.f32 0.0, %v2610
      %v2612 = vpop.f32.mrb[0].mxu0
      %v2613 = vpop.f32.mrb[0].mxu0
      %v2614 = vadd.f32 0.0, %v2613
      %v2615 = vpop.f32.mrb[0].mxu0
      %2616 = vmatprep.mubr.bf16.mxu0 0
      %2617 = vmatmul.mubr.bf16.gmra.mrb[0].mxu0 %v2468
      %v2618 = vpop.f32.mrb[0].mxu0
      %v2619 = vadd.f32 0.0, %v2618
      %v2620 = vpop.f32.mrb[0].mxu0
      %v2621 = vpop.f32.mrb[0].mxu0
      %v2622 = vadd.f32 0.0, %v2621
      %v2623 = vpop.f32.mrb[0].mxu0
      %2624 = vmatprep.mubr.bf16.mxu0 0
      %2625 = vmatmul.mubr.bf16.gmra.mrb[0].mxu0 %v2471
      %v2626 = vpop.f32.mrb[0].mxu0
      %v2627 = vadd.f32 0.0, %v2626
      %v2628 = vpop.f32.mrb[0].mxu0
      %v2629 = vpop.f32.mrb[0].mxu0
      %v2630 = vadd.f32 0.0, %v2629
      %v2631 = vpop.f32.mrb[0].mxu0
      %2632 = vmatprep.mubr.bf16.mxu0 0
      %2633 = vmatmul.mubr.bf16.gmra.mrb[0].mxu0 %v2474
      %v2634 = vpop.f32.mrb[0].mxu0
      %v2635 = vadd.f32 0.0, %v2634
      %v2636 = vpop.f32.mrb[0].mxu0
      %v2637 = vpop.f32.mrb[0].mxu0
      %v2638 = vadd.f32 0.0, %v2637
      %v2639 = vpop.f32.mrb[0].mxu0
      %2640 = vmatprep.mubr.bf16.mxu0 0
      %2641 = vmatmul.mubr.bf16.gmra.mrb[0].mxu0 %v2477
      %v2642 = vpop.f32.mrb[0].mxu0
      %v2643 = vadd.f32 0.0, %v2642
      %v2644 = vpop.f32.mrb[0].mxu0
      %v2645 = vpop.f32.mrb[0].mxu0
      %v2646 = vadd.f32 0.0, %v2645
      %v2647 = vpop.f32.mrb[0].mxu0
      %2648 = vmatprep.mubr.bf16.mxu0 0
      %2649 = vmatmul.mubr.bf16.gmra.mrb[0].mxu0 %v2480
      %v2650 = vpop.f32.mrb[0].mxu0
      %v2651 = vadd.f32 0.0, %v2650
      %v2652 = vpop.f32.mrb[0].mxu0
      %v2653 = vpop.f32.mrb[0].mxu0
      %v2654 = vadd.f32 0.0, %v2653
      %v2655 = vpop.f32.mrb[0].mxu0
      %2656 = vmatprep.mubr.bf16.mxu0 0
      %2657 = vmatmul.mubr.bf16.gmra.mrb[0].mxu0 %v2483
      %v2658 = vpop.f32.mrb[0].mxu0
      %v2659 = vadd.f32 0.0, %v2658
      %v2660 = vpop.f32.mrb[0].mxu0
      %v2661 = vpop.f32.mrb[0].mxu0
      %v2662 = vadd.f32 0.0, %v2661
      %v2663 = vpop.f32.mrb[0].mxu0
      %2664 = vdwg.mxu0
      %v2665 = vadd.f32 %v2307, %v2523
      %v2666 = vadd.f32 %v2308, %v2526
      %v2667 = vadd.f32 %v2309, %v2531
      %v2668 = vadd.f32 %v2310, %v2534
      %v2669 = vadd.f32 %v2311, %v2539
      %v2670 = vadd.f32 %v2312, %v2542
      %v2671 = vadd.f32 %v2313, %v2547
      %v2672 = vadd.f32 %v2314, %v2550
      %v2673 = vadd.f32 %v2315, %v2555
      %v2674 = vadd.f32 %v2316, %v2558
      %v2675 = vadd.f32 %v2317, %v2563
      %v2676 = vadd.f32 %v2318, %v2566
      %v2677 = vadd.f32 %v2319, %v2571
      %v2678 = vadd.f32 %v2320, %v2574
      %v2679 = vadd.f32 %v2321, %v2579
      %v2680 = vadd.f32 %v2322, %v2582
      %v2681 = vadd.f32 %v2323, %v2587
      %v2682 = vadd.f32 %v2324, %v2590
      %v2683 = vadd.f32 %v2325, %v2595
      %v2684 = vadd.f32 %v2326, %v2598
      %v2685 = vadd.f32 %v2327, %v2603
      %v2686 = vadd.f32 %v2328, %v2606
      %v2687 = vadd.f32 %v2329, %v2611
      %v2688 = vadd.f32 %v2330, %v2614
      %v2689 = vadd.f32 %v2331, %v2619
      %v2690 = vadd.f32 %v2332, %v2622
      %v2691 = vadd.f32 %v2333, %v2627
      %v2692 = vadd.f32 %v2334, %v2630
      %v2693 = vadd.f32 %v2335, %v2635
      %v2694 = vadd.f32 %v2336, %v2638
      %v2695 = vadd.f32 %v2337, %v2643
      %v2696 = vadd.f32 %v2338, %v2646
      %v2697 = vadd.f32 %v2339, %v2651
      %v2698 = vadd.f32 %v2340, %v2654
      %v2699 = vadd.f32 %v2341, %v2659
      %v2700 = vadd.f32 %v2342, %v2662
      %s2701 = scalar_lea.vmem %s1, 16
      %v2702 = vld [vmem:[%s2701] sm:$0x3]
      %vm2703 = vcmask 1044480
      %v2704 = vrot.slane %v261, 3
      %v2705 = vrot.slane %v262, 3
      %v2706 = vsel %vm2703, %v2704, %v2705
      %v2707 = vrot.slane %v263, 3
      %v2708 = vsel %vm2703, %v2705, %v2707
      %v2709 = vrot.slane %v264, 3
      %v2710 = vsel %vm2703, %v2707, %v2709
      %v2711 = vrot.slane %v265, 3
      %v2712 = vsel %vm2703, %v2709, %v2711
      %v2713 = vrot.slane %v266, 3
      %v2714 = vsel %vm2703, %v2711, %v2713
      %v2715 = vrot.slane %v267, 3
      %v2716 = vsel %vm2703, %v2713, %v2715
      %v2717 = vrot.slane %v268, 3
      %v2718 = vsel %vm2703, %v2715, %v2717
      %v2719 = vrot.slane %v269, 3
      %v2720 = vsel %vm2703, %v2717, %v2719
      %v2721 = vrot.slane %v270, 3
      %v2722 = vsel %vm2703, %v2719, %v2721
      %v2723 = vrot.slane %v271, 3
      %v2724 = vsel %vm2703, %v2721, %v2723
      %v2725 = vrot.slane %v272, 3
      %v2726 = vsel %vm2703, %v2723, %v2725
      %v2727 = vrot.slane %v273, 3
      %v2728 = vsel %vm2703, %v2725, %v2727
      %v2729 = vrot.slane %v274, 3
      %v2730 = vsel %vm2703, %v2727, %v2729
      %v2731 = vrot.slane %v275, 3
      %v2732 = vsel %vm2703, %v2729, %v2731
      %v2733 = vrot.slane %v276, 3
      %v2734 = vsel %vm2703, %v2731, %v2733
      %v2735 = vrot.slane %v1211, 3
      %v2736 = vsel %vm2703, %v2733, %v2735
      %v2737 = vrot.slane %v2111, 3
      %v2738 = vsel %vm2703, %v2735, %v2737
      %v2739 = vrot.slane %v2112, 3
      %v2740 = vsel %vm2703, %v2737, %v2739
      %v2742 = vsel %vm430, %v2706, 0
      %v2745 = vsel %vm430, %v2708, 0
      %v2748 = vsel %vm430, %v2710, 0
      %v2751 = vsel %vm430, %v2712, 0
      %v2754 = vsel %vm430, %v2714, 0
      %v2757 = vsel %vm430, %v2716, 0
      %v2760 = vsel %vm430, %v2718, 0
      %v2763 = vsel %vm430, %v2720, 0
      %v2766 = vsel %vm430, %v2722, 0
      %v2769 = vsel %vm430, %v2724, 0
      %v2772 = vsel %vm430, %v2726, 0
      %v2775 = vsel %vm430, %v2728, 0
      %v2778 = vsel %vm430, %v2730, 0
      %v2781 = vsel %vm430, %v2732, 0
      %v2784 = vsel %vm430, %v2734, 0
      %v2787 = vsel %vm430, %v2736, 0
      %v2790 = vsel %vm430, %v2738, 0
      %v2793 = vsel %vm430, %v2740, 0
      %v2796 = vsel %vm485, %v2702, 0
      %2798 = vmatprep.subr.bf16.mxu0 0
      %2799 = vmatpush1.bf16.msra.mxu0 %v2796
      %2800 = vmatprep.subr.bf16.mxu0 0
      %2801 = vmatpush1.bf16.msra.mxu0 0
      %2802 = vmatprep.subr.bf16.mxu0 0
      %2803 = vmatpush1.bf16.msra.mxu0 0
      %2804 = vmatprep.subr.bf16.mxu0 0
      %2805 = vmatpush1.bf16.msra.mxu0 0
      %2806 = vmatprep.subr.bf16.mxu0 0
      %2807 = vmatpush1.bf16.msra.mxu0 0
      %2808 = vmatprep.subr.bf16.mxu0 0
      %2809 = vmatpush1.bf16.msra.mxu0 0
      %2810 = vmatprep.subr.bf16.mxu0 0
      %2811 = vmatpush1.bf16.msra.mxu0 0
      %2812 = vmatprep.subr.bf16.mxu0 0
      %2813 = vmatpush1.bf16.msra.mxu0 0
      %2814 = vmatprep.subr.bf16.mxu0 0
      %2815 = vmatpush1.bf16.msra.mxu0 0
      %2816 = vmatprep.subr.bf16.mxu0 0
      %2817 = vmatpush1.bf16.msra.mxu0 0
      %2818 = vmatprep.subr.bf16.mxu0 0
      %2819 = vmatpush1.bf16.msra.mxu0 0
      %2820 = vmatprep.subr.bf16.mxu0 0
      %2821 = vmatpush1.bf16.msra.mxu0 0
      %2822 = vmatprep.subr.bf16.mxu0 0
      %2823 = vmatpush1.bf16.msra.mxu0 0
      %2824 = vmatprep.subr.bf16.mxu0 0
      %2825 = vmatpush1.bf16.msra.mxu0 0
      %2826 = vmatprep.subr.bf16.mxu0 0
      %2827 = vmatpush1.bf16.msra.mxu0 0
      %2828 = vmatprep.subr.bf16.mxu0 0
      %2829 = vmatpush1.bf16.msra.mxu0 0
      %2830 = vmatprep.mubr.bf16.mxu0 0
      %2831 = vmatmul.mubr.bf16.gmra.mrb[0].mxu0 %v2742
      %v2832 = vpop.f32.mrb[0].mxu0
      %v2833 = vadd.f32 0.0, %v2832
      %v2834 = vpop.f32.mrb[0].mxu0
      %v2835 = vpop.f32.mrb[0].mxu0
      %v2836 = vadd.f32 0.0, %v2835
      %v2837 = vpop.f32.mrb[0].mxu0
      %2838 = vmatprep.mubr.bf16.mxu0 0
      %2839 = vmatmul.mubr.bf16.gmra.mrb[0].mxu0 %v2745
      %v2840 = vpop.f32.mrb[0].mxu0
      %v2841 = vadd.f32 0.0, %v2840
      %v2842 = vpop.f32.mrb[0].mxu0
      %v2843 = vpop.f32.mrb[0].mxu0
      %v2844 = vadd.f32 0.0, %v2843
      %v2845 = vpop.f32.mrb[0].mxu0
      %2846 = vmatprep.mubr.bf16.mxu0 0
      %2847 = vmatmul.mubr.bf16.gmra.mrb[0].mxu0 %v2748
      %v2848 = vpop.f32.mrb[0].mxu0
      %v2849 = vadd.f32 0.0, %v2848
      %v2850 = vpop.f32.mrb[0].mxu0
      %v2851 = vpop.f32.mrb[0].mxu0
      %v2852 = vadd.f32 0.0, %v2851
      %v2853 = vpop.f32.mrb[0].mxu0
      %2854 = vmatprep.mubr.bf16.mxu0 0
      %2855 = vmatmul.mubr.bf16.gmra.mrb[0].mxu0 %v2751
      %v2856 = vpop.f32.mrb[0].mxu0
      %v2857 = vadd.f32 0.0, %v2856
      %v2858 = vpop.f32.mrb[0].mxu0
      %v2859 = vpop.f32.mrb[0].mxu0
      %v2860 = vadd.f32 0.0, %v2859
      %v2861 = vpop.f32.mrb[0].mxu0
      %2862 = vmatprep.mubr.bf16.mxu0 0
      %2863 = vmatmul.mubr.bf16.gmra.mrb[0].mxu0 %v2754
      %v2864 = vpop.f32.mrb[0].mxu0
      %v2865 = vadd.f32 0.0, %v2864
      %v2866 = vpop.f32.mrb[0].mxu0
      %v2867 = vpop.f32.mrb[0].mxu0
      %v2868 = vadd.f32 0.0, %v2867
      %v2869 = vpop.f32.mrb[0].mxu0
      %2870 = vmatprep.mubr.bf16.mxu0 0
      %2871 = vmatmul.mubr.bf16.gmra.mrb[0].mxu0 %v2757
      %v2872 = vpop.f32.mrb[0].mxu0
      %v2873 = vadd.f32 0.0, %v2872
      %v2874 = vpop.f32.mrb[0].mxu0
      %v2875 = vpop.f32.mrb[0].mxu0
      %v2876 = vadd.f32 0.0, %v2875
      %v2877 = vpop.f32.mrb[0].mxu0
      %2878 = vmatprep.mubr.bf16.mxu0 0
      %2879 = vmatmul.mubr.bf16.gmra.mrb[0].mxu0 %v2760
      %v2880 = vpop.f32.mrb[0].mxu0
      %v2881 = vadd.f32 0.0, %v2880
      %v2882 = vpop.f32.mrb[0].mxu0
      %v2883 = vpop.f32.mrb[0].mxu0
      %v2884 = vadd.f32 0.0, %v2883
      %v2885 = vpop.f32.mrb[0].mxu0
      %2886 = vmatprep.mubr.bf16.mxu0 0
      %2887 = vmatmul.mubr.bf16.gmra.mrb[0].mxu0 %v2763
      %v2888 = vpop.f32.mrb[0].mxu0
      %v2889 = vadd.f32 0.0, %v2888
      %v2890 = vpop.f32.mrb[0].mxu0
      %v2891 = vpop.f32.mrb[0].mxu0
      %v2892 = vadd.f32 0.0, %v2891
      %v2893 = vpop.f32.mrb[0].mxu0
      %2894 = vmatprep.mubr.bf16.mxu0 0
      %2895 = vmatmul.mubr.bf16.gmra.mrb[0].mxu0 %v2766
      %v2896 = vpop.f32.mrb[0].mxu0
      %v2897 = vadd.f32 0.0, %v2896
      %v2898 = vpop.f32.mrb[0].mxu0
      %v2899 = vpop.f32.mrb[0].mxu0
      %v2900 = vadd.f32 0.0, %v2899
      %v2901 = vpop.f32.mrb[0].mxu0
      %2902 = vmatprep.mubr.bf16.mxu0 0
      %2903 = vmatmul.mubr.bf16.gmra.mrb[0].mxu0 %v2769
      %v2904 = vpop.f32.mrb[0].mxu0
      %v2905 = vadd.f32 0.0, %v2904
      %v2906 = vpop.f32.mrb[0].mxu0
      %v2907 = vpop.f32.mrb[0].mxu0
      %v2908 = vadd.f32 0.0, %v2907
      %v2909 = vpop.f32.mrb[0].mxu0
      %2910 = vmatprep.mubr.bf16.mxu0 0
      %2911 = vmatmul.mubr.bf16.gmra.mrb[0].mxu0 %v2772
      %v2912 = vpop.f32.mrb[0].mxu0
      %v2913 = vadd.f32 0.0, %v2912
      %v2914 = vpop.f32.mrb[0].mxu0
      %v2915 = vpop.f32.mrb[0].mxu0
      %v2916 = vadd.f32 0.0, %v2915
      %v2917 = vpop.f32.mrb[0].mxu0
      %2918 = vmatprep.mubr.bf16.mxu0 0
      %2919 = vmatmul.mubr.bf16.gmra.mrb[0].mxu0 %v2775
      %v2920 = vpop.f32.mrb[0].mxu0
      %v2921 = vadd.f32 0.0, %v2920
      %v2922 = vpop.f32.mrb[0].mxu0
      %v2923 = vpop.f32.mrb[0].mxu0
      %v2924 = vadd.f32 0.0, %v2923
      %v2925 = vpop.f32.mrb[0].mxu0
      %2926 = vmatprep.mubr.bf16.mxu0 0
      %2927 = vmatmul.mubr.bf16.gmra.mrb[0].mxu0 %v2778
      %v2928 = vpop.f32.mrb[0].mxu0
      %v2929 = vadd.f32 0.0, %v2928
      %v2930 = vpop.f32.mrb[0].mxu0
      %v2931 = vpop.f32.mrb[0].mxu0
      %v2932 = vadd.f32 0.0, %v2931
      %v2933 = vpop.f32.mrb[0].mxu0
      %2934 = vmatprep.mubr.bf16.mxu0 0
      %2935 = vmatmul.mubr.bf16.gmra.mrb[0].mxu0 %v2781
      %v2936 = vpop.f32.mrb[0].mxu0
      %v2937 = vadd.f32 0.0, %v2936
      %v2938 = vpop.f32.mrb[0].mxu0
      %v2939 = vpop.f32.mrb[0].mxu0
      %v2940 = vadd.f32 0.0, %v2939
      %v2941 = vpop.f32.mrb[0].mxu0
      %2942 = vmatprep.mubr.bf16.mxu0 0
      %2943 = vmatmul.mubr.bf16.gmra.mrb[0].mxu0 %v2784
      %v2944 = vpop.f32.mrb[0].mxu0
      %v2945 = vadd.f32 0.0, %v2944
      %v2946 = vpop.f32.mrb[0].mxu0
      %v2947 = vpop.f32.mrb[0].mxu0
      %v2948 = vadd.f32 0.0, %v2947
      %v2949 = vpop.f32.mrb[0].mxu0
      %2950 = vmatprep.mubr.bf16.mxu0 0
      %2951 = vmatmul.mubr.bf16.gmra.mrb[0].mxu0 %v2787
      %v2952 = vpop.f32.mrb[0].mxu0
      %v2953 = vadd.f32 0.0, %v2952
      %v2954 = vpop.f32.mrb[0].mxu0
      %v2955 = vpop.f32.mrb[0].mxu0
      %v2956 = vadd.f32 0.0, %v2955
      %v2957 = vpop.f32.mrb[0].mxu0
      %2958 = vmatprep.mubr.bf16.mxu0 0
      %2959 = vmatmul.mubr.bf16.gmra.mrb[0].mxu0 %v2790
      %v2960 = vpop.f32.mrb[0].mxu0
      %v2961 = vadd.f32 0.0, %v2960
      %v2962 = vpop.f32.mrb[0].mxu0
      %v2963 = vpop.f32.mrb[0].mxu0
      %v2964 = vadd.f32 0.0, %v2963
      %v2965 = vpop.f32.mrb[0].mxu0
      %2966 = vmatprep.mubr.bf16.mxu0 0
      %2967 = vmatmul.mubr.bf16.gmra.mrb[0].mxu0 %v2793
      %v2968 = vpop.f32.mrb[0].mxu0
      %v2969 = vadd.f32 0.0, %v2968
      %v2970 = vpop.f32.mrb[0].mxu0
      %v2971 = vpop.f32.mrb[0].mxu0
      %v2972 = vadd.f32 0.0, %v2971
      %v2973 = vpop.f32.mrb[0].mxu0
      %2974 = vdwg.mxu0
      %v2975 = vadd.f32 %v2665, %v2833
      %v2976 = vadd.f32 %v2666, %v2836
      %v2977 = vadd.f32 %v2667, %v2841
      %v2978 = vadd.f32 %v2668, %v2844
      %v2979 = vadd.f32 %v2669, %v2849
      %v2980 = vadd.f32 %v2670, %v2852
      %v2981 = vadd.f32 %v2671, %v2857
      %v2982 = vadd.f32 %v2672, %v2860
      %v2983 = vadd.f32 %v2673, %v2865
      %v2984 = vadd.f32 %v2674, %v2868
      %v2985 = vadd.f32 %v2675, %v2873
      %v2986 = vadd.f32 %v2676, %v2876
      %v2987 = vadd.f32 %v2677, %v2881
      %v2988 = vadd.f32 %v2678, %v2884
      %v2989 = vadd.f32 %v2679, %v2889
      %v2990 = vadd.f32 %v2680, %v2892
      %v2991 = vadd.f32 %v2681, %v2897
      %v2992 = vadd.f32 %v2682, %v2900
      %v2993 = vadd.f32 %v2683, %v2905
      %v2994 = vadd.f32 %v2684, %v2908
      %v2995 = vadd.f32 %v2685, %v2913
      %v2996 = vadd.f32 %v2686, %v2916
      %v2997 = vadd.f32 %v2687, %v2921
      %v2998 = vadd.f32 %v2688, %v2924
      %v2999 = vadd.f32 %v2689, %v2929
      %v3000 = vadd.f32 %v2690, %v2932
      %v3001 = vadd.f32 %v2691, %v2937
      %v3002 = vadd.f32 %v2692, %v2940
      %v3003 = vadd.f32 %v2693, %v2945
      %v3004 = vadd.f32 %v2694, %v2948
      %v3005 = vadd.f32 %v2695, %v2953
      %v3006 = vadd.f32 %v2696, %v2956
      %v3007 = vadd.f32 %v2697, %v2961
      %v3008 = vadd.f32 %v2698, %v2964
      %v3009 = vadd.f32 %v2699, %v2969
      %v3010 = vadd.f32 %v2700, %v2972
      %v3011 = vlaneseq
      %v3012 = vshrl.u32 %v3011, 7
      %v3013 = vadd.s32 %v3012, 8
      %v3014 = vadd.s32 %v3012, 16
      %v3015 = vadd.s32 %v3012, 24
      %v3016 = vadd.s32 %v3012, 32
      %v3017 = vadd.s32 %v3012, 40
      %v3018 = vadd.s32 %v3012, 48
      %v3019 = vadd.s32 %v3012, 56
      %v3020 = vadd.s32 %v3012, 64
      %v3021 = vadd.s32 %v3012, 72
      %v3022 = vadd.s32 %v3012, 80
      %v3023 = vadd.s32 %v3012, 88
      %v3024 = vadd.s32 %v3012, 96
      %v3025 = vadd.s32 %v3012, 104
      %v3026 = vadd.s32 %v3012, 112
      %v3027 = vadd.s32 %v3012, 120
      %v3028 = vadd.s32 %v3012, 128
      %v3029 = vadd.s32 %v3012, 136
      %v3030 = vadd.s32 %v3012, 144
      %v3031 = vadd.s32 %v3012, 152
      %v3032 = vadd.s32 %v3012, 160
      %v3033 = vadd.s32 %v3012, 168
      %v3034 = vadd.s32 %v3012, 176
      %v3035 = vadd.s32 %v3012, 184
      %v3036 = vadd.s32 %v3012, 192
      %v3037 = vadd.s32 %v3012, 200
      %v3038 = vadd.s32 %v3012, 208
      %v3039 = vadd.s32 %v3012, 216
      %v3040 = vadd.s32 %v3012, 224
      %v3041 = vadd.s32 %v3012, 232
      %v3042 = vadd.s32 %v3012, 240
      %v3043 = vadd.s32 %v3012, 248
      %v3044 = vadd.s32 %v3012, 256
      %v3045 = vadd.s32 %v3012, 264
      %v3046 = vadd.s32 %v3012, 272
      %v3047 = vadd.s32 %v3012, 280
      %vm3048 = vcmp.lt.s32.totalorder %v3012, 0
      %v3049 = vsub.s32 0, %v3012
      %v3050 = vsel %vm3048, %v3049, %v3012
      %v3051 = vmul.u32.u64.compose %v3050, 3817748708
      %v3052 = vextract.low.u32 %v3051
      %v3053 = vextract.high.u32 %v3051
      %v3054 = vshrl.u32 %v3053, 4
      %v3055 = vmul.u32 %v3054, 18
      %v3056 = vsub.s32 %v3050, %v3055
      %v3057 = vsub.s32 0, %v3056
      %v3058 = vsel %vm3048, %v3057, %v3056
      %vm3059 = vcmp.lt.s32.totalorder %v3013, 0
      %v3060 = vsub.s32 0, %v3013
      %v3061 = vsel %vm3059, %v3060, %v3013
      %v3062 = vmul.u32.u64.compose %v3061, 3817748708
      %v3063 = vextract.low.u32 %v3062
      %v3064 = vextract.high.u32 %v3062
      %v3065 = vshrl.u32 %v3064, 4
      %v3066 = vmul.u32 %v3065, 18
      %v3067 = vsub.s32 %v3061, %v3066
      %v3068 = vsub.s32 0, %v3067
      %v3069 = vsel %vm3059, %v3068, %v3067
      %vm3070 = vcmp.lt.s32.totalorder %v3014, 0
      %v3071 = vsub.s32 0, %v3014
      %v3072 = vsel %vm3070, %v3071, %v3014
      %v3073 = vmul.u32.u64.compose %v3072, 3817748708
      %v3074 = vextract.low.u32 %v3073
      %v3075 = vextract.high.u32 %v3073
      %v3076 = vshrl.u32 %v3075, 4
      %v3077 = vmul.u32 %v3076, 18
      %v3078 = vsub.s32 %v3072, %v3077
      %v3079 = vsub.s32 0, %v3078
      %v3080 = vsel %vm3070, %v3079, %v3078
      %vm3081 = vcmp.lt.s32.totalorder %v3015, 0
      %v3082 = vsub.s32 0, %v3015
      %v3083 = vsel %vm3081, %v3082, %v3015
      %v3084 = vmul.u32.u64.compose %v3083, 3817748708
      %v3085 = vextract.low.u32 %v3084
      %v3086 = vextract.high.u32 %v3084
      %v3087 = vshrl.u32 %v3086, 4
      %v3088 = vmul.u32 %v3087, 18
      %v3089 = vsub.s32 %v3083, %v3088
      %v3090 = vsub.s32 0, %v3089
      %v3091 = vsel %vm3081, %v3090, %v3089
      %vm3092 = vcmp.lt.s32.totalorder %v3016, 0
      %v3093 = vsub.s32 0, %v3016
      %v3094 = vsel %vm3092, %v3093, %v3016
      %v3095 = vmul.u32.u64.compose %v3094, 3817748708
      %v3096 = vextract.low.u32 %v3095
      %v3097 = vextract.high.u32 %v3095
      %v3098 = vshrl.u32 %v3097, 4
      %v3099 = vmul.u32 %v3098, 18
      %v3100 = vsub.s32 %v3094, %v3099
      %v3101 = vsub.s32 0, %v3100
      %v3102 = vsel %vm3092, %v3101, %v3100
      %vm3103 = vcmp.lt.s32.totalorder %v3017, 0
      %v3104 = vsub.s32 0, %v3017
      %v3105 = vsel %vm3103, %v3104, %v3017
      %v3106 = vmul.u32.u64.compose %v3105, 3817748708
      %v3107 = vextract.low.u32 %v3106
      %v3108 = vextract.high.u32 %v3106
      %v3109 = vshrl.u32 %v3108, 4
      %v3110 = vmul.u32 %v3109, 18
      %v3111 = vsub.s32 %v3105, %v3110
      %v3112 = vsub.s32 0, %v3111
      %v3113 = vsel %vm3103, %v3112, %v3111
      %vm3114 = vcmp.lt.s32.totalorder %v3018, 0
      %v3115 = vsub.s32 0, %v3018
      %v3116 = vsel %vm3114, %v3115, %v3018
      %v3117 = vmul.u32.u64.compose %v3116, 3817748708
      %v3118 = vextract.low.u32 %v3117
      %v3119 = vextract.high.u32 %v3117
      %v3120 = vshrl.u32 %v3119, 4
      %v3121 = vmul.u32 %v3120, 18
      %v3122 = vsub.s32 %v3116, %v3121
      %v3123 = vsub.s32 0, %v3122
      %v3124 = vsel %vm3114, %v3123, %v3122
      %vm3125 = vcmp.lt.s32.totalorder %v3019, 0
      %v3126 = vsub.s32 0, %v3019
      %v3127 = vsel %vm3125, %v3126, %v3019
      %v3128 = vmul.u32.u64.compose %v3127, 3817748708
      %v3129 = vextract.low.u32 %v3128
      %v3130 = vextract.high.u32 %v3128
      %v3131 = vshrl.u32 %v3130, 4
      %v3132 = vmul.u32 %v3131, 18
      %v3133 = vsub.s32 %v3127, %v3132
      %v3134 = vsub.s32 0, %v3133
      %v3135 = vsel %vm3125, %v3134, %v3133
      %vm3136 = vcmp.lt.s32.totalorder %v3020, 0
      %v3137 = vsub.s32 0, %v3020
      %v3138 = vsel %vm3136, %v3137, %v3020
      %v3139 = vmul.u32.u64.compose %v3138, 3817748708
      %v3140 = vextract.low.u32 %v3139
      %v3141 = vextract.high.u32 %v3139
      %v3142 = vshrl.u32 %v3141, 4
      %v3143 = vmul.u32 %v3142, 18
      %v3144 = vsub.s32 %v3138, %v3143
      %v3145 = vsub.s32 0, %v3144
      %v3146 = vsel %vm3136, %v3145, %v3144
      %vm3147 = vcmp.lt.s32.totalorder %v3021, 0
      %v3148 = vsub.s32 0, %v3021
      %v3149 = vsel %vm3147, %v3148, %v3021
      %v3150 = vmul.u32.u64.compose %v3149, 3817748708
      %v3151 = vextract.low.u32 %v3150
      %v3152 = vextract.high.u32 %v3150
      %v3153 = vshrl.u32 %v3152, 4
      %v3154 = vmul.u32 %v3153, 18
      %v3155 = vsub.s32 %v3149, %v3154
      %v3156 = vsub.s32 0, %v3155
      %v3157 = vsel %vm3147, %v3156, %v3155
      %vm3158 = vcmp.lt.s32.totalorder %v3022, 0
      %v3159 = vsub.s32 0, %v3022
      %v3160 = vsel %vm3158, %v3159, %v3022
      %v3161 = vmul.u32.u64.compose %v3160, 3817748708
      %v3162 = vextract.low.u32 %v3161
      %v3163 = vextract.high.u32 %v3161
      %v3164 = vshrl.u32 %v3163, 4
      %v3165 = vmul.u32 %v3164, 18
      %v3166 = vsub.s32 %v3160, %v3165
      %v3167 = vsub.s32 0, %v3166
      %v3168 = vsel %vm3158, %v3167, %v3166
      %vm3169 = vcmp.lt.s32.totalorder %v3023, 0
      %v3170 = vsub.s32 0, %v3023
      %v3171 = vsel %vm3169, %v3170, %v3023
      %v3172 = vmul.u32.u64.compose %v3171, 3817748708
      %v3173 = vextract.low.u32 %v3172
      %v3174 = vextract.high.u32 %v3172
      %v3175 = vshrl.u32 %v3174, 4
      %v3176 = vmul.u32 %v3175, 18
      %v3177 = vsub.s32 %v3171, %v3176
      %v3178 = vsub.s32 0, %v3177
      %v3179 = vsel %vm3169, %v3178, %v3177
      %vm3180 = vcmp.lt.s32.totalorder %v3024, 0
      %v3181 = vsub.s32 0, %v3024
      %v3182 = vsel %vm3180, %v3181, %v3024
      %v3183 = vmul.u32.u64.compose %v3182, 3817748708
      %v3184 = vextract.low.u32 %v3183
      %v3185 = vextract.high.u32 %v3183
      %v3186 = vshrl.u32 %v3185, 4
      %v3187 = vmul.u32 %v3186, 18
      %v3188 = vsub.s32 %v3182, %v3187
      %v3189 = vsub.s32 0, %v3188
      %v3190 = vsel %vm3180, %v3189, %v3188
      %vm3191 = vcmp.lt.s32.totalorder %v3025, 0
      %v3192 = vsub.s32 0, %v3025
      %v3193 = vsel %vm3191, %v3192, %v3025
      %v3194 = vmul.u32.u64.compose %v3193, 3817748708
      %v3195 = vextract.low.u32 %v3194
      %v3196 = vextract.high.u32 %v3194
      %v3197 = vshrl.u32 %v3196, 4
      %v3198 = vmul.u32 %v3197, 18
      %v3199 = vsub.s32 %v3193, %v3198
      %v3200 = vsub.s32 0, %v3199
      %v3201 = vsel %vm3191, %v3200, %v3199
      %vm3202 = vcmp.lt.s32.totalorder %v3026, 0
      %v3203 = vsub.s32 0, %v3026
      %v3204 = vsel %vm3202, %v3203, %v3026
      %v3205 = vmul.u32.u64.compose %v3204, 3817748708
      %v3206 = vextract.low.u32 %v3205
      %v3207 = vextract.high.u32 %v3205
      %v3208 = vshrl.u32 %v3207, 4
      %v3209 = vmul.u32 %v3208, 18
      %v3210 = vsub.s32 %v3204, %v3209
      %v3211 = vsub.s32 0, %v3210
      %v3212 = vsel %vm3202, %v3211, %v3210
      %vm3213 = vcmp.lt.s32.totalorder %v3027, 0
      %v3214 = vsub.s32 0, %v3027
      %v3215 = vsel %vm3213, %v3214, %v3027
      %v3216 = vmul.u32.u64.compose %v3215, 3817748708
      %v3217 = vextract.low.u32 %v3216
      %v3218 = vextract.high.u32 %v3216
      %v3219 = vshrl.u32 %v3218, 4
      %v3220 = vmul.u32 %v3219, 18
      %v3221 = vsub.s32 %v3215, %v3220
      %v3222 = vsub.s32 0, %v3221
      %v3223 = vsel %vm3213, %v3222, %v3221
      %vm3224 = vcmp.lt.s32.totalorder %v3028, 0
      %v3225 = vsub.s32 0, %v3028
      %v3226 = vsel %vm3224, %v3225, %v3028
      %v3227 = vmul.u32.u64.compose %v3226, 3817748708
      %v3228 = vextract.low.u32 %v3227
      %v3229 = vextract.high.u32 %v3227
      %v3230 = vshrl.u32 %v3229, 4
      %v3231 = vmul.u32 %v3230, 18
      %v3232 = vsub.s32 %v3226, %v3231
      %v3233 = vsub.s32 0, %v3232
      %v3234 = vsel %vm3224, %v3233, %v3232
      %vm3235 = vcmp.lt.s32.totalorder %v3029, 0
      %v3236 = vsub.s32 0, %v3029
      %v3237 = vsel %vm3235, %v3236, %v3029
      %v3238 = vmul.u32.u64.compose %v3237, 3817748708
      %v3239 = vextract.low.u32 %v3238
      %v3240 = vextract.high.u32 %v3238
      %v3241 = vshrl.u32 %v3240, 4
      %v3242 = vmul.u32 %v3241, 18
      %v3243 = vsub.s32 %v3237, %v3242
      %v3244 = vsub.s32 0, %v3243
      %v3245 = vsel %vm3235, %v3244, %v3243
      %vm3246 = vcmp.lt.s32.totalorder %v3030, 0
      %v3247 = vsub.s32 0, %v3030
      %v3248 = vsel %vm3246, %v3247, %v3030
      %v3249 = vmul.u32.u64.compose %v3248, 3817748708
      %v3250 = vextract.low.u32 %v3249
      %v3251 = vextract.high.u32 %v3249
      %v3252 = vshrl.u32 %v3251, 4
      %v3253 = vmul.u32 %v3252, 18
      %v3254 = vsub.s32 %v3248, %v3253
      %v3255 = vsub.s32 0, %v3254
      %v3256 = vsel %vm3246, %v3255, %v3254
      %vm3257 = vcmp.lt.s32.totalorder %v3031, 0
      %v3258 = vsub.s32 0, %v3031
      %v3259 = vsel %vm3257, %v3258, %v3031
      %v3260 = vmul.u32.u64.compose %v3259, 3817748708
      %v3261 = vextract.low.u32 %v3260
      %v3262 = vextract.high.u32 %v3260
      %v3263 = vshrl.u32 %v3262, 4
      %v3264 = vmul.u32 %v3263, 18
      %v3265 = vsub.s32 %v3259, %v3264
      %v3266 = vsub.s32 0, %v3265
      %v3267 = vsel %vm3257, %v3266, %v3265
      %vm3268 = vcmp.lt.s32.totalorder %v3032, 0
      %v3269 = vsub.s32 0, %v3032
      %v3270 = vsel %vm3268, %v3269, %v3032
      %v3271 = vmul.u32.u64.compose %v3270, 3817748708
      %v3272 = vextract.low.u32 %v3271
      %v3273 = vextract.high.u32 %v3271
      %v3274 = vshrl.u32 %v3273, 4
      %v3275 = vmul.u32 %v3274, 18
      %v3276 = vsub.s32 %v3270, %v3275
      %v3277 = vsub.s32 0, %v3276
      %v3278 = vsel %vm3268, %v3277, %v3276
      %vm3279 = vcmp.lt.s32.totalorder %v3033, 0
      %v3280 = vsub.s32 0, %v3033
      %v3281 = vsel %vm3279, %v3280, %v3033
      %v3282 = vmul.u32.u64.compose %v3281, 3817748708
      %v3283 = vextract.low.u32 %v3282
      %v3284 = vextract.high.u32 %v3282
      %v3285 = vshrl.u32 %v3284, 4
      %v3286 = vmul.u32 %v3285, 18
      %v3287 = vsub.s32 %v3281, %v3286
      %v3288 = vsub.s32 0, %v3287
      %v3289 = vsel %vm3279, %v3288, %v3287
      %vm3290 = vcmp.lt.s32.totalorder %v3034, 0
      %v3291 = vsub.s32 0, %v3034
      %v3292 = vsel %vm3290, %v3291, %v3034
      %v3293 = vmul.u32.u64.compose %v3292, 3817748708
      %v3294 = vextract.low.u32 %v3293
      %v3295 = vextract.high.u32 %v3293
      %v3296 = vshrl.u32 %v3295, 4
      %v3297 = vmul.u32 %v3296, 18
      %v3298 = vsub.s32 %v3292, %v3297
      %v3299 = vsub.s32 0, %v3298
      %v3300 = vsel %vm3290, %v3299, %v3298
      %vm3301 = vcmp.lt.s32.totalorder %v3035, 0
      %v3302 = vsub.s32 0, %v3035
      %v3303 = vsel %vm3301, %v3302, %v3035
      %v3304 = vmul.u32.u64.compose %v3303, 3817748708
      %v3305 = vextract.low.u32 %v3304
      %v3306 = vextract.high.u32 %v3304
      %v3307 = vshrl.u32 %v3306, 4
      %v3308 = vmul.u32 %v3307, 18
      %v3309 = vsub.s32 %v3303, %v3308
      %v3310 = vsub.s32 0, %v3309
      %v3311 = vsel %vm3301, %v3310, %v3309
      %vm3312 = vcmp.lt.s32.totalorder %v3036, 0
      %v3313 = vsub.s32 0, %v3036
      %v3314 = vsel %vm3312, %v3313, %v3036
      %v3315 = vmul.u32.u64.compose %v3314, 3817748708
      %v3316 = vextract.low.u32 %v3315
      %v3317 = vextract.high.u32 %v3315
      %v3318 = vshrl.u32 %v3317, 4
      %v3319 = vmul.u32 %v3318, 18
      %v3320 = vsub.s32 %v3314, %v3319
      %v3321 = vsub.s32 0, %v3320
      %v3322 = vsel %vm3312, %v3321, %v3320
      %vm3323 = vcmp.lt.s32.totalorder %v3037, 0
      %v3324 = vsub.s32 0, %v3037
      %v3325 = vsel %vm3323, %v3324, %v3037
      %v3326 = vmul.u32.u64.compose %v3325, 3817748708
      %v3327 = vextract.low.u32 %v3326
      %v3328 = vextract.high.u32 %v3326
      %v3329 = vshrl.u32 %v3328, 4
      %v3330 = vmul.u32 %v3329, 18
      %v3331 = vsub.s32 %v3325, %v3330
      %v3332 = vsub.s32 0, %v3331
      %v3333 = vsel %vm3323, %v3332, %v3331
      %vm3334 = vcmp.lt.s32.totalorder %v3038, 0
      %v3335 = vsub.s32 0, %v3038
      %v3336 = vsel %vm3334, %v3335, %v3038
      %v3337 = vmul.u32.u64.compose %v3336, 3817748708
      %v3338 = vextract.low.u32 %v3337
      %v3339 = vextract.high.u32 %v3337
      %v3340 = vshrl.u32 %v3339, 4
      %v3341 = vmul.u32 %v3340, 18
      %v3342 = vsub.s32 %v3336, %v3341
      %v3343 = vsub.s32 0, %v3342
      %v3344 = vsel %vm3334, %v3343, %v3342
      %vm3345 = vcmp.lt.s32.totalorder %v3039, 0
      %v3346 = vsub.s32 0, %v3039
      %v3347 = vsel %vm3345, %v3346, %v3039
      %v3348 = vmul.u32.u64.compose %v3347, 3817748708
      %v3349 = vextract.low.u32 %v3348
      %v3350 = vextract.high.u32 %v3348
      %v3351 = vshrl.u32 %v3350, 4
      %v3352 = vmul.u32 %v3351, 18
      %v3353 = vsub.s32 %v3347, %v3352
      %v3354 = vsub.s32 0, %v3353
      %v3355 = vsel %vm3345, %v3354, %v3353
      %vm3356 = vcmp.lt.s32.totalorder %v3040, 0
      %v3357 = vsub.s32 0, %v3040
      %v3358 = vsel %vm3356, %v3357, %v3040
      %v3359 = vmul.u32.u64.compose %v3358, 3817748708
      %v3360 = vextract.low.u32 %v3359
      %v3361 = vextract.high.u32 %v3359
      %v3362 = vshrl.u32 %v3361, 4
      %v3363 = vmul.u32 %v3362, 18
      %v3364 = vsub.s32 %v3358, %v3363
      %v3365 = vsub.s32 0, %v3364
      %v3366 = vsel %vm3356, %v3365, %v3364
      %vm3367 = vcmp.lt.s32.totalorder %v3041, 0
      %v3368 = vsub.s32 0, %v3041
      %v3369 = vsel %vm3367, %v3368, %v3041
      %v3370 = vmul.u32.u64.compose %v3369, 3817748708
      %v3371 = vextract.low.u32 %v3370
      %v3372 = vextract.high.u32 %v3370
      %v3373 = vshrl.u32 %v3372, 4
      %v3374 = vmul.u32 %v3373, 18
      %v3375 = vsub.s32 %v3369, %v3374
      %v3376 = vsub.s32 0, %v3375
      %v3377 = vsel %vm3367, %v3376, %v3375
      %vm3378 = vcmp.lt.s32.totalorder %v3042, 0
      %v3379 = vsub.s32 0, %v3042
      %v3380 = vsel %vm3378, %v3379, %v3042
      %v3381 = vmul.u32.u64.compose %v3380, 3817748708
      %v3382 = vextract.low.u32 %v3381
      %v3383 = vextract.high.u32 %v3381
      %v3384 = vshrl.u32 %v3383, 4
      %v3385 = vmul.u32 %v3384, 18
      %v3386 = vsub.s32 %v3380, %v3385
      %v3387 = vsub.s32 0, %v3386
      %v3388 = vsel %vm3378, %v3387, %v3386
      %vm3389 = vcmp.lt.s32.totalorder %v3043, 0
      %v3390 = vsub.s32 0, %v3043
      %v3391 = vsel %vm3389, %v3390, %v3043
      %v3392 = vmul.u32.u64.compose %v3391, 3817748708
      %v3393 = vextract.low.u32 %v3392
      %v3394 = vextract.high.u32 %v3392
      %v3395 = vshrl.u32 %v3394, 4
      %v3396 = vmul.u32 %v3395, 18
      %v3397 = vsub.s32 %v3391, %v3396
      %v3398 = vsub.s32 0, %v3397
      %v3399 = vsel %vm3389, %v3398, %v3397
      %vm3400 = vcmp.lt.s32.totalorder %v3044, 0
      %v3401 = vsub.s32 0, %v3044
      %v3402 = vsel %vm3400, %v3401, %v3044
      %v3403 = vmul.u32.u64.compose %v3402, 3817748708
      %v3404 = vextract.low.u32 %v3403
      %v3405 = vextract.high.u32 %v3403
      %v3406 = vshrl.u32 %v3405, 4
      %v3407 = vmul.u32 %v3406, 18
      %v3408 = vsub.s32 %v3402, %v3407
      %v3409 = vsub.s32 0, %v3408
      %v3410 = vsel %vm3400, %v3409, %v3408
      %vm3411 = vcmp.lt.s32.totalorder %v3045, 0
      %v3412 = vsub.s32 0, %v3045
      %v3413 = vsel %vm3411, %v3412, %v3045
      %v3414 = vmul.u32.u64.compose %v3413, 3817748708
      %v3415 = vextract.low.u32 %v3414
      %v3416 = vextract.high.u32 %v3414
      %v3417 = vshrl.u32 %v3416, 4
      %v3418 = vmul.u32 %v3417, 18
      %v3419 = vsub.s32 %v3413, %v3418
      %v3420 = vsub.s32 0, %v3419
      %v3421 = vsel %vm3411, %v3420, %v3419
      %vm3422 = vcmp.lt.s32.totalorder %v3046, 0
      %v3423 = vsub.s32 0, %v3046
      %v3424 = vsel %vm3422, %v3423, %v3046
      %v3425 = vmul.u32.u64.compose %v3424, 3817748708
      %v3426 = vextract.low.u32 %v3425
      %v3427 = vextract.high.u32 %v3425
      %v3428 = vshrl.u32 %v3427, 4
      %v3429 = vmul.u32 %v3428, 18
      %v3430 = vsub.s32 %v3424, %v3429
      %v3431 = vsub.s32 0, %v3430
      %v3432 = vsel %vm3422, %v3431, %v3430
      %vm3433 = vcmp.lt.s32.totalorder %v3047, 0
      %v3434 = vsub.s32 0, %v3047
      %v3435 = vsel %vm3433, %v3434, %v3047
      %v3436 = vmul.u32.u64.compose %v3435, 3817748708
      %v3437 = vextract.low.u32 %v3436
      %v3438 = vextract.high.u32 %v3436
      %v3439 = vshrl.u32 %v3438, 4
      %v3440 = vmul.u32 %v3439, 18
      %v3441 = vsub.s32 %v3435, %v3440
      %v3442 = vsub.s32 0, %v3441
      %v3443 = vsel %vm3433, %v3442, %v3441
      %vm3444 = vcmp.ne.s32.totalorder %v3058, 0
      %vm3445 = vcmp.ne.s32.totalorder %v3069, 0
      %vm3446 = vcmp.ne.s32.totalorder %v3080, 0
      %vm3447 = vcmp.ne.s32.totalorder %v3091, 0
      %vm3448 = vcmp.ne.s32.totalorder %v3102, 0
      %vm3449 = vcmp.ne.s32.totalorder %v3113, 0
      %vm3450 = vcmp.ne.s32.totalorder %v3124, 0
      %vm3451 = vcmp.ne.s32.totalorder %v3135, 0
      %vm3452 = vcmp.ne.s32.totalorder %v3146, 0
      %vm3453 = vcmp.ne.s32.totalorder %v3157, 0
      %vm3454 = vcmp.ne.s32.totalorder %v3168, 0
      %vm3455 = vcmp.ne.s32.totalorder %v3179, 0
      %vm3456 = vcmp.ne.s32.totalorder %v3190, 0
      %vm3457 = vcmp.ne.s32.totalorder %v3201, 0
      %vm3458 = vcmp.ne.s32.totalorder %v3212, 0
      %vm3459 = vcmp.ne.s32.totalorder %v3223, 0
      %vm3460 = vcmp.ne.s32.totalorder %v3234, 0
      %vm3461 = vcmp.ne.s32.totalorder %v3245, 0
      %vm3462 = vcmp.ne.s32.totalorder %v3256, 0
      %vm3463 = vcmp.ne.s32.totalorder %v3267, 0
      %vm3464 = vcmp.ne.s32.totalorder %v3278, 0
      %vm3465 = vcmp.ne.s32.totalorder %v3289, 0
      %vm3466 = vcmp.ne.s32.totalorder %v3300, 0
      %vm3467 = vcmp.ne.s32.totalorder %v3311, 0
      %vm3468 = vcmp.ne.s32.totalorder %v3322, 0
      %vm3469 = vcmp.ne.s32.totalorder %v3333, 0
      %vm3470 = vcmp.ne.s32.totalorder %v3344, 0
      %vm3471 = vcmp.ne.s32.totalorder %v3355, 0
      %vm3472 = vcmp.ne.s32.totalorder %v3366, 0
      %vm3473 = vcmp.ne.s32.totalorder %v3377, 0
      %vm3474 = vcmp.ne.s32.totalorder %v3388, 0
      %vm3475 = vcmp.ne.s32.totalorder %v3399, 0
      %vm3476 = vcmp.ne.s32.totalorder %v3410, 0
      %vm3477 = vcmp.ne.s32.totalorder %v3421, 0
      %vm3478 = vcmp.ne.s32.totalorder %v3432, 0
      %vm3479 = vcmp.ne.s32.totalorder %v3443, 0
      %vm3480 = vcmp.lt.s32.totalorder %v3058, 0
      %vm3481 = vcmp.lt.s32.totalorder %v3069, 0
      %vm3482 = vcmp.lt.s32.totalorder %v3080, 0
      %vm3483 = vcmp.lt.s32.totalorder %v3091, 0
      %vm3484 = vcmp.lt.s32.totalorder %v3102, 0
      %vm3485 = vcmp.lt.s32.totalorder %v3113, 0
      %vm3486 = vcmp.lt.s32.totalorder %v3124, 0
      %vm3487 = vcmp.lt.s32.totalorder %v3135, 0
      %vm3488 = vcmp.lt.s32.totalorder %v3146, 0
      %vm3489 = vcmp.lt.s32.totalorder %v3157, 0
      %vm3490 = vcmp.lt.s32.totalorder %v3168, 0
      %vm3491 = vcmp.lt.s32.totalorder %v3179, 0
      %vm3492 = vcmp.lt.s32.totalorder %v3190, 0
      %vm3493 = vcmp.lt.s32.totalorder %v3201, 0
      %vm3494 = vcmp.lt.s32.totalorder %v3212, 0
      %vm3495 = vcmp.lt.s32.totalorder %v3223, 0
      %vm3496 = vcmp.lt.s32.totalorder %v3234, 0
      %vm3497 = vcmp.lt.s32.totalorder %v3245, 0
      %vm3498 = vcmp.lt.s32.totalorder %v3256, 0
      %vm3499 = vcmp.lt.s32.totalorder %v3267, 0
      %vm3500 = vcmp.lt.s32.totalorder %v3278, 0
      %vm3501 = vcmp.lt.s32.totalorder %v3289, 0
      %vm3502 = vcmp.lt.s32.totalorder %v3300, 0
      %vm3503 = vcmp.lt.s32.totalorder %v3311, 0
      %vm3504 = vcmp.lt.s32.totalorder %v3322, 0
      %vm3505 = vcmp.lt.s32.totalorder %v3333, 0
      %vm3506 = vcmp.lt.s32.totalorder %v3344, 0
      %vm3507 = vcmp.lt.s32.totalorder %v3355, 0
      %vm3508 = vcmp.lt.s32.totalorder %v3366, 0
      %vm3509 = vcmp.lt.s32.totalorder %v3377, 0
      %vm3510 = vcmp.lt.s32.totalorder %v3388, 0
      %vm3511 = vcmp.lt.s32.totalorder %v3399, 0
      %vm3512 = vcmp.lt.s32.totalorder %v3410, 0
      %vm3513 = vcmp.lt.s32.totalorder %v3421, 0
      %vm3514 = vcmp.lt.s32.totalorder %v3432, 0
      %vm3515 = vcmp.lt.s32.totalorder %v3443, 0
      %vm3516 = vmand %vm3480, %vm3444
      %vm3517 = vmand %vm3481, %vm3445
      %vm3518 = vmand %vm3482, %vm3446
      %vm3519 = vmand %vm3483, %vm3447
      %vm3520 = vmand %vm3484, %vm3448
      %vm3521 = vmand %vm3485, %vm3449
      %vm3522 = vmand %vm3486, %vm3450
      %vm3523 = vmand %vm3487, %vm3451
      %vm3524 = vmand %vm3488, %vm3452
      %vm3525 = vmand %vm3489, %vm3453
      %vm3526 = vmand %vm3490, %vm3454
      %vm3527 = vmand %vm3491, %vm3455
      %vm3528 = vmand %vm3492, %vm3456
      %vm3529 = vmand %vm3493, %vm3457
      %vm3530 = vmand %vm3494, %vm3458
      %vm3531 = vmand %vm3495, %vm3459
      %vm3532 = vmand %vm3496, %vm3460
      %vm3533 = vmand %vm3497, %vm3461
      %vm3534 = vmand %vm3498, %vm3462
      %vm3535 = vmand %vm3499, %vm3463
      %vm3536 = vmand %vm3500, %vm3464
      %vm3537 = vmand %vm3501, %vm3465
      %vm3538 = vmand %vm3502, %vm3466
      %vm3539 = vmand %vm3503, %vm3467
      %vm3540 = vmand %vm3504, %vm3468
      %vm3541 = vmand %vm3505, %vm3469
      %vm3542 = vmand %vm3506, %vm3470
      %vm3543 = vmand %vm3507, %vm3471
      %vm3544 = vmand %vm3508, %vm3472
      %vm3545 = vmand %vm3509, %vm3473
      %vm3546 = vmand %vm3510, %vm3474
      %vm3547 = vmand %vm3511, %vm3475
      %vm3548 = vmand %vm3512, %vm3476
      %vm3549 = vmand %vm3513, %vm3477
      %vm3550 = vmand %vm3514, %vm3478
      %vm3551 = vmand %vm3515, %vm3479
      %v3552 = vadd.s32 %v3058, 18
      %v3553 = vadd.s32 %v3069, 18
      %v3554 = vadd.s32 %v3080, 18
      %v3555 = vadd.s32 %v3091, 18
      %v3556 = vadd.s32 %v3102, 18
      %v3557 = vadd.s32 %v3113, 18
      %v3558 = vadd.s32 %v3124, 18
      %v3559 = vadd.s32 %v3135, 18
      %v3560 = vadd.s32 %v3146, 18
      %v3561 = vadd.s32 %v3157, 18
      %v3562 = vadd.s32 %v3168, 18
      %v3563 = vadd.s32 %v3179, 18
      %v3564 = vadd.s32 %v3190, 18
      %v3565 = vadd.s32 %v3201, 18
      %v3566 = vadd.s32 %v3212, 18
      %v3567 = vadd.s32 %v3223, 18
      %v3568 = vadd.s32 %v3234, 18
      %v3569 = vadd.s32 %v3245, 18
      %v3570 = vadd.s32 %v3256, 18
      %v3571 = vadd.s32 %v3267, 18
      %v3572 = vadd.s32 %v3278, 18
      %v3573 = vadd.s32 %v3289, 18
      %v3574 = vadd.s32 %v3300, 18
      %v3575 = vadd.s32 %v3311, 18
      %v3576 = vadd.s32 %v3322, 18
      %v3577 = vadd.s32 %v3333, 18
      %v3578 = vadd.s32 %v3344, 18
      %v3579 = vadd.s32 %v3355, 18
      %v3580 = vadd.s32 %v3366, 18
      %v3581 = vadd.s32 %v3377, 18
      %v3582 = vadd.s32 %v3388, 18
      %v3583 = vadd.s32 %v3399, 18
      %v3584 = vadd.s32 %v3410, 18
      %v3585 = vadd.s32 %v3421, 18
      %v3586 = vadd.s32 %v3432, 18
      %v3587 = vadd.s32 %v3443, 18
      %v3588 = vsel %vm3516, %v3552, %v3058
      %v3589 = vsel %vm3517, %v3553, %v3069
      %v3590 = vsel %vm3518, %v3554, %v3080
      %v3591 = vsel %vm3519, %v3555, %v3091
      %v3592 = vsel %vm3520, %v3556, %v3102
      %v3593 = vsel %vm3521, %v3557, %v3113
      %v3594 = vsel %vm3522, %v3558, %v3124
      %v3595 = vsel %vm3523, %v3559, %v3135
      %v3596 = vsel %vm3524, %v3560, %v3146
      %v3597 = vsel %vm3525, %v3561, %v3157
      %v3598 = vsel %vm3526, %v3562, %v3168
      %v3599 = vsel %vm3527, %v3563, %v3179
      %v3600 = vsel %vm3528, %v3564, %v3190
      %v3601 = vsel %vm3529, %v3565, %v3201
      %v3602 = vsel %vm3530, %v3566, %v3212
      %v3603 = vsel %vm3531, %v3567, %v3223
      %v3604 = vsel %vm3532, %v3568, %v3234
      %v3605 = vsel %vm3533, %v3569, %v3245
      %v3606 = vsel %vm3534, %v3570, %v3256
      %v3607 = vsel %vm3535, %v3571, %v3267
      %v3608 = vsel %vm3536, %v3572, %v3278
      %v3609 = vsel %vm3537, %v3573, %v3289
      %v3610 = vsel %vm3538, %v3574, %v3300
      %v3611 = vsel %vm3539, %v3575, %v3311
      %v3612 = vsel %vm3540, %v3576, %v3322
      %v3613 = vsel %vm3541, %v3577, %v3333
      %v3614 = vsel %vm3542, %v3578, %v3344
      %v3615 = vsel %vm3543, %v3579, %v3355
      %v3616 = vsel %vm3544, %v3580, %v3366
      %v3617 = vsel %vm3545, %v3581, %v3377
      %v3618 = vsel %vm3546, %v3582, %v3388
      %v3619 = vsel %vm3547, %v3583, %v3399
      %v3620 = vsel %vm3548, %v3584, %v3410
      %v3621 = vsel %vm3549, %v3585, %v3421
      %v3622 = vsel %vm3550, %v3586, %v3432
      %v3623 = vsel %vm3551, %v3587, %v3443
      %vm3624 = vcmp.lt.s32.totalorder %v3588, 16
      %vm3625 = vcmp.lt.s32.totalorder %v3589, 16
      %vm3626 = vcmp.lt.s32.totalorder %v3590, 16
      %vm3627 = vcmp.lt.s32.totalorder %v3591, 16
      %vm3628 = vcmp.lt.s32.totalorder %v3592, 16
      %vm3629 = vcmp.lt.s32.totalorder %v3593, 16
      %vm3630 = vcmp.lt.s32.totalorder %v3594, 16
      %vm3631 = vcmp.lt.s32.totalorder %v3595, 16
      %vm3632 = vcmp.lt.s32.totalorder %v3596, 16
      %vm3633 = vcmp.lt.s32.totalorder %v3597, 16
      %vm3634 = vcmp.lt.s32.totalorder %v3598, 16
      %vm3635 = vcmp.lt.s32.totalorder %v3599, 16
      %vm3636 = vcmp.lt.s32.totalorder %v3600, 16
      %vm3637 = vcmp.lt.s32.totalorder %v3601, 16
      %vm3638 = vcmp.lt.s32.totalorder %v3602, 16
      %vm3639 = vcmp.lt.s32.totalorder %v3603, 16
      %vm3640 = vcmp.lt.s32.totalorder %v3604, 16
      %vm3641 = vcmp.lt.s32.totalorder %v3605, 16
      %vm3642 = vcmp.lt.s32.totalorder %v3606, 16
      %vm3643 = vcmp.lt.s32.totalorder %v3607, 16
      %vm3644 = vcmp.lt.s32.totalorder %v3608, 16
      %vm3645 = vcmp.lt.s32.totalorder %v3609, 16
      %vm3646 = vcmp.lt.s32.totalorder %v3610, 16
      %vm3647 = vcmp.lt.s32.totalorder %v3611, 16
      %vm3648 = vcmp.lt.s32.totalorder %v3612, 16
      %vm3649 = vcmp.lt.s32.totalorder %v3613, 16
      %vm3650 = vcmp.lt.s32.totalorder %v3614, 16
      %vm3651 = vcmp.lt.s32.totalorder %v3615, 16
      %vm3652 = vcmp.lt.s32.totalorder %v3616, 16
      %vm3653 = vcmp.lt.s32.totalorder %v3617, 16
      %vm3654 = vcmp.lt.s32.totalorder %v3618, 16
      %vm3655 = vcmp.lt.s32.totalorder %v3619, 16
      %vm3656 = vcmp.lt.s32.totalorder %v3620, 16
      %vm3657 = vcmp.lt.s32.totalorder %v3621, 16
      %vm3658 = vcmp.lt.s32.totalorder %v3622, 16
      %vm3659 = vcmp.lt.s32.totalorder %v3623, 16
      %v3660 = vsel %vm3624, 1, 0
      %v3661 = vsel %vm3625, 1, 0
      %v3662 = vsel %vm3626, 1, 0
      %v3663 = vsel %vm3627, 1, 0
      %v3664 = vsel %vm3628, 1, 0
      %v3665 = vsel %vm3629, 1, 0
      %v3666 = vsel %vm3630, 1, 0
      %v3667 = vsel %vm3631, 1, 0
      %v3668 = vsel %vm3632, 1, 0
      %v3669 = vsel %vm3633, 1, 0
      %v3670 = vsel %vm3634, 1, 0
      %v3671 = vsel %vm3635, 1, 0
      %v3672 = vsel %vm3636, 1, 0
      %v3673 = vsel %vm3637, 1, 0
      %v3674 = vsel %vm3638, 1, 0
      %v3675 = vsel %vm3639, 1, 0
      %v3676 = vsel %vm3640, 1, 0
      %v3677 = vsel %vm3641, 1, 0
      %v3678 = vsel %vm3642, 1, 0
      %v3679 = vsel %vm3643, 1, 0
      %v3680 = vsel %vm3644, 1, 0
      %v3681 = vsel %vm3645, 1, 0
      %v3682 = vsel %vm3646, 1, 0
      %v3683 = vsel %vm3647, 1, 0
      %v3684 = vsel %vm3648, 1, 0
      %v3685 = vsel %vm3649, 1, 0
      %v3686 = vsel %vm3650, 1, 0
      %v3687 = vsel %vm3651, 1, 0
      %v3688 = vsel %vm3652, 1, 0
      %v3689 = vsel %vm3653, 1, 0
      %v3690 = vsel %vm3654, 1, 0
      %v3691 = vsel %vm3655, 1, 0
      %v3692 = vsel %vm3656, 1, 0
      %v3693 = vsel %vm3657, 1, 0
      %v3694 = vsel %vm3658, 1, 0
      %v3695 = vsel %vm3659, 1, 0
      %vm3696 = vcmp.eq.s32.totalorder %v3660, 1
      %vm3697 = vcmp.eq.s32.totalorder %v3661, 1
      %vm3698 = vcmp.eq.s32.totalorder %v3662, 1
      %vm3699 = vcmp.eq.s32.totalorder %v3663, 1
      %vm3700 = vcmp.eq.s32.totalorder %v3664, 1
      %vm3701 = vcmp.eq.s32.totalorder %v3665, 1
      %vm3702 = vcmp.eq.s32.totalorder %v3666, 1
      %vm3703 = vcmp.eq.s32.totalorder %v3667, 1
      %vm3704 = vcmp.eq.s32.totalorder %v3668, 1
      %vm3705 = vcmp.eq.s32.totalorder %v3669, 1
      %vm3706 = vcmp.eq.s32.totalorder %v3670, 1
      %vm3707 = vcmp.eq.s32.totalorder %v3671, 1
      %vm3708 = vcmp.eq.s32.totalorder %v3672, 1
      %vm3709 = vcmp.eq.s32.totalorder %v3673, 1
      %vm3710 = vcmp.eq.s32.totalorder %v3674, 1
      %vm3711 = vcmp.eq.s32.totalorder %v3675, 1
      %vm3712 = vcmp.eq.s32.totalorder %v3676, 1
      %vm3713 = vcmp.eq.s32.totalorder %v3677, 1
      %vm3714 = vcmp.eq.s32.totalorder %v3678, 1
      %vm3715 = vcmp.eq.s32.totalorder %v3679, 1
      %vm3716 = vcmp.eq.s32.totalorder %v3680, 1
      %vm3717 = vcmp.eq.s32.totalorder %v3681, 1
      %vm3718 = vcmp.eq.s32.totalorder %v3682, 1
      %vm3719 = vcmp.eq.s32.totalorder %v3683, 1
      %vm3720 = vcmp.eq.s32.totalorder %v3684, 1
      %vm3721 = vcmp.eq.s32.totalorder %v3685, 1
      %vm3722 = vcmp.eq.s32.totalorder %v3686, 1
      %vm3723 = vcmp.eq.s32.totalorder %v3687, 1
      %vm3724 = vcmp.eq.s32.totalorder %v3688, 1
      %vm3725 = vcmp.eq.s32.totalorder %v3689, 1
      %vm3726 = vcmp.eq.s32.totalorder %v3690, 1
      %vm3727 = vcmp.eq.s32.totalorder %v3691, 1
      %vm3728 = vcmp.eq.s32.totalorder %v3692, 1
      %vm3729 = vcmp.eq.s32.totalorder %v3693, 1
      %vm3730 = vcmp.eq.s32.totalorder %v3694, 1
      %vm3731 = vcmp.eq.s32.totalorder %v3695, 1
      %v3732 = vsel %vm3696, %v2975, 0.0
      %v3733 = vsel %vm3697, %v2976, 0.0
      %v3734 = vsel %vm3698, %v2977, 0.0
      %v3735 = vsel %vm3699, %v2978, 0.0
      %v3736 = vsel %vm3700, %v2979, 0.0
      %v3737 = vsel %vm3701, %v2980, 0.0
      %v3738 = vsel %vm3702, %v2981, 0.0
      %v3739 = vsel %vm3703, %v2982, 0.0
      %v3740 = vsel %vm3704, %v2983, 0.0
      %v3741 = vsel %vm3705, %v2984, 0.0
      %v3742 = vsel %vm3706, %v2985, 0.0
      %v3743 = vsel %vm3707, %v2986, 0.0
      %v3744 = vsel %vm3708, %v2987, 0.0
      %v3745 = vsel %vm3709, %v2988, 0.0
      %v3746 = vsel %vm3710, %v2989, 0.0
      %v3747 = vsel %vm3711, %v2990, 0.0
      %v3748 = vsel %vm3712, %v2991, 0.0
      %v3749 = vsel %vm3713, %v2992, 0.0
      %v3750 = vsel %vm3714, %v2993, 0.0
      %v3751 = vsel %vm3715, %v2994, 0.0
      %v3752 = vsel %vm3716, %v2995, 0.0
      %v3753 = vsel %vm3717, %v2996, 0.0
      %v3754 = vsel %vm3718, %v2997, 0.0
      %v3755 = vsel %vm3719, %v2998, 0.0
      %v3756 = vsel %vm3720, %v2999, 0.0
      %v3757 = vsel %vm3721, %v3000, 0.0
      %v3758 = vsel %vm3722, %v3001, 0.0
      %v3759 = vsel %vm3723, %v3002, 0.0
      %v3760 = vsel %vm3724, %v3003, 0.0
      %v3761 = vsel %vm3725, %v3004, 0.0
      %v3762 = vsel %vm3726, %v3005, 0.0
      %v3763 = vsel %vm3727, %v3006, 0.0
      %v3764 = vsel %vm3728, %v3007, 0.0
      %v3765 = vsel %vm3729, %v3008, 0.0
      %v3766 = vsel %vm3730, %v3009, 0.0
      %v3767 = vsel %vm3731, %v3010, 0.0
      %v3768 = vadd.f32 %v3732, %v3733
      %v3769 = vadd.f32 %v3768, %v3734
      %v3770 = vadd.f32 %v3769, %v3735
      %v3771 = vadd.f32 %v3770, %v3736
      %v3772 = vadd.f32 %v3771, %v3737
      %v3773 = vadd.f32 %v3772, %v3738
      %v3774 = vadd.f32 %v3773, %v3739
      %v3775 = vadd.f32 %v3774, %v3740
      %v3776 = vadd.f32 %v3775, %v3741
      %v3777 = vadd.f32 %v3776, %v3742
      %v3778 = vadd.f32 %v3777, %v3743
      %v3779 = vadd.f32 %v3778, %v3744
      %v3780 = vadd.f32 %v3779, %v3745
      %v3781 = vadd.f32 %v3780, %v3746
      %v3782 = vadd.f32 %v3781, %v3747
      %v3783 = vadd.f32 %v3782, %v3748
      %v3784 = vadd.f32 %v3783, %v3749
      %v3785 = vadd.f32 %v3784, %v3750
      %v3786 = vadd.f32 %v3785, %v3751
      %v3787 = vadd.f32 %v3786, %v3752
      %v3788 = vadd.f32 %v3787, %v3753
      %v3789 = vadd.f32 %v3788, %v3754
      %v3790 = vadd.f32 %v3789, %v3755
      %v3791 = vadd.f32 %v3790, %v3756
      %v3792 = vadd.f32 %v3791, %v3757
      %v3793 = vadd.f32 %v3792, %v3758
      %v3794 = vadd.f32 %v3793, %v3759
      %v3795 = vadd.f32 %v3794, %v3760
      %v3796 = vadd.f32 %v3795, %v3761
      %v3797 = vadd.f32 %v3796, %v3762
      %v3798 = vadd.f32 %v3797, %v3763
      %v3799 = vadd.f32 %v3798, %v3764
      %v3800 = vadd.f32 %v3799, %v3765
      %v3801 = vadd.f32 %v3800, %v3766
      %v3802 = vadd.f32 %v3801, %v3767
      %v3803 = vrot.slane %v3802, 4
      %v3804 = vadd.f32 %v3802, %v3803
      %v3805 = vrot.slane %v3804, 2
      %v3806 = vadd.f32 %v3804, %v3805
      %v3807 = vrot.slane %v3806, 1
      %v3808 = vadd.f32 %v3806, %v3807
      %3809 = vst [vmem:[%s172] sm:$0x1] %v3808
      %v3810 = vmul.f32 %v2975, %v2975
      %v3811 = vmul.f32 %v2976, %v2976
      %v3812 = vmul.f32 %v2977, %v2977
      %v3813 = vmul.f32 %v2978, %v2978
      %v3814 = vmul.f32 %v2979, %v2979
      %v3815 = vmul.f32 %v2980, %v2980
      %v3816 = vmul.f32 %v2981, %v2981
      %v3817 = vmul.f32 %v2982, %v2982
      %v3818 = vmul.f32 %v2983, %v2983
      %v3819 = vmul.f32 %v2984, %v2984
      %v3820 = vmul.f32 %v2985, %v2985
      %v3821 = vmul.f32 %v2986, %v2986
      %v3822 = vmul.f32 %v2987, %v2987
      %v3823 = vmul.f32 %v2988, %v2988
      %v3824 = vmul.f32 %v2989, %v2989
      %v3825 = vmul.f32 %v2990, %v2990
      %v3826 = vmul.f32 %v2991, %v2991
      %v3827 = vmul.f32 %v2992, %v2992
      %v3828 = vmul.f32 %v2993, %v2993
      %v3829 = vmul.f32 %v2994, %v2994
      %v3830 = vmul.f32 %v2995, %v2995
      %v3831 = vmul.f32 %v2996, %v2996
      %v3832 = vmul.f32 %v2997, %v2997
      %v3833 = vmul.f32 %v2998, %v2998
      %v3834 = vmul.f32 %v2999, %v2999
      %v3835 = vmul.f32 %v3000, %v3000
      %v3836 = vmul.f32 %v3001, %v3001
      %v3837 = vmul.f32 %v3002, %v3002
      %v3838 = vmul.f32 %v3003, %v3003
      %v3839 = vmul.f32 %v3004, %v3004
      %v3840 = vmul.f32 %v3005, %v3005
      %v3841 = vmul.f32 %v3006, %v3006
      %v3842 = vmul.f32 %v3007, %v3007
      %v3843 = vmul.f32 %v3008, %v3008
      %v3844 = vmul.f32 %v3009, %v3009
      %v3845 = vmul.f32 %v3010, %v3010
      %v3846 = vsel %vm3696, %v3810, 0.0
      %v3847 = vsel %vm3697, %v3811, 0.0
      %v3848 = vsel %vm3698, %v3812, 0.0
      %v3849 = vsel %vm3699, %v3813, 0.0
      %v3850 = vsel %vm3700, %v3814, 0.0
      %v3851 = vsel %vm3701, %v3815, 0.0
      %v3852 = vsel %vm3702, %v3816, 0.0
      %v3853 = vsel %vm3703, %v3817, 0.0
      %v3854 = vsel %vm3704, %v3818, 0.0
      %v3855 = vsel %vm3705, %v3819, 0.0
      %v3856 = vsel %vm3706, %v3820, 0.0
      %v3857 = vsel %vm3707, %v3821, 0.0
      %v3858 = vsel %vm3708, %v3822, 0.0
      %v3859 = vsel %vm3709, %v3823, 0.0
      %v3860 = vsel %vm3710, %v3824, 0.0
      %v3861 = vsel %vm3711, %v3825, 0.0
      %v3862 = vsel %vm3712, %v3826, 0.0
      %v3863 = vsel %vm3713, %v3827, 0.0
      %v3864 = vsel %vm3714, %v3828, 0.0
      %v3865 = vsel %vm3715, %v3829, 0.0
      %v3866 = vsel %vm3716, %v3830, 0.0
      %v3867 = vsel %vm3717, %v3831, 0.0
      %v3868 = vsel %vm3718, %v3832, 0.0
      %v3869 = vsel %vm3719, %v3833, 0.0
      %v3870 = vsel %vm3720, %v3834, 0.0
      %v3871 = vsel %vm3721, %v3835, 0.0
      %v3872 = vsel %vm3722, %v3836, 0.0
      %v3873 = vsel %vm3723, %v3837, 0.0
      %v3874 = vsel %vm3724, %v3838, 0.0
      %v3875 = vsel %vm3725, %v3839, 0.0
      %v3876 = vsel %vm3726, %v3840, 0.0
      %v3877 = vsel %vm3727, %v3841, 0.0
      %v3878 = vsel %vm3728, %v3842, 0.0
      %v3879 = vsel %vm3729, %v3843, 0.0
      %v3880 = vsel %vm3730, %v3844, 0.0
      %v3881 = vsel %vm3731, %v3845, 0.0
      %v3882 = vadd.f32 %v3846, %v3847
      %v3883 = vadd.f32 %v3882, %v3848
      %v3884 = vadd.f32 %v3883, %v3849
      %v3885 = vadd.f32 %v3884, %v3850
      %v3886 = vadd.f32 %v3885, %v3851
      %v3887 = vadd.f32 %v3886, %v3852
      %v3888 = vadd.f32 %v3887, %v3853
      %v3889 = vadd.f32 %v3888, %v3854
      %v3890 = vadd.f32 %v3889, %v3855
      %v3891 = vadd.f32 %v3890, %v3856
      %v3892 = vadd.f32 %v3891, %v3857
      %v3893 = vadd.f32 %v3892, %v3858
      %v3894 = vadd.f32 %v3893, %v3859
      %v3895 = vadd.f32 %v3894, %v3860
      %v3896 = vadd.f32 %v3895, %v3861
      %v3897 = vadd.f32 %v3896, %v3862
      %v3898 = vadd.f32 %v3897, %v3863
      %v3899 = vadd.f32 %v3898, %v3864
      %v3900 = vadd.f32 %v3899, %v3865
      %v3901 = vadd.f32 %v3900, %v3866
      %v3902 = vadd.f32 %v3901, %v3867
      %v3903 = vadd.f32 %v3902, %v3868
      %v3904 = vadd.f32 %v3903, %v3869
      %v3905 = vadd.f32 %v3904, %v3870
      %v3906 = vadd.f32 %v3905, %v3871
      %v3907 = vadd.f32 %v3906, %v3872
      %v3908 = vadd.f32 %v3907, %v3873
      %v3909 = vadd.f32 %v3908, %v3874
      %v3910 = vadd.f32 %v3909, %v3875
      %v3911 = vadd.f32 %v3910, %v3876
      %v3912 = vadd.f32 %v3911, %v3877
      %v3913 = vadd.f32 %v3912, %v3878
      %v3914 = vadd.f32 %v3913, %v3879
      %v3915 = vadd.f32 %v3914, %v3880
      %v3916 = vadd.f32 %v3915, %v3881
      %v3917 = vrot.slane %v3916, 4
      %v3918 = vadd.f32 %v3916, %v3917
      %v3919 = vrot.slane %v3918, 2
      %v3920 = vadd.f32 %v3918, %v3919
      %v3921 = vrot.slane %v3920, 1
      %v3922 = vadd.f32 %v3920, %v3921
      %3923 = vst [vmem:[%s175] sm:$0x1] %v3922
      %p3924 = scmp.lt.s32.totalorder %s15, 1
      %s3925 = scalar_select %p3924, %s15, 1
      %s3926 = scalar_lea.vmem %s2, %s3925
      %p3927 = scmp.lt.s32.totalorder %s15, 1
      %s3928 = scalar_select %p3927, %s15, 1
      %s3929 = scalar_lea.vmem %s3, %s3928
      // Predicated region
      $region29: #{cnn_block_forward.2} parent=27 // pred_check
        %p3930 = pneg %p80
      $region30: #{cnn_block_forward.2} parent=27 // pred_check_branch
        %3932 = sbr.rel (%p3930) target = $region32
      $region31: #{cnn_block_forward.2} parent=27 // pred_region
        _
      $region32: #{cnn_block_forward.2} parent=27 // pred_fallthru
        _
      // Predicated region
      $region33: #{cnn_block_forward.2} parent=27 // pred_check
        %p3933 = pneg %p106
      $region34: #{cnn_block_forward.2} parent=27 // pred_check_branch
        %3935 = sbr.rel (%p3933) target = $region36
      $region35: #{cnn_block_forward.2} parent=27 // pred_region
        _
      $region36: #{cnn_block_forward.2} parent=27 // pred_fallthru
        _
    $region28: #{cnn_block_forward.2} parent=5 // pred_fallthru
      _
    %p3936 = scmp.le.s32.totalorder 2, %s10
    // Predicated region
    $region37: #{cnn_block_forward.2} parent=5 // pred_check
      %p3937 = pneg %p3936
    $region38: #{cnn_block_forward.2} parent=5 // pred_check_branch
      %3939 = sbr.rel (%p3937) target = $region40
    $region39: #{cnn_block_forward.2} parent=5 // pred_region
      %s3940 = ssub.s32 %s10, 2
      // Predicated region
      $region41: #{cnn_block_forward.2} parent=39 // pred_check
        %p3941 = pneg %p86
      $region42: #{cnn_block_forward.2} parent=39 // pred_check_branch
        %3943 = sbr.rel (%p3941) target = $region44
      $region43: #{cnn_block_forward.2} parent=39 // pred_region
        %p3944 = scmp.lt.s32.totalorder %s16, 1
        %s3945 = scalar_select %p3944, %s16, 1
        %s3946 = scalar_lea.vmem %s2, %s3945
      $region44: #{cnn_block_forward.2} parent=39 // pred_fallthru
        _
      // Predicated region
      $region45: #{cnn_block_forward.2} parent=39 // pred_check
        %p3947 = pneg %p112
      $region46: #{cnn_block_forward.2} parent=39 // pred_check_branch
        %3949 = sbr.rel (%p3947) target = $region48
      $region47: #{cnn_block_forward.2} parent=39 // pred_region
        %p3950 = scmp.lt.s32.totalorder %s16, 1
        %s3951 = scalar_select %p3950, %s16, 1
        %s3952 = scalar_lea.vmem %s3, %s3951
      $region48: #{cnn_block_forward.2} parent=39 // pred_fallthru
        _
    $region40: #{cnn_block_forward.2} parent=5 // pred_fallthru
      _
  $region6: #{cnn_block_forward.2} parent=0 // loop_footer
    %s14 = sadd.s32 1, %s10
  $region7: #{cnn_block_forward.2} parent=0 // loop_footer_branch
    %9 = sbr.rel target = $region3
  $region8: #{cnn_block_forward.2} parent=0 // loop_exit
    _

</llo_original>
